<compile_context>
chip_gen: v5e
topology: v5e:2x2
jax: 0.10.0
libtpu: 0.0.40
codegen_flags: <defaults>
</compile_context>

<pallas_src>
import jax
import jax.numpy as jnp
import numpy as np
from jax.experimental import pallas as pl
from jax.experimental.pallas import tpu as pltpu

# Model sizes (PyTorch module defaults).
INPUT_SIZE = 1
H1 = 256
H2 = 256
D1 = 128
D2 = 64
D_OUT = 1


def lstm_stack_kernel(x_ref,      # (T, bb, I)   time-major input slab (f32)
                      wih1_ref,   # (I, 4*H1)    f32 (VPU path when I == 1)
                      b1_ref,     # (1, 4*H1)    f32 (b_ih1 + b_hh1)
                      whh1_ref,   # (H1, 4*H1)   matmul dtype
                      w2s_ref,    # (H1+H2, 4*H2) stacked [wih2; whh2], matmul dtype
                      b2_ref,     # (1, 4*H2)    f32 (b_ih2 + b_hh2)
                      h2_ref):    # (bb, H2)     f32 output: last hidden state of layer 2
    seq_len, bb, in_size = x_ref.shape
    hid1 = whh1_ref.shape[0]
    hid2 = w2s_ref.shape[1] // 4
    md = whh1_ref.dtype  # matmul operand dtype (f32 or bf16)

    def gate_split(g, hid):
        # PyTorch gate order: input, forget, cell(g), output — all math in f32.
        i = jax.nn.sigmoid(g[:, 0 * hid:1 * hid])
        f = jax.nn.sigmoid(g[:, 1 * hid:2 * hid])
        c_tilde = jnp.tanh(g[:, 2 * hid:3 * hid])
        o = jax.nn.sigmoid(g[:, 3 * hid:4 * hid])
        return i, f, c_tilde, o

    def step(t, carry):
        h1, c1, h2, c2 = carry
        xt = x_ref[t].astype(jnp.float32)                       # (bb, I)

        # ---- layer 1 input projection ----
        if in_size == 1:
            # K=1 "matmul" done as a VPU broadcast: (bb,1) * (1,4H1) + (1,4H1).
            g1 = xt * wih1_ref[...].astype(jnp.float32) + b1_ref[...]
        else:
            g1 = (jnp.dot(xt, wih1_ref[...].astype(jnp.float32),
                          preferred_element_type=jnp.float32) + b1_ref[...])
        # ---- layer 1 recurrence (K=H1 GEMM) ----
        g1 = g1 + jnp.dot(h1.astype(md), whh1_ref[...],
                          preferred_element_type=jnp.float32)
        i1, f1, ct1, o1 = gate_split(g1, hid1)
        c1 = f1 * c1 + i1 * ct1
        h1 = o1 * jnp.tanh(c1)

        # ---- layer 2: fused input + recurrent GEMM (K = H1+H2 = 512) ----
        h12 = jnp.concatenate([h1, h2], axis=1).astype(md)      # 256-lane aligned concat
        g2 = (jnp.dot(h12, w2s_ref[...], preferred_element_type=jnp.float32)
              + b2_ref[...])
        i2, f2, ct2, o2 = gate_split(g2, hid2)
        c2 = f2 * c2 + i2 * ct2
        h2 = o2 * jnp.tanh(c2)
        return h1, c1, h2, c2

    init = (jnp.zeros((bb, hid1), jnp.float32),
            jnp.zeros((bb, hid1), jnp.float32),
            jnp.zeros((bb, hid2), jnp.float32),
            jnp.zeros((bb, hid2), jnp.float32))
    unroll = seq_len if seq_len <= 16 else 8
    _, _, h2, _ = jax.lax.fori_loop(0, seq_len, step, init, unroll=unroll)

    h2_ref[...] = h2.astype(h2_ref.dtype)                        # lane-dense (bb, 256) store


def stock_price_predictor(x, params, *, matmul_dtype=jnp.float32, batch_block=None):
    """x: (B, T, INPUT_SIZE) batch-first (PyTorch convention). Returns (B, 1).

    matmul_dtype: operand dtype for the recurrent GEMMs (jnp.bfloat16 on
      v6e/v7x roughly doubles MXU throughput and halves weight VMEM/DMA);
      accumulation and all gate math stay f32.
    batch_block: rows per kernel invocation.  B is split into B//batch_block
      independent programs on a "parallel" grid axis (sharded across the two
      TensorCores on v7x).  Must divide B and be a multiple of 8 (or equal B).
    """
    B, T, I = x.shape
    (wih1, whh1, b1, wih2, whh2, b2, w1, bb1, w2, bb2, w3, bb3) = params
    hid1 = whh1.shape[0]
    hid2 = whh2.shape[0]

    if batch_block is None:
        batch_block = B
    assert B % batch_block == 0, "batch_block must divide B"
    assert batch_block == B or batch_block % 8 == 0, \
        "batch_block must be a multiple of 8 (f32 sublane count) or equal B"
    nb = B // batch_block

    x_tm = jnp.transpose(x, (1, 0, 2)).astype(jnp.float32)       # time-major (T, B, I)

    # Kernel-side parameter prep: stack layer-2 weights for the fused GEMM and
    # cast recurrent matmul operands to matmul_dtype.  Layer-1's input
    # projection weight and all biases stay f32 (VPU path / additive).
    w2s = jnp.concatenate([wih2, whh2], axis=0).astype(matmul_dtype)   # (H1+H2, 4*H2)
    whh1_k = whh1.astype(matmul_dtype)
    wih1_k = wih1.astype(jnp.float32)
    b1_k = b1.astype(jnp.float32)
    b2_k = b2.astype(jnp.float32)

    def const2d(arr):
        # Whole (small) 2-D parameter resident in VMEM for every grid step.
        return pl.BlockSpec(arr.shape, lambda bidx: (0, 0))

    grid_spec = pltpu.PrefetchScalarGridSpec(
        num_scalar_prefetch=0,
        grid=(nb,),                                              # batch blocks only
        in_specs=[
            pl.BlockSpec((T, batch_block, I), lambda bidx: (0, bidx, 0)),
            const2d(wih1_k), const2d(b1_k),
            const2d(whh1_k),
            const2d(w2s), const2d(b2_k),
        ],
        out_specs=pl.BlockSpec((batch_block, hid2), lambda bidx: (bidx, 0)),
    )

    h2 = pl.pallas_call(
        lstm_stack_kernel,
        out_shape=jax.ShapeDtypeStruct((B, hid2), jnp.float32),
        grid_spec=grid_spec,
        compiler_params=pltpu.CompilerParams(
            # Batch blocks are independent; on v7x they shard across both TCs.
            dimension_semantics=("parallel",),
        ),
    )(x_tm, wih1_k, b1_k, whh1_k, w2s, b2_k)

    # Tiny fc1 -> fc2 -> fc3 head in plain XLA on the lane-dense h2 slab
    # (moved out of the kernel per perf review; avoids lane-1 masked stores
    # and 6 resident weight blocks).
    d = h2 @ w1 + bb1
    d = d @ w2 + bb2
    out = d @ w3 + bb3
    return out


def init_params(key):
    """Deterministic synthetic parameters, stored pre-transposed for row-major GEMMs."""
    ks = jax.random.split(key, 16)
    s = 0.05

    def rnd(k, shape):
        return jax.random.normal(k, shape, dtype=jnp.float32) * s

    # LSTM1 (PyTorch W_ih: (4H1, I), W_hh: (4H1, H1), biases (4H1,)) — transposed.
    wih1 = rnd(ks[0], (INPUT_SIZE, 4 * H1))
    whh1 = rnd(ks[1], (H1, 4 * H1))
    b1 = rnd(ks[2], (1, 4 * H1)) + rnd(ks[3], (1, 4 * H1))       # b_ih + b_hh
    # LSTM2.
    wih2 = rnd(ks[4], (H1, 4 * H2))
    whh2 = rnd(ks[5], (H2, 4 * H2))
    b2 = rnd(ks[6], (1, 4 * H2)) + rnd(ks[7], (1, 4 * H2))
    # Dense head.
    w1 = rnd(ks[8], (H2, D1))
    bb1 = rnd(ks[9], (1, D1))
    w2 = rnd(ks[10], (D1, D2))
    bb2 = rnd(ks[11], (1, D2))
    w3 = rnd(ks[12], (D2, D_OUT))
    bb3 = rnd(ks[13], (1, D_OUT))
    return (wih1, whh1, b1, wih2, whh2, b2, w1, bb1, w2, bb2, w3, bb3)


def reference_forward(x, params, matmul_dtype=jnp.float32):
    """Pure-JAX reference with PyTorch nn.LSTM semantics.

    With matmul_dtype=f32 this is the exact f32 PyTorch-semantics forward.
    With matmul_dtype=bf16 it applies the same operand casting as the kernel
    (f32 accumulation, f32 gate math) so the kernel can be checked tightly.
    """
    (wih1, whh1, b1, wih2, whh2, b2, w1, bb1, w2, bb2, w3, bb3) = params
    B, T, _ = x.shape
    hid1 = whh1.shape[0]
    hid2 = whh2.shape[0]
    md = matmul_dtype

    def dot_md(a, w):
        return jnp.dot(a.astype(md), w.astype(md), preferred_element_type=jnp.float32)

    def cell(g_in, h, c, whh, hid):
        gates = g_in + dot_md(h, whh)
        i = jax.nn.sigmoid(gates[:, 0 * hid:1 * hid])
        f = jax.nn.sigmoid(gates[:, 1 * hid:2 * hid])
        g = jnp.tanh(gates[:, 2 * hid:3 * hid])
        o = jax.nn.sigmoid(gates[:, 3 * hid:4 * hid])
        c = f * c + i * g
        h = o * jnp.tanh(c)
        return h, c

    h1 = jnp.zeros((B, hid1), jnp.float32)
    c1 = jnp.zeros((B, hid1), jnp.float32)
    h2 = jnp.zeros((B, hid2), jnp.float32)
    c2 = jnp.zeros((B, hid2), jnp.float32)
    for t in range(T):
        xt = x[:, t, :].astype(jnp.float32)
        g1_in = xt @ wih1 + b1                       # f32 input path (matches kernel)
        h1, c1 = cell(g1_in, h1, c1, whh1, hid1)
        g2_in = dot_md(h1, wih2) + b2
        h2, c2 = cell(g2_in, h2, c2, whh2, hid2)
    out = h2 @ w1 + bb1
    out = out @ w2 + bb2
    out = out @ w3 + bb3
    return out


if __name__ == "__main__":
    key = jax.random.PRNGKey(0)
    k_x, k_p, k_x2 = jax.random.split(key, 3)

    B, T = 8, 8                                       # B=8 fills the f32 sublanes
    x = jax.random.normal(k_x, (B, T, INPUT_SIZE), dtype=jnp.float32)
    params = init_params(k_p)

    # 1) f32 matmuls: exact PyTorch-semantics forward.
    out_f32 = jax.block_until_ready(stock_price_predictor(x, params))
    ref_f32 = reference_forward(x, params)
    np.testing.assert_allclose(np.asarray(out_f32), np.asarray(ref_f32),
                               rtol=1e-4, atol=1e-5)
    assert out_f32.shape == (B, 1)

    # 2) bf16 matmul operands (fast path for v6e/v7x MXU); compared against a
    #    reference using identical operand casting (f32 accumulate + gates).
    out_bf16 = jax.block_until_ready(
        stock_price_predictor(x, params, matmul_dtype=jnp.bfloat16))
    ref_bf16 = reference_forward(x, params, matmul_dtype=jnp.bfloat16)
    np.testing.assert_allclose(np.asarray(out_bf16), np.asarray(ref_bf16),
                               rtol=5e-3, atol=1e-4)

    # 3) Batch-blocked "parallel" grid (shards across both TCs on v7x).
    B2 = 16
    x2 = jax.random.normal(k_x2, (B2, T, INPUT_SIZE), dtype=jnp.float32)
    out_blk = jax.block_until_ready(
        stock_price_predictor(x2, params, batch_block=8))
    ref_blk = reference_forward(x2, params)
    np.testing.assert_allclose(np.asarray(out_blk), np.asarray(ref_blk),
                               rtol=1e-4, atol=1e-5)

    print("KERNEL_OK")
</pallas_src>

<mosaic_0001>
module attributes {stable_mosaic.version = 11 : i64} {
  func.func @lstm_stack_kernel(%arg0: i32, %arg1: memref<8x8x1xf32, #tpu.memory_space<vmem>>, %arg2: memref<1x1024xf32, #tpu.memory_space<vmem>>, %arg3: memref<1x1024xf32, #tpu.memory_space<vmem>>, %arg4: memref<256x1024xf32, #tpu.memory_space<vmem>>, %arg5: memref<512x1024xf32, #tpu.memory_space<vmem>>, %arg6: memref<1x1024xf32, #tpu.memory_space<vmem>>, %arg7: memref<8x256xf32, #tpu.memory_space<vmem>>) attributes {dimension_semantics = [#tpu.dimension_semantics<parallel>], iteration_bounds = array<i64: 1>, scalar_prefetch = 0 : i64, scratch_operands = 0 : i64, tpu.core_type = #tpu.core_type<tc>, window_params = [{transform_indices = @transform_0, window_bounds = array<i64: 8, 8, 1>}, {pipeline_mode = #tpu.pipeline_mode<synchronous>, transform_indices = @transform_1, window_bounds = array<i64: 1, 1024>}, {pipeline_mode = #tpu.pipeline_mode<synchronous>, transform_indices = @transform_2, window_bounds = array<i64: 1, 1024>}, {pipeline_mode = #tpu.pipeline_mode<synchronous>, transform_indices = @transform_3, window_bounds = array<i64: 256, 1024>}, {pipeline_mode = #tpu.pipeline_mode<synchronous>, transform_indices = @transform_4, window_bounds = array<i64: 512, 1024>}, {pipeline_mode = #tpu.pipeline_mode<synchronous>, transform_indices = @transform_5, window_bounds = array<i64: 1, 1024>}, {transform_indices = @transform_6, window_bounds = array<i64: 8, 256>}]} {
    %cst = arith.constant 0.000000e+00 : f32
    %0 = vector.broadcast %cst : f32 to vector<8x256xf32>
    %cst_0 = arith.constant 0.000000e+00 : f32
    %1 = vector.broadcast %cst_0 : f32 to vector<8x256xf32>
    %cst_1 = arith.constant 0.000000e+00 : f32
    %2 = vector.broadcast %cst_1 : f32 to vector<8x256xf32>
    %cst_2 = arith.constant 0.000000e+00 : f32
    %3 = vector.broadcast %cst_2 : f32 to vector<8x256xf32>
    %c0_i32 = arith.constant 0 : i32
    %4 = arith.index_cast %c0_i32 : i32 to index
    %c0 = arith.constant 0 : index
    %c0_3 = arith.constant 0 : index
    %5 = vector.load %arg1[%4, %c0, %c0_3] : memref<8x8x1xf32, #tpu.memory_space<vmem>>, vector<1x8x1xf32>
    %6 = vector.shape_cast %5 : vector<1x8x1xf32> to vector<8x1xf32>
    %c0_4 = arith.constant 0 : index
    %c0_5 = arith.constant 0 : index
    %7 = vector.load %arg2[%c0_4, %c0_5] : memref<1x1024xf32, #tpu.memory_space<vmem>>, vector<1x1024xf32>
    %8 = vector.broadcast %6 : vector<8x1xf32> to vector<8x1024xf32>
    %9 = vector.broadcast %7 : vector<1x1024xf32> to vector<8x1024xf32>
    %10 = arith.mulf %8, %9 : vector<8x1024xf32>
    %c0_6 = arith.constant 0 : index
    %c0_7 = arith.constant 0 : index
    %11 = vector.load %arg3[%c0_6, %c0_7] : memref<1x1024xf32, #tpu.memory_space<vmem>>, vector<1x1024xf32>
    %12 = vector.broadcast %11 : vector<1x1024xf32> to vector<8x1024xf32>
    %13 = arith.addf %10, %12 : vector<8x1024xf32>
    %c0_8 = arith.constant 0 : index
    %c0_9 = arith.constant 0 : index
    %14 = vector.load %arg4[%c0_8, %c0_9] : memref<256x1024xf32, #tpu.memory_space<vmem>>, vector<256x1024xf32>
    %cst_10 = arith.constant dense<0.000000e+00> : vector<8x1024xf32>
    %15 = tpu.matmul %0, %14, %cst_10 {dimension_numbers = #tpu.dot_dimension_numbers<[1], [0], [0], [1], [0, 0, 1, 1], [], []>} : vector<8x256xf32>, vector<256x1024xf32>, vector<8x1024xf32> -> vector<8x1024xf32>
    %16 = arith.addf %13, %15 : vector<8x1024xf32>
    %17 = vector.extract_strided_slice %16 {offsets = [0, 0], sizes = [8, 256], strides = [1, 1]} : vector<8x1024xf32> to vector<8x256xf32>
    %18 = arith.negf %17 : vector<8x256xf32>
    %19 = math.exp %18 : vector<8x256xf32>
    %cst_11 = arith.constant 1.000000e+00 : f32
    %20 = vector.broadcast %cst_11 : f32 to vector<8x256xf32>
    %21 = arith.addf %20, %19 : vector<8x256xf32>
    %22 = arith.divf %20, %21 : vector<8x256xf32>
    %23 = vector.extract_strided_slice %16 {offsets = [0, 256], sizes = [8, 256], strides = [1, 1]} : vector<8x1024xf32> to vector<8x256xf32>
    %24 = arith.negf %23 : vector<8x256xf32>
    %25 = math.exp %24 : vector<8x256xf32>
    %cst_12 = arith.constant 1.000000e+00 : f32
    %26 = vector.broadcast %cst_12 : f32 to vector<8x256xf32>
    %27 = arith.addf %26, %25 : vector<8x256xf32>
    %28 = arith.divf %26, %27 : vector<8x256xf32>
    %29 = vector.extract_strided_slice %16 {offsets = [0, 512], sizes = [8, 256], strides = [1, 1]} : vector<8x1024xf32> to vector<8x256xf32>
    %30 = math.tanh %29 : vector<8x256xf32>
    %31 = vector.extract_strided_slice %16 {offsets = [0, 768], sizes = [8, 256], strides = [1, 1]} : vector<8x1024xf32> to vector<8x256xf32>
    %32 = arith.negf %31 : vector<8x256xf32>
    %33 = math.exp %32 : vector<8x256xf32>
    %cst_13 = arith.constant 1.000000e+00 : f32
    %34 = vector.broadcast %cst_13 : f32 to vector<8x256xf32>
    %35 = arith.addf %34, %33 : vector<8x256xf32>
    %36 = arith.divf %34, %35 : vector<8x256xf32>
    %37 = arith.mulf %28, %1 : vector<8x256xf32>
    %38 = arith.mulf %22, %30 : vector<8x256xf32>
    %39 = arith.addf %37, %38 : vector<8x256xf32>
    %40 = math.tanh %39 : vector<8x256xf32>
    %41 = arith.mulf %36, %40 : vector<8x256xf32>
    %42 = tpu.concatenate %41, %2 in 1 : vector<8x256xf32>, vector<8x256xf32> -> vector<8x512xf32>
    %c0_14 = arith.constant 0 : index
    %c0_15 = arith.constant 0 : index
    %43 = vector.load %arg5[%c0_14, %c0_15] : memref<512x1024xf32, #tpu.memory_space<vmem>>, vector<512x1024xf32>
    %cst_16 = arith.constant dense<0.000000e+00> : vector<8x1024xf32>
    %44 = tpu.matmul %42, %43, %cst_16 {dimension_numbers = #tpu.dot_dimension_numbers<[1], [0], [0], [1], [0, 0, 1, 1], [], []>} : vector<8x512xf32>, vector<512x1024xf32>, vector<8x1024xf32> -> vector<8x1024xf32>
    %c0_17 = arith.constant 0 : index
    %c0_18 = arith.constant 0 : index
    %45 = vector.load %arg6[%c0_17, %c0_18] : memref<1x1024xf32, #tpu.memory_space<vmem>>, vector<1x1024xf32>
    %46 = vector.broadcast %45 : vector<1x1024xf32> to vector<8x1024xf32>
    %47 = arith.addf %44, %46 : vector<8x1024xf32>
    %48 = vector.extract_strided_slice %47 {offsets = [0, 0], sizes = [8, 256], strides = [1, 1]} : vector<8x1024xf32> to vector<8x256xf32>
    %49 = arith.negf %48 : vector<8x256xf32>
    %50 = math.exp %49 : vector<8x256xf32>
    %cst_19 = arith.constant 1.000000e+00 : f32
    %51 = vector.broadcast %cst_19 : f32 to vector<8x256xf32>
    %52 = arith.addf %51, %50 : vector<8x256xf32>
    %53 = arith.divf %51, %52 : vector<8x256xf32>
    %54 = vector.extract_strided_slice %47 {offsets = [0, 256], sizes = [8, 256], strides = [1, 1]} : vector<8x1024xf32> to vector<8x256xf32>
    %55 = arith.negf %54 : vector<8x256xf32>
    %56 = math.exp %55 : vector<8x256xf32>
    %cst_20 = arith.constant 1.000000e+00 : f32
    %57 = vector.broadcast %cst_20 : f32 to vector<8x256xf32>
    %58 = arith.addf %57, %56 : vector<8x256xf32>
    %59 = arith.divf %57, %58 : vector<8x256xf32>
    %60 = vector.extract_strided_slice %47 {offsets = [0, 512], sizes = [8, 256], strides = [1, 1]} : vector<8x1024xf32> to vector<8x256xf32>
    %61 = math.tanh %60 : vector<8x256xf32>
    %62 = vector.extract_strided_slice %47 {offsets = [0, 768], sizes = [8, 256], strides = [1, 1]} : vector<8x1024xf32> to vector<8x256xf32>
    %63 = arith.negf %62 : vector<8x256xf32>
    %64 = math.exp %63 : vector<8x256xf32>
    %cst_21 = arith.constant 1.000000e+00 : f32
    %65 = vector.broadcast %cst_21 : f32 to vector<8x256xf32>
    %66 = arith.addf %65, %64 : vector<8x256xf32>
    %67 = arith.divf %65, %66 : vector<8x256xf32>
    %68 = arith.mulf %59, %3 : vector<8x256xf32>
    %69 = arith.mulf %53, %61 : vector<8x256xf32>
    %70 = arith.addf %68, %69 : vector<8x256xf32>
    %71 = math.tanh %70 : vector<8x256xf32>
    %72 = arith.mulf %67, %71 : vector<8x256xf32>
    %c1_i32 = arith.constant 1 : i32
    %73 = arith.index_cast %c1_i32 : i32 to index
    %c0_22 = arith.constant 0 : index
    %c0_23 = arith.constant 0 : index
    %74 = vector.load %arg1[%73, %c0_22, %c0_23] : memref<8x8x1xf32, #tpu.memory_space<vmem>>, vector<1x8x1xf32>
    %75 = vector.shape_cast %74 : vector<1x8x1xf32> to vector<8x1xf32>
    %c0_24 = arith.constant 0 : index
    %c0_25 = arith.constant 0 : index
    %76 = vector.load %arg2[%c0_24, %c0_25] : memref<1x1024xf32, #tpu.memory_space<vmem>>, vector<1x1024xf32>
    %77 = vector.broadcast %75 : vector<8x1xf32> to vector<8x1024xf32>
    %78 = vector.broadcast %76 : vector<1x1024xf32> to vector<8x1024xf32>
    %79 = arith.mulf %77, %78 : vector<8x1024xf32>
    %c0_26 = arith.constant 0 : index
    %c0_27 = arith.constant 0 : index
    %80 = vector.load %arg3[%c0_26, %c0_27] : memref<1x1024xf32, #tpu.memory_space<vmem>>, vector<1x1024xf32>
    %81 = vector.broadcast %80 : vector<1x1024xf32> to vector<8x1024xf32>
    %82 = arith.addf %79, %81 : vector<8x1024xf32>
    %c0_28 = arith.constant 0 : index
    %c0_29 = arith.constant 0 : index
    %83 = vector.load %arg4[%c0_28, %c0_29] : memref<256x1024xf32, #tpu.memory_space<vmem>>, vector<256x1024xf32>
    %cst_30 = arith.constant dense<0.000000e+00> : vector<8x1024xf32>
    %84 = tpu.matmul %41, %83, %cst_30 {dimension_numbers = #tpu.dot_dimension_numbers<[1], [0], [0], [1], [0, 0, 1, 1], [], []>} : vector<8x256xf32>, vector<256x1024xf32>, vector<8x1024xf32> -> vector<8x1024xf32>
    %85 = arith.addf %82, %84 : vector<8x1024xf32>
    %86 = vector.extract_strided_slice %85 {offsets = [0, 0], sizes = [8, 256], strides = [1, 1]} : vector<8x1024xf32> to vector<8x256xf32>
    %87 = arith.negf %86 : vector<8x256xf32>
    %88 = math.exp %87 : vector<8x256xf32>
    %cst_31 = arith.constant 1.000000e+00 : f32
    %89 = vector.broadcast %cst_31 : f32 to vector<8x256xf32>
    %90 = arith.addf %89, %88 : vector<8x256xf32>
    %91 = arith.divf %89, %90 : vector<8x256xf32>
    %92 = vector.extract_strided_slice %85 {offsets = [0, 256], sizes = [8, 256], strides = [1, 1]} : vector<8x1024xf32> to vector<8x256xf32>
    %93 = arith.negf %92 : vector<8x256xf32>
    %94 = math.exp %93 : vector<8x256xf32>
    %cst_32 = arith.constant 1.000000e+00 : f32
    %95 = vector.broadcast %cst_32 : f32 to vector<8x256xf32>
    %96 = arith.addf %95, %94 : vector<8x256xf32>
    %97 = arith.divf %95, %96 : vector<8x256xf32>
    %98 = vector.extract_strided_slice %85 {offsets = [0, 512], sizes = [8, 256], strides = [1, 1]} : vector<8x1024xf32> to vector<8x256xf32>
    %99 = math.tanh %98 : vector<8x256xf32>
    %100 = vector.extract_strided_slice %85 {offsets = [0, 768], sizes = [8, 256], strides = [1, 1]} : vector<8x1024xf32> to vector<8x256xf32>
    %101 = arith.negf %100 : vector<8x256xf32>
    %102 = math.exp %101 : vector<8x256xf32>
    %cst_33 = arith.constant 1.000000e+00 : f32
    %103 = vector.broadcast %cst_33 : f32 to vector<8x256xf32>
    %104 = arith.addf %103, %102 : vector<8x256xf32>
    %105 = arith.divf %103, %104 : vector<8x256xf32>
    %106 = arith.mulf %97, %39 : vector<8x256xf32>
    %107 = arith.mulf %91, %99 : vector<8x256xf32>
    %108 = arith.addf %106, %107 : vector<8x256xf32>
    %109 = math.tanh %108 : vector<8x256xf32>
    %110 = arith.mulf %105, %109 : vector<8x256xf32>
    %111 = tpu.concatenate %110, %72 in 1 : vector<8x256xf32>, vector<8x256xf32> -> vector<8x512xf32>
    %c0_34 = arith.constant 0 : index
    %c0_35 = arith.constant 0 : index
    %112 = vector.load %arg5[%c0_34, %c0_35] : memref<512x1024xf32, #tpu.memory_space<vmem>>, vector<512x1024xf32>
    %cst_36 = arith.constant dense<0.000000e+00> : vector<8x1024xf32>
    %113 = tpu.matmul %111, %112, %cst_36 {dimension_numbers = #tpu.dot_dimension_numbers<[1], [0], [0], [1], [0, 0, 1, 1], [], []>} : vector<8x512xf32>, vector<512x1024xf32>, vector<8x1024xf32> -> vector<8x1024xf32>
    %c0_37 = arith.constant 0 : index
    %c0_38 = arith.constant 0 : index
    %114 = vector.load %arg6[%c0_37, %c0_38] : memref<1x1024xf32, #tpu.memory_space<vmem>>, vector<1x1024xf32>
    %115 = vector.broadcast %114 : vector<1x1024xf32> to vector<8x1024xf32>
    %116 = arith.addf %113, %115 : vector<8x1024xf32>
    %117 = vector.extract_strided_slice %116 {offsets = [0, 0], sizes = [8, 256], strides = [1, 1]} : vector<8x1024xf32> to vector<8x256xf32>
    %118 = arith.negf %117 : vector<8x256xf32>
    %119 = math.exp %118 : vector<8x256xf32>
    %cst_39 = arith.constant 1.000000e+00 : f32
    %120 = vector.broadcast %cst_39 : f32 to vector<8x256xf32>
    %121 = arith.addf %120, %119 : vector<8x256xf32>
    %122 = arith.divf %120, %121 : vector<8x256xf32>
    %123 = vector.extract_strided_slice %116 {offsets = [0, 256], sizes = [8, 256], strides = [1, 1]} : vector<8x1024xf32> to vector<8x256xf32>
    %124 = arith.negf %123 : vector<8x256xf32>
    %125 = math.exp %124 : vector<8x256xf32>
    %cst_40 = arith.constant 1.000000e+00 : f32
    %126 = vector.broadcast %cst_40 : f32 to vector<8x256xf32>
    %127 = arith.addf %126, %125 : vector<8x256xf32>
    %128 = arith.divf %126, %127 : vector<8x256xf32>
    %129 = vector.extract_strided_slice %116 {offsets = [0, 512], sizes = [8, 256], strides = [1, 1]} : vector<8x1024xf32> to vector<8x256xf32>
    %130 = math.tanh %129 : vector<8x256xf32>
    %131 = vector.extract_strided_slice %116 {offsets = [0, 768], sizes = [8, 256], strides = [1, 1]} : vector<8x1024xf32> to vector<8x256xf32>
    %132 = arith.negf %131 : vector<8x256xf32>
    %133 = math.exp %132 : vector<8x256xf32>
    %cst_41 = arith.constant 1.000000e+00 : f32
    %134 = vector.broadcast %cst_41 : f32 to vector<8x256xf32>
    %135 = arith.addf %134, %133 : vector<8x256xf32>
    %136 = arith.divf %134, %135 : vector<8x256xf32>
    %137 = arith.mulf %128, %70 : vector<8x256xf32>
    %138 = arith.mulf %122, %130 : vector<8x256xf32>
    %139 = arith.addf %137, %138 : vector<8x256xf32>
    %140 = math.tanh %139 : vector<8x256xf32>
    %141 = arith.mulf %136, %140 : vector<8x256xf32>
    %c2_i32 = arith.constant 2 : i32
    %142 = arith.index_cast %c2_i32 : i32 to index
    %c0_42 = arith.constant 0 : index
    %c0_43 = arith.constant 0 : index
    %143 = vector.load %arg1[%142, %c0_42, %c0_43] : memref<8x8x1xf32, #tpu.memory_space<vmem>>, vector<1x8x1xf32>
    %144 = vector.shape_cast %143 : vector<1x8x1xf32> to vector<8x1xf32>
    %c0_44 = arith.constant 0 : index
    %c0_45 = arith.constant 0 : index
    %145 = vector.load %arg2[%c0_44, %c0_45] : memref<1x1024xf32, #tpu.memory_space<vmem>>, vector<1x1024xf32>
    %146 = vector.broadcast %144 : vector<8x1xf32> to vector<8x1024xf32>
    %147 = vector.broadcast %145 : vector<1x1024xf32> to vector<8x1024xf32>
    %148 = arith.mulf %146, %147 : vector<8x1024xf32>
    %c0_46 = arith.constant 0 : index
    %c0_47 = arith.constant 0 : index
    %149 = vector.load %arg3[%c0_46, %c0_47] : memref<1x1024xf32, #tpu.memory_space<vmem>>, vector<1x1024xf32>
    %150 = vector.broadcast %149 : vector<1x1024xf32> to vector<8x1024xf32>
    %151 = arith.addf %148, %150 : vector<8x1024xf32>
    %c0_48 = arith.constant 0 : index
    %c0_49 = arith.constant 0 : index
    %152 = vector.load %arg4[%c0_48, %c0_49] : memref<256x1024xf32, #tpu.memory_space<vmem>>, vector<256x1024xf32>
    %cst_50 = arith.constant dense<0.000000e+00> : vector<8x1024xf32>
    %153 = tpu.matmul %110, %152, %cst_50 {dimension_numbers = #tpu.dot_dimension_numbers<[1], [0], [0], [1], [0, 0, 1, 1], [], []>} : vector<8x256xf32>, vector<256x1024xf32>, vector<8x1024xf32> -> vector<8x1024xf32>
    %154 = arith.addf %151, %153 : vector<8x1024xf32>
    %155 = vector.extract_strided_slice %154 {offsets = [0, 0], sizes = [8, 256], strides = [1, 1]} : vector<8x1024xf32> to vector<8x256xf32>
    %156 = arith.negf %155 : vector<8x256xf32>
    %157 = math.exp %156 : vector<8x256xf32>
    %cst_51 = arith.constant 1.000000e+00 : f32
    %158 = vector.broadcast %cst_51 : f32 to vector<8x256xf32>
    %159 = arith.addf %158, %157 : vector<8x256xf32>
    %160 = arith.divf %158, %159 : vector<8x256xf32>
    %161 = vector.extract_strided_slice %154 {offsets = [0, 256], sizes = [8, 256], strides = [1, 1]} : vector<8x1024xf32> to vector<8x256xf32>
    %162 = arith.negf %161 : vector<8x256xf32>
    %163 = math.exp %162 : vector<8x256xf32>
    %cst_52 = arith.constant 1.000000e+00 : f32
    %164 = vector.broadcast %cst_52 : f32 to vector<8x256xf32>
    %165 = arith.addf %164, %163 : vector<8x256xf32>
    %166 = arith.divf %164, %165 : vector<8x256xf32>
    %167 = vector.extract_strided_slice %154 {offsets = [0, 512], sizes = [8, 256], strides = [1, 1]} : vector<8x1024xf32> to vector<8x256xf32>
    %168 = math.tanh %167 : vector<8x256xf32>
    %169 = vector.extract_strided_slice %154 {offsets = [0, 768], sizes = [8, 256], strides = [1, 1]} : vector<8x1024xf32> to vector<8x256xf32>
    %170 = arith.negf %169 : vector<8x256xf32>
    %171 = math.exp %170 : vector<8x256xf32>
    %cst_53 = arith.constant 1.000000e+00 : f32
    %172 = vector.broadcast %cst_53 : f32 to vector<8x256xf32>
    %173 = arith.addf %172, %171 : vector<8x256xf32>
    %174 = arith.divf %172, %173 : vector<8x256xf32>
    %175 = arith.mulf %166, %108 : vector<8x256xf32>
    %176 = arith.mulf %160, %168 : vector<8x256xf32>
    %177 = arith.addf %175, %176 : vector<8x256xf32>
    %178 = math.tanh %177 : vector<8x256xf32>
    %179 = arith.mulf %174, %178 : vector<8x256xf32>
    %180 = tpu.concatenate %179, %141 in 1 : vector<8x256xf32>, vector<8x256xf32> -> vector<8x512xf32>
    %c0_54 = arith.constant 0 : index
    %c0_55 = arith.constant 0 : index
    %181 = vector.load %arg5[%c0_54, %c0_55] : memref<512x1024xf32, #tpu.memory_space<vmem>>, vector<512x1024xf32>
    %cst_56 = arith.constant dense<0.000000e+00> : vector<8x1024xf32>
    %182 = tpu.matmul %180, %181, %cst_56 {dimension_numbers = #tpu.dot_dimension_numbers<[1], [0], [0], [1], [0, 0, 1, 1], [], []>} : vector<8x512xf32>, vector<512x1024xf32>, vector<8x1024xf32> -> vector<8x1024xf32>
    %c0_57 = arith.constant 0 : index
    %c0_58 = arith.constant 0 : index
    %183 = vector.load %arg6[%c0_57, %c0_58] : memref<1x1024xf32, #tpu.memory_space<vmem>>, vector<1x1024xf32>
    %184 = vector.broadcast %183 : vector<1x1024xf32> to vector<8x1024xf32>
    %185 = arith.addf %182, %184 : vector<8x1024xf32>
    %186 = vector.extract_strided_slice %185 {offsets = [0, 0], sizes = [8, 256], strides = [1, 1]} : vector<8x1024xf32> to vector<8x256xf32>
    %187 = arith.negf %186 : vector<8x256xf32>
    %188 = math.exp %187 : vector<8x256xf32>
    %cst_59 = arith.constant 1.000000e+00 : f32
    %189 = vector.broadcast %cst_59 : f32 to vector<8x256xf32>
    %190 = arith.addf %189, %188 : vector<8x256xf32>
    %191 = arith.divf %189, %190 : vector<8x256xf32>
    %192 = vector.extract_strided_slice %185 {offsets = [0, 256], sizes = [8, 256], strides = [1, 1]} : vector<8x1024xf32> to vector<8x256xf32>
    %193 = arith.negf %192 : vector<8x256xf32>
    %194 = math.exp %193 : vector<8x256xf32>
    %cst_60 = arith.constant 1.000000e+00 : f32
    %195 = vector.broadcast %cst_60 : f32 to vector<8x256xf32>
    %196 = arith.addf %195, %194 : vector<8x256xf32>
    %197 = arith.divf %195, %196 : vector<8x256xf32>
    %198 = vector.extract_strided_slice %185 {offsets = [0, 512], sizes = [8, 256], strides = [1, 1]} : vector<8x1024xf32> to vector<8x256xf32>
    %199 = math.tanh %198 : vector<8x256xf32>
    %200 = vector.extract_strided_slice %185 {offsets = [0, 768], sizes = [8, 256], strides = [1, 1]} : vector<8x1024xf32> to vector<8x256xf32>
    %201 = arith.negf %200 : vector<8x256xf32>
    %202 = math.exp %201 : vector<8x256xf32>
    %cst_61 = arith.constant 1.000000e+00 : f32
    %203 = vector.broadcast %cst_61 : f32 to vector<8x256xf32>
    %204 = arith.addf %203, %202 : vector<8x256xf32>
    %205 = arith.divf %203, %204 : vector<8x256xf32>
    %206 = arith.mulf %197, %139 : vector<8x256xf32>
    %207 = arith.mulf %191, %199 : vector<8x256xf32>
    %208 = arith.addf %206, %207 : vector<8x256xf32>
    %209 = math.tanh %208 : vector<8x256xf32>
    %210 = arith.mulf %205, %209 : vector<8x256xf32>
    %c3_i32 = arith.constant 3 : i32
    %211 = arith.index_cast %c3_i32 : i32 to index
    %c0_62 = arith.constant 0 : index
    %c0_63 = arith.constant 0 : index
    %212 = vector.load %arg1[%211, %c0_62, %c0_63] : memref<8x8x1xf32, #tpu.memory_space<vmem>>, vector<1x8x1xf32>
    %213 = vector.shape_cast %212 : vector<1x8x1xf32> to vector<8x1xf32>
    %c0_64 = arith.constant 0 : index
    %c0_65 = arith.constant 0 : index
    %214 = vector.load %arg2[%c0_64, %c0_65] : memref<1x1024xf32, #tpu.memory_space<vmem>>, vector<1x1024xf32>
    %215 = vector.broadcast %213 : vector<8x1xf32> to vector<8x1024xf32>
    %216 = vector.broadcast %214 : vector<1x1024xf32> to vector<8x1024xf32>
    %217 = arith.mulf %215, %216 : vector<8x1024xf32>
    %c0_66 = arith.constant 0 : index
    %c0_67 = arith.constant 0 : index
    %218 = vector.load %arg3[%c0_66, %c0_67] : memref<1x1024xf32, #tpu.memory_space<vmem>>, vector<1x1024xf32>
    %219 = vector.broadcast %218 : vector<1x1024xf32> to vector<8x1024xf32>
    %220 = arith.addf %217, %219 : vector<8x1024xf32>
    %c0_68 = arith.constant 0 : index
    %c0_69 = arith.constant 0 : index
    %221 = vector.load %arg4[%c0_68, %c0_69] : memref<256x1024xf32, #tpu.memory_space<vmem>>, vector<256x1024xf32>
    %cst_70 = arith.constant dense<0.000000e+00> : vector<8x1024xf32>
    %222 = tpu.matmul %179, %221, %cst_70 {dimension_numbers = #tpu.dot_dimension_numbers<[1], [0], [0], [1], [0, 0, 1, 1], [], []>} : vector<8x256xf32>, vector<256x1024xf32>, vector<8x1024xf32> -> vector<8x1024xf32>
    %223 = arith.addf %220, %222 : vector<8x1024xf32>
    %224 = vector.extract_strided_slice %223 {offsets = [0, 0], sizes = [8, 256], strides = [1, 1]} : vector<8x1024xf32> to vector<8x256xf32>
    %225 = arith.negf %224 : vector<8x256xf32>
    %226 = math.exp %225 : vector<8x256xf32>
    %cst_71 = arith.constant 1.000000e+00 : f32
    %227 = vector.broadcast %cst_71 : f32 to vector<8x256xf32>
    %228 = arith.addf %227, %226 : vector<8x256xf32>
    %229 = arith.divf %227, %228 : vector<8x256xf32>
    %230 = vector.extract_strided_slice %223 {offsets = [0, 256], sizes = [8, 256], strides = [1, 1]} : vector<8x1024xf32> to vector<8x256xf32>
    %231 = arith.negf %230 : vector<8x256xf32>
    %232 = math.exp %231 : vector<8x256xf32>
    %cst_72 = arith.constant 1.000000e+00 : f32
    %233 = vector.broadcast %cst_72 : f32 to vector<8x256xf32>
    %234 = arith.addf %233, %232 : vector<8x256xf32>
    %235 = arith.divf %233, %234 : vector<8x256xf32>
    %236 = vector.extract_strided_slice %223 {offsets = [0, 512], sizes = [8, 256], strides = [1, 1]} : vector<8x1024xf32> to vector<8x256xf32>
    %237 = math.tanh %236 : vector<8x256xf32>
    %238 = vector.extract_strided_slice %223 {offsets = [0, 768], sizes = [8, 256], strides = [1, 1]} : vector<8x1024xf32> to vector<8x256xf32>
    %239 = arith.negf %238 : vector<8x256xf32>
    %240 = math.exp %239 : vector<8x256xf32>
    %cst_73 = arith.constant 1.000000e+00 : f32
    %241 = vector.broadcast %cst_73 : f32 to vector<8x256xf32>
    %242 = arith.addf %241, %240 : vector<8x256xf32>
    %243 = arith.divf %241, %242 : vector<8x256xf32>
    %244 = arith.mulf %235, %177 : vector<8x256xf32>
    %245 = arith.mulf %229, %237 : vector<8x256xf32>
    %246 = arith.addf %244, %245 : vector<8x256xf32>
    %247 = math.tanh %246 : vector<8x256xf32>
    %248 = arith.mulf %243, %247 : vector<8x256xf32>
    %249 = tpu.concatenate %248, %210 in 1 : vector<8x256xf32>, vector<8x256xf32> -> vector<8x512xf32>
    %c0_74 = arith.constant 0 : index
    %c0_75 = arith.constant 0 : index
    %250 = vector.load %arg5[%c0_74, %c0_75] : memref<512x1024xf32, #tpu.memory_space<vmem>>, vector<512x1024xf32>
    %cst_76 = arith.constant dense<0.000000e+00> : vector<8x1024xf32>
    %251 = tpu.matmul %249, %250, %cst_76 {dimension_numbers = #tpu.dot_dimension_numbers<[1], [0], [0], [1], [0, 0, 1, 1], [], []>} : vector<8x512xf32>, vector<512x1024xf32>, vector<8x1024xf32> -> vector<8x1024xf32>
    %c0_77 = arith.constant 0 : index
    %c0_78 = arith.constant 0 : index
    %252 = vector.load %arg6[%c0_77, %c0_78] : memref<1x1024xf32, #tpu.memory_space<vmem>>, vector<1x1024xf32>
    %253 = vector.broadcast %252 : vector<1x1024xf32> to vector<8x1024xf32>
    %254 = arith.addf %251, %253 : vector<8x1024xf32>
    %255 = vector.extract_strided_slice %254 {offsets = [0, 0], sizes = [8, 256], strides = [1, 1]} : vector<8x1024xf32> to vector<8x256xf32>
    %256 = arith.negf %255 : vector<8x256xf32>
    %257 = math.exp %256 : vector<8x256xf32>
    %cst_79 = arith.constant 1.000000e+00 : f32
    %258 = vector.broadcast %cst_79 : f32 to vector<8x256xf32>
    %259 = arith.addf %258, %257 : vector<8x256xf32>
    %260 = arith.divf %258, %259 : vector<8x256xf32>
    %261 = vector.extract_strided_slice %254 {offsets = [0, 256], sizes = [8, 256], strides = [1, 1]} : vector<8x1024xf32> to vector<8x256xf32>
    %262 = arith.negf %261 : vector<8x256xf32>
    %263 = math.exp %262 : vector<8x256xf32>
    %cst_80 = arith.constant 1.000000e+00 : f32
    %264 = vector.broadcast %cst_80 : f32 to vector<8x256xf32>
    %265 = arith.addf %264, %263 : vector<8x256xf32>
    %266 = arith.divf %264, %265 : vector<8x256xf32>
    %267 = vector.extract_strided_slice %254 {offsets = [0, 512], sizes = [8, 256], strides = [1, 1]} : vector<8x1024xf32> to vector<8x256xf32>
    %268 = math.tanh %267 : vector<8x256xf32>
    %269 = vector.extract_strided_slice %254 {offsets = [0, 768], sizes = [8, 256], strides = [1, 1]} : vector<8x1024xf32> to vector<8x256xf32>
    %270 = arith.negf %269 : vector<8x256xf32>
    %271 = math.exp %270 : vector<8x256xf32>
    %cst_81 = arith.constant 1.000000e+00 : f32
    %272 = vector.broadcast %cst_81 : f32 to vector<8x256xf32>
    %273 = arith.addf %272, %271 : vector<8x256xf32>
    %274 = arith.divf %272, %273 : vector<8x256xf32>
    %275 = arith.mulf %266, %208 : vector<8x256xf32>
    %276 = arith.mulf %260, %268 : vector<8x256xf32>
    %277 = arith.addf %275, %276 : vector<8x256xf32>
    %278 = math.tanh %277 : vector<8x256xf32>
    %279 = arith.mulf %274, %278 : vector<8x256xf32>
    %c4_i32 = arith.constant 4 : i32
    %280 = arith.index_cast %c4_i32 : i32 to index
    %c0_82 = arith.constant 0 : index
    %c0_83 = arith.constant 0 : index
    %281 = vector.load %arg1[%280, %c0_82, %c0_83] : memref<8x8x1xf32, #tpu.memory_space<vmem>>, vector<1x8x1xf32>
    %282 = vector.shape_cast %281 : vector<1x8x1xf32> to vector<8x1xf32>
    %c0_84 = arith.constant 0 : index
    %c0_85 = arith.constant 0 : index
    %283 = vector.load %arg2[%c0_84, %c0_85] : memref<1x1024xf32, #tpu.memory_space<vmem>>, vector<1x1024xf32>
    %284 = vector.broadcast %282 : vector<8x1xf32> to vector<8x1024xf32>
    %285 = vector.broadcast %283 : vector<1x1024xf32> to vector<8x1024xf32>
    %286 = arith.mulf %284, %285 : vector<8x1024xf32>
    %c0_86 = arith.constant 0 : index
    %c0_87 = arith.constant 0 : index
    %287 = vector.load %arg3[%c0_86, %c0_87] : memref<1x1024xf32, #tpu.memory_space<vmem>>, vector<1x1024xf32>
    %288 = vector.broadcast %287 : vector<1x1024xf32> to vector<8x1024xf32>
    %289 = arith.addf %286, %288 : vector<8x1024xf32>
    %c0_88 = arith.constant 0 : index
    %c0_89 = arith.constant 0 : index
    %290 = vector.load %arg4[%c0_88, %c0_89] : memref<256x1024xf32, #tpu.memory_space<vmem>>, vector<256x1024xf32>
    %cst_90 = arith.constant dense<0.000000e+00> : vector<8x1024xf32>
    %291 = tpu.matmul %248, %290, %cst_90 {dimension_numbers = #tpu.dot_dimension_numbers<[1], [0], [0], [1], [0, 0, 1, 1], [], []>} : vector<8x256xf32>, vector<256x1024xf32>, vector<8x1024xf32> -> vector<8x1024xf32>
    %292 = arith.addf %289, %291 : vector<8x1024xf32>
    %293 = vector.extract_strided_slice %292 {offsets = [0, 0], sizes = [8, 256], strides = [1, 1]} : vector<8x1024xf32> to vector<8x256xf32>
    %294 = arith.negf %293 : vector<8x256xf32>
    %295 = math.exp %294 : vector<8x256xf32>
    %cst_91 = arith.constant 1.000000e+00 : f32
    %296 = vector.broadcast %cst_91 : f32 to vector<8x256xf32>
    %297 = arith.addf %296, %295 : vector<8x256xf32>
    %298 = arith.divf %296, %297 : vector<8x256xf32>
    %299 = vector.extract_strided_slice %292 {offsets = [0, 256], sizes = [8, 256], strides = [1, 1]} : vector<8x1024xf32> to vector<8x256xf32>
    %300 = arith.negf %299 : vector<8x256xf32>
    %301 = math.exp %300 : vector<8x256xf32>
    %cst_92 = arith.constant 1.000000e+00 : f32
    %302 = vector.broadcast %cst_92 : f32 to vector<8x256xf32>
    %303 = arith.addf %302, %301 : vector<8x256xf32>
    %304 = arith.divf %302, %303 : vector<8x256xf32>
    %305 = vector.extract_strided_slice %292 {offsets = [0, 512], sizes = [8, 256], strides = [1, 1]} : vector<8x1024xf32> to vector<8x256xf32>
    %306 = math.tanh %305 : vector<8x256xf32>
    %307 = vector.extract_strided_slice %292 {offsets = [0, 768], sizes = [8, 256], strides = [1, 1]} : vector<8x1024xf32> to vector<8x256xf32>
    %308 = arith.negf %307 : vector<8x256xf32>
    %309 = math.exp %308 : vector<8x256xf32>
    %cst_93 = arith.constant 1.000000e+00 : f32
    %310 = vector.broadcast %cst_93 : f32 to vector<8x256xf32>
    %311 = arith.addf %310, %309 : vector<8x256xf32>
    %312 = arith.divf %310, %311 : vector<8x256xf32>
    %313 = arith.mulf %304, %246 : vector<8x256xf32>
    %314 = arith.mulf %298, %306 : vector<8x256xf32>
    %315 = arith.addf %313, %314 : vector<8x256xf32>
    %316 = math.tanh %315 : vector<8x256xf32>
    %317 = arith.mulf %312, %316 : vector<8x256xf32>
    %318 = tpu.concatenate %317, %279 in 1 : vector<8x256xf32>, vector<8x256xf32> -> vector<8x512xf32>
    %c0_94 = arith.constant 0 : index
    %c0_95 = arith.constant 0 : index
    %319 = vector.load %arg5[%c0_94, %c0_95] : memref<512x1024xf32, #tpu.memory_space<vmem>>, vector<512x1024xf32>
    %cst_96 = arith.constant dense<0.000000e+00> : vector<8x1024xf32>
    %320 = tpu.matmul %318, %319, %cst_96 {dimension_numbers = #tpu.dot_dimension_numbers<[1], [0], [0], [1], [0, 0, 1, 1], [], []>} : vector<8x512xf32>, vector<512x1024xf32>, vector<8x1024xf32> -> vector<8x1024xf32>
    %c0_97 = arith.constant 0 : index
    %c0_98 = arith.constant 0 : index
    %321 = vector.load %arg6[%c0_97, %c0_98] : memref<1x1024xf32, #tpu.memory_space<vmem>>, vector<1x1024xf32>
    %322 = vector.broadcast %321 : vector<1x1024xf32> to vector<8x1024xf32>
    %323 = arith.addf %320, %322 : vector<8x1024xf32>
    %324 = vector.extract_strided_slice %323 {offsets = [0, 0], sizes = [8, 256], strides = [1, 1]} : vector<8x1024xf32> to vector<8x256xf32>
    %325 = arith.negf %324 : vector<8x256xf32>
    %326 = math.exp %325 : vector<8x256xf32>
    %cst_99 = arith.constant 1.000000e+00 : f32
    %327 = vector.broadcast %cst_99 : f32 to vector<8x256xf32>
    %328 = arith.addf %327, %326 : vector<8x256xf32>
    %329 = arith.divf %327, %328 : vector<8x256xf32>
    %330 = vector.extract_strided_slice %323 {offsets = [0, 256], sizes = [8, 256], strides = [1, 1]} : vector<8x1024xf32> to vector<8x256xf32>
    %331 = arith.negf %330 : vector<8x256xf32>
    %332 = math.exp %331 : vector<8x256xf32>
    %cst_100 = arith.constant 1.000000e+00 : f32
    %333 = vector.broadcast %cst_100 : f32 to vector<8x256xf32>
    %334 = arith.addf %333, %332 : vector<8x256xf32>
    %335 = arith.divf %333, %334 : vector<8x256xf32>
    %336 = vector.extract_strided_slice %323 {offsets = [0, 512], sizes = [8, 256], strides = [1, 1]} : vector<8x1024xf32> to vector<8x256xf32>
    %337 = math.tanh %336 : vector<8x256xf32>
    %338 = vector.extract_strided_slice %323 {offsets = [0, 768], sizes = [8, 256], strides = [1, 1]} : vector<8x1024xf32> to vector<8x256xf32>
    %339 = arith.negf %338 : vector<8x256xf32>
    %340 = math.exp %339 : vector<8x256xf32>
    %cst_101 = arith.constant 1.000000e+00 : f32
    %341 = vector.broadcast %cst_101 : f32 to vector<8x256xf32>
    %342 = arith.addf %341, %340 : vector<8x256xf32>
    %343 = arith.divf %341, %342 : vector<8x256xf32>
    %344 = arith.mulf %335, %277 : vector<8x256xf32>
    %345 = arith.mulf %329, %337 : vector<8x256xf32>
    %346 = arith.addf %344, %345 : vector<8x256xf32>
    %347 = math.tanh %346 : vector<8x256xf32>
    %348 = arith.mulf %343, %347 : vector<8x256xf32>
    %c5_i32 = arith.constant 5 : i32
    %349 = arith.index_cast %c5_i32 : i32 to index
    %c0_102 = arith.constant 0 : index
    %c0_103 = arith.constant 0 : index
    %350 = vector.load %arg1[%349, %c0_102, %c0_103] : memref<8x8x1xf32, #tpu.memory_space<vmem>>, vector<1x8x1xf32>
    %351 = vector.shape_cast %350 : vector<1x8x1xf32> to vector<8x1xf32>
    %c0_104 = arith.constant 0 : index
    %c0_105 = arith.constant 0 : index
    %352 = vector.load %arg2[%c0_104, %c0_105] : memref<1x1024xf32, #tpu.memory_space<vmem>>, vector<1x1024xf32>
    %353 = vector.broadcast %351 : vector<8x1xf32> to vector<8x1024xf32>
    %354 = vector.broadcast %352 : vector<1x1024xf32> to vector<8x1024xf32>
    %355 = arith.mulf %353, %354 : vector<8x1024xf32>
    %c0_106 = arith.constant 0 : index
    %c0_107 = arith.constant 0 : index
    %356 = vector.load %arg3[%c0_106, %c0_107] : memref<1x1024xf32, #tpu.memory_space<vmem>>, vector<1x1024xf32>
    %357 = vector.broadcast %356 : vector<1x1024xf32> to vector<8x1024xf32>
    %358 = arith.addf %355, %357 : vector<8x1024xf32>
    %c0_108 = arith.constant 0 : index
    %c0_109 = arith.constant 0 : index
    %359 = vector.load %arg4[%c0_108, %c0_109] : memref<256x1024xf32, #tpu.memory_space<vmem>>, vector<256x1024xf32>
    %cst_110 = arith.constant dense<0.000000e+00> : vector<8x1024xf32>
    %360 = tpu.matmul %317, %359, %cst_110 {dimension_numbers = #tpu.dot_dimension_numbers<[1], [0], [0], [1], [0, 0, 1, 1], [], []>} : vector<8x256xf32>, vector<256x1024xf32>, vector<8x1024xf32> -> vector<8x1024xf32>
    %361 = arith.addf %358, %360 : vector<8x1024xf32>
    %362 = vector.extract_strided_slice %361 {offsets = [0, 0], sizes = [8, 256], strides = [1, 1]} : vector<8x1024xf32> to vector<8x256xf32>
    %363 = arith.negf %362 : vector<8x256xf32>
    %364 = math.exp %363 : vector<8x256xf32>
    %cst_111 = arith.constant 1.000000e+00 : f32
    %365 = vector.broadcast %cst_111 : f32 to vector<8x256xf32>
    %366 = arith.addf %365, %364 : vector<8x256xf32>
    %367 = arith.divf %365, %366 : vector<8x256xf32>
    %368 = vector.extract_strided_slice %361 {offsets = [0, 256], sizes = [8, 256], strides = [1, 1]} : vector<8x1024xf32> to vector<8x256xf32>
    %369 = arith.negf %368 : vector<8x256xf32>
    %370 = math.exp %369 : vector<8x256xf32>
    %cst_112 = arith.constant 1.000000e+00 : f32
    %371 = vector.broadcast %cst_112 : f32 to vector<8x256xf32>
    %372 = arith.addf %371, %370 : vector<8x256xf32>
    %373 = arith.divf %371, %372 : vector<8x256xf32>
    %374 = vector.extract_strided_slice %361 {offsets = [0, 512], sizes = [8, 256], strides = [1, 1]} : vector<8x1024xf32> to vector<8x256xf32>
    %375 = math.tanh %374 : vector<8x256xf32>
    %376 = vector.extract_strided_slice %361 {offsets = [0, 768], sizes = [8, 256], strides = [1, 1]} : vector<8x1024xf32> to vector<8x256xf32>
    %377 = arith.negf %376 : vector<8x256xf32>
    %378 = math.exp %377 : vector<8x256xf32>
    %cst_113 = arith.constant 1.000000e+00 : f32
    %379 = vector.broadcast %cst_113 : f32 to vector<8x256xf32>
    %380 = arith.addf %379, %378 : vector<8x256xf32>
    %381 = arith.divf %379, %380 : vector<8x256xf32>
    %382 = arith.mulf %373, %315 : vector<8x256xf32>
    %383 = arith.mulf %367, %375 : vector<8x256xf32>
    %384 = arith.addf %382, %383 : vector<8x256xf32>
    %385 = math.tanh %384 : vector<8x256xf32>
    %386 = arith.mulf %381, %385 : vector<8x256xf32>
    %387 = tpu.concatenate %386, %348 in 1 : vector<8x256xf32>, vector<8x256xf32> -> vector<8x512xf32>
    %c0_114 = arith.constant 0 : index
    %c0_115 = arith.constant 0 : index
    %388 = vector.load %arg5[%c0_114, %c0_115] : memref<512x1024xf32, #tpu.memory_space<vmem>>, vector<512x1024xf32>
    %cst_116 = arith.constant dense<0.000000e+00> : vector<8x1024xf32>
    %389 = tpu.matmul %387, %388, %cst_116 {dimension_numbers = #tpu.dot_dimension_numbers<[1], [0], [0], [1], [0, 0, 1, 1], [], []>} : vector<8x512xf32>, vector<512x1024xf32>, vector<8x1024xf32> -> vector<8x1024xf32>
    %c0_117 = arith.constant 0 : index
    %c0_118 = arith.constant 0 : index
    %390 = vector.load %arg6[%c0_117, %c0_118] : memref<1x1024xf32, #tpu.memory_space<vmem>>, vector<1x1024xf32>
    %391 = vector.broadcast %390 : vector<1x1024xf32> to vector<8x1024xf32>
    %392 = arith.addf %389, %391 : vector<8x1024xf32>
    %393 = vector.extract_strided_slice %392 {offsets = [0, 0], sizes = [8, 256], strides = [1, 1]} : vector<8x1024xf32> to vector<8x256xf32>
    %394 = arith.negf %393 : vector<8x256xf32>
    %395 = math.exp %394 : vector<8x256xf32>
    %cst_119 = arith.constant 1.000000e+00 : f32
    %396 = vector.broadcast %cst_119 : f32 to vector<8x256xf32>
    %397 = arith.addf %396, %395 : vector<8x256xf32>
    %398 = arith.divf %396, %397 : vector<8x256xf32>
    %399 = vector.extract_strided_slice %392 {offsets = [0, 256], sizes = [8, 256], strides = [1, 1]} : vector<8x1024xf32> to vector<8x256xf32>
    %400 = arith.negf %399 : vector<8x256xf32>
    %401 = math.exp %400 : vector<8x256xf32>
    %cst_120 = arith.constant 1.000000e+00 : f32
    %402 = vector.broadcast %cst_120 : f32 to vector<8x256xf32>
    %403 = arith.addf %402, %401 : vector<8x256xf32>
    %404 = arith.divf %402, %403 : vector<8x256xf32>
    %405 = vector.extract_strided_slice %392 {offsets = [0, 512], sizes = [8, 256], strides = [1, 1]} : vector<8x1024xf32> to vector<8x256xf32>
    %406 = math.tanh %405 : vector<8x256xf32>
    %407 = vector.extract_strided_slice %392 {offsets = [0, 768], sizes = [8, 256], strides = [1, 1]} : vector<8x1024xf32> to vector<8x256xf32>
    %408 = arith.negf %407 : vector<8x256xf32>
    %409 = math.exp %408 : vector<8x256xf32>
    %cst_121 = arith.constant 1.000000e+00 : f32
    %410 = vector.broadcast %cst_121 : f32 to vector<8x256xf32>
    %411 = arith.addf %410, %409 : vector<8x256xf32>
    %412 = arith.divf %410, %411 : vector<8x256xf32>
    %413 = arith.mulf %404, %346 : vector<8x256xf32>
    %414 = arith.mulf %398, %406 : vector<8x256xf32>
    %415 = arith.addf %413, %414 : vector<8x256xf32>
    %416 = math.tanh %415 : vector<8x256xf32>
    %417 = arith.mulf %412, %416 : vector<8x256xf32>
    %c6_i32 = arith.constant 6 : i32
    %418 = arith.index_cast %c6_i32 : i32 to index
    %c0_122 = arith.constant 0 : index
    %c0_123 = arith.constant 0 : index
    %419 = vector.load %arg1[%418, %c0_122, %c0_123] : memref<8x8x1xf32, #tpu.memory_space<vmem>>, vector<1x8x1xf32>
    %420 = vector.shape_cast %419 : vector<1x8x1xf32> to vector<8x1xf32>
    %c0_124 = arith.constant 0 : index
    %c0_125 = arith.constant 0 : index
    %421 = vector.load %arg2[%c0_124, %c0_125] : memref<1x1024xf32, #tpu.memory_space<vmem>>, vector<1x1024xf32>
    %422 = vector.broadcast %420 : vector<8x1xf32> to vector<8x1024xf32>
    %423 = vector.broadcast %421 : vector<1x1024xf32> to vector<8x1024xf32>
    %424 = arith.mulf %422, %423 : vector<8x1024xf32>
    %c0_126 = arith.constant 0 : index
    %c0_127 = arith.constant 0 : index
    %425 = vector.load %arg3[%c0_126, %c0_127] : memref<1x1024xf32, #tpu.memory_space<vmem>>, vector<1x1024xf32>
    %426 = vector.broadcast %425 : vector<1x1024xf32> to vector<8x1024xf32>
    %427 = arith.addf %424, %426 : vector<8x1024xf32>
    %c0_128 = arith.constant 0 : index
    %c0_129 = arith.constant 0 : index
    %428 = vector.load %arg4[%c0_128, %c0_129] : memref<256x1024xf32, #tpu.memory_space<vmem>>, vector<256x1024xf32>
    %cst_130 = arith.constant dense<0.000000e+00> : vector<8x1024xf32>
    %429 = tpu.matmul %386, %428, %cst_130 {dimension_numbers = #tpu.dot_dimension_numbers<[1], [0], [0], [1], [0, 0, 1, 1], [], []>} : vector<8x256xf32>, vector<256x1024xf32>, vector<8x1024xf32> -> vector<8x1024xf32>
    %430 = arith.addf %427, %429 : vector<8x1024xf32>
    %431 = vector.extract_strided_slice %430 {offsets = [0, 0], sizes = [8, 256], strides = [1, 1]} : vector<8x1024xf32> to vector<8x256xf32>
    %432 = arith.negf %431 : vector<8x256xf32>
    %433 = math.exp %432 : vector<8x256xf32>
    %cst_131 = arith.constant 1.000000e+00 : f32
    %434 = vector.broadcast %cst_131 : f32 to vector<8x256xf32>
    %435 = arith.addf %434, %433 : vector<8x256xf32>
    %436 = arith.divf %434, %435 : vector<8x256xf32>
    %437 = vector.extract_strided_slice %430 {offsets = [0, 256], sizes = [8, 256], strides = [1, 1]} : vector<8x1024xf32> to vector<8x256xf32>
    %438 = arith.negf %437 : vector<8x256xf32>
    %439 = math.exp %438 : vector<8x256xf32>
    %cst_132 = arith.constant 1.000000e+00 : f32
    %440 = vector.broadcast %cst_132 : f32 to vector<8x256xf32>
    %441 = arith.addf %440, %439 : vector<8x256xf32>
    %442 = arith.divf %440, %441 : vector<8x256xf32>
    %443 = vector.extract_strided_slice %430 {offsets = [0, 512], sizes = [8, 256], strides = [1, 1]} : vector<8x1024xf32> to vector<8x256xf32>
    %444 = math.tanh %443 : vector<8x256xf32>
    %445 = vector.extract_strided_slice %430 {offsets = [0, 768], sizes = [8, 256], strides = [1, 1]} : vector<8x1024xf32> to vector<8x256xf32>
    %446 = arith.negf %445 : vector<8x256xf32>
    %447 = math.exp %446 : vector<8x256xf32>
    %cst_133 = arith.constant 1.000000e+00 : f32
    %448 = vector.broadcast %cst_133 : f32 to vector<8x256xf32>
    %449 = arith.addf %448, %447 : vector<8x256xf32>
    %450 = arith.divf %448, %449 : vector<8x256xf32>
    %451 = arith.mulf %442, %384 : vector<8x256xf32>
    %452 = arith.mulf %436, %444 : vector<8x256xf32>
    %453 = arith.addf %451, %452 : vector<8x256xf32>
    %454 = math.tanh %453 : vector<8x256xf32>
    %455 = arith.mulf %450, %454 : vector<8x256xf32>
    %456 = tpu.concatenate %455, %417 in 1 : vector<8x256xf32>, vector<8x256xf32> -> vector<8x512xf32>
    %c0_134 = arith.constant 0 : index
    %c0_135 = arith.constant 0 : index
    %457 = vector.load %arg5[%c0_134, %c0_135] : memref<512x1024xf32, #tpu.memory_space<vmem>>, vector<512x1024xf32>
    %cst_136 = arith.constant dense<0.000000e+00> : vector<8x1024xf32>
    %458 = tpu.matmul %456, %457, %cst_136 {dimension_numbers = #tpu.dot_dimension_numbers<[1], [0], [0], [1], [0, 0, 1, 1], [], []>} : vector<8x512xf32>, vector<512x1024xf32>, vector<8x1024xf32> -> vector<8x1024xf32>
    %c0_137 = arith.constant 0 : index
    %c0_138 = arith.constant 0 : index
    %459 = vector.load %arg6[%c0_137, %c0_138] : memref<1x1024xf32, #tpu.memory_space<vmem>>, vector<1x1024xf32>
    %460 = vector.broadcast %459 : vector<1x1024xf32> to vector<8x1024xf32>
    %461 = arith.addf %458, %460 : vector<8x1024xf32>
    %462 = vector.extract_strided_slice %461 {offsets = [0, 0], sizes = [8, 256], strides = [1, 1]} : vector<8x1024xf32> to vector<8x256xf32>
    %463 = arith.negf %462 : vector<8x256xf32>
    %464 = math.exp %463 : vector<8x256xf32>
    %cst_139 = arith.constant 1.000000e+00 : f32
    %465 = vector.broadcast %cst_139 : f32 to vector<8x256xf32>
    %466 = arith.addf %465, %464 : vector<8x256xf32>
    %467 = arith.divf %465, %466 : vector<8x256xf32>
    %468 = vector.extract_strided_slice %461 {offsets = [0, 256], sizes = [8, 256], strides = [1, 1]} : vector<8x1024xf32> to vector<8x256xf32>
    %469 = arith.negf %468 : vector<8x256xf32>
    %470 = math.exp %469 : vector<8x256xf32>
    %cst_140 = arith.constant 1.000000e+00 : f32
    %471 = vector.broadcast %cst_140 : f32 to vector<8x256xf32>
    %472 = arith.addf %471, %470 : vector<8x256xf32>
    %473 = arith.divf %471, %472 : vector<8x256xf32>
    %474 = vector.extract_strided_slice %461 {offsets = [0, 512], sizes = [8, 256], strides = [1, 1]} : vector<8x1024xf32> to vector<8x256xf32>
    %475 = math.tanh %474 : vector<8x256xf32>
    %476 = vector.extract_strided_slice %461 {offsets = [0, 768], sizes = [8, 256], strides = [1, 1]} : vector<8x1024xf32> to vector<8x256xf32>
    %477 = arith.negf %476 : vector<8x256xf32>
    %478 = math.exp %477 : vector<8x256xf32>
    %cst_141 = arith.constant 1.000000e+00 : f32
    %479 = vector.broadcast %cst_141 : f32 to vector<8x256xf32>
    %480 = arith.addf %479, %478 : vector<8x256xf32>
    %481 = arith.divf %479, %480 : vector<8x256xf32>
    %482 = arith.mulf %473, %415 : vector<8x256xf32>
    %483 = arith.mulf %467, %475 : vector<8x256xf32>
    %484 = arith.addf %482, %483 : vector<8x256xf32>
    %485 = math.tanh %484 : vector<8x256xf32>
    %486 = arith.mulf %481, %485 : vector<8x256xf32>
    %c7_i32 = arith.constant 7 : i32
    %487 = arith.index_cast %c7_i32 : i32 to index
    %c0_142 = arith.constant 0 : index
    %c0_143 = arith.constant 0 : index
    %488 = vector.load %arg1[%487, %c0_142, %c0_143] : memref<8x8x1xf32, #tpu.memory_space<vmem>>, vector<1x8x1xf32>
    %489 = vector.shape_cast %488 : vector<1x8x1xf32> to vector<8x1xf32>
    %c0_144 = arith.constant 0 : index
    %c0_145 = arith.constant 0 : index
    %490 = vector.load %arg2[%c0_144, %c0_145] : memref<1x1024xf32, #tpu.memory_space<vmem>>, vector<1x1024xf32>
    %491 = vector.broadcast %489 : vector<8x1xf32> to vector<8x1024xf32>
    %492 = vector.broadcast %490 : vector<1x1024xf32> to vector<8x1024xf32>
    %493 = arith.mulf %491, %492 : vector<8x1024xf32>
    %c0_146 = arith.constant 0 : index
    %c0_147 = arith.constant 0 : index
    %494 = vector.load %arg3[%c0_146, %c0_147] : memref<1x1024xf32, #tpu.memory_space<vmem>>, vector<1x1024xf32>
    %495 = vector.broadcast %494 : vector<1x1024xf32> to vector<8x1024xf32>
    %496 = arith.addf %493, %495 : vector<8x1024xf32>
    %c0_148 = arith.constant 0 : index
    %c0_149 = arith.constant 0 : index
    %497 = vector.load %arg4[%c0_148, %c0_149] : memref<256x1024xf32, #tpu.memory_space<vmem>>, vector<256x1024xf32>
    %cst_150 = arith.constant dense<0.000000e+00> : vector<8x1024xf32>
    %498 = tpu.matmul %455, %497, %cst_150 {dimension_numbers = #tpu.dot_dimension_numbers<[1], [0], [0], [1], [0, 0, 1, 1], [], []>} : vector<8x256xf32>, vector<256x1024xf32>, vector<8x1024xf32> -> vector<8x1024xf32>
    %499 = arith.addf %496, %498 : vector<8x1024xf32>
    %500 = vector.extract_strided_slice %499 {offsets = [0, 0], sizes = [8, 256], strides = [1, 1]} : vector<8x1024xf32> to vector<8x256xf32>
    %501 = arith.negf %500 : vector<8x256xf32>
    %502 = math.exp %501 : vector<8x256xf32>
    %cst_151 = arith.constant 1.000000e+00 : f32
    %503 = vector.broadcast %cst_151 : f32 to vector<8x256xf32>
    %504 = arith.addf %503, %502 : vector<8x256xf32>
    %505 = arith.divf %503, %504 : vector<8x256xf32>
    %506 = vector.extract_strided_slice %499 {offsets = [0, 256], sizes = [8, 256], strides = [1, 1]} : vector<8x1024xf32> to vector<8x256xf32>
    %507 = arith.negf %506 : vector<8x256xf32>
    %508 = math.exp %507 : vector<8x256xf32>
    %cst_152 = arith.constant 1.000000e+00 : f32
    %509 = vector.broadcast %cst_152 : f32 to vector<8x256xf32>
    %510 = arith.addf %509, %508 : vector<8x256xf32>
    %511 = arith.divf %509, %510 : vector<8x256xf32>
    %512 = vector.extract_strided_slice %499 {offsets = [0, 512], sizes = [8, 256], strides = [1, 1]} : vector<8x1024xf32> to vector<8x256xf32>
    %513 = math.tanh %512 : vector<8x256xf32>
    %514 = vector.extract_strided_slice %499 {offsets = [0, 768], sizes = [8, 256], strides = [1, 1]} : vector<8x1024xf32> to vector<8x256xf32>
    %515 = arith.negf %514 : vector<8x256xf32>
    %516 = math.exp %515 : vector<8x256xf32>
    %cst_153 = arith.constant 1.000000e+00 : f32
    %517 = vector.broadcast %cst_153 : f32 to vector<8x256xf32>
    %518 = arith.addf %517, %516 : vector<8x256xf32>
    %519 = arith.divf %517, %518 : vector<8x256xf32>
    %520 = arith.mulf %511, %453 : vector<8x256xf32>
    %521 = arith.mulf %505, %513 : vector<8x256xf32>
    %522 = arith.addf %520, %521 : vector<8x256xf32>
    %523 = math.tanh %522 : vector<8x256xf32>
    %524 = arith.mulf %519, %523 : vector<8x256xf32>
    %525 = tpu.concatenate %524, %486 in 1 : vector<8x256xf32>, vector<8x256xf32> -> vector<8x512xf32>
    %c0_154 = arith.constant 0 : index
    %c0_155 = arith.constant 0 : index
    %526 = vector.load %arg5[%c0_154, %c0_155] : memref<512x1024xf32, #tpu.memory_space<vmem>>, vector<512x1024xf32>
    %cst_156 = arith.constant dense<0.000000e+00> : vector<8x1024xf32>
    %527 = tpu.matmul %525, %526, %cst_156 {dimension_numbers = #tpu.dot_dimension_numbers<[1], [0], [0], [1], [0, 0, 1, 1], [], []>} : vector<8x512xf32>, vector<512x1024xf32>, vector<8x1024xf32> -> vector<8x1024xf32>
    %c0_157 = arith.constant 0 : index
    %c0_158 = arith.constant 0 : index
    %528 = vector.load %arg6[%c0_157, %c0_158] : memref<1x1024xf32, #tpu.memory_space<vmem>>, vector<1x1024xf32>
    %529 = vector.broadcast %528 : vector<1x1024xf32> to vector<8x1024xf32>
    %530 = arith.addf %527, %529 : vector<8x1024xf32>
    %531 = vector.extract_strided_slice %530 {offsets = [0, 0], sizes = [8, 256], strides = [1, 1]} : vector<8x1024xf32> to vector<8x256xf32>
    %532 = arith.negf %531 : vector<8x256xf32>
    %533 = math.exp %532 : vector<8x256xf32>
    %cst_159 = arith.constant 1.000000e+00 : f32
    %534 = vector.broadcast %cst_159 : f32 to vector<8x256xf32>
    %535 = arith.addf %534, %533 : vector<8x256xf32>
    %536 = arith.divf %534, %535 : vector<8x256xf32>
    %537 = vector.extract_strided_slice %530 {offsets = [0, 256], sizes = [8, 256], strides = [1, 1]} : vector<8x1024xf32> to vector<8x256xf32>
    %538 = arith.negf %537 : vector<8x256xf32>
    %539 = math.exp %538 : vector<8x256xf32>
    %cst_160 = arith.constant 1.000000e+00 : f32
    %540 = vector.broadcast %cst_160 : f32 to vector<8x256xf32>
    %541 = arith.addf %540, %539 : vector<8x256xf32>
    %542 = arith.divf %540, %541 : vector<8x256xf32>
    %543 = vector.extract_strided_slice %530 {offsets = [0, 512], sizes = [8, 256], strides = [1, 1]} : vector<8x1024xf32> to vector<8x256xf32>
    %544 = math.tanh %543 : vector<8x256xf32>
    %545 = vector.extract_strided_slice %530 {offsets = [0, 768], sizes = [8, 256], strides = [1, 1]} : vector<8x1024xf32> to vector<8x256xf32>
    %546 = arith.negf %545 : vector<8x256xf32>
    %547 = math.exp %546 : vector<8x256xf32>
    %cst_161 = arith.constant 1.000000e+00 : f32
    %548 = vector.broadcast %cst_161 : f32 to vector<8x256xf32>
    %549 = arith.addf %548, %547 : vector<8x256xf32>
    %550 = arith.divf %548, %549 : vector<8x256xf32>
    %551 = arith.mulf %542, %484 : vector<8x256xf32>
    %552 = arith.mulf %536, %544 : vector<8x256xf32>
    %553 = arith.addf %551, %552 : vector<8x256xf32>
    %554 = math.tanh %553 : vector<8x256xf32>
    %555 = arith.mulf %550, %554 : vector<8x256xf32>
    %c8_i32 = arith.constant 8 : i32
    %c0_162 = arith.constant 0 : index
    %c0_163 = arith.constant 0 : index
    %556 = vector.load %arg7[%c0_162, %c0_163] : memref<8x256xf32, #tpu.memory_space<vmem>>, vector<8x256xf32>
    tpu.vector_store %arg7[%c0_162, %c0_163], %555 {strides = array<i32>} : memref<8x256xf32, #tpu.memory_space<vmem>>, vector<8x256xf32>,
    return
  }
  func.func @transform_0(%arg0: i32) -> (i32, i32, i32) {
    %c0_i32 = arith.constant 0 : i32
    %c0_i32_0 = arith.constant 0 : i32
    %c0_i32_1 = arith.constant 0 : i32
    return %c0_i32, %arg0, %c0_i32_0 : i32, i32, i32
  }
  func.func @transform_1(%arg0: i32) -> (i32, i32) {
    %c0_i32 = arith.constant 0 : i32
    %c0_i32_0 = arith.constant 0 : i32
    %c0_i32_1 = arith.constant 0 : i32
    return %c0_i32, %c0_i32_0 : i32, i32
  }
  func.func @transform_2(%arg0: i32) -> (i32, i32) {
    %c0_i32 = arith.constant 0 : i32
    %c0_i32_0 = arith.constant 0 : i32
    %c0_i32_1 = arith.constant 0 : i32
    return %c0_i32, %c0_i32_0 : i32, i32
  }
  func.func @transform_3(%arg0: i32) -> (i32, i32) {
    %c0_i32 = arith.constant 0 : i32
    %c0_i32_0 = arith.constant 0 : i32
    %c0_i32_1 = arith.constant 0 : i32
    return %c0_i32, %c0_i32_0 : i32, i32
  }
  func.func @transform_4(%arg0: i32) -> (i32, i32) {
    %c0_i32 = arith.constant 0 : i32
    %c0_i32_0 = arith.constant 0 : i32
    %c0_i32_1 = arith.constant 0 : i32
    return %c0_i32, %c0_i32_0 : i32, i32
  }
  func.func @transform_5(%arg0: i32) -> (i32, i32) {
    %c0_i32 = arith.constant 0 : i32
    %c0_i32_0 = arith.constant 0 : i32
    %c0_i32_1 = arith.constant 0 : i32
    return %c0_i32, %c0_i32_0 : i32, i32
  }
  func.func @transform_6(%arg0: i32) -> (i32, i32) {
    %c0_i32 = arith.constant 0 : i32
    %c0_i32_0 = arith.constant 0 : i32
    return %arg0, %c0_i32 : i32, i32
  }
}

</mosaic_0001>

<llo_original>
// kernel: tpu_custom_call.1
$region0: #{tpu_custom_call.1}
  #allocation0 [shape = 'u32[]', space=smem, size = 0x4, offset = 0x4, fixed_abs, tag = 'smem constant byte address 0x4 - core index']
  #allocation1 [shape = 'u32[72,128]{1,0:T(1,128)}', space=vmem, size = 0x9000, scoped, tag = 'internal scratch']
  %s0 = inlined_call_operand.vmem [shape: f32[8,8,1], index: 0, kind: input, shape index: {}]
  %s1 = inlined_call_operand.hbm [shape: f32[1,1024], index: 1, kind: input, shape index: {}]
  %s2 = inlined_call_operand.hbm [shape: f32[1,1024], index: 2, kind: input, shape index: {}]
  %s3 = inlined_call_operand.hbm [shape: f32[256,1024], index: 3, kind: input, shape index: {}]
  %s4 = inlined_call_operand.hbm [shape: f32[512,1024], index: 4, kind: input, shape index: {}]
  %s5 = inlined_call_operand.hbm [shape: f32[1,1024], index: 5, kind: input, shape index: {}]
  %s6 = inlined_call_operand.hbm [shape: f32[8,256], index: 6, kind: output, shape index: {}]
  %s7 = sld [smem:[#allocation0]]
  $region54: #{tpu_custom_call.1} parent=0
    _
  %s9 = ssub.s32 1, %s7
  %s10 = scalar_select 0, %s9, %s7
  $region1: #{tpu_custom_call.1} parent=0
    #allocation2 [shape = 'u8[4096]{0}', space=vmem, size = 0x1000, scoped, tag = 'input window, operand 1, single buffered']
    #allocation3 [shape = 's32[1]{0}', space=sflag, size = 0x4, scoped, tag = 'scoped memory for tpu_custom_call.1']
    #allocation4 [shape = 's32[1]{0}', space=sflag, size = 0x4, scoped, tag = 'scoped memory for tpu_custom_call.1']
    #allocation5 [shape = 'u8[4096]{0}', space=vmem, size = 0x1000, scoped, tag = 'input window, operand 2, single buffered']
    #allocation6 [shape = 's32[1]{0}', space=sflag, size = 0x4, scoped, tag = 'scoped memory for tpu_custom_call.1']
    #allocation7 [shape = 'u8[1048576]{0}', space=vmem, size = 0x100000, scoped, tag = 'input window, operand 3, single buffered']
    #allocation8 [shape = 'u8[2097152]{0}', space=vmem, size = 0x200000, scoped, tag = 'input window, operand 4, single buffered']
    #allocation9 [shape = 's32[1]{0}', space=sflag, size = 0x4, scoped, tag = 'scoped memory for tpu_custom_call.1']
    #allocation10 [shape = 'u8[4096]{0}', space=vmem, size = 0x1000, scoped, tag = 'input window, operand 5, single buffered']
    #allocation11 [shape = 'u8[8192]{0}', space=vmem, size = 0x2000, scoped, tag = 'output window, operand 0, single buffered']
    %11 = vsyncpa [#allocation3], 0
    %12 = vsyncpa [#allocation6], 0
    %13 = vsyncpa [#allocation9], 0
    %14 = vsyncpa [#allocation4], 0
    // Predicated region
    $region2: #{tpu_custom_call.1} parent=1 // pred_check
      _
    $region3: #{tpu_custom_call.1} parent=1 // pred_check_branch
      %16 = sbr.rel (0) target = $region5
    $region4: #{tpu_custom_call.1} parent=1 // pred_region
      _
    $region5: #{tpu_custom_call.1} parent=1 // pred_fallthru
      _
    // Predicated region
    $region6: #{tpu_custom_call.1} parent=1 // pred_check
      _
    $region7: #{tpu_custom_call.1} parent=1 // pred_check_branch
      %18 = sbr.rel (0) target = $region9
    $region8: #{tpu_custom_call.1} parent=1 // pred_region
      %20 = vsyncadd [#allocation3], 0
      %s22 = sshll.u32 %s1, 4
      %s23 = int_to_ptr.hbm [resolvable:$true] %s22
      %s24 = sshll.u32 [#allocation2], 4
      %s25 = int_to_ptr.vmem [resolvable:$true] %s24
      %27 = dma.hbm_to_vmem [thread:$0]  %s23, 128, %s25, [#allocation3]
    $region9: #{tpu_custom_call.1} parent=1 // pred_fallthru
      _
    // Predicated region
    $region10: #{tpu_custom_call.1} parent=1 // pred_check
      _
    $region11: #{tpu_custom_call.1} parent=1 // pred_check_branch
      %29 = sbr.rel (0) target = $region13
    $region12: #{tpu_custom_call.1} parent=1 // pred_region
      %31 = vsyncadd [#allocation6], 0
      %s33 = sshll.u32 %s2, 4
      %s34 = int_to_ptr.hbm [resolvable:$true] %s33
      %s35 = sshll.u32 [#allocation5], 4
      %s36 = int_to_ptr.vmem [resolvable:$true] %s35
      %38 = dma.hbm_to_vmem [thread:$0]  %s34, 128, %s36, [#allocation6]
    $region13: #{tpu_custom_call.1} parent=1 // pred_fallthru
      _
    // Predicated region
    $region14: #{tpu_custom_call.1} parent=1 // pred_check
      _
    $region15: #{tpu_custom_call.1} parent=1 // pred_check_branch
      %40 = sbr.rel (0) target = $region17
    $region16: #{tpu_custom_call.1} parent=1 // pred_region
      %42 = vsyncadd [#allocation6], 0
      %s43 = sshll.u32 %s3, 4
      %s44 = int_to_ptr.hbm [resolvable:$true] %s43
      %s45 = sshll.u32 [#allocation7], 4
      %s46 = int_to_ptr.vmem [resolvable:$true] %s45
      %51 = dma.hbm_to_vmem [thread:$0]  %s44, 32768, %s46, [#allocation6], 1024, 1024, 64
    $region17: #{tpu_custom_call.1} parent=1 // pred_fallthru
      _
    // Predicated region
    $region18: #{tpu_custom_call.1} parent=1 // pred_check
      _
    $region19: #{tpu_custom_call.1} parent=1 // pred_check_branch
      %53 = sbr.rel (0) target = $region21
    $region20: #{tpu_custom_call.1} parent=1 // pred_region
      %55 = vsyncadd [#allocation9], 0
      %s56 = sshll.u32 %s4, 4
      %s57 = int_to_ptr.hbm [resolvable:$true] %s56
      %s58 = sshll.u32 [#allocation8], 4
      %s59 = int_to_ptr.vmem [resolvable:$true] %s58
      %64 = dma.hbm_to_vmem [thread:$0]  %s57, 65536, %s59, [#allocation9], 1024, 1024, 64
    $region21: #{tpu_custom_call.1} parent=1 // pred_fallthru
      _
    // Predicated region
    $region22: #{tpu_custom_call.1} parent=1 // pred_check
      _
    $region23: #{tpu_custom_call.1} parent=1 // pred_check_branch
      %66 = sbr.rel (0) target = $region25
    $region24: #{tpu_custom_call.1} parent=1 // pred_region
      %68 = vsyncadd [#allocation9], 0
      %s70 = sshll.u32 %s5, 4
      %s71 = int_to_ptr.hbm [resolvable:$true] %s70
      %s72 = sshll.u32 [#allocation10], 4
      %s73 = int_to_ptr.vmem [resolvable:$true] %s72
      %75 = dma.hbm_to_vmem [thread:$0]  %s71, 128, %s73, [#allocation9]
    $region25: #{tpu_custom_call.1} parent=1 // pred_fallthru
      _
    // Predicated region
    $region26: #{tpu_custom_call.1} parent=1 // pred_check
      _
    $region27: #{tpu_custom_call.1} parent=1 // pred_check_branch
      %77 = sbr.rel (0) target = $region29
    $region28: #{tpu_custom_call.1} parent=1 // pred_region
      %79 = dma.done [#allocation3], 128
    $region29: #{tpu_custom_call.1} parent=1 // pred_fallthru
      _
    // Predicated region
    $region30: #{tpu_custom_call.1} parent=1 // pred_check
      _
    $region31: #{tpu_custom_call.1} parent=1 // pred_check_branch
      %81 = sbr.rel (0) target = $region33
    $region32: #{tpu_custom_call.1} parent=1 // pred_region
      %83 = dma.done [#allocation6], 128
    $region33: #{tpu_custom_call.1} parent=1 // pred_fallthru
      _
    // Predicated region
    $region34: #{tpu_custom_call.1} parent=1 // pred_check
      _
    $region35: #{tpu_custom_call.1} parent=1 // pred_check_branch
      %85 = sbr.rel (0) target = $region37
    $region36: #{tpu_custom_call.1} parent=1 // pred_region
      %87 = dma.done [#allocation6], 32768
    $region37: #{tpu_custom_call.1} parent=1 // pred_fallthru
      _
    // Predicated region
    $region38: #{tpu_custom_call.1} parent=1 // pred_check
      _
    $region39: #{tpu_custom_call.1} parent=1 // pred_check_branch
      %89 = sbr.rel (0) target = $region41
    $region40: #{tpu_custom_call.1} parent=1 // pred_region
      %91 = dma.done [#allocation9], 65536
    $region41: #{tpu_custom_call.1} parent=1 // pred_fallthru
      _
    // Predicated region
    $region42: #{tpu_custom_call.1} parent=1 // pred_check
      _
    $region43: #{tpu_custom_call.1} parent=1 // pred_check_branch
      %93 = sbr.rel (0) target = $region45
    $region44: #{tpu_custom_call.1} parent=1 // pred_region
      %95 = dma.done [#allocation9], 128
    $region45: #{tpu_custom_call.1} parent=1 // pred_fallthru
      _
    %v96 = vld [vmem:[%s0] sm:$0xff]
    %v97 = vld [vmem:[#allocation2] sm:$0xff]
    %99 = vset.pattern.permute.xlu0 0
    %100 = vperm.xlu0 %99, %v96
    %v101 = vpop.permute.xlu0 %100
    %v104 = vperm.slane %v97, 0
    %v105 = vperm.slane %v97, 1
    %v106 = vperm.slane %v97, 2
    %v107 = vperm.slane %v97, 3
    %v108 = vperm.slane %v97, 4
    %v109 = vperm.slane %v97, 5
    %v110 = vperm.slane %v97, 6
    %v111 = vperm.slane %v97, 7
    %v120 = vmul.f32 %v101, %v104
    %v121 = vmul.f32 %v101, %v105
    %v122 = vmul.f32 %v101, %v106
    %v123 = vmul.f32 %v101, %v107
    %v124 = vmul.f32 %v101, %v108
    %v125 = vmul.f32 %v101, %v109
    %v126 = vmul.f32 %v101, %v110
    %v127 = vmul.f32 %v101, %v111
    %v128 = vld [vmem:[#allocation5] sm:$0xff]
    %v130 = vperm.slane %v128, 0
    %v131 = vperm.slane %v128, 1
    %v132 = vperm.slane %v128, 2
    %v133 = vperm.slane %v128, 3
    %v134 = vperm.slane %v128, 4
    %v135 = vperm.slane %v128, 5
    %v136 = vperm.slane %v128, 6
    %v137 = vperm.slane %v128, 7
    %v146 = vadd.f32 %v120, %v130
    %v147 = vadd.f32 %v121, %v131
    %v148 = vadd.f32 %v122, %v132
    %v149 = vadd.f32 %v123, %v133
    %v150 = vadd.f32 %v124, %v134
    %v151 = vadd.f32 %v125, %v135
    %v152 = vadd.f32 %v126, %v136
    %v153 = vadd.f32 %v127, %v137
    %v154 = vld [vmem:[#allocation7] sm:$0xff]
    %v155 = vld [vmem:[#allocation7 + $0x8] sm:$0xff]
    %v156 = vld [vmem:[#allocation7 + $0x10] sm:$0xff]
    %v157 = vld [vmem:[#allocation7 + $0x18] sm:$0xff]
    %v158 = vld [vmem:[#allocation7 + $0x20] sm:$0xff]
    %v159 = vld [vmem:[#allocation7 + $0x28] sm:$0xff]
    %v160 = vld [vmem:[#allocation7 + $0x30] sm:$0xff]
    %v161 = vld [vmem:[#allocation7 + $0x38] sm:$0xff]
    %v162 = vld [vmem:[#allocation7 + $0x40] sm:$0xff]
    %v163 = vld [vmem:[#allocation7 + $0x48] sm:$0xff]
    %v164 = vld [vmem:[#allocation7 + $0x50] sm:$0xff]
    %v165 = vld [vmem:[#allocation7 + $0x58] sm:$0xff]
    %v166 = vld [vmem:[#allocation7 + $0x60] sm:$0xff]
    %v167 = vld [vmem:[#allocation7 + $0x68] sm:$0xff]
    %v168 = vld [vmem:[#allocation7 + $0x70] sm:$0xff]
    %v169 = vld [vmem:[#allocation7 + $0x78] sm:$0xff]
    %v170 = vld [vmem:[#allocation7 + $0x80] sm:$0xff]
    %v171 = vld [vmem:[#allocation7 + $0x88] sm:$0xff]
    %v172 = vld [vmem:[#allocation7 + $0x90] sm:$0xff]
    %v173 = vld [vmem:[#allocation7 + $0x98] sm:$0xff]
    %v174 = vld [vmem:[#allocation7 + $0xa0] sm:$0xff]
    %v175 = vld [vmem:[#allocation7 + $0xa8] sm:$0xff]
    %v176 = vld [vmem:[#allocation7 + $0xb0] sm:$0xff]
    %v177 = vld [vmem:[#allocation7 + $0xb8] sm:$0xff]
    %v178 = vld [vmem:[#allocation7 + $0xc0] sm:$0xff]
    %v179 = vld [vmem:[#allocation7 + $0xc8] sm:$0xff]
    %v180 = vld [vmem:[#allocation7 + $0xd0] sm:$0xff]
    %v181 = vld [vmem:[#allocation7 + $0xd8] sm:$0xff]
    %v182 = vld [vmem:[#allocation7 + $0xe0] sm:$0xff]
    %v183 = vld [vmem:[#allocation7 + $0xe8] sm:$0xff]
    %v184 = vld [vmem:[#allocation7 + $0xf0] sm:$0xff]
    %v185 = vld [vmem:[#allocation7 + $0xf8] sm:$0xff]
    %v186 = vld [vmem:[#allocation7 + $0x100] sm:$0xff]
    %v187 = vld [vmem:[#allocation7 + $0x108] sm:$0xff]
    %v188 = vld [vmem:[#allocation7 + $0x110] sm:$0xff]
    %v189 = vld [vmem:[#allocation7 + $0x118] sm:$0xff]
    %v190 = vld [vmem:[#allocation7 + $0x120] sm:$0xff]
    %v191 = vld [vmem:[#allocation7 + $0x128] sm:$0xff]
    %v192 = vld [vmem:[#allocation7 + $0x130] sm:$0xff]
    %v193 = vld [vmem:[#allocation7 + $0x138] sm:$0xff]
    %v194 = vld [vmem:[#allocation7 + $0x140] sm:$0xff]
    %v195 = vld [vmem:[#allocation7 + $0x148] sm:$0xff]
    %v196 = vld [vmem:[#allocation7 + $0x150] sm:$0xff]
    %v197 = vld [vmem:[#allocation7 + $0x158] sm:$0xff]
    %v198 = vld [vmem:[#allocation7 + $0x160] sm:$0xff]
    %v199 = vld [vmem:[#allocation7 + $0x168] sm:$0xff]
    %v200 = vld [vmem:[#allocation7 + $0x170] sm:$0xff]
    %v201 = vld [vmem:[#allocation7 + $0x178] sm:$0xff]
    %v202 = vld [vmem:[#allocation7 + $0x180] sm:$0xff]
    %v203 = vld [vmem:[#allocation7 + $0x188] sm:$0xff]
    %v204 = vld [vmem:[#allocation7 + $0x190] sm:$0xff]
    %v205 = vld [vmem:[#allocation7 + $0x198] sm:$0xff]
    %v206 = vld [vmem:[#allocation7 + $0x1a0] sm:$0xff]
    %v207 = vld [vmem:[#allocation7 + $0x1a8] sm:$0xff]
    %v208 = vld [vmem:[#allocation7 + $0x1b0] sm:$0xff]
    %v209 = vld [vmem:[#allocation7 + $0x1b8] sm:$0xff]
    %v210 = vld [vmem:[#allocation7 + $0x1c0] sm:$0xff]
    %v211 = vld [vmem:[#allocation7 + $0x1c8] sm:$0xff]
    %v212 = vld [vmem:[#allocation7 + $0x1d0] sm:$0xff]
    %v213 = vld [vmem:[#allocation7 + $0x1d8] sm:$0xff]
    %v214 = vld [vmem:[#allocation7 + $0x1e0] sm:$0xff]
    %v215 = vld [vmem:[#allocation7 + $0x1e8] sm:$0xff]
    %v216 = vld [vmem:[#allocation7 + $0x1f0] sm:$0xff]
    %v217 = vld [vmem:[#allocation7 + $0x1f8] sm:$0xff]
    %v218 = vld [vmem:[#allocation7 + $0x200] sm:$0xff]
    %v219 = vld [vmem:[#allocation7 + $0x208] sm:$0xff]
    %v220 = vld [vmem:[#allocation7 + $0x210] sm:$0xff]
    %v221 = vld [vmem:[#allocation7 + $0x218] sm:$0xff]
    %v222 = vld [vmem:[#allocation7 + $0x220] sm:$0xff]
    %v223 = vld [vmem:[#allocation7 + $0x228] sm:$0xff]
    %v224 = vld [vmem:[#allocation7 + $0x230] sm:$0xff]
    %v225 = vld [vmem:[#allocation7 + $0x238] sm:$0xff]
    %v226 = vld [vmem:[#allocation7 + $0x240] sm:$0xff]
    %v227 = vld [vmem:[#allocation7 + $0x248] sm:$0xff]
    %v228 = vld [vmem:[#allocation7 + $0x250] sm:$0xff]
    %v229 = vld [vmem:[#allocation7 + $0x258] sm:$0xff]
    %v230 = vld [vmem:[#allocation7 + $0x260] sm:$0xff]
    %v231 = vld [vmem:[#allocation7 + $0x268] sm:$0xff]
    %v232 = vld [vmem:[#allocation7 + $0x270] sm:$0xff]
    %v233 = vld [vmem:[#allocation7 + $0x278] sm:$0xff]
    %v234 = vld [vmem:[#allocation7 + $0x280] sm:$0xff]
    %v235 = vld [vmem:[#allocation7 + $0x288] sm:$0xff]
    %v236 = vld [vmem:[#allocation7 + $0x290] sm:$0xff]
    %v237 = vld [vmem:[#allocation7 + $0x298] sm:$0xff]
    %v238 = vld [vmem:[#allocation7 + $0x2a0] sm:$0xff]
    %v239 = vld [vmem:[#allocation7 + $0x2a8] sm:$0xff]
    %v240 = vld [vmem:[#allocation7 + $0x2b0] sm:$0xff]
    %v241 = vld [vmem:[#allocation7 + $0x2b8] sm:$0xff]
    %v242 = vld [vmem:[#allocation7 + $0x2c0] sm:$0xff]
    %v243 = vld [vmem:[#allocation7 + $0x2c8] sm:$0xff]
    %v244 = vld [vmem:[#allocation7 + $0x2d0] sm:$0xff]
    %v245 = vld [vmem:[#allocation7 + $0x2d8] sm:$0xff]
    %v246 = vld [vmem:[#allocation7 + $0x2e0] sm:$0xff]
    %v247 = vld [vmem:[#allocation7 + $0x2e8] sm:$0xff]
    %v248 = vld [vmem:[#allocation7 + $0x2f0] sm:$0xff]
    %v249 = vld [vmem:[#allocation7 + $0x2f8] sm:$0xff]
    %v250 = vld [vmem:[#allocation7 + $0x300] sm:$0xff]
    %v251 = vld [vmem:[#allocation7 + $0x308] sm:$0xff]
    %v252 = vld [vmem:[#allocation7 + $0x310] sm:$0xff]
    %v253 = vld [vmem:[#allocation7 + $0x318] sm:$0xff]
    %v254 = vld [vmem:[#allocation7 + $0x320] sm:$0xff]
    %v255 = vld [vmem:[#allocation7 + $0x328] sm:$0xff]
    %v256 = vld [vmem:[#allocation7 + $0x330] sm:$0xff]
    %v257 = vld [vmem:[#allocation7 + $0x338] sm:$0xff]
    %v258 = vld [vmem:[#allocation7 + $0x340] sm:$0xff]
    %v259 = vld [vmem:[#allocation7 + $0x348] sm:$0xff]
    %v260 = vld [vmem:[#allocation7 + $0x350] sm:$0xff]
    %v261 = vld [vmem:[#allocation7 + $0x358] sm:$0xff]
    %v262 = vld [vmem:[#allocation7 + $0x360] sm:$0xff]
    %v263 = vld [vmem:[#allocation7 + $0x368] sm:$0xff]
    %v264 = vld [vmem:[#allocation7 + $0x370] sm:$0xff]
    %v265 = vld [vmem:[#allocation7 + $0x378] sm:$0xff]
    %v266 = vld [vmem:[#allocation7 + $0x380] sm:$0xff]
    %v267 = vld [vmem:[#allocation7 + $0x388] sm:$0xff]
    %v268 = vld [vmem:[#allocation7 + $0x390] sm:$0xff]
    %v269 = vld [vmem:[#allocation7 + $0x398] sm:$0xff]
    %v270 = vld [vmem:[#allocation7 + $0x3a0] sm:$0xff]
    %v271 = vld [vmem:[#allocation7 + $0x3a8] sm:$0xff]
    %v272 = vld [vmem:[#allocation7 + $0x3b0] sm:$0xff]
    %v273 = vld [vmem:[#allocation7 + $0x3b8] sm:$0xff]
    %v274 = vld [vmem:[#allocation7 + $0x3c0] sm:$0xff]
    %v275 = vld [vmem:[#allocation7 + $0x3c8] sm:$0xff]
    %v276 = vld [vmem:[#allocation7 + $0x3d0] sm:$0xff]
    %v277 = vld [vmem:[#allocation7 + $0x3d8] sm:$0xff]
    %v278 = vld [vmem:[#allocation7 + $0x3e0] sm:$0xff]
    %v279 = vld [vmem:[#allocation7 + $0x3e8] sm:$0xff]
    %v280 = vld [vmem:[#allocation7 + $0x3f0] sm:$0xff]
    %v281 = vld [vmem:[#allocation7 + $0x3f8] sm:$0xff]
    %v282 = vld [vmem:[#allocation7 + $0x400] sm:$0xff]
    %v283 = vld [vmem:[#allocation7 + $0x408] sm:$0xff]
    %v284 = vld [vmem:[#allocation7 + $0x410] sm:$0xff]
    %v285 = vld [vmem:[#allocation7 + $0x418] sm:$0xff]
    %v286 = vld [vmem:[#allocation7 + $0x420] sm:$0xff]
    %v287 = vld [vmem:[#allocation7 + $0x428] sm:$0xff]
    %v288 = vld [vmem:[#allocation7 + $0x430] sm:$0xff]
    %v289 = vld [vmem:[#allocation7 + $0x438] sm:$0xff]
    %v290 = vld [vmem:[#allocation7 + $0x440] sm:$0xff]
    %v291 = vld [vmem:[#allocation7 + $0x448] sm:$0xff]
    %v292 = vld [vmem:[#allocation7 + $0x450] sm:$0xff]
    %v293 = vld [vmem:[#allocation7 + $0x458] sm:$0xff]
    %v294 = vld [vmem:[#allocation7 + $0x460] sm:$0xff]
    %v295 = vld [vmem:[#allocation7 + $0x468] sm:$0xff]
    %v296 = vld [vmem:[#allocation7 + $0x470] sm:$0xff]
    %v297 = vld [vmem:[#allocation7 + $0x478] sm:$0xff]
    %v298 = vld [vmem:[#allocation7 + $0x480] sm:$0xff]
    %v299 = vld [vmem:[#allocation7 + $0x488] sm:$0xff]
    %v300 = vld [vmem:[#allocation7 + $0x490] sm:$0xff]
    %v301 = vld [vmem:[#allocation7 + $0x498] sm:$0xff]
    %v302 = vld [vmem:[#allocation7 + $0x4a0] sm:$0xff]
    %v303 = vld [vmem:[#allocation7 + $0x4a8] sm:$0xff]
    %v304 = vld [vmem:[#allocation7 + $0x4b0] sm:$0xff]
    %v305 = vld [vmem:[#allocation7 + $0x4b8] sm:$0xff]
    %v306 = vld [vmem:[#allocation7 + $0x4c0] sm:$0xff]
    %v307 = vld [vmem:[#allocation7 + $0x4c8] sm:$0xff]
    %v308 = vld [vmem:[#allocation7 + $0x4d0] sm:$0xff]
    %v309 = vld [vmem:[#allocation7 + $0x4d8] sm:$0xff]
    %v310 = vld [vmem:[#allocation7 + $0x4e0] sm:$0xff]
    %v311 = vld [vmem:[#allocation7 + $0x4e8] sm:$0xff]
    %v312 = vld [vmem:[#allocation7 + $0x4f0] sm:$0xff]
    %v313 = vld [vmem:[#allocation7 + $0x4f8] sm:$0xff]
    %v314 = vld [vmem:[#allocation7 + $0x500] sm:$0xff]
    %v315 = vld [vmem:[#allocation7 + $0x508] sm:$0xff]
    %v316 = vld [vmem:[#allocation7 + $0x510] sm:$0xff]
    %v317 = vld [vmem:[#allocation7 + $0x518] sm:$0xff]
    %v318 = vld [vmem:[#allocation7 + $0x520] sm:$0xff]
    %v319 = vld [vmem:[#allocation7 + $0x528] sm:$0xff]
    %v320 = vld [vmem:[#allocation7 + $0x530] sm:$0xff]
    %v321 = vld [vmem:[#allocation7 + $0x538] sm:$0xff]
    %v322 = vld [vmem:[#allocation7 + $0x540] sm:$0xff]
    %v323 = vld [vmem:[#allocation7 + $0x548] sm:$0xff]
    %v324 = vld [vmem:[#allocation7 + $0x550] sm:$0xff]
    %v325 = vld [vmem:[#allocation7 + $0x558] sm:$0xff]
    %v326 = vld [vmem:[#allocation7 + $0x560] sm:$0xff]
    %v327 = vld [vmem:[#allocation7 + $0x568] sm:$0xff]
    %v328 = vld [vmem:[#allocation7 + $0x570] sm:$0xff]
    %v329 = vld [vmem:[#allocation7 + $0x578] sm:$0xff]
    %v330 = vld [vmem:[#allocation7 + $0x580] sm:$0xff]
    %v331 = vld [vmem:[#allocation7 + $0x588] sm:$0xff]
    %v332 = vld [vmem:[#allocation7 + $0x590] sm:$0xff]
    %v333 = vld [vmem:[#allocation7 + $0x598] sm:$0xff]
    %v334 = vld [vmem:[#allocation7 + $0x5a0] sm:$0xff]
    %v335 = vld [vmem:[#allocation7 + $0x5a8] sm:$0xff]
    %v336 = vld [vmem:[#allocation7 + $0x5b0] sm:$0xff]
    %v337 = vld [vmem:[#allocation7 + $0x5b8] sm:$0xff]
    %v338 = vld [vmem:[#allocation7 + $0x5c0] sm:$0xff]
    %v339 = vld [vmem:[#allocation7 + $0x5c8] sm:$0xff]
    %v340 = vld [vmem:[#allocation7 + $0x5d0] sm:$0xff]
    %v341 = vld [vmem:[#allocation7 + $0x5d8] sm:$0xff]
    %v342 = vld [vmem:[#allocation7 + $0x5e0] sm:$0xff]
    %v343 = vld [vmem:[#allocation7 + $0x5e8] sm:$0xff]
    %v344 = vld [vmem:[#allocation7 + $0x5f0] sm:$0xff]
    %v345 = vld [vmem:[#allocation7 + $0x5f8] sm:$0xff]
    %v346 = vld [vmem:[#allocation7 + $0x600] sm:$0xff]
    %v347 = vld [vmem:[#allocation7 + $0x608] sm:$0xff]
    %v348 = vld [vmem:[#allocation7 + $0x610] sm:$0xff]
    %v349 = vld [vmem:[#allocation7 + $0x618] sm:$0xff]
    %v350 = vld [vmem:[#allocation7 + $0x620] sm:$0xff]
    %v351 = vld [vmem:[#allocation7 + $0x628] sm:$0xff]
    %v352 = vld [vmem:[#allocation7 + $0x630] sm:$0xff]
    %v353 = vld [vmem:[#allocation7 + $0x638] sm:$0xff]
    %v354 = vld [vmem:[#allocation7 + $0x640] sm:$0xff]
    %v355 = vld [vmem:[#allocation7 + $0x648] sm:$0xff]
    %v356 = vld [vmem:[#allocation7 + $0x650] sm:$0xff]
    %v357 = vld [vmem:[#allocation7 + $0x658] sm:$0xff]
    %v358 = vld [vmem:[#allocation7 + $0x660] sm:$0xff]
    %v359 = vld [vmem:[#allocation7 + $0x668] sm:$0xff]
    %v360 = vld [vmem:[#allocation7 + $0x670] sm:$0xff]
    %v361 = vld [vmem:[#allocation7 + $0x678] sm:$0xff]
    %v362 = vld [vmem:[#allocation7 + $0x680] sm:$0xff]
    %v363 = vld [vmem:[#allocation7 + $0x688] sm:$0xff]
    %v364 = vld [vmem:[#allocation7 + $0x690] sm:$0xff]
    %v365 = vld [vmem:[#allocation7 + $0x698] sm:$0xff]
    %v366 = vld [vmem:[#allocation7 + $0x6a0] sm:$0xff]
    %v367 = vld [vmem:[#allocation7 + $0x6a8] sm:$0xff]
    %v368 = vld [vmem:[#allocation7 + $0x6b0] sm:$0xff]
    %v369 = vld [vmem:[#allocation7 + $0x6b8] sm:$0xff]
    %v370 = vld [vmem:[#allocation7 + $0x6c0] sm:$0xff]
    %v371 = vld [vmem:[#allocation7 + $0x6c8] sm:$0xff]
    %v372 = vld [vmem:[#allocation7 + $0x6d0] sm:$0xff]
    %v373 = vld [vmem:[#allocation7 + $0x6d8] sm:$0xff]
    %v374 = vld [vmem:[#allocation7 + $0x6e0] sm:$0xff]
    %v375 = vld [vmem:[#allocation7 + $0x6e8] sm:$0xff]
    %v376 = vld [vmem:[#allocation7 + $0x6f0] sm:$0xff]
    %v377 = vld [vmem:[#allocation7 + $0x6f8] sm:$0xff]
    %v378 = vld [vmem:[#allocation7 + $0x700] sm:$0xff]
    %v379 = vld [vmem:[#allocation7 + $0x708] sm:$0xff]
    %v380 = vld [vmem:[#allocation7 + $0x710] sm:$0xff]
    %v381 = vld [vmem:[#allocation7 + $0x718] sm:$0xff]
    %v382 = vld [vmem:[#allocation7 + $0x720] sm:$0xff]
    %v383 = vld [vmem:[#allocation7 + $0x728] sm:$0xff]
    %v384 = vld [vmem:[#allocation7 + $0x730] sm:$0xff]
    %v385 = vld [vmem:[#allocation7 + $0x738] sm:$0xff]
    %v386 = vld [vmem:[#allocation7 + $0x740] sm:$0xff]
    %v387 = vld [vmem:[#allocation7 + $0x748] sm:$0xff]
    %v388 = vld [vmem:[#allocation7 + $0x750] sm:$0xff]
    %v389 = vld [vmem:[#allocation7 + $0x758] sm:$0xff]
    %v390 = vld [vmem:[#allocation7 + $0x760] sm:$0xff]
    %v391 = vld [vmem:[#allocation7 + $0x768] sm:$0xff]
    %v392 = vld [vmem:[#allocation7 + $0x770] sm:$0xff]
    %v393 = vld [vmem:[#allocation7 + $0x778] sm:$0xff]
    %v394 = vld [vmem:[#allocation7 + $0x780] sm:$0xff]
    %v395 = vld [vmem:[#allocation7 + $0x788] sm:$0xff]
    %v396 = vld [vmem:[#allocation7 + $0x790] sm:$0xff]
    %v397 = vld [vmem:[#allocation7 + $0x798] sm:$0xff]
    %v398 = vld [vmem:[#allocation7 + $0x7a0] sm:$0xff]
    %v399 = vld [vmem:[#allocation7 + $0x7a8] sm:$0xff]
    %v400 = vld [vmem:[#allocation7 + $0x7b0] sm:$0xff]
    %v401 = vld [vmem:[#allocation7 + $0x7b8] sm:$0xff]
    %v402 = vld [vmem:[#allocation7 + $0x7c0] sm:$0xff]
    %v403 = vld [vmem:[#allocation7 + $0x7c8] sm:$0xff]
    %v404 = vld [vmem:[#allocation7 + $0x7d0] sm:$0xff]
    %v405 = vld [vmem:[#allocation7 + $0x7d8] sm:$0xff]
    %v406 = vld [vmem:[#allocation7 + $0x7e0] sm:$0xff]
    %v407 = vld [vmem:[#allocation7 + $0x7e8] sm:$0xff]
    %v408 = vld [vmem:[#allocation7 + $0x7f0] sm:$0xff]
    %v409 = vld [vmem:[#allocation7 + $0x7f8] sm:$0xff]
    %410 = vmatpush.msra.mxu0 %v274
    %411 = vmatpush.msra.mxu0 %v266
    %412 = vmatpush.msra.mxu0 %v258
    %413 = vmatpush.msra.mxu0 %v250
    %414 = vmatpush.msra.mxu0 %v242
    %415 = vmatpush.msra.mxu0 %v234
    %416 = vmatpush.msra.mxu0 %v226
    %417 = vmatpush.msra.mxu0 %v218
    %418 = vmatpush.msra.mxu0 %v210
    %419 = vmatpush.msra.mxu0 %v202
    %420 = vmatpush.msra.mxu0 %v194
    %421 = vmatpush.msra.mxu0 %v186
    %422 = vmatpush.msra.mxu0 %v178
    %423 = vmatpush.msra.mxu0 %v170
    %424 = vmatpush.msra.mxu0 %v162
    %425 = vmatpush.msra.mxu0 %v154
    %426 = vmatmul.f32.gmra.mxu0 0.0
    %v427 = vpop.f32.mrf.mxu0
    %v428 = vadd.f32 0.0, %v427
    %429 = vdwg.mxu0
    %430 = vmatpush.msra.mxu0 %v402
    %431 = vmatpush.msra.mxu0 %v394
    %432 = vmatpush.msra.mxu0 %v386
    %433 = vmatpush.msra.mxu0 %v378
    %434 = vmatpush.msra.mxu0 %v370
    %435 = vmatpush.msra.mxu0 %v362
    %436 = vmatpush.msra.mxu0 %v354
    %437 = vmatpush.msra.mxu0 %v346
    %438 = vmatpush.msra.mxu0 %v338
    %439 = vmatpush.msra.mxu0 %v330
    %440 = vmatpush.msra.mxu0 %v322
    %441 = vmatpush.msra.mxu0 %v314
    %442 = vmatpush.msra.mxu0 %v306
    %443 = vmatpush.msra.mxu0 %v298
    %444 = vmatpush.msra.mxu0 %v290
    %445 = vmatpush.msra.mxu0 %v282
    %446 = vmatmul.f32.gmra.mxu0 0.0
    %v447 = vpop.f32.mrf.mxu0
    %v448 = vadd.f32 %v428, %v447
    %449 = vdwg.mxu0
    %450 = vmatpush.msra.mxu0 %v275
    %451 = vmatpush.msra.mxu0 %v267
    %452 = vmatpush.msra.mxu0 %v259
    %453 = vmatpush.msra.mxu0 %v251
    %454 = vmatpush.msra.mxu0 %v243
    %455 = vmatpush.msra.mxu0 %v235
    %456 = vmatpush.msra.mxu0 %v227
    %457 = vmatpush.msra.mxu0 %v219
    %458 = vmatpush.msra.mxu0 %v211
    %459 = vmatpush.msra.mxu0 %v203
    %460 = vmatpush.msra.mxu0 %v195
    %461 = vmatpush.msra.mxu0 %v187
    %462 = vmatpush.msra.mxu0 %v179
    %463 = vmatpush.msra.mxu0 %v171
    %464 = vmatpush.msra.mxu0 %v163
    %465 = vmatpush.msra.mxu0 %v155
    %466 = vmatmul.f32.gmra.mxu0 0.0
    %v467 = vpop.f32.mrf.mxu0
    %v468 = vadd.f32 0.0, %v467
    %469 = vdwg.mxu0
    %470 = vmatpush.msra.mxu0 %v403
    %471 = vmatpush.msra.mxu0 %v395
    %472 = vmatpush.msra.mxu0 %v387
    %473 = vmatpush.msra.mxu0 %v379
    %474 = vmatpush.msra.mxu0 %v371
    %475 = vmatpush.msra.mxu0 %v363
    %476 = vmatpush.msra.mxu0 %v355
    %477 = vmatpush.msra.mxu0 %v347
    %478 = vmatpush.msra.mxu0 %v339
    %479 = vmatpush.msra.mxu0 %v331
    %480 = vmatpush.msra.mxu0 %v323
    %481 = vmatpush.msra.mxu0 %v315
    %482 = vmatpush.msra.mxu0 %v307
    %483 = vmatpush.msra.mxu0 %v299
    %484 = vmatpush.msra.mxu0 %v291
    %485 = vmatpush.msra.mxu0 %v283
    %486 = vmatmul.f32.gmra.mxu0 0.0
    %v487 = vpop.f32.mrf.mxu0
    %v488 = vadd.f32 %v468, %v487
    %489 = vdwg.mxu0
    %490 = vmatpush.msra.mxu0 %v276
    %491 = vmatpush.msra.mxu0 %v268
    %492 = vmatpush.msra.mxu0 %v260
    %493 = vmatpush.msra.mxu0 %v252
    %494 = vmatpush.msra.mxu0 %v244
    %495 = vmatpush.msra.mxu0 %v236
    %496 = vmatpush.msra.mxu0 %v228
    %497 = vmatpush.msra.mxu0 %v220
    %498 = vmatpush.msra.mxu0 %v212
    %499 = vmatpush.msra.mxu0 %v204
    %500 = vmatpush.msra.mxu0 %v196
    %501 = vmatpush.msra.mxu0 %v188
    %502 = vmatpush.msra.mxu0 %v180
    %503 = vmatpush.msra.mxu0 %v172
    %504 = vmatpush.msra.mxu0 %v164
    %505 = vmatpush.msra.mxu0 %v156
    %506 = vmatmul.f32.gmra.mxu0 0.0
    %v507 = vpop.f32.mrf.mxu0
    %v508 = vadd.f32 0.0, %v507
    %509 = vdwg.mxu0
    %510 = vmatpush.msra.mxu0 %v404
    %511 = vmatpush.msra.mxu0 %v396
    %512 = vmatpush.msra.mxu0 %v388
    %513 = vmatpush.msra.mxu0 %v380
    %514 = vmatpush.msra.mxu0 %v372
    %515 = vmatpush.msra.mxu0 %v364
    %516 = vmatpush.msra.mxu0 %v356
    %517 = vmatpush.msra.mxu0 %v348
    %518 = vmatpush.msra.mxu0 %v340
    %519 = vmatpush.msra.mxu0 %v332
    %520 = vmatpush.msra.mxu0 %v324
    %521 = vmatpush.msra.mxu0 %v316
    %522 = vmatpush.msra.mxu0 %v308
    %523 = vmatpush.msra.mxu0 %v300
    %524 = vmatpush.msra.mxu0 %v292
    %525 = vmatpush.msra.mxu0 %v284
    %526 = vmatmul.f32.gmra.mxu0 0.0
    %v527 = vpop.f32.mrf.mxu0
    %v528 = vadd.f32 %v508, %v527
    %529 = vdwg.mxu0
    %530 = vmatpush.msra.mxu0 %v277
    %531 = vmatpush.msra.mxu0 %v269
    %532 = vmatpush.msra.mxu0 %v261
    %533 = vmatpush.msra.mxu0 %v253
    %534 = vmatpush.msra.mxu0 %v245
    %535 = vmatpush.msra.mxu0 %v237
    %536 = vmatpush.msra.mxu0 %v229
    %537 = vmatpush.msra.mxu0 %v221
    %538 = vmatpush.msra.mxu0 %v213
    %539 = vmatpush.msra.mxu0 %v205
    %540 = vmatpush.msra.mxu0 %v197
    %541 = vmatpush.msra.mxu0 %v189
    %542 = vmatpush.msra.mxu0 %v181
    %543 = vmatpush.msra.mxu0 %v173
    %544 = vmatpush.msra.mxu0 %v165
    %545 = vmatpush.msra.mxu0 %v157
    %546 = vmatmul.f32.gmra.mxu0 0.0
    %v547 = vpop.f32.mrf.mxu0
    %v548 = vadd.f32 0.0, %v547
    %549 = vdwg.mxu0
    %550 = vmatpush.msra.mxu0 %v405
    %551 = vmatpush.msra.mxu0 %v397
    %552 = vmatpush.msra.mxu0 %v389
    %553 = vmatpush.msra.mxu0 %v381
    %554 = vmatpush.msra.mxu0 %v373
    %555 = vmatpush.msra.mxu0 %v365
    %556 = vmatpush.msra.mxu0 %v357
    %557 = vmatpush.msra.mxu0 %v349
    %558 = vmatpush.msra.mxu0 %v341
    %559 = vmatpush.msra.mxu0 %v333
    %560 = vmatpush.msra.mxu0 %v325
    %561 = vmatpush.msra.mxu0 %v317
    %562 = vmatpush.msra.mxu0 %v309
    %563 = vmatpush.msra.mxu0 %v301
    %564 = vmatpush.msra.mxu0 %v293
    %565 = vmatpush.msra.mxu0 %v285
    %566 = vmatmul.f32.gmra.mxu0 0.0
    %v567 = vpop.f32.mrf.mxu0
    %v568 = vadd.f32 %v548, %v567
    %569 = vdwg.mxu0
    %570 = vmatpush.msra.mxu0 %v278
    %571 = vmatpush.msra.mxu0 %v270
    %572 = vmatpush.msra.mxu0 %v262
    %573 = vmatpush.msra.mxu0 %v254
    %574 = vmatpush.msra.mxu0 %v246
    %575 = vmatpush.msra.mxu0 %v238
    %576 = vmatpush.msra.mxu0 %v230
    %577 = vmatpush.msra.mxu0 %v222
    %578 = vmatpush.msra.mxu0 %v214
    %579 = vmatpush.msra.mxu0 %v206
    %580 = vmatpush.msra.mxu0 %v198
    %581 = vmatpush.msra.mxu0 %v190
    %582 = vmatpush.msra.mxu0 %v182
    %583 = vmatpush.msra.mxu0 %v174
    %584 = vmatpush.msra.mxu0 %v166
    %585 = vmatpush.msra.mxu0 %v158
    %586 = vmatmul.f32.gmra.mxu0 0.0
    %v587 = vpop.f32.mrf.mxu0
    %v588 = vadd.f32 0.0, %v587
    %589 = vdwg.mxu0
    %590 = vmatpush.msra.mxu0 %v406
    %591 = vmatpush.msra.mxu0 %v398
    %592 = vmatpush.msra.mxu0 %v390
    %593 = vmatpush.msra.mxu0 %v382
    %594 = vmatpush.msra.mxu0 %v374
    %595 = vmatpush.msra.mxu0 %v366
    %596 = vmatpush.msra.mxu0 %v358
    %597 = vmatpush.msra.mxu0 %v350
    %598 = vmatpush.msra.mxu0 %v342
    %599 = vmatpush.msra.mxu0 %v334
    %600 = vmatpush.msra.mxu0 %v326
    %601 = vmatpush.msra.mxu0 %v318
    %602 = vmatpush.msra.mxu0 %v310
    %603 = vmatpush.msra.mxu0 %v302
    %604 = vmatpush.msra.mxu0 %v294
    %605 = vmatpush.msra.mxu0 %v286
    %606 = vmatmul.f32.gmra.mxu0 0.0
    %v607 = vpop.f32.mrf.mxu0
    %v608 = vadd.f32 %v588, %v607
    %609 = vdwg.mxu0
    %610 = vmatpush.msra.mxu0 %v279
    %611 = vmatpush.msra.mxu0 %v271
    %612 = vmatpush.msra.mxu0 %v263
    %613 = vmatpush.msra.mxu0 %v255
    %614 = vmatpush.msra.mxu0 %v247
    %615 = vmatpush.msra.mxu0 %v239
    %616 = vmatpush.msra.mxu0 %v231
    %617 = vmatpush.msra.mxu0 %v223
    %618 = vmatpush.msra.mxu0 %v215
    %619 = vmatpush.msra.mxu0 %v207
    %620 = vmatpush.msra.mxu0 %v199
    %621 = vmatpush.msra.mxu0 %v191
    %622 = vmatpush.msra.mxu0 %v183
    %623 = vmatpush.msra.mxu0 %v175
    %624 = vmatpush.msra.mxu0 %v167
    %625 = vmatpush.msra.mxu0 %v159
    %626 = vmatmul.f32.gmra.mxu0 0.0
    %v627 = vpop.f32.mrf.mxu0
    %v628 = vadd.f32 0.0, %v627
    %629 = vdwg.mxu0
    %630 = vmatpush.msra.mxu0 %v407
    %631 = vmatpush.msra.mxu0 %v399
    %632 = vmatpush.msra.mxu0 %v391
    %633 = vmatpush.msra.mxu0 %v383
    %634 = vmatpush.msra.mxu0 %v375
    %635 = vmatpush.msra.mxu0 %v367
    %636 = vmatpush.msra.mxu0 %v359
    %637 = vmatpush.msra.mxu0 %v351
    %638 = vmatpush.msra.mxu0 %v343
    %639 = vmatpush.msra.mxu0 %v335
    %640 = vmatpush.msra.mxu0 %v327
    %641 = vmatpush.msra.mxu0 %v319
    %642 = vmatpush.msra.mxu0 %v311
    %643 = vmatpush.msra.mxu0 %v303
    %644 = vmatpush.msra.mxu0 %v295
    %645 = vmatpush.msra.mxu0 %v287
    %646 = vmatmul.f32.gmra.mxu0 0.0
    %v647 = vpop.f32.mrf.mxu0
    %v648 = vadd.f32 %v628, %v647
    %649 = vdwg.mxu0
    %650 = vmatpush.msra.mxu0 %v280
    %651 = vmatpush.msra.mxu0 %v272
    %652 = vmatpush.msra.mxu0 %v264
    %653 = vmatpush.msra.mxu0 %v256
    %654 = vmatpush.msra.mxu0 %v248
    %655 = vmatpush.msra.mxu0 %v240
    %656 = vmatpush.msra.mxu0 %v232
    %657 = vmatpush.msra.mxu0 %v224
    %658 = vmatpush.msra.mxu0 %v216
    %659 = vmatpush.msra.mxu0 %v208
    %660 = vmatpush.msra.mxu0 %v200
    %661 = vmatpush.msra.mxu0 %v192
    %662 = vmatpush.msra.mxu0 %v184
    %663 = vmatpush.msra.mxu0 %v176
    %664 = vmatpush.msra.mxu0 %v168
    %665 = vmatpush.msra.mxu0 %v160
    %666 = vmatmul.f32.gmra.mxu0 0.0
    %v667 = vpop.f32.mrf.mxu0
    %v668 = vadd.f32 0.0, %v667
    %669 = vdwg.mxu0
    %670 = vmatpush.msra.mxu0 %v408
    %671 = vmatpush.msra.mxu0 %v400
    %672 = vmatpush.msra.mxu0 %v392
    %673 = vmatpush.msra.mxu0 %v384
    %674 = vmatpush.msra.mxu0 %v376
    %675 = vmatpush.msra.mxu0 %v368
    %676 = vmatpush.msra.mxu0 %v360
    %677 = vmatpush.msra.mxu0 %v352
    %678 = vmatpush.msra.mxu0 %v344
    %679 = vmatpush.msra.mxu0 %v336
    %680 = vmatpush.msra.mxu0 %v328
    %681 = vmatpush.msra.mxu0 %v320
    %682 = vmatpush.msra.mxu0 %v312
    %683 = vmatpush.msra.mxu0 %v304
    %684 = vmatpush.msra.mxu0 %v296
    %685 = vmatpush.msra.mxu0 %v288
    %686 = vmatmul.f32.gmra.mxu0 0.0
    %v687 = vpop.f32.mrf.mxu0
    %v688 = vadd.f32 %v668, %v687
    %689 = vdwg.mxu0
    %690 = vmatpush.msra.mxu0 %v281
    %691 = vmatpush.msra.mxu0 %v273
    %692 = vmatpush.msra.mxu0 %v265
    %693 = vmatpush.msra.mxu0 %v257
    %694 = vmatpush.msra.mxu0 %v249
    %695 = vmatpush.msra.mxu0 %v241
    %696 = vmatpush.msra.mxu0 %v233
    %697 = vmatpush.msra.mxu0 %v225
    %698 = vmatpush.msra.mxu0 %v217
    %699 = vmatpush.msra.mxu0 %v209
    %700 = vmatpush.msra.mxu0 %v201
    %701 = vmatpush.msra.mxu0 %v193
    %702 = vmatpush.msra.mxu0 %v185
    %703 = vmatpush.msra.mxu0 %v177
    %704 = vmatpush.msra.mxu0 %v169
    %705 = vmatpush.msra.mxu0 %v161
    %706 = vmatmul.f32.gmra.mxu0 0.0
    %v707 = vpop.f32.mrf.mxu0
    %v708 = vadd.f32 0.0, %v707
    %709 = vdwg.mxu0
    %710 = vmatpush.msra.mxu0 %v409
    %711 = vmatpush.msra.mxu0 %v401
    %712 = vmatpush.msra.mxu0 %v393
    %713 = vmatpush.msra.mxu0 %v385
    %714 = vmatpush.msra.mxu0 %v377
    %715 = vmatpush.msra.mxu0 %v369
    %716 = vmatpush.msra.mxu0 %v361
    %717 = vmatpush.msra.mxu0 %v353
    %718 = vmatpush.msra.mxu0 %v345
    %719 = vmatpush.msra.mxu0 %v337
    %720 = vmatpush.msra.mxu0 %v329
    %721 = vmatpush.msra.mxu0 %v321
    %722 = vmatpush.msra.mxu0 %v313
    %723 = vmatpush.msra.mxu0 %v305
    %724 = vmatpush.msra.mxu0 %v297
    %725 = vmatpush.msra.mxu0 %v289
    %726 = vmatmul.f32.gmra.mxu0 0.0
    %v727 = vpop.f32.mrf.mxu0
    %v728 = vadd.f32 %v708, %v727
    %729 = vdwg.mxu0
    %v730 = vadd.f32 %v146, %v448
    %v731 = vadd.f32 %v147, %v488
    %v732 = vadd.f32 %v148, %v528
    %v733 = vadd.f32 %v149, %v568
    %v734 = vadd.f32 %v150, %v608
    %v735 = vadd.f32 %v151, %v648
    %v736 = vadd.f32 %v152, %v688
    %v737 = vadd.f32 %v153, %v728
    %v738 = vxor.u32 %v730, 2147483648
    %v739 = vxor.u32 %v731, 2147483648
    %v740 = vmul.f32 %v738, 1.442695
    %v741 = vpow.pop %v740
    %v742 = vmul.f32 %v739, 1.442695
    %v743 = vpow.pop %v742
    %v744 = vadd.f32 %v741, 1.0
    %v745 = vadd.f32 %v743, 1.0
    %v746 = vrcp.pop %v744
    %v747 = vmul.f32 %v744, %v746
    %v748 = vsub.f32 1.0, %v747
    %v749 = vmul.f32 %v746, %v748
    %v750 = vadd.f32 %v746, %v749
    %vm751 = vweird.f32 %v744
    %vm752 = vweird.f32 %v746
    %vm753 = vmor %vm751, %vm752
    %v754 = vsel %vm753, %v746, %v750
    %v755 = vand.u32 2147483647, %v744
    %vm756 = vcmp.eq.f32.partialorder %v755, 8.507059e+37
    %v757 = vand.u32 %v744, 2147483648
    %v758 = vor.u32 1.1754944e-38, %v757
    %v759 = vsel %vm756, %v758, %v754
    %v760 = vmul.f32 1.0, %v759
    %v761 = vrcp.pop %v745
    %v762 = vmul.f32 %v745, %v761
    %v763 = vsub.f32 1.0, %v762
    %v764 = vmul.f32 %v761, %v763
    %v765 = vadd.f32 %v761, %v764
    %vm766 = vweird.f32 %v745
    %vm767 = vweird.f32 %v761
    %vm768 = vmor %vm766, %vm767
    %v769 = vsel %vm768, %v761, %v765
    %v770 = vand.u32 2147483647, %v745
    %vm771 = vcmp.eq.f32.partialorder %v770, 8.507059e+37
    %v772 = vand.u32 %v745, 2147483648
    %v773 = vor.u32 1.1754944e-38, %v772
    %v774 = vsel %vm771, %v773, %v769
    %v775 = vmul.f32 1.0, %v774
    %v776 = vxor.u32 %v732, 2147483648
    %v777 = vxor.u32 %v733, 2147483648
    %v778 = vmul.f32 %v776, 1.442695
    %v779 = vpow.pop %v778
    %v780 = vmul.f32 %v777, 1.442695
    %v781 = vpow.pop %v780
    %v782 = vadd.f32 %v779, 1.0
    %v783 = vadd.f32 %v781, 1.0
    %v784 = vrcp.pop %v782
    %v785 = vmul.f32 %v782, %v784
    %v786 = vsub.f32 1.0, %v785
    %v787 = vmul.f32 %v784, %v786
    %v788 = vadd.f32 %v784, %v787
    %vm789 = vweird.f32 %v782
    %vm790 = vweird.f32 %v784
    %vm791 = vmor %vm789, %vm790
    %v792 = vsel %vm791, %v784, %v788
    %v793 = vand.u32 2147483647, %v782
    %vm794 = vcmp.eq.f32.partialorder %v793, 8.507059e+37
    %v795 = vand.u32 %v782, 2147483648
    %v796 = vor.u32 1.1754944e-38, %v795
    %v797 = vsel %vm794, %v796, %v792
    %v798 = vmul.f32 1.0, %v797
    %v799 = vrcp.pop %v783
    %v800 = vmul.f32 %v783, %v799
    %v801 = vsub.f32 1.0, %v800
    %v802 = vmul.f32 %v799, %v801
    %v803 = vadd.f32 %v799, %v802
    %vm804 = vweird.f32 %v783
    %vm805 = vweird.f32 %v799
    %vm806 = vmor %vm804, %vm805
    %v807 = vsel %vm806, %v799, %v803
    %v808 = vand.u32 2147483647, %v783
    %vm809 = vcmp.eq.f32.partialorder %v808, 8.507059e+37
    %v810 = vand.u32 %v783, 2147483648
    %v811 = vor.u32 1.1754944e-38, %v810
    %v812 = vsel %vm809, %v811, %v807
    %v813 = vmul.f32 1.0, %v812
    %v814 = vtanh.pop %v734
    %v815 = vtanh.pop %v735
    %v816 = vxor.u32 %v736, 2147483648
    %v817 = vxor.u32 %v737, 2147483648
    %v818 = vmul.f32 %v816, 1.442695
    %v819 = vpow.pop %v818
    %v820 = vmul.f32 %v817, 1.442695
    %v821 = vpow.pop %v820
    %v822 = vadd.f32 %v819, 1.0
    %v823 = vadd.f32 %v821, 1.0
    %v824 = vrcp.pop %v822
    %v825 = vmul.f32 %v822, %v824
    %v826 = vsub.f32 1.0, %v825
    %v827 = vmul.f32 %v824, %v826
    %v828 = vadd.f32 %v824, %v827
    %vm829 = vweird.f32 %v822
    %vm830 = vweird.f32 %v824
    %vm831 = vmor %vm829, %vm830
    %v832 = vsel %vm831, %v824, %v828
    %v833 = vand.u32 2147483647, %v822
    %vm834 = vcmp.eq.f32.partialorder %v833, 8.507059e+37
    %v835 = vand.u32 %v822, 2147483648
    %v836 = vor.u32 1.1754944e-38, %v835
    %v837 = vsel %vm834, %v836, %v832
    %v838 = vmul.f32 1.0, %v837
    %v839 = vrcp.pop %v823
    %v840 = vmul.f32 %v823, %v839
    %v841 = vsub.f32 1.0, %v840
    %v842 = vmul.f32 %v839, %v841
    %v843 = vadd.f32 %v839, %v842
    %vm844 = vweird.f32 %v823
    %vm845 = vweird.f32 %v839
    %vm846 = vmor %vm844, %vm845
    %v847 = vsel %vm846, %v839, %v843
    %v848 = vand.u32 2147483647, %v823
    %vm849 = vcmp.eq.f32.partialorder %v848, 8.507059e+37
    %v850 = vand.u32 %v823, 2147483648
    %v851 = vor.u32 1.1754944e-38, %v850
    %v852 = vsel %vm849, %v851, %v847
    %v853 = vmul.f32 1.0, %v852
    %v854 = vmul.f32 %v798, 0.0
    %v855 = vmul.f32 %v813, 0.0
    %v856 = vmul.f32 %v760, %v814
    %v857 = vmul.f32 %v775, %v815
    %v858 = vadd.f32 %v854, %v856
    %v859 = vadd.f32 %v855, %v857
    %v860 = vtanh.pop %v858
    %v861 = vtanh.pop %v859
    %v862 = vmul.f32 %v838, %v860
    %v863 = vmul.f32 %v853, %v861
    %v864 = vld [vmem:[#allocation8] sm:$0xff]
    %v865 = vld [vmem:[#allocation8 + $0x8] sm:$0xff]
    %v866 = vld [vmem:[#allocation8 + $0x10] sm:$0xff]
    %v867 = vld [vmem:[#allocation8 + $0x18] sm:$0xff]
    %v868 = vld [vmem:[#allocation8 + $0x20] sm:$0xff]
    %v869 = vld [vmem:[#allocation8 + $0x28] sm:$0xff]
    %v870 = vld [vmem:[#allocation8 + $0x30] sm:$0xff]
    %v871 = vld [vmem:[#allocation8 + $0x38] sm:$0xff]
    %v872 = vld [vmem:[#allocation8 + $0x40] sm:$0xff]
    %v873 = vld [vmem:[#allocation8 + $0x48] sm:$0xff]
    %v874 = vld [vmem:[#allocation8 + $0x50] sm:$0xff]
    %v875 = vld [vmem:[#allocation8 + $0x58] sm:$0xff]
    %v876 = vld [vmem:[#allocation8 + $0x60] sm:$0xff]
    %v877 = vld [vmem:[#allocation8 + $0x68] sm:$0xff]
    %v878 = vld [vmem:[#allocation8 + $0x70] sm:$0xff]
    %v879 = vld [vmem:[#allocation8 + $0x78] sm:$0xff]
    %v880 = vld [vmem:[#allocation8 + $0x80] sm:$0xff]
    %v881 = vld [vmem:[#allocation8 + $0x88] sm:$0xff]
    %v882 = vld [vmem:[#allocation8 + $0x90] sm:$0xff]
    %v883 = vld [vmem:[#allocation8 + $0x98] sm:$0xff]
    %v884 = vld [vmem:[#allocation8 + $0xa0] sm:$0xff]
    %v885 = vld [vmem:[#allocation8 + $0xa8] sm:$0xff]
    %v886 = vld [vmem:[#allocation8 + $0xb0] sm:$0xff]
    %v887 = vld [vmem:[#allocation8 + $0xb8] sm:$0xff]
    %v888 = vld [vmem:[#allocation8 + $0xc0] sm:$0xff]
    %v889 = vld [vmem:[#allocation8 + $0xc8] sm:$0xff]
    %v890 = vld [vmem:[#allocation8 + $0xd0] sm:$0xff]
    %v891 = vld [vmem:[#allocation8 + $0xd8] sm:$0xff]
    %v892 = vld [vmem:[#allocation8 + $0xe0] sm:$0xff]
    %v893 = vld [vmem:[#allocation8 + $0xe8] sm:$0xff]
    %v894 = vld [vmem:[#allocation8 + $0xf0] sm:$0xff]
    %v895 = vld [vmem:[#allocation8 + $0xf8] sm:$0xff]
    %v896 = vld [vmem:[#allocation8 + $0x100] sm:$0xff]
    %v897 = vld [vmem:[#allocation8 + $0x108] sm:$0xff]
    %v898 = vld [vmem:[#allocation8 + $0x110] sm:$0xff]
    %v899 = vld [vmem:[#allocation8 + $0x118] sm:$0xff]
    %v900 = vld [vmem:[#allocation8 + $0x120] sm:$0xff]
    %v901 = vld [vmem:[#allocation8 + $0x128] sm:$0xff]
    %v902 = vld [vmem:[#allocation8 + $0x130] sm:$0xff]
    %v903 = vld [vmem:[#allocation8 + $0x138] sm:$0xff]
    %v904 = vld [vmem:[#allocation8 + $0x140] sm:$0xff]
    %v905 = vld [vmem:[#allocation8 + $0x148] sm:$0xff]
    %v906 = vld [vmem:[#allocation8 + $0x150] sm:$0xff]
    %v907 = vld [vmem:[#allocation8 + $0x158] sm:$0xff]
    %v908 = vld [vmem:[#allocation8 + $0x160] sm:$0xff]
    %v909 = vld [vmem:[#allocation8 + $0x168] sm:$0xff]
    %v910 = vld [vmem:[#allocation8 + $0x170] sm:$0xff]
    %v911 = vld [vmem:[#allocation8 + $0x178] sm:$0xff]
    %v912 = vld [vmem:[#allocation8 + $0x180] sm:$0xff]
    %v913 = vld [vmem:[#allocation8 + $0x188] sm:$0xff]
    %v914 = vld [vmem:[#allocation8 + $0x190] sm:$0xff]
    %v915 = vld [vmem:[#allocation8 + $0x198] sm:$0xff]
    %v916 = vld [vmem:[#allocation8 + $0x1a0] sm:$0xff]
    %v917 = vld [vmem:[#allocation8 + $0x1a8] sm:$0xff]
    %v918 = vld [vmem:[#allocation8 + $0x1b0] sm:$0xff]
    %v919 = vld [vmem:[#allocation8 + $0x1b8] sm:$0xff]
    %v920 = vld [vmem:[#allocation8 + $0x1c0] sm:$0xff]
    %v921 = vld [vmem:[#allocation8 + $0x1c8] sm:$0xff]
    %v922 = vld [vmem:[#allocation8 + $0x1d0] sm:$0xff]
    %v923 = vld [vmem:[#allocation8 + $0x1d8] sm:$0xff]
    %v924 = vld [vmem:[#allocation8 + $0x1e0] sm:$0xff]
    %v925 = vld [vmem:[#allocation8 + $0x1e8] sm:$0xff]
    %v926 = vld [vmem:[#allocation8 + $0x1f0] sm:$0xff]
    %v927 = vld [vmem:[#allocation8 + $0x1f8] sm:$0xff]
    %v928 = vld [vmem:[#allocation8 + $0x200] sm:$0xff]
    %v929 = vld [vmem:[#allocation8 + $0x208] sm:$0xff]
    %v930 = vld [vmem:[#allocation8 + $0x210] sm:$0xff]
    %v931 = vld [vmem:[#allocation8 + $0x218] sm:$0xff]
    %v932 = vld [vmem:[#allocation8 + $0x220] sm:$0xff]
    %v933 = vld [vmem:[#allocation8 + $0x228] sm:$0xff]
    %v934 = vld [vmem:[#allocation8 + $0x230] sm:$0xff]
    %v935 = vld [vmem:[#allocation8 + $0x238] sm:$0xff]
    %v936 = vld [vmem:[#allocation8 + $0x240] sm:$0xff]
    %v937 = vld [vmem:[#allocation8 + $0x248] sm:$0xff]
    %v938 = vld [vmem:[#allocation8 + $0x250] sm:$0xff]
    %v939 = vld [vmem:[#allocation8 + $0x258] sm:$0xff]
    %v940 = vld [vmem:[#allocation8 + $0x260] sm:$0xff]
    %v941 = vld [vmem:[#allocation8 + $0x268] sm:$0xff]
    %v942 = vld [vmem:[#allocation8 + $0x270] sm:$0xff]
    %v943 = vld [vmem:[#allocation8 + $0x278] sm:$0xff]
    %v944 = vld [vmem:[#allocation8 + $0x280] sm:$0xff]
    %v945 = vld [vmem:[#allocation8 + $0x288] sm:$0xff]
    %v946 = vld [vmem:[#allocation8 + $0x290] sm:$0xff]
    %v947 = vld [vmem:[#allocation8 + $0x298] sm:$0xff]
    %v948 = vld [vmem:[#allocation8 + $0x2a0] sm:$0xff]
    %v949 = vld [vmem:[#allocation8 + $0x2a8] sm:$0xff]
    %v950 = vld [vmem:[#allocation8 + $0x2b0] sm:$0xff]
    %v951 = vld [vmem:[#allocation8 + $0x2b8] sm:$0xff]
    %v952 = vld [vmem:[#allocation8 + $0x2c0] sm:$0xff]
    %v953 = vld [vmem:[#allocation8 + $0x2c8] sm:$0xff]
    %v954 = vld [vmem:[#allocation8 + $0x2d0] sm:$0xff]
    %v955 = vld [vmem:[#allocation8 + $0x2d8] sm:$0xff]
    %v956 = vld [vmem:[#allocation8 + $0x2e0] sm:$0xff]
    %v957 = vld [vmem:[#allocation8 + $0x2e8] sm:$0xff]
    %v958 = vld [vmem:[#allocation8 + $0x2f0] sm:$0xff]
    %v959 = vld [vmem:[#allocation8 + $0x2f8] sm:$0xff]
    %v960 = vld [vmem:[#allocation8 + $0x300] sm:$0xff]
    %v961 = vld [vmem:[#allocation8 + $0x308] sm:$0xff]
    %v962 = vld [vmem:[#allocation8 + $0x310] sm:$0xff]
    %v963 = vld [vmem:[#allocation8 + $0x318] sm:$0xff]
    %v964 = vld [vmem:[#allocation8 + $0x320] sm:$0xff]
    %v965 = vld [vmem:[#allocation8 + $0x328] sm:$0xff]
    %v966 = vld [vmem:[#allocation8 + $0x330] sm:$0xff]
    %v967 = vld [vmem:[#allocation8 + $0x338] sm:$0xff]
    %v968 = vld [vmem:[#allocation8 + $0x340] sm:$0xff]
    %v969 = vld [vmem:[#allocation8 + $0x348] sm:$0xff]
    %v970 = vld [vmem:[#allocation8 + $0x350] sm:$0xff]
    %v971 = vld [vmem:[#allocation8 + $0x358] sm:$0xff]
    %v972 = vld [vmem:[#allocation8 + $0x360] sm:$0xff]
    %v973 = vld [vmem:[#allocation8 + $0x368] sm:$0xff]
    %v974 = vld [vmem:[#allocation8 + $0x370] sm:$0xff]
    %v975 = vld [vmem:[#allocation8 + $0x378] sm:$0xff]
    %v976 = vld [vmem:[#allocation8 + $0x380] sm:$0xff]
    %v977 = vld [vmem:[#allocation8 + $0x388] sm:$0xff]
    %v978 = vld [vmem:[#allocation8 + $0x390] sm:$0xff]
    %v979 = vld [vmem:[#allocation8 + $0x398] sm:$0xff]
    %v980 = vld [vmem:[#allocation8 + $0x3a0] sm:$0xff]
    %v981 = vld [vmem:[#allocation8 + $0x3a8] sm:$0xff]
    %v982 = vld [vmem:[#allocation8 + $0x3b0] sm:$0xff]
    %v983 = vld [vmem:[#allocation8 + $0x3b8] sm:$0xff]
    %v984 = vld [vmem:[#allocation8 + $0x3c0] sm:$0xff]
    %v985 = vld [vmem:[#allocation8 + $0x3c8] sm:$0xff]
    %v986 = vld [vmem:[#allocation8 + $0x3d0] sm:$0xff]
    %v987 = vld [vmem:[#allocation8 + $0x3d8] sm:$0xff]
    %v988 = vld [vmem:[#allocation8 + $0x3e0] sm:$0xff]
    %v989 = vld [vmem:[#allocation8 + $0x3e8] sm:$0xff]
    %v990 = vld [vmem:[#allocation8 + $0x3f0] sm:$0xff]
    %v991 = vld [vmem:[#allocation8 + $0x3f8] sm:$0xff]
    %v992 = vld [vmem:[#allocation8 + $0x400] sm:$0xff]
    %v993 = vld [vmem:[#allocation8 + $0x408] sm:$0xff]
    %v994 = vld [vmem:[#allocation8 + $0x410] sm:$0xff]
    %v995 = vld [vmem:[#allocation8 + $0x418] sm:$0xff]
    %v996 = vld [vmem:[#allocation8 + $0x420] sm:$0xff]
    %v997 = vld [vmem:[#allocation8 + $0x428] sm:$0xff]
    %v998 = vld [vmem:[#allocation8 + $0x430] sm:$0xff]
    %v999 = vld [vmem:[#allocation8 + $0x438] sm:$0xff]
    %v1000 = vld [vmem:[#allocation8 + $0x440] sm:$0xff]
    %v1001 = vld [vmem:[#allocation8 + $0x448] sm:$0xff]
    %v1002 = vld [vmem:[#allocation8 + $0x450] sm:$0xff]
    %v1003 = vld [vmem:[#allocation8 + $0x458] sm:$0xff]
    %v1004 = vld [vmem:[#allocation8 + $0x460] sm:$0xff]
    %v1005 = vld [vmem:[#allocation8 + $0x468] sm:$0xff]
    %v1006 = vld [vmem:[#allocation8 + $0x470] sm:$0xff]
    %v1007 = vld [vmem:[#allocation8 + $0x478] sm:$0xff]
    %v1008 = vld [vmem:[#allocation8 + $0x480] sm:$0xff]
    %v1009 = vld [vmem:[#allocation8 + $0x488] sm:$0xff]
    %v1010 = vld [vmem:[#allocation8 + $0x490] sm:$0xff]
    %v1011 = vld [vmem:[#allocation8 + $0x498] sm:$0xff]
    %v1012 = vld [vmem:[#allocation8 + $0x4a0] sm:$0xff]
    %v1013 = vld [vmem:[#allocation8 + $0x4a8] sm:$0xff]
    %v1014 = vld [vmem:[#allocation8 + $0x4b0] sm:$0xff]
    %v1015 = vld [vmem:[#allocation8 + $0x4b8] sm:$0xff]
    %v1016 = vld [vmem:[#allocation8 + $0x4c0] sm:$0xff]
    %v1017 = vld [vmem:[#allocation8 + $0x4c8] sm:$0xff]
    %v1018 = vld [vmem:[#allocation8 + $0x4d0] sm:$0xff]
    %v1019 = vld [vmem:[#allocation8 + $0x4d8] sm:$0xff]
    %v1020 = vld [vmem:[#allocation8 + $0x4e0] sm:$0xff]
    %v1021 = vld [vmem:[#allocation8 + $0x4e8] sm:$0xff]
    %v1022 = vld [vmem:[#allocation8 + $0x4f0] sm:$0xff]
    %v1023 = vld [vmem:[#allocation8 + $0x4f8] sm:$0xff]
    %v1024 = vld [vmem:[#allocation8 + $0x500] sm:$0xff]
    %v1025 = vld [vmem:[#allocation8 + $0x508] sm:$0xff]
    %v1026 = vld [vmem:[#allocation8 + $0x510] sm:$0xff]
    %v1027 = vld [vmem:[#allocation8 + $0x518] sm:$0xff]
    %v1028 = vld [vmem:[#allocation8 + $0x520] sm:$0xff]
    %v1029 = vld [vmem:[#allocation8 + $0x528] sm:$0xff]
    %v1030 = vld [vmem:[#allocation8 + $0x530] sm:$0xff]
    %v1031 = vld [vmem:[#allocation8 + $0x538] sm:$0xff]
    %v1032 = vld [vmem:[#allocation8 + $0x540] sm:$0xff]
    %v1033 = vld [vmem:[#allocation8 + $0x548] sm:$0xff]
    %v1034 = vld [vmem:[#allocation8 + $0x550] sm:$0xff]
    %v1035 = vld [vmem:[#allocation8 + $0x558] sm:$0xff]
    %v1036 = vld [vmem:[#allocation8 + $0x560] sm:$0xff]
    %v1037 = vld [vmem:[#allocation8 + $0x568] sm:$0xff]
    %v1038 = vld [vmem:[#allocation8 + $0x570] sm:$0xff]
    %v1039 = vld [vmem:[#allocation8 + $0x578] sm:$0xff]
    %v1040 = vld [vmem:[#allocation8 + $0x580] sm:$0xff]
    %v1041 = vld [vmem:[#allocation8 + $0x588] sm:$0xff]
    %v1042 = vld [vmem:[#allocation8 + $0x590] sm:$0xff]
    %v1043 = vld [vmem:[#allocation8 + $0x598] sm:$0xff]
    %v1044 = vld [vmem:[#allocation8 + $0x5a0] sm:$0xff]
    %v1045 = vld [vmem:[#allocation8 + $0x5a8] sm:$0xff]
    %v1046 = vld [vmem:[#allocation8 + $0x5b0] sm:$0xff]
    %v1047 = vld [vmem:[#allocation8 + $0x5b8] sm:$0xff]
    %v1048 = vld [vmem:[#allocation8 + $0x5c0] sm:$0xff]
    %v1049 = vld [vmem:[#allocation8 + $0x5c8] sm:$0xff]
    %v1050 = vld [vmem:[#allocation8 + $0x5d0] sm:$0xff]
    %v1051 = vld [vmem:[#allocation8 + $0x5d8] sm:$0xff]
    %v1052 = vld [vmem:[#allocation8 + $0x5e0] sm:$0xff]
    %v1053 = vld [vmem:[#allocation8 + $0x5e8] sm:$0xff]
    %v1054 = vld [vmem:[#allocation8 + $0x5f0] sm:$0xff]
    %v1055 = vld [vmem:[#allocation8 + $0x5f8] sm:$0xff]
    %v1056 = vld [vmem:[#allocation8 + $0x600] sm:$0xff]
    %v1057 = vld [vmem:[#allocation8 + $0x608] sm:$0xff]
    %v1058 = vld [vmem:[#allocation8 + $0x610] sm:$0xff]
    %v1059 = vld [vmem:[#allocation8 + $0x618] sm:$0xff]
    %v1060 = vld [vmem:[#allocation8 + $0x620] sm:$0xff]
    %v1061 = vld [vmem:[#allocation8 + $0x628] sm:$0xff]
    %v1062 = vld [vmem:[#allocation8 + $0x630] sm:$0xff]
    %v1063 = vld [vmem:[#allocation8 + $0x638] sm:$0xff]
    %v1064 = vld [vmem:[#allocation8 + $0x640] sm:$0xff]
    %v1065 = vld [vmem:[#allocation8 + $0x648] sm:$0xff]
    %v1066 = vld [vmem:[#allocation8 + $0x650] sm:$0xff]
    %v1067 = vld [vmem:[#allocation8 + $0x658] sm:$0xff]
    %v1068 = vld [vmem:[#allocation8 + $0x660] sm:$0xff]
    %v1069 = vld [vmem:[#allocation8 + $0x668] sm:$0xff]
    %v1070 = vld [vmem:[#allocation8 + $0x670] sm:$0xff]
    %v1071 = vld [vmem:[#allocation8 + $0x678] sm:$0xff]
    %v1072 = vld [vmem:[#allocation8 + $0x680] sm:$0xff]
    %v1073 = vld [vmem:[#allocation8 + $0x688] sm:$0xff]
    %v1074 = vld [vmem:[#allocation8 + $0x690] sm:$0xff]
    %v1075 = vld [vmem:[#allocation8 + $0x698] sm:$0xff]
    %v1076 = vld [vmem:[#allocation8 + $0x6a0] sm:$0xff]
    %v1077 = vld [vmem:[#allocation8 + $0x6a8] sm:$0xff]
    %v1078 = vld [vmem:[#allocation8 + $0x6b0] sm:$0xff]
    %v1079 = vld [vmem:[#allocation8 + $0x6b8] sm:$0xff]
    %v1080 = vld [vmem:[#allocation8 + $0x6c0] sm:$0xff]
    %v1081 = vld [vmem:[#allocation8 + $0x6c8] sm:$0xff]
    %v1082 = vld [vmem:[#allocation8 + $0x6d0] sm:$0xff]
    %v1083 = vld [vmem:[#allocation8 + $0x6d8] sm:$0xff]
    %v1084 = vld [vmem:[#allocation8 + $0x6e0] sm:$0xff]
    %v1085 = vld [vmem:[#allocation8 + $0x6e8] sm:$0xff]
    %v1086 = vld [vmem:[#allocation8 + $0x6f0] sm:$0xff]
    %v1087 = vld [vmem:[#allocation8 + $0x6f8] sm:$0xff]
    %v1088 = vld [vmem:[#allocation8 + $0x700] sm:$0xff]
    %v1089 = vld [vmem:[#allocation8 + $0x708] sm:$0xff]
    %v1090 = vld [vmem:[#allocation8 + $0x710] sm:$0xff]
    %v1091 = vld [vmem:[#allocation8 + $0x718] sm:$0xff]
    %v1092 = vld [vmem:[#allocation8 + $0x720] sm:$0xff]
    %v1093 = vld [vmem:[#allocation8 + $0x728] sm:$0xff]
    %v1094 = vld [vmem:[#allocation8 + $0x730] sm:$0xff]
    %v1095 = vld [vmem:[#allocation8 + $0x738] sm:$0xff]
    %v1096 = vld [vmem:[#allocation8 + $0x740] sm:$0xff]
    %v1097 = vld [vmem:[#allocation8 + $0x748] sm:$0xff]
    %v1098 = vld [vmem:[#allocation8 + $0x750] sm:$0xff]
    %v1099 = vld [vmem:[#allocation8 + $0x758] sm:$0xff]
    %v1100 = vld [vmem:[#allocation8 + $0x760] sm:$0xff]
    %v1101 = vld [vmem:[#allocation8 + $0x768] sm:$0xff]
    %v1102 = vld [vmem:[#allocation8 + $0x770] sm:$0xff]
    %v1103 = vld [vmem:[#allocation8 + $0x778] sm:$0xff]
    %v1104 = vld [vmem:[#allocation8 + $0x780] sm:$0xff]
    %v1105 = vld [vmem:[#allocation8 + $0x788] sm:$0xff]
    %v1106 = vld [vmem:[#allocation8 + $0x790] sm:$0xff]
    %v1107 = vld [vmem:[#allocation8 + $0x798] sm:$0xff]
    %v1108 = vld [vmem:[#allocation8 + $0x7a0] sm:$0xff]
    %v1109 = vld [vmem:[#allocation8 + $0x7a8] sm:$0xff]
    %v1110 = vld [vmem:[#allocation8 + $0x7b0] sm:$0xff]
    %v1111 = vld [vmem:[#allocation8 + $0x7b8] sm:$0xff]
    %v1112 = vld [vmem:[#allocation8 + $0x7c0] sm:$0xff]
    %v1113 = vld [vmem:[#allocation8 + $0x7c8] sm:$0xff]
    %v1114 = vld [vmem:[#allocation8 + $0x7d0] sm:$0xff]
    %v1115 = vld [vmem:[#allocation8 + $0x7d8] sm:$0xff]
    %v1116 = vld [vmem:[#allocation8 + $0x7e0] sm:$0xff]
    %v1117 = vld [vmem:[#allocation8 + $0x7e8] sm:$0xff]
    %v1118 = vld [vmem:[#allocation8 + $0x7f0] sm:$0xff]
    %v1119 = vld [vmem:[#allocation8 + $0x7f8] sm:$0xff]
    %v1120 = vld [vmem:[#allocation8 + $0x800] sm:$0xff]
    %v1121 = vld [vmem:[#allocation8 + $0x808] sm:$0xff]
    %v1122 = vld [vmem:[#allocation8 + $0x810] sm:$0xff]
    %v1123 = vld [vmem:[#allocation8 + $0x818] sm:$0xff]
    %v1124 = vld [vmem:[#allocation8 + $0x820] sm:$0xff]
    %v1125 = vld [vmem:[#allocation8 + $0x828] sm:$0xff]
    %v1126 = vld [vmem:[#allocation8 + $0x830] sm:$0xff]
    %v1127 = vld [vmem:[#allocation8 + $0x838] sm:$0xff]
    %v1128 = vld [vmem:[#allocation8 + $0x840] sm:$0xff]
    %v1129 = vld [vmem:[#allocation8 + $0x848] sm:$0xff]
    %v1130 = vld [vmem:[#allocation8 + $0x850] sm:$0xff]
    %v1131 = vld [vmem:[#allocation8 + $0x858] sm:$0xff]
    %v1132 = vld [vmem:[#allocation8 + $0x860] sm:$0xff]
    %v1133 = vld [vmem:[#allocation8 + $0x868] sm:$0xff]
    %v1134 = vld [vmem:[#allocation8 + $0x870] sm:$0xff]
    %v1135 = vld [vmem:[#allocation8 + $0x878] sm:$0xff]
    %v1136 = vld [vmem:[#allocation8 + $0x880] sm:$0xff]
    %v1137 = vld [vmem:[#allocation8 + $0x888] sm:$0xff]
    %v1138 = vld [vmem:[#allocation8 + $0x890] sm:$0xff]
    %v1139 = vld [vmem:[#allocation8 + $0x898] sm:$0xff]
    %v1140 = vld [vmem:[#allocation8 + $0x8a0] sm:$0xff]
    %v1141 = vld [vmem:[#allocation8 + $0x8a8] sm:$0xff]
    %v1142 = vld [vmem:[#allocation8 + $0x8b0] sm:$0xff]
    %v1143 = vld [vmem:[#allocation8 + $0x8b8] sm:$0xff]
    %v1144 = vld [vmem:[#allocation8 + $0x8c0] sm:$0xff]
    %v1145 = vld [vmem:[#allocation8 + $0x8c8] sm:$0xff]
    %v1146 = vld [vmem:[#allocation8 + $0x8d0] sm:$0xff]
    %v1147 = vld [vmem:[#allocation8 + $0x8d8] sm:$0xff]
    %v1148 = vld [vmem:[#allocation8 + $0x8e0] sm:$0xff]
    %v1149 = vld [vmem:[#allocation8 + $0x8e8] sm:$0xff]
    %v1150 = vld [vmem:[#allocation8 + $0x8f0] sm:$0xff]
    %v1151 = vld [vmem:[#allocation8 + $0x8f8] sm:$0xff]
    %v1152 = vld [vmem:[#allocation8 + $0x900] sm:$0xff]
    %v1153 = vld [vmem:[#allocation8 + $0x908] sm:$0xff]
    %v1154 = vld [vmem:[#allocation8 + $0x910] sm:$0xff]
    %v1155 = vld [vmem:[#allocation8 + $0x918] sm:$0xff]
    %v1156 = vld [vmem:[#allocation8 + $0x920] sm:$0xff]
    %v1157 = vld [vmem:[#allocation8 + $0x928] sm:$0xff]
    %v1158 = vld [vmem:[#allocation8 + $0x930] sm:$0xff]
    %v1159 = vld [vmem:[#allocation8 + $0x938] sm:$0xff]
    %v1160 = vld [vmem:[#allocation8 + $0x940] sm:$0xff]
    %v1161 = vld [vmem:[#allocation8 + $0x948] sm:$0xff]
    %v1162 = vld [vmem:[#allocation8 + $0x950] sm:$0xff]
    %v1163 = vld [vmem:[#allocation8 + $0x958] sm:$0xff]
    %v1164 = vld [vmem:[#allocation8 + $0x960] sm:$0xff]
    %v1165 = vld [vmem:[#allocation8 + $0x968] sm:$0xff]
    %v1166 = vld [vmem:[#allocation8 + $0x970] sm:$0xff]
    %v1167 = vld [vmem:[#allocation8 + $0x978] sm:$0xff]
    %v1168 = vld [vmem:[#allocation8 + $0x980] sm:$0xff]
    %v1169 = vld [vmem:[#allocation8 + $0x988] sm:$0xff]
    %v1170 = vld [vmem:[#allocation8 + $0x990] sm:$0xff]
    %v1171 = vld [vmem:[#allocation8 + $0x998] sm:$0xff]
    %v1172 = vld [vmem:[#allocation8 + $0x9a0] sm:$0xff]
    %v1173 = vld [vmem:[#allocation8 + $0x9a8] sm:$0xff]
    %v1174 = vld [vmem:[#allocation8 + $0x9b0] sm:$0xff]
    %v1175 = vld [vmem:[#allocation8 + $0x9b8] sm:$0xff]
    %v1176 = vld [vmem:[#allocation8 + $0x9c0] sm:$0xff]
    %v1177 = vld [vmem:[#allocation8 + $0x9c8] sm:$0xff]
    %v1178 = vld [vmem:[#allocation8 + $0x9d0] sm:$0xff]
    %v1179 = vld [vmem:[#allocation8 + $0x9d8] sm:$0xff]
    %v1180 = vld [vmem:[#allocation8 + $0x9e0] sm:$0xff]
    %v1181 = vld [vmem:[#allocation8 + $0x9e8] sm:$0xff]
    %v1182 = vld [vmem:[#allocation8 + $0x9f0] sm:$0xff]
    %v1183 = vld [vmem:[#allocation8 + $0x9f8] sm:$0xff]
    %v1184 = vld [vmem:[#allocation8 + $0xa00] sm:$0xff]
    %v1185 = vld [vmem:[#allocation8 + $0xa08] sm:$0xff]
    %v1186 = vld [vmem:[#allocation8 + $0xa10] sm:$0xff]
    %v1187 = vld [vmem:[#allocation8 + $0xa18] sm:$0xff]
    %v1188 = vld [vmem:[#allocation8 + $0xa20] sm:$0xff]
    %v1189 = vld [vmem:[#allocation8 + $0xa28] sm:$0xff]
    %v1190 = vld [vmem:[#allocation8 + $0xa30] sm:$0xff]
    %v1191 = vld [vmem:[#allocation8 + $0xa38] sm:$0xff]
    %v1192 = vld [vmem:[#allocation8 + $0xa40] sm:$0xff]
    %v1193 = vld [vmem:[#allocation8 + $0xa48] sm:$0xff]
    %v1194 = vld [vmem:[#allocation8 + $0xa50] sm:$0xff]
    %v1195 = vld [vmem:[#allocation8 + $0xa58] sm:$0xff]
    %v1196 = vld [vmem:[#allocation8 + $0xa60] sm:$0xff]
    %v1197 = vld [vmem:[#allocation8 + $0xa68] sm:$0xff]
    %v1198 = vld [vmem:[#allocation8 + $0xa70] sm:$0xff]
    %v1199 = vld [vmem:[#allocation8 + $0xa78] sm:$0xff]
    %v1200 = vld [vmem:[#allocation8 + $0xa80] sm:$0xff]
    %v1201 = vld [vmem:[#allocation8 + $0xa88] sm:$0xff]
    %v1202 = vld [vmem:[#allocation8 + $0xa90] sm:$0xff]
    %v1203 = vld [vmem:[#allocation8 + $0xa98] sm:$0xff]
    %v1204 = vld [vmem:[#allocation8 + $0xaa0] sm:$0xff]
    %v1205 = vld [vmem:[#allocation8 + $0xaa8] sm:$0xff]
    %v1206 = vld [vmem:[#allocation8 + $0xab0] sm:$0xff]
    %v1207 = vld [vmem:[#allocation8 + $0xab8] sm:$0xff]
    %v1208 = vld [vmem:[#allocation8 + $0xac0] sm:$0xff]
    %v1209 = vld [vmem:[#allocation8 + $0xac8] sm:$0xff]
    %v1210 = vld [vmem:[#allocation8 + $0xad0] sm:$0xff]
    %v1211 = vld [vmem:[#allocation8 + $0xad8] sm:$0xff]
    %v1212 = vld [vmem:[#allocation8 + $0xae0] sm:$0xff]
    %v1213 = vld [vmem:[#allocation8 + $0xae8] sm:$0xff]
    %v1214 = vld [vmem:[#allocation8 + $0xaf0] sm:$0xff]
    %v1215 = vld [vmem:[#allocation8 + $0xaf8] sm:$0xff]
    %v1216 = vld [vmem:[#allocation8 + $0xb00] sm:$0xff]
    %v1217 = vld [vmem:[#allocation8 + $0xb08] sm:$0xff]
    %v1218 = vld [vmem:[#allocation8 + $0xb10] sm:$0xff]
    %v1219 = vld [vmem:[#allocation8 + $0xb18] sm:$0xff]
    %v1220 = vld [vmem:[#allocation8 + $0xb20] sm:$0xff]
    %v1221 = vld [vmem:[#allocation8 + $0xb28] sm:$0xff]
    %v1222 = vld [vmem:[#allocation8 + $0xb30] sm:$0xff]
    %v1223 = vld [vmem:[#allocation8 + $0xb38] sm:$0xff]
    %v1224 = vld [vmem:[#allocation8 + $0xb40] sm:$0xff]
    %v1225 = vld [vmem:[#allocation8 + $0xb48] sm:$0xff]
    %v1226 = vld [vmem:[#allocation8 + $0xb50] sm:$0xff]
    %v1227 = vld [vmem:[#allocation8 + $0xb58] sm:$0xff]
    %v1228 = vld [vmem:[#allocation8 + $0xb60] sm:$0xff]
    %v1229 = vld [vmem:[#allocation8 + $0xb68] sm:$0xff]
    %v1230 = vld [vmem:[#allocation8 + $0xb70] sm:$0xff]
    %v1231 = vld [vmem:[#allocation8 + $0xb78] sm:$0xff]
    %v1232 = vld [vmem:[#allocation8 + $0xb80] sm:$0xff]
    %v1233 = vld [vmem:[#allocation8 + $0xb88] sm:$0xff]
    %v1234 = vld [vmem:[#allocation8 + $0xb90] sm:$0xff]
    %v1235 = vld [vmem:[#allocation8 + $0xb98] sm:$0xff]
    %v1236 = vld [vmem:[#allocation8 + $0xba0] sm:$0xff]
    %v1237 = vld [vmem:[#allocation8 + $0xba8] sm:$0xff]
    %v1238 = vld [vmem:[#allocation8 + $0xbb0] sm:$0xff]
    %v1239 = vld [vmem:[#allocation8 + $0xbb8] sm:$0xff]
    %v1240 = vld [vmem:[#allocation8 + $0xbc0] sm:$0xff]
    %v1241 = vld [vmem:[#allocation8 + $0xbc8] sm:$0xff]
    %v1242 = vld [vmem:[#allocation8 + $0xbd0] sm:$0xff]
    %v1243 = vld [vmem:[#allocation8 + $0xbd8] sm:$0xff]
    %v1244 = vld [vmem:[#allocation8 + $0xbe0] sm:$0xff]
    %v1245 = vld [vmem:[#allocation8 + $0xbe8] sm:$0xff]
    %v1246 = vld [vmem:[#allocation8 + $0xbf0] sm:$0xff]
    %v1247 = vld [vmem:[#allocation8 + $0xbf8] sm:$0xff]
    %v1248 = vld [vmem:[#allocation8 + $0xc00] sm:$0xff]
    %v1249 = vld [vmem:[#allocation8 + $0xc08] sm:$0xff]
    %v1250 = vld [vmem:[#allocation8 + $0xc10] sm:$0xff]
    %v1251 = vld [vmem:[#allocation8 + $0xc18] sm:$0xff]
    %v1252 = vld [vmem:[#allocation8 + $0xc20] sm:$0xff]
    %v1253 = vld [vmem:[#allocation8 + $0xc28] sm:$0xff]
    %v1254 = vld [vmem:[#allocation8 + $0xc30] sm:$0xff]
    %v1255 = vld [vmem:[#allocation8 + $0xc38] sm:$0xff]
    %v1256 = vld [vmem:[#allocation8 + $0xc40] sm:$0xff]
    %v1257 = vld [vmem:[#allocation8 + $0xc48] sm:$0xff]
    %v1258 = vld [vmem:[#allocation8 + $0xc50] sm:$0xff]
    %v1259 = vld [vmem:[#allocation8 + $0xc58] sm:$0xff]
    %v1260 = vld [vmem:[#allocation8 + $0xc60] sm:$0xff]
    %v1261 = vld [vmem:[#allocation8 + $0xc68] sm:$0xff]
    %v1262 = vld [vmem:[#allocation8 + $0xc70] sm:$0xff]
    %v1263 = vld [vmem:[#allocation8 + $0xc78] sm:$0xff]
    %v1264 = vld [vmem:[#allocation8 + $0xc80] sm:$0xff]
    %v1265 = vld [vmem:[#allocation8 + $0xc88] sm:$0xff]
    %v1266 = vld [vmem:[#allocation8 + $0xc90] sm:$0xff]
    %v1267 = vld [vmem:[#allocation8 + $0xc98] sm:$0xff]
    %v1268 = vld [vmem:[#allocation8 + $0xca0] sm:$0xff]
    %v1269 = vld [vmem:[#allocation8 + $0xca8] sm:$0xff]
    %v1270 = vld [vmem:[#allocation8 + $0xcb0] sm:$0xff]
    %v1271 = vld [vmem:[#allocation8 + $0xcb8] sm:$0xff]
    %v1272 = vld [vmem:[#allocation8 + $0xcc0] sm:$0xff]
    %v1273 = vld [vmem:[#allocation8 + $0xcc8] sm:$0xff]
    %v1274 = vld [vmem:[#allocation8 + $0xcd0] sm:$0xff]
    %v1275 = vld [vmem:[#allocation8 + $0xcd8] sm:$0xff]
    %v1276 = vld [vmem:[#allocation8 + $0xce0] sm:$0xff]
    %v1277 = vld [vmem:[#allocation8 + $0xce8] sm:$0xff]
    %v1278 = vld [vmem:[#allocation8 + $0xcf0] sm:$0xff]
    %v1279 = vld [vmem:[#allocation8 + $0xcf8] sm:$0xff]
    %v1280 = vld [vmem:[#allocation8 + $0xd00] sm:$0xff]
    %v1281 = vld [vmem:[#allocation8 + $0xd08] sm:$0xff]
    %v1282 = vld [vmem:[#allocation8 + $0xd10] sm:$0xff]
    %v1283 = vld [vmem:[#allocation8 + $0xd18] sm:$0xff]
    %v1284 = vld [vmem:[#allocation8 + $0xd20] sm:$0xff]
    %v1285 = vld [vmem:[#allocation8 + $0xd28] sm:$0xff]
    %v1286 = vld [vmem:[#allocation8 + $0xd30] sm:$0xff]
    %v1287 = vld [vmem:[#allocation8 + $0xd38] sm:$0xff]
    %v1288 = vld [vmem:[#allocation8 + $0xd40] sm:$0xff]
    %v1289 = vld [vmem:[#allocation8 + $0xd48] sm:$0xff]
    %v1290 = vld [vmem:[#allocation8 + $0xd50] sm:$0xff]
    %v1291 = vld [vmem:[#allocation8 + $0xd58] sm:$0xff]
    %v1292 = vld [vmem:[#allocation8 + $0xd60] sm:$0xff]
    %v1293 = vld [vmem:[#allocation8 + $0xd68] sm:$0xff]
    %v1294 = vld [vmem:[#allocation8 + $0xd70] sm:$0xff]
    %v1295 = vld [vmem:[#allocation8 + $0xd78] sm:$0xff]
    %v1296 = vld [vmem:[#allocation8 + $0xd80] sm:$0xff]
    %v1297 = vld [vmem:[#allocation8 + $0xd88] sm:$0xff]
    %v1298 = vld [vmem:[#allocation8 + $0xd90] sm:$0xff]
    %v1299 = vld [vmem:[#allocation8 + $0xd98] sm:$0xff]
    %v1300 = vld [vmem:[#allocation8 + $0xda0] sm:$0xff]
    %v1301 = vld [vmem:[#allocation8 + $0xda8] sm:$0xff]
    %v1302 = vld [vmem:[#allocation8 + $0xdb0] sm:$0xff]
    %v1303 = vld [vmem:[#allocation8 + $0xdb8] sm:$0xff]
    %v1304 = vld [vmem:[#allocation8 + $0xdc0] sm:$0xff]
    %v1305 = vld [vmem:[#allocation8 + $0xdc8] sm:$0xff]
    %v1306 = vld [vmem:[#allocation8 + $0xdd0] sm:$0xff]
    %v1307 = vld [vmem:[#allocation8 + $0xdd8] sm:$0xff]
    %v1308 = vld [vmem:[#allocation8 + $0xde0] sm:$0xff]
    %v1309 = vld [vmem:[#allocation8 + $0xde8] sm:$0xff]
    %v1310 = vld [vmem:[#allocation8 + $0xdf0] sm:$0xff]
    %v1311 = vld [vmem:[#allocation8 + $0xdf8] sm:$0xff]
    %v1312 = vld [vmem:[#allocation8 + $0xe00] sm:$0xff]
    %v1313 = vld [vmem:[#allocation8 + $0xe08] sm:$0xff]
    %v1314 = vld [vmem:[#allocation8 + $0xe10] sm:$0xff]
    %v1315 = vld [vmem:[#allocation8 + $0xe18] sm:$0xff]
    %v1316 = vld [vmem:[#allocation8 + $0xe20] sm:$0xff]
    %v1317 = vld [vmem:[#allocation8 + $0xe28] sm:$0xff]
    %v1318 = vld [vmem:[#allocation8 + $0xe30] sm:$0xff]
    %v1319 = vld [vmem:[#allocation8 + $0xe38] sm:$0xff]
    %v1320 = vld [vmem:[#allocation8 + $0xe40] sm:$0xff]
    %v1321 = vld [vmem:[#allocation8 + $0xe48] sm:$0xff]
    %v1322 = vld [vmem:[#allocation8 + $0xe50] sm:$0xff]
    %v1323 = vld [vmem:[#allocation8 + $0xe58] sm:$0xff]
    %v1324 = vld [vmem:[#allocation8 + $0xe60] sm:$0xff]
    %v1325 = vld [vmem:[#allocation8 + $0xe68] sm:$0xff]
    %v1326 = vld [vmem:[#allocation8 + $0xe70] sm:$0xff]
    %v1327 = vld [vmem:[#allocation8 + $0xe78] sm:$0xff]
    %v1328 = vld [vmem:[#allocation8 + $0xe80] sm:$0xff]
    %v1329 = vld [vmem:[#allocation8 + $0xe88] sm:$0xff]
    %v1330 = vld [vmem:[#allocation8 + $0xe90] sm:$0xff]
    %v1331 = vld [vmem:[#allocation8 + $0xe98] sm:$0xff]
    %v1332 = vld [vmem:[#allocation8 + $0xea0] sm:$0xff]
    %v1333 = vld [vmem:[#allocation8 + $0xea8] sm:$0xff]
    %v1334 = vld [vmem:[#allocation8 + $0xeb0] sm:$0xff]
    %v1335 = vld [vmem:[#allocation8 + $0xeb8] sm:$0xff]
    %v1336 = vld [vmem:[#allocation8 + $0xec0] sm:$0xff]
    %v1337 = vld [vmem:[#allocation8 + $0xec8] sm:$0xff]
    %v1338 = vld [vmem:[#allocation8 + $0xed0] sm:$0xff]
    %v1339 = vld [vmem:[#allocation8 + $0xed8] sm:$0xff]
    %v1340 = vld [vmem:[#allocation8 + $0xee0] sm:$0xff]
    %v1341 = vld [vmem:[#allocation8 + $0xee8] sm:$0xff]
    %v1342 = vld [vmem:[#allocation8 + $0xef0] sm:$0xff]
    %v1343 = vld [vmem:[#allocation8 + $0xef8] sm:$0xff]
    %v1344 = vld [vmem:[#allocation8 + $0xf00] sm:$0xff]
    %v1345 = vld [vmem:[#allocation8 + $0xf08] sm:$0xff]
    %v1346 = vld [vmem:[#allocation8 + $0xf10] sm:$0xff]
    %v1347 = vld [vmem:[#allocation8 + $0xf18] sm:$0xff]
    %v1348 = vld [vmem:[#allocation8 + $0xf20] sm:$0xff]
    %v1349 = vld [vmem:[#allocation8 + $0xf28] sm:$0xff]
    %v1350 = vld [vmem:[#allocation8 + $0xf30] sm:$0xff]
    %v1351 = vld [vmem:[#allocation8 + $0xf38] sm:$0xff]
    %v1352 = vld [vmem:[#allocation8 + $0xf40] sm:$0xff]
    %v1353 = vld [vmem:[#allocation8 + $0xf48] sm:$0xff]
    %v1354 = vld [vmem:[#allocation8 + $0xf50] sm:$0xff]
    %v1355 = vld [vmem:[#allocation8 + $0xf58] sm:$0xff]
    %v1356 = vld [vmem:[#allocation8 + $0xf60] sm:$0xff]
    %v1357 = vld [vmem:[#allocation8 + $0xf68] sm:$0xff]
    %v1358 = vld [vmem:[#allocation8 + $0xf70] sm:$0xff]
    %v1359 = vld [vmem:[#allocation8 + $0xf78] sm:$0xff]
    %v1360 = vld [vmem:[#allocation8 + $0xf80] sm:$0xff]
    %v1361 = vld [vmem:[#allocation8 + $0xf88] sm:$0xff]
    %v1362 = vld [vmem:[#allocation8 + $0xf90] sm:$0xff]
    %v1363 = vld [vmem:[#allocation8 + $0xf98] sm:$0xff]
    %v1364 = vld [vmem:[#allocation8 + $0xfa0] sm:$0xff]
    %v1365 = vld [vmem:[#allocation8 + $0xfa8] sm:$0xff]
    %v1366 = vld [vmem:[#allocation8 + $0xfb0] sm:$0xff]
    %v1367 = vld [vmem:[#allocation8 + $0xfb8] sm:$0xff]
    %v1368 = vld [vmem:[#allocation8 + $0xfc0] sm:$0xff]
    %v1369 = vld [vmem:[#allocation8 + $0xfc8] sm:$0xff]
    %v1370 = vld [vmem:[#allocation8 + $0xfd0] sm:$0xff]
    %v1371 = vld [vmem:[#allocation8 + $0xfd8] sm:$0xff]
    %v1372 = vld [vmem:[#allocation8 + $0xfe0] sm:$0xff]
    %v1373 = vld [vmem:[#allocation8 + $0xfe8] sm:$0xff]
    %v1374 = vld [vmem:[#allocation8 + $0xff0] sm:$0xff]
    %v1375 = vld [vmem:[#allocation8 + $0xff8] sm:$0xff]
    %v1376 = vld [vmem:[#allocation10] sm:$0xff]
    %v1378 = vperm.slane %v1376, 0
    %v1379 = vperm.slane %v1376, 1
    %v1380 = vperm.slane %v1376, 2
    %v1381 = vperm.slane %v1376, 3
    %v1382 = vperm.slane %v1376, 4
    %v1383 = vperm.slane %v1376, 5
    %v1384 = vperm.slane %v1376, 6
    %v1385 = vperm.slane %v1376, 7
    %1394 = vmatpush.msra.mxu0 %v984
    %1395 = vmatpush.msra.mxu0 %v976
    %1396 = vmatpush.msra.mxu0 %v968
    %1397 = vmatpush.msra.mxu0 %v960
    %1398 = vmatpush.msra.mxu0 %v952
    %1399 = vmatpush.msra.mxu0 %v944
    %1400 = vmatpush.msra.mxu0 %v936
    %1401 = vmatpush.msra.mxu0 %v928
    %1402 = vmatpush.msra.mxu0 %v920
    %1403 = vmatpush.msra.mxu0 %v912
    %1404 = vmatpush.msra.mxu0 %v904
    %1405 = vmatpush.msra.mxu0 %v896
    %1406 = vmatpush.msra.mxu0 %v888
    %1407 = vmatpush.msra.mxu0 %v880
    %1408 = vmatpush.msra.mxu0 %v872
    %1409 = vmatpush.msra.mxu0 %v864
    %1410 = vmatmul.f32.gmra.mxu0 %v862
    %v1411 = vpop.f32.mrf.mxu0
    %v1412 = vadd.f32 %v1378, %v1411
    %1413 = vdwg.mxu0
    %1414 = vmatpush.msra.mxu0 %v1112
    %1415 = vmatpush.msra.mxu0 %v1104
    %1416 = vmatpush.msra.mxu0 %v1096
    %1417 = vmatpush.msra.mxu0 %v1088
    %1418 = vmatpush.msra.mxu0 %v1080
    %1419 = vmatpush.msra.mxu0 %v1072
    %1420 = vmatpush.msra.mxu0 %v1064
    %1421 = vmatpush.msra.mxu0 %v1056
    %1422 = vmatpush.msra.mxu0 %v1048
    %1423 = vmatpush.msra.mxu0 %v1040
    %1424 = vmatpush.msra.mxu0 %v1032
    %1425 = vmatpush.msra.mxu0 %v1024
    %1426 = vmatpush.msra.mxu0 %v1016
    %1427 = vmatpush.msra.mxu0 %v1008
    %1428 = vmatpush.msra.mxu0 %v1000
    %1429 = vmatpush.msra.mxu0 %v992
    %1430 = vmatmul.f32.gmra.mxu0 %v863
    %v1431 = vpop.f32.mrf.mxu0
    %v1432 = vadd.f32 %v1412, %v1431
    %1433 = vdwg.mxu0
    %1434 = vmatpush.msra.mxu0 %v1240
    %1435 = vmatpush.msra.mxu0 %v1232
    %1436 = vmatpush.msra.mxu0 %v1224
    %1437 = vmatpush.msra.mxu0 %v1216
    %1438 = vmatpush.msra.mxu0 %v1208
    %1439 = vmatpush.msra.mxu0 %v1200
    %1440 = vmatpush.msra.mxu0 %v1192
    %1441 = vmatpush.msra.mxu0 %v1184
    %1442 = vmatpush.msra.mxu0 %v1176
    %1443 = vmatpush.msra.mxu0 %v1168
    %1444 = vmatpush.msra.mxu0 %v1160
    %1445 = vmatpush.msra.mxu0 %v1152
    %1446 = vmatpush.msra.mxu0 %v1144
    %1447 = vmatpush.msra.mxu0 %v1136
    %1448 = vmatpush.msra.mxu0 %v1128
    %1449 = vmatpush.msra.mxu0 %v1120
    %1450 = vmatmul.f32.gmra.mxu0 0.0
    %v1451 = vpop.f32.mrf.mxu0
    %v1452 = vadd.f32 %v1432, %v1451
    %1453 = vdwg.mxu0
    %1454 = vmatpush.msra.mxu0 %v1368
    %1455 = vmatpush.msra.mxu0 %v1360
    %1456 = vmatpush.msra.mxu0 %v1352
    %1457 = vmatpush.msra.mxu0 %v1344
    %1458 = vmatpush.msra.mxu0 %v1336
    %1459 = vmatpush.msra.mxu0 %v1328
    %1460 = vmatpush.msra.mxu0 %v1320
    %1461 = vmatpush.msra.mxu0 %v1312
    %1462 = vmatpush.msra.mxu0 %v1304
    %1463 = vmatpush.msra.mxu0 %v1296
    %1464 = vmatpush.msra.mxu0 %v1288
    %1465 = vmatpush.msra.mxu0 %v1280
    %1466 = vmatpush.msra.mxu0 %v1272
    %1467 = vmatpush.msra.mxu0 %v1264
    %1468 = vmatpush.msra.mxu0 %v1256
    %1469 = vmatpush.msra.mxu0 %v1248
    %1470 = vmatmul.f32.gmra.mxu0 0.0
    %v1471 = vpop.f32.mrf.mxu0
    %v1472 = vadd.f32 %v1452, %v1471
    %1473 = vdwg.mxu0
    %1474 = vmatpush.msra.mxu0 %v985
    %1475 = vmatpush.msra.mxu0 %v977
    %1476 = vmatpush.msra.mxu0 %v969
    %1477 = vmatpush.msra.mxu0 %v961
    %1478 = vmatpush.msra.mxu0 %v953
    %1479 = vmatpush.msra.mxu0 %v945
    %1480 = vmatpush.msra.mxu0 %v937
    %1481 = vmatpush.msra.mxu0 %v929
    %1482 = vmatpush.msra.mxu0 %v921
    %1483 = vmatpush.msra.mxu0 %v913
    %1484 = vmatpush.msra.mxu0 %v905
    %1485 = vmatpush.msra.mxu0 %v897
    %1486 = vmatpush.msra.mxu0 %v889
    %1487 = vmatpush.msra.mxu0 %v881
    %1488 = vmatpush.msra.mxu0 %v873
    %1489 = vmatpush.msra.mxu0 %v865
    %1490 = vmatmul.f32.gmra.mxu0 %v862
    %v1491 = vpop.f32.mrf.mxu0
    %v1492 = vadd.f32 %v1379, %v1491
    %1493 = vdwg.mxu0
    %1494 = vmatpush.msra.mxu0 %v1113
    %1495 = vmatpush.msra.mxu0 %v1105
    %1496 = vmatpush.msra.mxu0 %v1097
    %1497 = vmatpush.msra.mxu0 %v1089
    %1498 = vmatpush.msra.mxu0 %v1081
    %1499 = vmatpush.msra.mxu0 %v1073
    %1500 = vmatpush.msra.mxu0 %v1065
    %1501 = vmatpush.msra.mxu0 %v1057
    %1502 = vmatpush.msra.mxu0 %v1049
    %1503 = vmatpush.msra.mxu0 %v1041
    %1504 = vmatpush.msra.mxu0 %v1033
    %1505 = vmatpush.msra.mxu0 %v1025
    %1506 = vmatpush.msra.mxu0 %v1017
    %1507 = vmatpush.msra.mxu0 %v1009
    %1508 = vmatpush.msra.mxu0 %v1001
    %1509 = vmatpush.msra.mxu0 %v993
    %1510 = vmatmul.f32.gmra.mxu0 %v863
    %v1511 = vpop.f32.mrf.mxu0
    %v1512 = vadd.f32 %v1492, %v1511
    %1513 = vdwg.mxu0
    %1514 = vmatpush.msra.mxu0 %v1241
    %1515 = vmatpush.msra.mxu0 %v1233
    %1516 = vmatpush.msra.mxu0 %v1225
    %1517 = vmatpush.msra.mxu0 %v1217
    %1518 = vmatpush.msra.mxu0 %v1209
    %1519 = vmatpush.msra.mxu0 %v1201
    %1520 = vmatpush.msra.mxu0 %v1193
    %1521 = vmatpush.msra.mxu0 %v1185
    %1522 = vmatpush.msra.mxu0 %v1177
    %1523 = vmatpush.msra.mxu0 %v1169
    %1524 = vmatpush.msra.mxu0 %v1161
    %1525 = vmatpush.msra.mxu0 %v1153
    %1526 = vmatpush.msra.mxu0 %v1145
    %1527 = vmatpush.msra.mxu0 %v1137
    %1528 = vmatpush.msra.mxu0 %v1129
    %1529 = vmatpush.msra.mxu0 %v1121
    %1530 = vmatmul.f32.gmra.mxu0 0.0
    %v1531 = vpop.f32.mrf.mxu0
    %v1532 = vadd.f32 %v1512, %v1531
    %1533 = vdwg.mxu0
    %1534 = vmatpush.msra.mxu0 %v1369
    %1535 = vmatpush.msra.mxu0 %v1361
    %1536 = vmatpush.msra.mxu0 %v1353
    %1537 = vmatpush.msra.mxu0 %v1345
    %1538 = vmatpush.msra.mxu0 %v1337
    %1539 = vmatpush.msra.mxu0 %v1329
    %1540 = vmatpush.msra.mxu0 %v1321
    %1541 = vmatpush.msra.mxu0 %v1313
    %1542 = vmatpush.msra.mxu0 %v1305
    %1543 = vmatpush.msra.mxu0 %v1297
    %1544 = vmatpush.msra.mxu0 %v1289
    %1545 = vmatpush.msra.mxu0 %v1281
    %1546 = vmatpush.msra.mxu0 %v1273
    %1547 = vmatpush.msra.mxu0 %v1265
    %1548 = vmatpush.msra.mxu0 %v1257
    %1549 = vmatpush.msra.mxu0 %v1249
    %1550 = vmatmul.f32.gmra.mxu0 0.0
    %v1551 = vpop.f32.mrf.mxu0
    %v1552 = vadd.f32 %v1532, %v1551
    %1553 = vdwg.mxu0
    %1554 = vmatpush.msra.mxu0 %v986
    %1555 = vmatpush.msra.mxu0 %v978
    %1556 = vmatpush.msra.mxu0 %v970
    %1557 = vmatpush.msra.mxu0 %v962
    %1558 = vmatpush.msra.mxu0 %v954
    %1559 = vmatpush.msra.mxu0 %v946
    %1560 = vmatpush.msra.mxu0 %v938
    %1561 = vmatpush.msra.mxu0 %v930
    %1562 = vmatpush.msra.mxu0 %v922
    %1563 = vmatpush.msra.mxu0 %v914
    %1564 = vmatpush.msra.mxu0 %v906
    %1565 = vmatpush.msra.mxu0 %v898
    %1566 = vmatpush.msra.mxu0 %v890
    %1567 = vmatpush.msra.mxu0 %v882
    %1568 = vmatpush.msra.mxu0 %v874
    %1569 = vmatpush.msra.mxu0 %v866
    %1570 = vmatmul.f32.gmra.mxu0 %v862
    %v1571 = vpop.f32.mrf.mxu0
    %v1572 = vadd.f32 %v1380, %v1571
    %1573 = vdwg.mxu0
    %1574 = vmatpush.msra.mxu0 %v1114
    %1575 = vmatpush.msra.mxu0 %v1106
    %1576 = vmatpush.msra.mxu0 %v1098
    %1577 = vmatpush.msra.mxu0 %v1090
    %1578 = vmatpush.msra.mxu0 %v1082
    %1579 = vmatpush.msra.mxu0 %v1074
    %1580 = vmatpush.msra.mxu0 %v1066
    %1581 = vmatpush.msra.mxu0 %v1058
    %1582 = vmatpush.msra.mxu0 %v1050
    %1583 = vmatpush.msra.mxu0 %v1042
    %1584 = vmatpush.msra.mxu0 %v1034
    %1585 = vmatpush.msra.mxu0 %v1026
    %1586 = vmatpush.msra.mxu0 %v1018
    %1587 = vmatpush.msra.mxu0 %v1010
    %1588 = vmatpush.msra.mxu0 %v1002
    %1589 = vmatpush.msra.mxu0 %v994
    %1590 = vmatmul.f32.gmra.mxu0 %v863
    %v1591 = vpop.f32.mrf.mxu0
    %v1592 = vadd.f32 %v1572, %v1591
    %1593 = vdwg.mxu0
    %1594 = vmatpush.msra.mxu0 %v1242
    %1595 = vmatpush.msra.mxu0 %v1234
    %1596 = vmatpush.msra.mxu0 %v1226
    %1597 = vmatpush.msra.mxu0 %v1218
    %1598 = vmatpush.msra.mxu0 %v1210
    %1599 = vmatpush.msra.mxu0 %v1202
    %1600 = vmatpush.msra.mxu0 %v1194
    %1601 = vmatpush.msra.mxu0 %v1186
    %1602 = vmatpush.msra.mxu0 %v1178
    %1603 = vmatpush.msra.mxu0 %v1170
    %1604 = vmatpush.msra.mxu0 %v1162
    %1605 = vmatpush.msra.mxu0 %v1154
    %1606 = vmatpush.msra.mxu0 %v1146
    %1607 = vmatpush.msra.mxu0 %v1138
    %1608 = vmatpush.msra.mxu0 %v1130
    %1609 = vmatpush.msra.mxu0 %v1122
    %1610 = vmatmul.f32.gmra.mxu0 0.0
    %v1611 = vpop.f32.mrf.mxu0
    %v1612 = vadd.f32 %v1592, %v1611
    %1613 = vdwg.mxu0
    %1614 = vmatpush.msra.mxu0 %v1370
    %1615 = vmatpush.msra.mxu0 %v1362
    %1616 = vmatpush.msra.mxu0 %v1354
    %1617 = vmatpush.msra.mxu0 %v1346
    %1618 = vmatpush.msra.mxu0 %v1338
    %1619 = vmatpush.msra.mxu0 %v1330
    %1620 = vmatpush.msra.mxu0 %v1322
    %1621 = vmatpush.msra.mxu0 %v1314
    %1622 = vmatpush.msra.mxu0 %v1306
    %1623 = vmatpush.msra.mxu0 %v1298
    %1624 = vmatpush.msra.mxu0 %v1290
    %1625 = vmatpush.msra.mxu0 %v1282
    %1626 = vmatpush.msra.mxu0 %v1274
    %1627 = vmatpush.msra.mxu0 %v1266
    %1628 = vmatpush.msra.mxu0 %v1258
    %1629 = vmatpush.msra.mxu0 %v1250
    %1630 = vmatmul.f32.gmra.mxu0 0.0
    %v1631 = vpop.f32.mrf.mxu0
    %v1632 = vadd.f32 %v1612, %v1631
    %1633 = vdwg.mxu0
    %1634 = vmatpush.msra.mxu0 %v987
    %1635 = vmatpush.msra.mxu0 %v979
    %1636 = vmatpush.msra.mxu0 %v971
    %1637 = vmatpush.msra.mxu0 %v963
    %1638 = vmatpush.msra.mxu0 %v955
    %1639 = vmatpush.msra.mxu0 %v947
    %1640 = vmatpush.msra.mxu0 %v939
    %1641 = vmatpush.msra.mxu0 %v931
    %1642 = vmatpush.msra.mxu0 %v923
    %1643 = vmatpush.msra.mxu0 %v915
    %1644 = vmatpush.msra.mxu0 %v907
    %1645 = vmatpush.msra.mxu0 %v899
    %1646 = vmatpush.msra.mxu0 %v891
    %1647 = vmatpush.msra.mxu0 %v883
    %1648 = vmatpush.msra.mxu0 %v875
    %1649 = vmatpush.msra.mxu0 %v867
    %1650 = vmatmul.f32.gmra.mxu0 %v862
    %v1651 = vpop.f32.mrf.mxu0
    %v1652 = vadd.f32 %v1381, %v1651
    %1653 = vdwg.mxu0
    %1654 = vmatpush.msra.mxu0 %v1115
    %1655 = vmatpush.msra.mxu0 %v1107
    %1656 = vmatpush.msra.mxu0 %v1099
    %1657 = vmatpush.msra.mxu0 %v1091
    %1658 = vmatpush.msra.mxu0 %v1083
    %1659 = vmatpush.msra.mxu0 %v1075
    %1660 = vmatpush.msra.mxu0 %v1067
    %1661 = vmatpush.msra.mxu0 %v1059
    %1662 = vmatpush.msra.mxu0 %v1051
    %1663 = vmatpush.msra.mxu0 %v1043
    %1664 = vmatpush.msra.mxu0 %v1035
    %1665 = vmatpush.msra.mxu0 %v1027
    %1666 = vmatpush.msra.mxu0 %v1019
    %1667 = vmatpush.msra.mxu0 %v1011
    %1668 = vmatpush.msra.mxu0 %v1003
    %1669 = vmatpush.msra.mxu0 %v995
    %1670 = vmatmul.f32.gmra.mxu0 %v863
    %v1671 = vpop.f32.mrf.mxu0
    %v1672 = vadd.f32 %v1652, %v1671
    %1673 = vdwg.mxu0
    %1674 = vmatpush.msra.mxu0 %v1243
    %1675 = vmatpush.msra.mxu0 %v1235
    %1676 = vmatpush.msra.mxu0 %v1227
    %1677 = vmatpush.msra.mxu0 %v1219
    %1678 = vmatpush.msra.mxu0 %v1211
    %1679 = vmatpush.msra.mxu0 %v1203
    %1680 = vmatpush.msra.mxu0 %v1195
    %1681 = vmatpush.msra.mxu0 %v1187
    %1682 = vmatpush.msra.mxu0 %v1179
    %1683 = vmatpush.msra.mxu0 %v1171
    %1684 = vmatpush.msra.mxu0 %v1163
    %1685 = vmatpush.msra.mxu0 %v1155
    %1686 = vmatpush.msra.mxu0 %v1147
    %1687 = vmatpush.msra.mxu0 %v1139
    %1688 = vmatpush.msra.mxu0 %v1131
    %1689 = vmatpush.msra.mxu0 %v1123
    %1690 = vmatmul.f32.gmra.mxu0 0.0
    %v1691 = vpop.f32.mrf.mxu0
    %v1692 = vadd.f32 %v1672, %v1691
    %1693 = vdwg.mxu0
    %1694 = vmatpush.msra.mxu0 %v1371
    %1695 = vmatpush.msra.mxu0 %v1363
    %1696 = vmatpush.msra.mxu0 %v1355
    %1697 = vmatpush.msra.mxu0 %v1347
    %1698 = vmatpush.msra.mxu0 %v1339
    %1699 = vmatpush.msra.mxu0 %v1331
    %1700 = vmatpush.msra.mxu0 %v1323
    %1701 = vmatpush.msra.mxu0 %v1315
    %1702 = vmatpush.msra.mxu0 %v1307
    %1703 = vmatpush.msra.mxu0 %v1299
    %1704 = vmatpush.msra.mxu0 %v1291
    %1705 = vmatpush.msra.mxu0 %v1283
    %1706 = vmatpush.msra.mxu0 %v1275
    %1707 = vmatpush.msra.mxu0 %v1267
    %1708 = vmatpush.msra.mxu0 %v1259
    %1709 = vmatpush.msra.mxu0 %v1251
    %1710 = vmatmul.f32.gmra.mxu0 0.0
    %v1711 = vpop.f32.mrf.mxu0
    %v1712 = vadd.f32 %v1692, %v1711
    %1713 = vdwg.mxu0
    %1714 = vmatpush.msra.mxu0 %v988
    %1715 = vmatpush.msra.mxu0 %v980
    %1716 = vmatpush.msra.mxu0 %v972
    %1717 = vmatpush.msra.mxu0 %v964
    %1718 = vmatpush.msra.mxu0 %v956
    %1719 = vmatpush.msra.mxu0 %v948
    %1720 = vmatpush.msra.mxu0 %v940
    %1721 = vmatpush.msra.mxu0 %v932
    %1722 = vmatpush.msra.mxu0 %v924
    %1723 = vmatpush.msra.mxu0 %v916
    %1724 = vmatpush.msra.mxu0 %v908
    %1725 = vmatpush.msra.mxu0 %v900
    %1726 = vmatpush.msra.mxu0 %v892
    %1727 = vmatpush.msra.mxu0 %v884
    %1728 = vmatpush.msra.mxu0 %v876
    %1729 = vmatpush.msra.mxu0 %v868
    %1730 = vmatmul.f32.gmra.mxu0 %v862
    %v1731 = vpop.f32.mrf.mxu0
    %v1732 = vadd.f32 %v1382, %v1731
    %1733 = vdwg.mxu0
    %1734 = vmatpush.msra.mxu0 %v1116
    %1735 = vmatpush.msra.mxu0 %v1108
    %1736 = vmatpush.msra.mxu0 %v1100
    %1737 = vmatpush.msra.mxu0 %v1092
    %1738 = vmatpush.msra.mxu0 %v1084
    %1739 = vmatpush.msra.mxu0 %v1076
    %1740 = vmatpush.msra.mxu0 %v1068
    %1741 = vmatpush.msra.mxu0 %v1060
    %1742 = vmatpush.msra.mxu0 %v1052
    %1743 = vmatpush.msra.mxu0 %v1044
    %1744 = vmatpush.msra.mxu0 %v1036
    %1745 = vmatpush.msra.mxu0 %v1028
    %1746 = vmatpush.msra.mxu0 %v1020
    %1747 = vmatpush.msra.mxu0 %v1012
    %1748 = vmatpush.msra.mxu0 %v1004
    %1749 = vmatpush.msra.mxu0 %v996
    %1750 = vmatmul.f32.gmra.mxu0 %v863
    %v1751 = vpop.f32.mrf.mxu0
    %v1752 = vadd.f32 %v1732, %v1751
    %1753 = vdwg.mxu0
    %1754 = vmatpush.msra.mxu0 %v1244
    %1755 = vmatpush.msra.mxu0 %v1236
    %1756 = vmatpush.msra.mxu0 %v1228
    %1757 = vmatpush.msra.mxu0 %v1220
    %1758 = vmatpush.msra.mxu0 %v1212
    %1759 = vmatpush.msra.mxu0 %v1204
    %1760 = vmatpush.msra.mxu0 %v1196
    %1761 = vmatpush.msra.mxu0 %v1188
    %1762 = vmatpush.msra.mxu0 %v1180
    %1763 = vmatpush.msra.mxu0 %v1172
    %1764 = vmatpush.msra.mxu0 %v1164
    %1765 = vmatpush.msra.mxu0 %v1156
    %1766 = vmatpush.msra.mxu0 %v1148
    %1767 = vmatpush.msra.mxu0 %v1140
    %1768 = vmatpush.msra.mxu0 %v1132
    %1769 = vmatpush.msra.mxu0 %v1124
    %1770 = vmatmul.f32.gmra.mxu0 0.0
    %v1771 = vpop.f32.mrf.mxu0
    %v1772 = vadd.f32 %v1752, %v1771
    %1773 = vdwg.mxu0
    %1774 = vmatpush.msra.mxu0 %v1372
    %1775 = vmatpush.msra.mxu0 %v1364
    %1776 = vmatpush.msra.mxu0 %v1356
    %1777 = vmatpush.msra.mxu0 %v1348
    %1778 = vmatpush.msra.mxu0 %v1340
    %1779 = vmatpush.msra.mxu0 %v1332
    %1780 = vmatpush.msra.mxu0 %v1324
    %1781 = vmatpush.msra.mxu0 %v1316
    %1782 = vmatpush.msra.mxu0 %v1308
    %1783 = vmatpush.msra.mxu0 %v1300
    %1784 = vmatpush.msra.mxu0 %v1292
    %1785 = vmatpush.msra.mxu0 %v1284
    %1786 = vmatpush.msra.mxu0 %v1276
    %1787 = vmatpush.msra.mxu0 %v1268
    %1788 = vmatpush.msra.mxu0 %v1260
    %1789 = vmatpush.msra.mxu0 %v1252
    %1790 = vmatmul.f32.gmra.mxu0 0.0
    %v1791 = vpop.f32.mrf.mxu0
    %v1792 = vadd.f32 %v1772, %v1791
    %1793 = vdwg.mxu0
    %1794 = vmatpush.msra.mxu0 %v989
    %1795 = vmatpush.msra.mxu0 %v981
    %1796 = vmatpush.msra.mxu0 %v973
    %1797 = vmatpush.msra.mxu0 %v965
    %1798 = vmatpush.msra.mxu0 %v957
    %1799 = vmatpush.msra.mxu0 %v949
    %1800 = vmatpush.msra.mxu0 %v941
    %1801 = vmatpush.msra.mxu0 %v933
    %1802 = vmatpush.msra.mxu0 %v925
    %1803 = vmatpush.msra.mxu0 %v917
    %1804 = vmatpush.msra.mxu0 %v909
    %1805 = vmatpush.msra.mxu0 %v901
    %1806 = vmatpush.msra.mxu0 %v893
    %1807 = vmatpush.msra.mxu0 %v885
    %1808 = vmatpush.msra.mxu0 %v877
    %1809 = vmatpush.msra.mxu0 %v869
    %1810 = vmatmul.f32.gmra.mxu0 %v862
    %v1811 = vpop.f32.mrf.mxu0
    %v1812 = vadd.f32 %v1383, %v1811
    %1813 = vdwg.mxu0
    %1814 = vmatpush.msra.mxu0 %v1117
    %1815 = vmatpush.msra.mxu0 %v1109
    %1816 = vmatpush.msra.mxu0 %v1101
    %1817 = vmatpush.msra.mxu0 %v1093
    %1818 = vmatpush.msra.mxu0 %v1085
    %1819 = vmatpush.msra.mxu0 %v1077
    %1820 = vmatpush.msra.mxu0 %v1069
    %1821 = vmatpush.msra.mxu0 %v1061
    %1822 = vmatpush.msra.mxu0 %v1053
    %1823 = vmatpush.msra.mxu0 %v1045
    %1824 = vmatpush.msra.mxu0 %v1037
    %1825 = vmatpush.msra.mxu0 %v1029
    %1826 = vmatpush.msra.mxu0 %v1021
    %1827 = vmatpush.msra.mxu0 %v1013
    %1828 = vmatpush.msra.mxu0 %v1005
    %1829 = vmatpush.msra.mxu0 %v997
    %1830 = vmatmul.f32.gmra.mxu0 %v863
    %v1831 = vpop.f32.mrf.mxu0
    %v1832 = vadd.f32 %v1812, %v1831
    %1833 = vdwg.mxu0
    %1834 = vmatpush.msra.mxu0 %v1245
    %1835 = vmatpush.msra.mxu0 %v1237
    %1836 = vmatpush.msra.mxu0 %v1229
    %1837 = vmatpush.msra.mxu0 %v1221
    %1838 = vmatpush.msra.mxu0 %v1213
    %1839 = vmatpush.msra.mxu0 %v1205
    %1840 = vmatpush.msra.mxu0 %v1197
    %1841 = vmatpush.msra.mxu0 %v1189
    %1842 = vmatpush.msra.mxu0 %v1181
    %1843 = vmatpush.msra.mxu0 %v1173
    %1844 = vmatpush.msra.mxu0 %v1165
    %1845 = vmatpush.msra.mxu0 %v1157
    %1846 = vmatpush.msra.mxu0 %v1149
    %1847 = vmatpush.msra.mxu0 %v1141
    %1848 = vmatpush.msra.mxu0 %v1133
    %1849 = vmatpush.msra.mxu0 %v1125
    %1850 = vmatmul.f32.gmra.mxu0 0.0
    %v1851 = vpop.f32.mrf.mxu0
    %v1852 = vadd.f32 %v1832, %v1851
    %1853 = vdwg.mxu0
    %1854 = vmatpush.msra.mxu0 %v1373
    %1855 = vmatpush.msra.mxu0 %v1365
    %1856 = vmatpush.msra.mxu0 %v1357
    %1857 = vmatpush.msra.mxu0 %v1349
    %1858 = vmatpush.msra.mxu0 %v1341
    %1859 = vmatpush.msra.mxu0 %v1333
    %1860 = vmatpush.msra.mxu0 %v1325
    %1861 = vmatpush.msra.mxu0 %v1317
    %1862 = vmatpush.msra.mxu0 %v1309
    %1863 = vmatpush.msra.mxu0 %v1301
    %1864 = vmatpush.msra.mxu0 %v1293
    %1865 = vmatpush.msra.mxu0 %v1285
    %1866 = vmatpush.msra.mxu0 %v1277
    %1867 = vmatpush.msra.mxu0 %v1269
    %1868 = vmatpush.msra.mxu0 %v1261
    %1869 = vmatpush.msra.mxu0 %v1253
    %1870 = vmatmul.f32.gmra.mxu0 0.0
    %v1871 = vpop.f32.mrf.mxu0
    %v1872 = vadd.f32 %v1852, %v1871
    %1873 = vdwg.mxu0
    %1874 = vmatpush.msra.mxu0 %v990
    %1875 = vmatpush.msra.mxu0 %v982
    %1876 = vmatpush.msra.mxu0 %v974
    %1877 = vmatpush.msra.mxu0 %v966
    %1878 = vmatpush.msra.mxu0 %v958
    %1879 = vmatpush.msra.mxu0 %v950
    %1880 = vmatpush.msra.mxu0 %v942
    %1881 = vmatpush.msra.mxu0 %v934
    %1882 = vmatpush.msra.mxu0 %v926
    %1883 = vmatpush.msra.mxu0 %v918
    %1884 = vmatpush.msra.mxu0 %v910
    %1885 = vmatpush.msra.mxu0 %v902
    %1886 = vmatpush.msra.mxu0 %v894
    %1887 = vmatpush.msra.mxu0 %v886
    %1888 = vmatpush.msra.mxu0 %v878
    %1889 = vmatpush.msra.mxu0 %v870
    %1890 = vmatmul.f32.gmra.mxu0 %v862
    %v1891 = vpop.f32.mrf.mxu0
    %v1892 = vadd.f32 %v1384, %v1891
    %1893 = vdwg.mxu0
    %1894 = vmatpush.msra.mxu0 %v1118
    %1895 = vmatpush.msra.mxu0 %v1110
    %1896 = vmatpush.msra.mxu0 %v1102
    %1897 = vmatpush.msra.mxu0 %v1094
    %1898 = vmatpush.msra.mxu0 %v1086
    %1899 = vmatpush.msra.mxu0 %v1078
    %1900 = vmatpush.msra.mxu0 %v1070
    %1901 = vmatpush.msra.mxu0 %v1062
    %1902 = vmatpush.msra.mxu0 %v1054
    %1903 = vmatpush.msra.mxu0 %v1046
    %1904 = vmatpush.msra.mxu0 %v1038
    %1905 = vmatpush.msra.mxu0 %v1030
    %1906 = vmatpush.msra.mxu0 %v1022
    %1907 = vmatpush.msra.mxu0 %v1014
    %1908 = vmatpush.msra.mxu0 %v1006
    %1909 = vmatpush.msra.mxu0 %v998
    %1910 = vmatmul.f32.gmra.mxu0 %v863
    %v1911 = vpop.f32.mrf.mxu0
    %v1912 = vadd.f32 %v1892, %v1911
    %1913 = vdwg.mxu0
    %1914 = vmatpush.msra.mxu0 %v1246
    %1915 = vmatpush.msra.mxu0 %v1238
    %1916 = vmatpush.msra.mxu0 %v1230
    %1917 = vmatpush.msra.mxu0 %v1222
    %1918 = vmatpush.msra.mxu0 %v1214
    %1919 = vmatpush.msra.mxu0 %v1206
    %1920 = vmatpush.msra.mxu0 %v1198
    %1921 = vmatpush.msra.mxu0 %v1190
    %1922 = vmatpush.msra.mxu0 %v1182
    %1923 = vmatpush.msra.mxu0 %v1174
    %1924 = vmatpush.msra.mxu0 %v1166
    %1925 = vmatpush.msra.mxu0 %v1158
    %1926 = vmatpush.msra.mxu0 %v1150
    %1927 = vmatpush.msra.mxu0 %v1142
    %1928 = vmatpush.msra.mxu0 %v1134
    %1929 = vmatpush.msra.mxu0 %v1126
    %1930 = vmatmul.f32.gmra.mxu0 0.0
    %v1931 = vpop.f32.mrf.mxu0
    %v1932 = vadd.f32 %v1912, %v1931
    %1933 = vdwg.mxu0
    %1934 = vmatpush.msra.mxu0 %v1374
    %1935 = vmatpush.msra.mxu0 %v1366
    %1936 = vmatpush.msra.mxu0 %v1358
    %1937 = vmatpush.msra.mxu0 %v1350
    %1938 = vmatpush.msra.mxu0 %v1342
    %1939 = vmatpush.msra.mxu0 %v1334
    %1940 = vmatpush.msra.mxu0 %v1326
    %1941 = vmatpush.msra.mxu0 %v1318
    %1942 = vmatpush.msra.mxu0 %v1310
    %1943 = vmatpush.msra.mxu0 %v1302
    %1944 = vmatpush.msra.mxu0 %v1294
    %1945 = vmatpush.msra.mxu0 %v1286
    %1946 = vmatpush.msra.mxu0 %v1278
    %1947 = vmatpush.msra.mxu0 %v1270
    %1948 = vmatpush.msra.mxu0 %v1262
    %1949 = vmatpush.msra.mxu0 %v1254
    %1950 = vmatmul.f32.gmra.mxu0 0.0
    %v1951 = vpop.f32.mrf.mxu0
    %v1952 = vadd.f32 %v1932, %v1951
    %1953 = vdwg.mxu0
    %1954 = vmatpush.msra.mxu0 %v991
    %1955 = vmatpush.msra.mxu0 %v983
    %1956 = vmatpush.msra.mxu0 %v975
    %1957 = vmatpush.msra.mxu0 %v967
    %1958 = vmatpush.msra.mxu0 %v959
    %1959 = vmatpush.msra.mxu0 %v951
    %1960 = vmatpush.msra.mxu0 %v943
    %1961 = vmatpush.msra.mxu0 %v935
    %1962 = vmatpush.msra.mxu0 %v927
    %1963 = vmatpush.msra.mxu0 %v919
    %1964 = vmatpush.msra.mxu0 %v911
    %1965 = vmatpush.msra.mxu0 %v903
    %1966 = vmatpush.msra.mxu0 %v895
    %1967 = vmatpush.msra.mxu0 %v887
    %1968 = vmatpush.msra.mxu0 %v879
    %1969 = vmatpush.msra.mxu0 %v871
    %1970 = vmatmul.f32.gmra.mxu0 %v862
    %v1971 = vpop.f32.mrf.mxu0
    %v1972 = vadd.f32 %v1385, %v1971
    %1973 = vdwg.mxu0
    %1974 = vmatpush.msra.mxu0 %v1119
    %1975 = vmatpush.msra.mxu0 %v1111
    %1976 = vmatpush.msra.mxu0 %v1103
    %1977 = vmatpush.msra.mxu0 %v1095
    %1978 = vmatpush.msra.mxu0 %v1087
    %1979 = vmatpush.msra.mxu0 %v1079
    %1980 = vmatpush.msra.mxu0 %v1071
    %1981 = vmatpush.msra.mxu0 %v1063
    %1982 = vmatpush.msra.mxu0 %v1055
    %1983 = vmatpush.msra.mxu0 %v1047
    %1984 = vmatpush.msra.mxu0 %v1039
    %1985 = vmatpush.msra.mxu0 %v1031
    %1986 = vmatpush.msra.mxu0 %v1023
    %1987 = vmatpush.msra.mxu0 %v1015
    %1988 = vmatpush.msra.mxu0 %v1007
    %1989 = vmatpush.msra.mxu0 %v999
    %1990 = vmatmul.f32.gmra.mxu0 %v863
    %v1991 = vpop.f32.mrf.mxu0
    %v1992 = vadd.f32 %v1972, %v1991
    %1993 = vdwg.mxu0
    %1994 = vmatpush.msra.mxu0 %v1247
    %1995 = vmatpush.msra.mxu0 %v1239
    %1996 = vmatpush.msra.mxu0 %v1231
    %1997 = vmatpush.msra.mxu0 %v1223
    %1998 = vmatpush.msra.mxu0 %v1215
    %1999 = vmatpush.msra.mxu0 %v1207
    %2000 = vmatpush.msra.mxu0 %v1199
    %2001 = vmatpush.msra.mxu0 %v1191
    %2002 = vmatpush.msra.mxu0 %v1183
    %2003 = vmatpush.msra.mxu0 %v1175
    %2004 = vmatpush.msra.mxu0 %v1167
    %2005 = vmatpush.msra.mxu0 %v1159
    %2006 = vmatpush.msra.mxu0 %v1151
    %2007 = vmatpush.msra.mxu0 %v1143
    %2008 = vmatpush.msra.mxu0 %v1135
    %2009 = vmatpush.msra.mxu0 %v1127
    %2010 = vmatmul.f32.gmra.mxu0 0.0
    %v2011 = vpop.f32.mrf.mxu0
    %v2012 = vadd.f32 %v1992, %v2011
    %2013 = vdwg.mxu0
    %2014 = vmatpush.msra.mxu0 %v1375
    %2015 = vmatpush.msra.mxu0 %v1367
    %2016 = vmatpush.msra.mxu0 %v1359
    %2017 = vmatpush.msra.mxu0 %v1351
    %2018 = vmatpush.msra.mxu0 %v1343
    %2019 = vmatpush.msra.mxu0 %v1335
    %2020 = vmatpush.msra.mxu0 %v1327
    %2021 = vmatpush.msra.mxu0 %v1319
    %2022 = vmatpush.msra.mxu0 %v1311
    %2023 = vmatpush.msra.mxu0 %v1303
    %2024 = vmatpush.msra.mxu0 %v1295
    %2025 = vmatpush.msra.mxu0 %v1287
    %2026 = vmatpush.msra.mxu0 %v1279
    %2027 = vmatpush.msra.mxu0 %v1271
    %2028 = vmatpush.msra.mxu0 %v1263
    %2029 = vmatpush.msra.mxu0 %v1255
    %2030 = vmatmul.f32.gmra.mxu0 0.0
    %v2031 = vpop.f32.mrf.mxu0
    %v2032 = vadd.f32 %v2012, %v2031
    %2033 = vdwg.mxu0
    %v2034 = vxor.u32 %v1472, 2147483648
    %v2035 = vxor.u32 %v1552, 2147483648
    %v2036 = vmul.f32 %v2034, 1.442695
    %v2037 = vpow.pop %v2036
    %v2038 = vmul.f32 %v2035, 1.442695
    %v2039 = vpow.pop %v2038
    %v2040 = vadd.f32 %v2037, 1.0
    %v2041 = vadd.f32 %v2039, 1.0
    %v2042 = vrcp.pop %v2040
    %v2043 = vmul.f32 %v2040, %v2042
    %v2044 = vsub.f32 1.0, %v2043
    %v2045 = vmul.f32 %v2042, %v2044
    %v2046 = vadd.f32 %v2042, %v2045
    %vm2047 = vweird.f32 %v2040
    %vm2048 = vweird.f32 %v2042
    %vm2049 = vmor %vm2047, %vm2048
    %v2050 = vsel %vm2049, %v2042, %v2046
    %v2051 = vand.u32 2147483647, %v2040
    %vm2052 = vcmp.eq.f32.partialorder %v2051, 8.507059e+37
    %v2053 = vand.u32 %v2040, 2147483648
    %v2054 = vor.u32 1.1754944e-38, %v2053
    %v2055 = vsel %vm2052, %v2054, %v2050
    %v2056 = vmul.f32 1.0, %v2055
    %v2057 = vrcp.pop %v2041
    %v2058 = vmul.f32 %v2041, %v2057
    %v2059 = vsub.f32 1.0, %v2058
    %v2060 = vmul.f32 %v2057, %v2059
    %v2061 = vadd.f32 %v2057, %v2060
    %vm2062 = vweird.f32 %v2041
    %vm2063 = vweird.f32 %v2057
    %vm2064 = vmor %vm2062, %vm2063
    %v2065 = vsel %vm2064, %v2057, %v2061
    %v2066 = vand.u32 2147483647, %v2041
    %vm2067 = vcmp.eq.f32.partialorder %v2066, 8.507059e+37
    %v2068 = vand.u32 %v2041, 2147483648
    %v2069 = vor.u32 1.1754944e-38, %v2068
    %v2070 = vsel %vm2067, %v2069, %v2065
    %v2071 = vmul.f32 1.0, %v2070
    %v2072 = vxor.u32 %v1632, 2147483648
    %v2073 = vxor.u32 %v1712, 2147483648
    %v2074 = vmul.f32 %v2072, 1.442695
    %v2075 = vpow.pop %v2074
    %v2076 = vmul.f32 %v2073, 1.442695
    %v2077 = vpow.pop %v2076
    %v2078 = vadd.f32 %v2075, 1.0
    %v2079 = vadd.f32 %v2077, 1.0
    %v2080 = vrcp.pop %v2078
    %v2081 = vmul.f32 %v2078, %v2080
    %v2082 = vsub.f32 1.0, %v2081
    %v2083 = vmul.f32 %v2080, %v2082
    %v2084 = vadd.f32 %v2080, %v2083
    %vm2085 = vweird.f32 %v2078
    %vm2086 = vweird.f32 %v2080
    %vm2087 = vmor %vm2085, %vm2086
    %v2088 = vsel %vm2087, %v2080, %v2084
    %v2089 = vand.u32 2147483647, %v2078
    %vm2090 = vcmp.eq.f32.partialorder %v2089, 8.507059e+37
    %v2091 = vand.u32 %v2078, 2147483648
    %v2092 = vor.u32 1.1754944e-38, %v2091
    %v2093 = vsel %vm2090, %v2092, %v2088
    %v2094 = vmul.f32 1.0, %v2093
    %v2095 = vrcp.pop %v2079
    %v2096 = vmul.f32 %v2079, %v2095
    %v2097 = vsub.f32 1.0, %v2096
    %v2098 = vmul.f32 %v2095, %v2097
    %v2099 = vadd.f32 %v2095, %v2098
    %vm2100 = vweird.f32 %v2079
    %vm2101 = vweird.f32 %v2095
    %vm2102 = vmor %vm2100, %vm2101
    %v2103 = vsel %vm2102, %v2095, %v2099
    %v2104 = vand.u32 2147483647, %v2079
    %vm2105 = vcmp.eq.f32.partialorder %v2104, 8.507059e+37
    %v2106 = vand.u32 %v2079, 2147483648
    %v2107 = vor.u32 1.1754944e-38, %v2106
    %v2108 = vsel %vm2105, %v2107, %v2103
    %v2109 = vmul.f32 1.0, %v2108
    %v2110 = vtanh.pop %v1792
    %v2111 = vtanh.pop %v1872
    %v2112 = vxor.u32 %v1952, 2147483648
    %v2113 = vxor.u32 %v2032, 2147483648
    %v2114 = vmul.f32 %v2112, 1.442695
    %v2115 = vpow.pop %v2114
    %v2116 = vmul.f32 %v2113, 1.442695
    %v2117 = vpow.pop %v2116
    %v2118 = vadd.f32 %v2115, 1.0
    %v2119 = vadd.f32 %v2117, 1.0
    %v2120 = vrcp.pop %v2118
    %v2121 = vmul.f32 %v2118, %v2120
    %v2122 = vsub.f32 1.0, %v2121
    %v2123 = vmul.f32 %v2120, %v2122
    %v2124 = vadd.f32 %v2120, %v2123
    %vm2125 = vweird.f32 %v2118
    %vm2126 = vweird.f32 %v2120
    %vm2127 = vmor %vm2125, %vm2126
    %v2128 = vsel %vm2127, %v2120, %v2124
    %v2129 = vand.u32 2147483647, %v2118
    %vm2130 = vcmp.eq.f32.partialorder %v2129, 8.507059e+37
    %v2131 = vand.u32 %v2118, 2147483648
    %v2132 = vor.u32 1.1754944e-38, %v2131
    %v2133 = vsel %vm2130, %v2132, %v2128
    %v2134 = vmul.f32 1.0, %v2133
    %v2135 = vrcp.pop %v2119
    %v2136 = vmul.f32 %v2119, %v2135
    %v2137 = vsub.f32 1.0, %v2136
    %v2138 = vmul.f32 %v2135, %v2137
    %v2139 = vadd.f32 %v2135, %v2138
    %vm2140 = vweird.f32 %v2119
    %vm2141 = vweird.f32 %v2135
    %vm2142 = vmor %vm2140, %vm2141
    %v2143 = vsel %vm2142, %v2135, %v2139
    %v2144 = vand.u32 2147483647, %v2119
    %vm2145 = vcmp.eq.f32.partialorder %v2144, 8.507059e+37
    %v2146 = vand.u32 %v2119, 2147483648
    %v2147 = vor.u32 1.1754944e-38, %v2146
    %v2148 = vsel %vm2145, %v2147, %v2143
    %v2149 = vmul.f32 1.0, %v2148
    %v2150 = vmul.f32 %v2094, 0.0
    %v2151 = vmul.f32 %v2109, 0.0
    %v2152 = vmul.f32 %v2056, %v2110
    %v2153 = vmul.f32 %v2071, %v2111
    %v2154 = vadd.f32 %v2150, %v2152
    %v2155 = vadd.f32 %v2151, %v2153
    %v2156 = vtanh.pop %v2154
    %v2157 = vtanh.pop %v2155
    %v2158 = vmul.f32 %v2134, %v2156
    %v2159 = vmul.f32 %v2149, %v2157
    %s2160 = scalar_lea.vmem %s0, 8
    %v2161 = vld [vmem:[%s2160] sm:$0xff]
    %2163 = vset.pattern.permute.xlu0 0
    %2164 = vperm.xlu0 %2163, %v2161
    %v2165 = vpop.permute.xlu0 %2164
    %v2167 = vmul.f32 %v2165, %v104
    %v2168 = vmul.f32 %v2165, %v105
    %v2169 = vmul.f32 %v2165, %v106
    %v2170 = vmul.f32 %v2165, %v107
    %v2171 = vmul.f32 %v2165, %v108
    %v2172 = vmul.f32 %v2165, %v109
    %v2173 = vmul.f32 %v2165, %v110
    %v2174 = vmul.f32 %v2165, %v111
    %v2175 = vadd.f32 %v2167, %v130
    %v2176 = vadd.f32 %v2168, %v131
    %v2177 = vadd.f32 %v2169, %v132
    %v2178 = vadd.f32 %v2170, %v133
    %v2179 = vadd.f32 %v2171, %v134
    %v2180 = vadd.f32 %v2172, %v135
    %v2181 = vadd.f32 %v2173, %v136
    %v2182 = vadd.f32 %v2174, %v137
    %2183 = vmatpush.msra.mxu0 %v274
    %2184 = vmatpush.msra.mxu0 %v266
    %2185 = vmatpush.msra.mxu0 %v258
    %2186 = vmatpush.msra.mxu0 %v250
    %2187 = vmatpush.msra.mxu0 %v242
    %2188 = vmatpush.msra.mxu0 %v234
    %2189 = vmatpush.msra.mxu0 %v226
    %2190 = vmatpush.msra.mxu0 %v218
    %2191 = vmatpush.msra.mxu0 %v210
    %2192 = vmatpush.msra.mxu0 %v202
    %2193 = vmatpush.msra.mxu0 %v194
    %2194 = vmatpush.msra.mxu0 %v186
    %2195 = vmatpush.msra.mxu0 %v178
    %2196 = vmatpush.msra.mxu0 %v170
    %2197 = vmatpush.msra.mxu0 %v162
    %2198 = vmatpush.msra.mxu0 %v154
    %2199 = vmatmul.f32.gmra.mxu0 %v862
    %v2200 = vpop.f32.mrf.mxu0
    %v2201 = vadd.f32 0.0, %v2200
    %2202 = vdwg.mxu0
    %2203 = vmatpush.msra.mxu0 %v402
    %2204 = vmatpush.msra.mxu0 %v394
    %2205 = vmatpush.msra.mxu0 %v386
    %2206 = vmatpush.msra.mxu0 %v378
    %2207 = vmatpush.msra.mxu0 %v370
    %2208 = vmatpush.msra.mxu0 %v362
    %2209 = vmatpush.msra.mxu0 %v354
    %2210 = vmatpush.msra.mxu0 %v346
    %2211 = vmatpush.msra.mxu0 %v338
    %2212 = vmatpush.msra.mxu0 %v330
    %2213 = vmatpush.msra.mxu0 %v322
    %2214 = vmatpush.msra.mxu0 %v314
    %2215 = vmatpush.msra.mxu0 %v306
    %2216 = vmatpush.msra.mxu0 %v298
    %2217 = vmatpush.msra.mxu0 %v290
    %2218 = vmatpush.msra.mxu0 %v282
    %2219 = vmatmul.f32.gmra.mxu0 %v863
    %v2220 = vpop.f32.mrf.mxu0
    %v2221 = vadd.f32 %v2201, %v2220
    %2222 = vdwg.mxu0
    %2223 = vmatpush.msra.mxu0 %v275
    %2224 = vmatpush.msra.mxu0 %v267
    %2225 = vmatpush.msra.mxu0 %v259
    %2226 = vmatpush.msra.mxu0 %v251
    %2227 = vmatpush.msra.mxu0 %v243
    %2228 = vmatpush.msra.mxu0 %v235
    %2229 = vmatpush.msra.mxu0 %v227
    %2230 = vmatpush.msra.mxu0 %v219
    %2231 = vmatpush.msra.mxu0 %v211
    %2232 = vmatpush.msra.mxu0 %v203
    %2233 = vmatpush.msra.mxu0 %v195
    %2234 = vmatpush.msra.mxu0 %v187
    %2235 = vmatpush.msra.mxu0 %v179
    %2236 = vmatpush.msra.mxu0 %v171
    %2237 = vmatpush.msra.mxu0 %v163
    %2238 = vmatpush.msra.mxu0 %v155
    %2239 = vmatmul.f32.gmra.mxu0 %v862
    %v2240 = vpop.f32.mrf.mxu0
    %v2241 = vadd.f32 0.0, %v2240
    %2242 = vdwg.mxu0
    %2243 = vmatpush.msra.mxu0 %v403
    %2244 = vmatpush.msra.mxu0 %v395
    %2245 = vmatpush.msra.mxu0 %v387
    %2246 = vmatpush.msra.mxu0 %v379
    %2247 = vmatpush.msra.mxu0 %v371
    %2248 = vmatpush.msra.mxu0 %v363
    %2249 = vmatpush.msra.mxu0 %v355
    %2250 = vmatpush.msra.mxu0 %v347
    %2251 = vmatpush.msra.mxu0 %v339
    %2252 = vmatpush.msra.mxu0 %v331
    %2253 = vmatpush.msra.mxu0 %v323
    %2254 = vmatpush.msra.mxu0 %v315
    %2255 = vmatpush.msra.mxu0 %v307
    %2256 = vmatpush.msra.mxu0 %v299
    %2257 = vmatpush.msra.mxu0 %v291
    %2258 = vmatpush.msra.mxu0 %v283
    %2259 = vmatmul.f32.gmra.mxu0 %v863
    %v2260 = vpop.f32.mrf.mxu0
    %v2261 = vadd.f32 %v2241, %v2260
    %2262 = vdwg.mxu0
    %2263 = vmatpush.msra.mxu0 %v276
    %2264 = vmatpush.msra.mxu0 %v268
    %2265 = vmatpush.msra.mxu0 %v260
    %2266 = vmatpush.msra.mxu0 %v252
    %2267 = vmatpush.msra.mxu0 %v244
    %2268 = vmatpush.msra.mxu0 %v236
    %2269 = vmatpush.msra.mxu0 %v228
    %2270 = vmatpush.msra.mxu0 %v220
    %2271 = vmatpush.msra.mxu0 %v212
    %2272 = vmatpush.msra.mxu0 %v204
    %2273 = vmatpush.msra.mxu0 %v196
    %2274 = vmatpush.msra.mxu0 %v188
    %2275 = vmatpush.msra.mxu0 %v180
    %2276 = vmatpush.msra.mxu0 %v172
    %2277 = vmatpush.msra.mxu0 %v164
    %2278 = vmatpush.msra.mxu0 %v156
    %2279 = vmatmul.f32.gmra.mxu0 %v862
    %v2280 = vpop.f32.mrf.mxu0
    %v2281 = vadd.f32 0.0, %v2280
    %2282 = vdwg.mxu0
    %2283 = vmatpush.msra.mxu0 %v404
    %2284 = vmatpush.msra.mxu0 %v396
    %2285 = vmatpush.msra.mxu0 %v388
    %2286 = vmatpush.msra.mxu0 %v380
    %2287 = vmatpush.msra.mxu0 %v372
    %2288 = vmatpush.msra.mxu0 %v364
    %2289 = vmatpush.msra.mxu0 %v356
    %2290 = vmatpush.msra.mxu0 %v348
    %2291 = vmatpush.msra.mxu0 %v340
    %2292 = vmatpush.msra.mxu0 %v332
    %2293 = vmatpush.msra.mxu0 %v324
    %2294 = vmatpush.msra.mxu0 %v316
    %2295 = vmatpush.msra.mxu0 %v308
    %2296 = vmatpush.msra.mxu0 %v300
    %2297 = vmatpush.msra.mxu0 %v292
    %2298 = vmatpush.msra.mxu0 %v284
    %2299 = vmatmul.f32.gmra.mxu0 %v863
    %v2300 = vpop.f32.mrf.mxu0
    %v2301 = vadd.f32 %v2281, %v2300
    %2302 = vdwg.mxu0
    %2303 = vmatpush.msra.mxu0 %v277
    %2304 = vmatpush.msra.mxu0 %v269
    %2305 = vmatpush.msra.mxu0 %v261
    %2306 = vmatpush.msra.mxu0 %v253
    %2307 = vmatpush.msra.mxu0 %v245
    %2308 = vmatpush.msra.mxu0 %v237
    %2309 = vmatpush.msra.mxu0 %v229
    %2310 = vmatpush.msra.mxu0 %v221
    %2311 = vmatpush.msra.mxu0 %v213
    %2312 = vmatpush.msra.mxu0 %v205
    %2313 = vmatpush.msra.mxu0 %v197
    %2314 = vmatpush.msra.mxu0 %v189
    %2315 = vmatpush.msra.mxu0 %v181
    %2316 = vmatpush.msra.mxu0 %v173
    %2317 = vmatpush.msra.mxu0 %v165
    %2318 = vmatpush.msra.mxu0 %v157
    %2319 = vmatmul.f32.gmra.mxu0 %v862
    %v2320 = vpop.f32.mrf.mxu0
    %v2321 = vadd.f32 0.0, %v2320
    %2322 = vdwg.mxu0
    %2323 = vmatpush.msra.mxu0 %v405
    %2324 = vmatpush.msra.mxu0 %v397
    %2325 = vmatpush.msra.mxu0 %v389
    %2326 = vmatpush.msra.mxu0 %v381
    %2327 = vmatpush.msra.mxu0 %v373
    %2328 = vmatpush.msra.mxu0 %v365
    %2329 = vmatpush.msra.mxu0 %v357
    %2330 = vmatpush.msra.mxu0 %v349
    %2331 = vmatpush.msra.mxu0 %v341
    %2332 = vmatpush.msra.mxu0 %v333
    %2333 = vmatpush.msra.mxu0 %v325
    %2334 = vmatpush.msra.mxu0 %v317
    %2335 = vmatpush.msra.mxu0 %v309
    %2336 = vmatpush.msra.mxu0 %v301
    %2337 = vmatpush.msra.mxu0 %v293
    %2338 = vmatpush.msra.mxu0 %v285
    %2339 = vmatmul.f32.gmra.mxu0 %v863
    %v2340 = vpop.f32.mrf.mxu0
    %v2341 = vadd.f32 %v2321, %v2340
    %2342 = vdwg.mxu0
    %2343 = vmatpush.msra.mxu0 %v278
    %2344 = vmatpush.msra.mxu0 %v270
    %2345 = vmatpush.msra.mxu0 %v262
    %2346 = vmatpush.msra.mxu0 %v254
    %2347 = vmatpush.msra.mxu0 %v246
    %2348 = vmatpush.msra.mxu0 %v238
    %2349 = vmatpush.msra.mxu0 %v230
    %2350 = vmatpush.msra.mxu0 %v222
    %2351 = vmatpush.msra.mxu0 %v214
    %2352 = vmatpush.msra.mxu0 %v206
    %2353 = vmatpush.msra.mxu0 %v198
    %2354 = vmatpush.msra.mxu0 %v190
    %2355 = vmatpush.msra.mxu0 %v182
    %2356 = vmatpush.msra.mxu0 %v174
    %2357 = vmatpush.msra.mxu0 %v166
    %2358 = vmatpush.msra.mxu0 %v158
    %2359 = vmatmul.f32.gmra.mxu0 %v862
    %v2360 = vpop.f32.mrf.mxu0
    %v2361 = vadd.f32 0.0, %v2360
    %2362 = vdwg.mxu0
    %2363 = vmatpush.msra.mxu0 %v406
    %2364 = vmatpush.msra.mxu0 %v398
    %2365 = vmatpush.msra.mxu0 %v390
    %2366 = vmatpush.msra.mxu0 %v382
    %2367 = vmatpush.msra.mxu0 %v374
    %2368 = vmatpush.msra.mxu0 %v366
    %2369 = vmatpush.msra.mxu0 %v358
    %2370 = vmatpush.msra.mxu0 %v350
    %2371 = vmatpush.msra.mxu0 %v342
    %2372 = vmatpush.msra.mxu0 %v334
    %2373 = vmatpush.msra.mxu0 %v326
    %2374 = vmatpush.msra.mxu0 %v318
    %2375 = vmatpush.msra.mxu0 %v310
    %2376 = vmatpush.msra.mxu0 %v302
    %2377 = vmatpush.msra.mxu0 %v294
    %2378 = vmatpush.msra.mxu0 %v286
    %2379 = vmatmul.f32.gmra.mxu0 %v863
    %v2380 = vpop.f32.mrf.mxu0
    %v2381 = vadd.f32 %v2361, %v2380
    %2382 = vdwg.mxu0
    %2383 = vmatpush.msra.mxu0 %v279
    %2384 = vmatpush.msra.mxu0 %v271
    %2385 = vmatpush.msra.mxu0 %v263
    %2386 = vmatpush.msra.mxu0 %v255
    %2387 = vmatpush.msra.mxu0 %v247
    %2388 = vmatpush.msra.mxu0 %v239
    %2389 = vmatpush.msra.mxu0 %v231
    %2390 = vmatpush.msra.mxu0 %v223
    %2391 = vmatpush.msra.mxu0 %v215
    %2392 = vmatpush.msra.mxu0 %v207
    %2393 = vmatpush.msra.mxu0 %v199
    %2394 = vmatpush.msra.mxu0 %v191
    %2395 = vmatpush.msra.mxu0 %v183
    %2396 = vmatpush.msra.mxu0 %v175
    %2397 = vmatpush.msra.mxu0 %v167
    %2398 = vmatpush.msra.mxu0 %v159
    %2399 = vmatmul.f32.gmra.mxu0 %v862
    %v2400 = vpop.f32.mrf.mxu0
    %v2401 = vadd.f32 0.0, %v2400
    %2402 = vdwg.mxu0
    %2403 = vmatpush.msra.mxu0 %v407
    %2404 = vmatpush.msra.mxu0 %v399
    %2405 = vmatpush.msra.mxu0 %v391
    %2406 = vmatpush.msra.mxu0 %v383
    %2407 = vmatpush.msra.mxu0 %v375
    %2408 = vmatpush.msra.mxu0 %v367
    %2409 = vmatpush.msra.mxu0 %v359
    %2410 = vmatpush.msra.mxu0 %v351
    %2411 = vmatpush.msra.mxu0 %v343
    %2412 = vmatpush.msra.mxu0 %v335
    %2413 = vmatpush.msra.mxu0 %v327
    %2414 = vmatpush.msra.mxu0 %v319
    %2415 = vmatpush.msra.mxu0 %v311
    %2416 = vmatpush.msra.mxu0 %v303
    %2417 = vmatpush.msra.mxu0 %v295
    %2418 = vmatpush.msra.mxu0 %v287
    %2419 = vmatmul.f32.gmra.mxu0 %v863
    %v2420 = vpop.f32.mrf.mxu0
    %v2421 = vadd.f32 %v2401, %v2420
    %2422 = vdwg.mxu0
    %2423 = vmatpush.msra.mxu0 %v280
    %2424 = vmatpush.msra.mxu0 %v272
    %2425 = vmatpush.msra.mxu0 %v264
    %2426 = vmatpush.msra.mxu0 %v256
    %2427 = vmatpush.msra.mxu0 %v248
    %2428 = vmatpush.msra.mxu0 %v240
    %2429 = vmatpush.msra.mxu0 %v232
    %2430 = vmatpush.msra.mxu0 %v224
    %2431 = vmatpush.msra.mxu0 %v216
    %2432 = vmatpush.msra.mxu0 %v208
    %2433 = vmatpush.msra.mxu0 %v200
    %2434 = vmatpush.msra.mxu0 %v192
    %2435 = vmatpush.msra.mxu0 %v184
    %2436 = vmatpush.msra.mxu0 %v176
    %2437 = vmatpush.msra.mxu0 %v168
    %2438 = vmatpush.msra.mxu0 %v160
    %2439 = vmatmul.f32.gmra.mxu0 %v862
    %v2440 = vpop.f32.mrf.mxu0
    %v2441 = vadd.f32 0.0, %v2440
    %2442 = vdwg.mxu0
    %2443 = vmatpush.msra.mxu0 %v408
    %2444 = vmatpush.msra.mxu0 %v400
    %2445 = vmatpush.msra.mxu0 %v392
    %2446 = vmatpush.msra.mxu0 %v384
    %2447 = vmatpush.msra.mxu0 %v376
    %2448 = vmatpush.msra.mxu0 %v368
    %2449 = vmatpush.msra.mxu0 %v360
    %2450 = vmatpush.msra.mxu0 %v352
    %2451 = vmatpush.msra.mxu0 %v344
    %2452 = vmatpush.msra.mxu0 %v336
    %2453 = vmatpush.msra.mxu0 %v328
    %2454 = vmatpush.msra.mxu0 %v320
    %2455 = vmatpush.msra.mxu0 %v312
    %2456 = vmatpush.msra.mxu0 %v304
    %2457 = vmatpush.msra.mxu0 %v296
    %2458 = vmatpush.msra.mxu0 %v288
    %2459 = vmatmul.f32.gmra.mxu0 %v863
    %v2460 = vpop.f32.mrf.mxu0
    %v2461 = vadd.f32 %v2441, %v2460
    %2462 = vdwg.mxu0
    %2463 = vmatpush.msra.mxu0 %v281
    %2464 = vmatpush.msra.mxu0 %v273
    %2465 = vmatpush.msra.mxu0 %v265
    %2466 = vmatpush.msra.mxu0 %v257
    %2467 = vmatpush.msra.mxu0 %v249
    %2468 = vmatpush.msra.mxu0 %v241
    %2469 = vmatpush.msra.mxu0 %v233
    %2470 = vmatpush.msra.mxu0 %v225
    %2471 = vmatpush.msra.mxu0 %v217
    %2472 = vmatpush.msra.mxu0 %v209
    %2473 = vmatpush.msra.mxu0 %v201
    %2474 = vmatpush.msra.mxu0 %v193
    %2475 = vmatpush.msra.mxu0 %v185
    %2476 = vmatpush.msra.mxu0 %v177
    %2477 = vmatpush.msra.mxu0 %v169
    %2478 = vmatpush.msra.mxu0 %v161
    %2479 = vmatmul.f32.gmra.mxu0 %v862
    %v2480 = vpop.f32.mrf.mxu0
    %v2481 = vadd.f32 0.0, %v2480
    %2482 = vdwg.mxu0
    %2483 = vmatpush.msra.mxu0 %v409
    %2484 = vmatpush.msra.mxu0 %v401
    %2485 = vmatpush.msra.mxu0 %v393
    %2486 = vmatpush.msra.mxu0 %v385
    %2487 = vmatpush.msra.mxu0 %v377
    %2488 = vmatpush.msra.mxu0 %v369
    %2489 = vmatpush.msra.mxu0 %v361
    %2490 = vmatpush.msra.mxu0 %v353
    %2491 = vmatpush.msra.mxu0 %v345
    %2492 = vmatpush.msra.mxu0 %v337
    %2493 = vmatpush.msra.mxu0 %v329
    %2494 = vmatpush.msra.mxu0 %v321
    %2495 = vmatpush.msra.mxu0 %v313
    %2496 = vmatpush.msra.mxu0 %v305
    %2497 = vmatpush.msra.mxu0 %v297
    %2498 = vmatpush.msra.mxu0 %v289
    %2499 = vmatmul.f32.gmra.mxu0 %v863
    %v2500 = vpop.f32.mrf.mxu0
    %v2501 = vadd.f32 %v2481, %v2500
    %2502 = vdwg.mxu0
    %v2503 = vadd.f32 %v2175, %v2221
    %v2504 = vadd.f32 %v2176, %v2261
    %v2505 = vadd.f32 %v2177, %v2301
    %v2506 = vadd.f32 %v2178, %v2341
    %v2507 = vadd.f32 %v2179, %v2381
    %v2508 = vadd.f32 %v2180, %v2421
    %v2509 = vadd.f32 %v2181, %v2461
    %v2510 = vadd.f32 %v2182, %v2501
    %v2511 = vxor.u32 %v2503, 2147483648
    %v2512 = vxor.u32 %v2504, 2147483648
    %v2513 = vmul.f32 %v2511, 1.442695
    %v2514 = vpow.pop %v2513
    %v2515 = vmul.f32 %v2512, 1.442695
    %v2516 = vpow.pop %v2515
    %v2517 = vadd.f32 %v2514, 1.0
    %v2518 = vadd.f32 %v2516, 1.0
    %v2519 = vrcp.pop %v2517
    %v2520 = vmul.f32 %v2517, %v2519
    %v2521 = vsub.f32 1.0, %v2520
    %v2522 = vmul.f32 %v2519, %v2521
    %v2523 = vadd.f32 %v2519, %v2522
    %vm2524 = vweird.f32 %v2517
    %vm2525 = vweird.f32 %v2519
    %vm2526 = vmor %vm2524, %vm2525
    %v2527 = vsel %vm2526, %v2519, %v2523
    %v2528 = vand.u32 2147483647, %v2517
    %vm2529 = vcmp.eq.f32.partialorder %v2528, 8.507059e+37
    %v2530 = vand.u32 %v2517, 2147483648
    %v2531 = vor.u32 1.1754944e-38, %v2530
    %v2532 = vsel %vm2529, %v2531, %v2527
    %v2533 = vmul.f32 1.0, %v2532
    %v2534 = vrcp.pop %v2518
    %v2535 = vmul.f32 %v2518, %v2534
    %v2536 = vsub.f32 1.0, %v2535
    %v2537 = vmul.f32 %v2534, %v2536
    %v2538 = vadd.f32 %v2534, %v2537
    %vm2539 = vweird.f32 %v2518
    %vm2540 = vweird.f32 %v2534
    %vm2541 = vmor %vm2539, %vm2540
    %v2542 = vsel %vm2541, %v2534, %v2538
    %v2543 = vand.u32 2147483647, %v2518
    %vm2544 = vcmp.eq.f32.partialorder %v2543, 8.507059e+37
    %v2545 = vand.u32 %v2518, 2147483648
    %v2546 = vor.u32 1.1754944e-38, %v2545
    %v2547 = vsel %vm2544, %v2546, %v2542
    %v2548 = vmul.f32 1.0, %v2547
    %v2549 = vxor.u32 %v2505, 2147483648
    %v2550 = vxor.u32 %v2506, 2147483648
    %v2551 = vmul.f32 %v2549, 1.442695
    %v2552 = vpow.pop %v2551
    %v2553 = vmul.f32 %v2550, 1.442695
    %v2554 = vpow.pop %v2553
    %v2555 = vadd.f32 %v2552, 1.0
    %v2556 = vadd.f32 %v2554, 1.0
    %v2557 = vrcp.pop %v2555
    %v2558 = vmul.f32 %v2555, %v2557
    %v2559 = vsub.f32 1.0, %v2558
    %v2560 = vmul.f32 %v2557, %v2559
    %v2561 = vadd.f32 %v2557, %v2560
    %vm2562 = vweird.f32 %v2555
    %vm2563 = vweird.f32 %v2557
    %vm2564 = vmor %vm2562, %vm2563
    %v2565 = vsel %vm2564, %v2557, %v2561
    %v2566 = vand.u32 2147483647, %v2555
    %vm2567 = vcmp.eq.f32.partialorder %v2566, 8.507059e+37
    %v2568 = vand.u32 %v2555, 2147483648
    %v2569 = vor.u32 1.1754944e-38, %v2568
    %v2570 = vsel %vm2567, %v2569, %v2565
    %v2571 = vmul.f32 1.0, %v2570
    %v2572 = vrcp.pop %v2556
    %v2573 = vmul.f32 %v2556, %v2572
    %v2574 = vsub.f32 1.0, %v2573
    %v2575 = vmul.f32 %v2572, %v2574
    %v2576 = vadd.f32 %v2572, %v2575
    %vm2577 = vweird.f32 %v2556
    %vm2578 = vweird.f32 %v2572
    %vm2579 = vmor %vm2577, %vm2578
    %v2580 = vsel %vm2579, %v2572, %v2576
    %v2581 = vand.u32 2147483647, %v2556
    %vm2582 = vcmp.eq.f32.partialorder %v2581, 8.507059e+37
    %v2583 = vand.u32 %v2556, 2147483648
    %v2584 = vor.u32 1.1754944e-38, %v2583
    %v2585 = vsel %vm2582, %v2584, %v2580
    %v2586 = vmul.f32 1.0, %v2585
    %v2587 = vtanh.pop %v2507
    %v2588 = vtanh.pop %v2508
    %v2589 = vxor.u32 %v2509, 2147483648
    %v2590 = vxor.u32 %v2510, 2147483648
    %v2591 = vmul.f32 %v2589, 1.442695
    %v2592 = vpow.pop %v2591
    %v2593 = vmul.f32 %v2590, 1.442695
    %v2594 = vpow.pop %v2593
    %v2595 = vadd.f32 %v2592, 1.0
    %v2596 = vadd.f32 %v2594, 1.0
    %v2597 = vrcp.pop %v2595
    %v2598 = vmul.f32 %v2595, %v2597
    %v2599 = vsub.f32 1.0, %v2598
    %v2600 = vmul.f32 %v2597, %v2599
    %v2601 = vadd.f32 %v2597, %v2600
    %vm2602 = vweird.f32 %v2595
    %vm2603 = vweird.f32 %v2597
    %vm2604 = vmor %vm2602, %vm2603
    %v2605 = vsel %vm2604, %v2597, %v2601
    %v2606 = vand.u32 2147483647, %v2595
    %vm2607 = vcmp.eq.f32.partialorder %v2606, 8.507059e+37
    %v2608 = vand.u32 %v2595, 2147483648
    %v2609 = vor.u32 1.1754944e-38, %v2608
    %v2610 = vsel %vm2607, %v2609, %v2605
    %v2611 = vmul.f32 1.0, %v2610
    %v2612 = vrcp.pop %v2596
    %v2613 = vmul.f32 %v2596, %v2612
    %v2614 = vsub.f32 1.0, %v2613
    %v2615 = vmul.f32 %v2612, %v2614
    %v2616 = vadd.f32 %v2612, %v2615
    %vm2617 = vweird.f32 %v2596
    %vm2618 = vweird.f32 %v2612
    %vm2619 = vmor %vm2617, %vm2618
    %v2620 = vsel %vm2619, %v2612, %v2616
    %v2621 = vand.u32 2147483647, %v2596
    %vm2622 = vcmp.eq.f32.partialorder %v2621, 8.507059e+37
    %v2623 = vand.u32 %v2596, 2147483648
    %v2624 = vor.u32 1.1754944e-38, %v2623
    %v2625 = vsel %vm2622, %v2624, %v2620
    %v2626 = vmul.f32 1.0, %v2625
    %v2627 = vmul.f32 %v2571, %v858
    %v2628 = vmul.f32 %v2586, %v859
    %v2629 = vmul.f32 %v2533, %v2587
    %v2630 = vmul.f32 %v2548, %v2588
    %v2631 = vadd.f32 %v2627, %v2629
    %v2632 = vadd.f32 %v2628, %v2630
    %v2633 = vtanh.pop %v2631
    %v2634 = vtanh.pop %v2632
    %v2635 = vmul.f32 %v2611, %v2633
    %v2636 = vmul.f32 %v2626, %v2634
    %2637 = vmatpush.msra.mxu0 %v984
    %2638 = vmatpush.msra.mxu0 %v976
    %2639 = vmatpush.msra.mxu0 %v968
    %2640 = vmatpush.msra.mxu0 %v960
    %2641 = vmatpush.msra.mxu0 %v952
    %2642 = vmatpush.msra.mxu0 %v944
    %2643 = vmatpush.msra.mxu0 %v936
    %2644 = vmatpush.msra.mxu0 %v928
    %2645 = vmatpush.msra.mxu0 %v920
    %2646 = vmatpush.msra.mxu0 %v912
    %2647 = vmatpush.msra.mxu0 %v904
    %2648 = vmatpush.msra.mxu0 %v896
    %2649 = vmatpush.msra.mxu0 %v888
    %2650 = vmatpush.msra.mxu0 %v880
    %2651 = vmatpush.msra.mxu0 %v872
    %2652 = vmatpush.msra.mxu0 %v864
    %2653 = vmatmul.f32.gmra.mxu0 %v2635
    %v2654 = vpop.f32.mrf.mxu0
    %v2655 = vadd.f32 %v1378, %v2654
    %2656 = vdwg.mxu0
    %2657 = vmatpush.msra.mxu0 %v1112
    %2658 = vmatpush.msra.mxu0 %v1104
    %2659 = vmatpush.msra.mxu0 %v1096
    %2660 = vmatpush.msra.mxu0 %v1088
    %2661 = vmatpush.msra.mxu0 %v1080
    %2662 = vmatpush.msra.mxu0 %v1072
    %2663 = vmatpush.msra.mxu0 %v1064
    %2664 = vmatpush.msra.mxu0 %v1056
    %2665 = vmatpush.msra.mxu0 %v1048
    %2666 = vmatpush.msra.mxu0 %v1040
    %2667 = vmatpush.msra.mxu0 %v1032
    %2668 = vmatpush.msra.mxu0 %v1024
    %2669 = vmatpush.msra.mxu0 %v1016
    %2670 = vmatpush.msra.mxu0 %v1008
    %2671 = vmatpush.msra.mxu0 %v1000
    %2672 = vmatpush.msra.mxu0 %v992
    %2673 = vmatmul.f32.gmra.mxu0 %v2636
    %v2674 = vpop.f32.mrf.mxu0
    %v2675 = vadd.f32 %v2655, %v2674
    %2676 = vdwg.mxu0
    %2677 = vmatpush.msra.mxu0 %v1240
    %2678 = vmatpush.msra.mxu0 %v1232
    %2679 = vmatpush.msra.mxu0 %v1224
    %2680 = vmatpush.msra.mxu0 %v1216
    %2681 = vmatpush.msra.mxu0 %v1208
    %2682 = vmatpush.msra.mxu0 %v1200
    %2683 = vmatpush.msra.mxu0 %v1192
    %2684 = vmatpush.msra.mxu0 %v1184
    %2685 = vmatpush.msra.mxu0 %v1176
    %2686 = vmatpush.msra.mxu0 %v1168
    %2687 = vmatpush.msra.mxu0 %v1160
    %2688 = vmatpush.msra.mxu0 %v1152
    %2689 = vmatpush.msra.mxu0 %v1144
    %2690 = vmatpush.msra.mxu0 %v1136
    %2691 = vmatpush.msra.mxu0 %v1128
    %2692 = vmatpush.msra.mxu0 %v1120
    %2693 = vmatmul.f32.gmra.mxu0 %v2158
    %v2694 = vpop.f32.mrf.mxu0
    %v2695 = vadd.f32 %v2675, %v2694
    %2696 = vdwg.mxu0
    %2697 = vmatpush.msra.mxu0 %v1368
    %2698 = vmatpush.msra.mxu0 %v1360
    %2699 = vmatpush.msra.mxu0 %v1352
    %2700 = vmatpush.msra.mxu0 %v1344
    %2701 = vmatpush.msra.mxu0 %v1336
    %2702 = vmatpush.msra.mxu0 %v1328
    %2703 = vmatpush.msra.mxu0 %v1320
    %2704 = vmatpush.msra.mxu0 %v1312
    %2705 = vmatpush.msra.mxu0 %v1304
    %2706 = vmatpush.msra.mxu0 %v1296
    %2707 = vmatpush.msra.mxu0 %v1288
    %2708 = vmatpush.msra.mxu0 %v1280
    %2709 = vmatpush.msra.mxu0 %v1272
    %2710 = vmatpush.msra.mxu0 %v1264
    %2711 = vmatpush.msra.mxu0 %v1256
    %2712 = vmatpush.msra.mxu0 %v1248
    %2713 = vmatmul.f32.gmra.mxu0 %v2159
    %v2714 = vpop.f32.mrf.mxu0
    %v2715 = vadd.f32 %v2695, %v2714
    %2716 = vdwg.mxu0
    %2717 = vmatpush.msra.mxu0 %v985
    %2718 = vmatpush.msra.mxu0 %v977
    %2719 = vmatpush.msra.mxu0 %v969
    %2720 = vmatpush.msra.mxu0 %v961
    %2721 = vmatpush.msra.mxu0 %v953
    %2722 = vmatpush.msra.mxu0 %v945
    %2723 = vmatpush.msra.mxu0 %v937
    %2724 = vmatpush.msra.mxu0 %v929
    %2725 = vmatpush.msra.mxu0 %v921
    %2726 = vmatpush.msra.mxu0 %v913
    %2727 = vmatpush.msra.mxu0 %v905
    %2728 = vmatpush.msra.mxu0 %v897
    %2729 = vmatpush.msra.mxu0 %v889
    %2730 = vmatpush.msra.mxu0 %v881
    %2731 = vmatpush.msra.mxu0 %v873
    %2732 = vmatpush.msra.mxu0 %v865
    %2733 = vmatmul.f32.gmra.mxu0 %v2635
    %v2734 = vpop.f32.mrf.mxu0
    %v2735 = vadd.f32 %v1379, %v2734
    %2736 = vdwg.mxu0
    %2737 = vmatpush.msra.mxu0 %v1113
    %2738 = vmatpush.msra.mxu0 %v1105
    %2739 = vmatpush.msra.mxu0 %v1097
    %2740 = vmatpush.msra.mxu0 %v1089
    %2741 = vmatpush.msra.mxu0 %v1081
    %2742 = vmatpush.msra.mxu0 %v1073
    %2743 = vmatpush.msra.mxu0 %v1065
    %2744 = vmatpush.msra.mxu0 %v1057
    %2745 = vmatpush.msra.mxu0 %v1049
    %2746 = vmatpush.msra.mxu0 %v1041
    %2747 = vmatpush.msra.mxu0 %v1033
    %2748 = vmatpush.msra.mxu0 %v1025
    %2749 = vmatpush.msra.mxu0 %v1017
    %2750 = vmatpush.msra.mxu0 %v1009
    %2751 = vmatpush.msra.mxu0 %v1001
    %2752 = vmatpush.msra.mxu0 %v993
    %2753 = vmatmul.f32.gmra.mxu0 %v2636
    %v2754 = vpop.f32.mrf.mxu0
    %v2755 = vadd.f32 %v2735, %v2754
    %2756 = vdwg.mxu0
    %2757 = vmatpush.msra.mxu0 %v1241
    %2758 = vmatpush.msra.mxu0 %v1233
    %2759 = vmatpush.msra.mxu0 %v1225
    %2760 = vmatpush.msra.mxu0 %v1217
    %2761 = vmatpush.msra.mxu0 %v1209
    %2762 = vmatpush.msra.mxu0 %v1201
    %2763 = vmatpush.msra.mxu0 %v1193
    %2764 = vmatpush.msra.mxu0 %v1185
    %2765 = vmatpush.msra.mxu0 %v1177
    %2766 = vmatpush.msra.mxu0 %v1169
    %2767 = vmatpush.msra.mxu0 %v1161
    %2768 = vmatpush.msra.mxu0 %v1153
    %2769 = vmatpush.msra.mxu0 %v1145
    %2770 = vmatpush.msra.mxu0 %v1137
    %2771 = vmatpush.msra.mxu0 %v1129
    %2772 = vmatpush.msra.mxu0 %v1121
    %2773 = vmatmul.f32.gmra.mxu0 %v2158
    %v2774 = vpop.f32.mrf.mxu0
    %v2775 = vadd.f32 %v2755, %v2774
    %2776 = vdwg.mxu0
    %2777 = vmatpush.msra.mxu0 %v1369
    %2778 = vmatpush.msra.mxu0 %v1361
    %2779 = vmatpush.msra.mxu0 %v1353
    %2780 = vmatpush.msra.mxu0 %v1345
    %2781 = vmatpush.msra.mxu0 %v1337
    %2782 = vmatpush.msra.mxu0 %v1329
    %2783 = vmatpush.msra.mxu0 %v1321
    %2784 = vmatpush.msra.mxu0 %v1313
    %2785 = vmatpush.msra.mxu0 %v1305
    %2786 = vmatpush.msra.mxu0 %v1297
    %2787 = vmatpush.msra.mxu0 %v1289
    %2788 = vmatpush.msra.mxu0 %v1281
    %2789 = vmatpush.msra.mxu0 %v1273
    %2790 = vmatpush.msra.mxu0 %v1265
    %2791 = vmatpush.msra.mxu0 %v1257
    %2792 = vmatpush.msra.mxu0 %v1249
    %2793 = vmatmul.f32.gmra.mxu0 %v2159
    %v2794 = vpop.f32.mrf.mxu0
    %v2795 = vadd.f32 %v2775, %v2794
    %2796 = vdwg.mxu0
    %2797 = vmatpush.msra.mxu0 %v986
    %2798 = vmatpush.msra.mxu0 %v978
    %2799 = vmatpush.msra.mxu0 %v970
    %2800 = vmatpush.msra.mxu0 %v962
    %2801 = vmatpush.msra.mxu0 %v954
    %2802 = vmatpush.msra.mxu0 %v946
    %2803 = vmatpush.msra.mxu0 %v938
    %2804 = vmatpush.msra.mxu0 %v930
    %2805 = vmatpush.msra.mxu0 %v922
    %2806 = vmatpush.msra.mxu0 %v914
    %2807 = vmatpush.msra.mxu0 %v906
    %2808 = vmatpush.msra.mxu0 %v898
    %2809 = vmatpush.msra.mxu0 %v890
    %2810 = vmatpush.msra.mxu0 %v882
    %2811 = vmatpush.msra.mxu0 %v874
    %2812 = vmatpush.msra.mxu0 %v866
    %2813 = vmatmul.f32.gmra.mxu0 %v2635
    %v2814 = vpop.f32.mrf.mxu0
    %v2815 = vadd.f32 %v1380, %v2814
    %2816 = vdwg.mxu0
    %2817 = vmatpush.msra.mxu0 %v1114
    %2818 = vmatpush.msra.mxu0 %v1106
    %2819 = vmatpush.msra.mxu0 %v1098
    %2820 = vmatpush.msra.mxu0 %v1090
    %2821 = vmatpush.msra.mxu0 %v1082
    %2822 = vmatpush.msra.mxu0 %v1074
    %2823 = vmatpush.msra.mxu0 %v1066
    %2824 = vmatpush.msra.mxu0 %v1058
    %2825 = vmatpush.msra.mxu0 %v1050
    %2826 = vmatpush.msra.mxu0 %v1042
    %2827 = vmatpush.msra.mxu0 %v1034
    %2828 = vmatpush.msra.mxu0 %v1026
    %2829 = vmatpush.msra.mxu0 %v1018
    %2830 = vmatpush.msra.mxu0 %v1010
    %2831 = vmatpush.msra.mxu0 %v1002
    %2832 = vmatpush.msra.mxu0 %v994
    %2833 = vmatmul.f32.gmra.mxu0 %v2636
    %v2834 = vpop.f32.mrf.mxu0
    %v2835 = vadd.f32 %v2815, %v2834
    %2836 = vdwg.mxu0
    %2837 = vmatpush.msra.mxu0 %v1242
    %2838 = vmatpush.msra.mxu0 %v1234
    %2839 = vmatpush.msra.mxu0 %v1226
    %2840 = vmatpush.msra.mxu0 %v1218
    %2841 = vmatpush.msra.mxu0 %v1210
    %2842 = vmatpush.msra.mxu0 %v1202
    %2843 = vmatpush.msra.mxu0 %v1194
    %2844 = vmatpush.msra.mxu0 %v1186
    %2845 = vmatpush.msra.mxu0 %v1178
    %2846 = vmatpush.msra.mxu0 %v1170
    %2847 = vmatpush.msra.mxu0 %v1162
    %2848 = vmatpush.msra.mxu0 %v1154
    %2849 = vmatpush.msra.mxu0 %v1146
    %2850 = vmatpush.msra.mxu0 %v1138
    %2851 = vmatpush.msra.mxu0 %v1130
    %2852 = vmatpush.msra.mxu0 %v1122
    %2853 = vmatmul.f32.gmra.mxu0 %v2158
    %v2854 = vpop.f32.mrf.mxu0
    %v2855 = vadd.f32 %v2835, %v2854
    %2856 = vdwg.mxu0
    %2857 = vmatpush.msra.mxu0 %v1370
    %2858 = vmatpush.msra.mxu0 %v1362
    %2859 = vmatpush.msra.mxu0 %v1354
    %2860 = vmatpush.msra.mxu0 %v1346
    %2861 = vmatpush.msra.mxu0 %v1338
    %2862 = vmatpush.msra.mxu0 %v1330
    %2863 = vmatpush.msra.mxu0 %v1322
    %2864 = vmatpush.msra.mxu0 %v1314
    %2865 = vmatpush.msra.mxu0 %v1306
    %2866 = vmatpush.msra.mxu0 %v1298
    %2867 = vmatpush.msra.mxu0 %v1290
    %2868 = vmatpush.msra.mxu0 %v1282
    %2869 = vmatpush.msra.mxu0 %v1274
    %2870 = vmatpush.msra.mxu0 %v1266
    %2871 = vmatpush.msra.mxu0 %v1258
    %2872 = vmatpush.msra.mxu0 %v1250
    %2873 = vmatmul.f32.gmra.mxu0 %v2159
    %v2874 = vpop.f32.mrf.mxu0
    %v2875 = vadd.f32 %v2855, %v2874
    %2876 = vdwg.mxu0
    %2877 = vmatpush.msra.mxu0 %v987
    %2878 = vmatpush.msra.mxu0 %v979
    %2879 = vmatpush.msra.mxu0 %v971
    %2880 = vmatpush.msra.mxu0 %v963
    %2881 = vmatpush.msra.mxu0 %v955
    %2882 = vmatpush.msra.mxu0 %v947
    %2883 = vmatpush.msra.mxu0 %v939
    %2884 = vmatpush.msra.mxu0 %v931
    %2885 = vmatpush.msra.mxu0 %v923
    %2886 = vmatpush.msra.mxu0 %v915
    %2887 = vmatpush.msra.mxu0 %v907
    %2888 = vmatpush.msra.mxu0 %v899
    %2889 = vmatpush.msra.mxu0 %v891
    %2890 = vmatpush.msra.mxu0 %v883
    %2891 = vmatpush.msra.mxu0 %v875
    %2892 = vmatpush.msra.mxu0 %v867
    %2893 = vmatmul.f32.gmra.mxu0 %v2635
    %v2894 = vpop.f32.mrf.mxu0
    %v2895 = vadd.f32 %v1381, %v2894
    %2896 = vdwg.mxu0
    %2897 = vmatpush.msra.mxu0 %v1115
    %2898 = vmatpush.msra.mxu0 %v1107
    %2899 = vmatpush.msra.mxu0 %v1099
    %2900 = vmatpush.msra.mxu0 %v1091
    %2901 = vmatpush.msra.mxu0 %v1083
    %2902 = vmatpush.msra.mxu0 %v1075
    %2903 = vmatpush.msra.mxu0 %v1067
    %2904 = vmatpush.msra.mxu0 %v1059
    %2905 = vmatpush.msra.mxu0 %v1051
    %2906 = vmatpush.msra.mxu0 %v1043
    %2907 = vmatpush.msra.mxu0 %v1035
    %2908 = vmatpush.msra.mxu0 %v1027
    %2909 = vmatpush.msra.mxu0 %v1019
    %2910 = vmatpush.msra.mxu0 %v1011
    %2911 = vmatpush.msra.mxu0 %v1003
    %2912 = vmatpush.msra.mxu0 %v995
    %2913 = vmatmul.f32.gmra.mxu0 %v2636
    %v2914 = vpop.f32.mrf.mxu0
    %v2915 = vadd.f32 %v2895, %v2914
    %2916 = vdwg.mxu0
    %2917 = vmatpush.msra.mxu0 %v1243
    %2918 = vmatpush.msra.mxu0 %v1235
    %2919 = vmatpush.msra.mxu0 %v1227
    %2920 = vmatpush.msra.mxu0 %v1219
    %2921 = vmatpush.msra.mxu0 %v1211
    %2922 = vmatpush.msra.mxu0 %v1203
    %2923 = vmatpush.msra.mxu0 %v1195
    %2924 = vmatpush.msra.mxu0 %v1187
    %2925 = vmatpush.msra.mxu0 %v1179
    %2926 = vmatpush.msra.mxu0 %v1171
    %2927 = vmatpush.msra.mxu0 %v1163
    %2928 = vmatpush.msra.mxu0 %v1155
    %2929 = vmatpush.msra.mxu0 %v1147
    %2930 = vmatpush.msra.mxu0 %v1139
    %2931 = vmatpush.msra.mxu0 %v1131
    %2932 = vmatpush.msra.mxu0 %v1123
    %2933 = vmatmul.f32.gmra.mxu0 %v2158
    %v2934 = vpop.f32.mrf.mxu0
    %v2935 = vadd.f32 %v2915, %v2934
    %2936 = vdwg.mxu0
    %2937 = vmatpush.msra.mxu0 %v1371
    %2938 = vmatpush.msra.mxu0 %v1363
    %2939 = vmatpush.msra.mxu0 %v1355
    %2940 = vmatpush.msra.mxu0 %v1347
    %2941 = vmatpush.msra.mxu0 %v1339
    %2942 = vmatpush.msra.mxu0 %v1331
    %2943 = vmatpush.msra.mxu0 %v1323
    %2944 = vmatpush.msra.mxu0 %v1315
    %2945 = vmatpush.msra.mxu0 %v1307
    %2946 = vmatpush.msra.mxu0 %v1299
    %2947 = vmatpush.msra.mxu0 %v1291
    %2948 = vmatpush.msra.mxu0 %v1283
    %2949 = vmatpush.msra.mxu0 %v1275
    %2950 = vmatpush.msra.mxu0 %v1267
    %2951 = vmatpush.msra.mxu0 %v1259
    %2952 = vmatpush.msra.mxu0 %v1251
    %2953 = vmatmul.f32.gmra.mxu0 %v2159
    %v2954 = vpop.f32.mrf.mxu0
    %v2955 = vadd.f32 %v2935, %v2954
    %2956 = vdwg.mxu0
    %2957 = vmatpush.msra.mxu0 %v988
    %2958 = vmatpush.msra.mxu0 %v980
    %2959 = vmatpush.msra.mxu0 %v972
    %2960 = vmatpush.msra.mxu0 %v964
    %2961 = vmatpush.msra.mxu0 %v956
    %2962 = vmatpush.msra.mxu0 %v948
    %2963 = vmatpush.msra.mxu0 %v940
    %2964 = vmatpush.msra.mxu0 %v932
    %2965 = vmatpush.msra.mxu0 %v924
    %2966 = vmatpush.msra.mxu0 %v916
    %2967 = vmatpush.msra.mxu0 %v908
    %2968 = vmatpush.msra.mxu0 %v900
    %2969 = vmatpush.msra.mxu0 %v892
    %2970 = vmatpush.msra.mxu0 %v884
    %2971 = vmatpush.msra.mxu0 %v876
    %2972 = vmatpush.msra.mxu0 %v868
    %2973 = vmatmul.f32.gmra.mxu0 %v2635
    %v2974 = vpop.f32.mrf.mxu0
    %v2975 = vadd.f32 %v1382, %v2974
    %2976 = vdwg.mxu0
    %2977 = vmatpush.msra.mxu0 %v1116
    %2978 = vmatpush.msra.mxu0 %v1108
    %2979 = vmatpush.msra.mxu0 %v1100
    %2980 = vmatpush.msra.mxu0 %v1092
    %2981 = vmatpush.msra.mxu0 %v1084
    %2982 = vmatpush.msra.mxu0 %v1076
    %2983 = vmatpush.msra.mxu0 %v1068
    %2984 = vmatpush.msra.mxu0 %v1060
    %2985 = vmatpush.msra.mxu0 %v1052
    %2986 = vmatpush.msra.mxu0 %v1044
    %2987 = vmatpush.msra.mxu0 %v1036
    %2988 = vmatpush.msra.mxu0 %v1028
    %2989 = vmatpush.msra.mxu0 %v1020
    %2990 = vmatpush.msra.mxu0 %v1012
    %2991 = vmatpush.msra.mxu0 %v1004
    %2992 = vmatpush.msra.mxu0 %v996
    %2993 = vmatmul.f32.gmra.mxu0 %v2636
    %v2994 = vpop.f32.mrf.mxu0
    %v2995 = vadd.f32 %v2975, %v2994
    %2996 = vdwg.mxu0
    %2997 = vmatpush.msra.mxu0 %v1244
    %2998 = vmatpush.msra.mxu0 %v1236
    %2999 = vmatpush.msra.mxu0 %v1228
    %3000 = vmatpush.msra.mxu0 %v1220
    %3001 = vmatpush.msra.mxu0 %v1212
    %3002 = vmatpush.msra.mxu0 %v1204
    %3003 = vmatpush.msra.mxu0 %v1196
    %3004 = vmatpush.msra.mxu0 %v1188
    %3005 = vmatpush.msra.mxu0 %v1180
    %3006 = vmatpush.msra.mxu0 %v1172
    %3007 = vmatpush.msra.mxu0 %v1164
    %3008 = vmatpush.msra.mxu0 %v1156
    %3009 = vmatpush.msra.mxu0 %v1148
    %3010 = vmatpush.msra.mxu0 %v1140
    %3011 = vmatpush.msra.mxu0 %v1132
    %3012 = vmatpush.msra.mxu0 %v1124
    %3013 = vmatmul.f32.gmra.mxu0 %v2158
    %v3014 = vpop.f32.mrf.mxu0
    %v3015 = vadd.f32 %v2995, %v3014
    %3016 = vdwg.mxu0
    %3017 = vmatpush.msra.mxu0 %v1372
    %3018 = vmatpush.msra.mxu0 %v1364
    %3019 = vmatpush.msra.mxu0 %v1356
    %3020 = vmatpush.msra.mxu0 %v1348
    %3021 = vmatpush.msra.mxu0 %v1340
    %3022 = vmatpush.msra.mxu0 %v1332
    %3023 = vmatpush.msra.mxu0 %v1324
    %3024 = vmatpush.msra.mxu0 %v1316
    %3025 = vmatpush.msra.mxu0 %v1308
    %3026 = vmatpush.msra.mxu0 %v1300
    %3027 = vmatpush.msra.mxu0 %v1292
    %3028 = vmatpush.msra.mxu0 %v1284
    %3029 = vmatpush.msra.mxu0 %v1276
    %3030 = vmatpush.msra.mxu0 %v1268
    %3031 = vmatpush.msra.mxu0 %v1260
    %3032 = vmatpush.msra.mxu0 %v1252
    %3033 = vmatmul.f32.gmra.mxu0 %v2159
    %v3034 = vpop.f32.mrf.mxu0
    %v3035 = vadd.f32 %v3015, %v3034
    %3036 = vdwg.mxu0
    %3037 = vmatpush.msra.mxu0 %v989
    %3038 = vmatpush.msra.mxu0 %v981
    %3039 = vmatpush.msra.mxu0 %v973
    %3040 = vmatpush.msra.mxu0 %v965
    %3041 = vmatpush.msra.mxu0 %v957
    %3042 = vmatpush.msra.mxu0 %v949
    %3043 = vmatpush.msra.mxu0 %v941
    %3044 = vmatpush.msra.mxu0 %v933
    %3045 = vmatpush.msra.mxu0 %v925
    %3046 = vmatpush.msra.mxu0 %v917
    %3047 = vmatpush.msra.mxu0 %v909
    %3048 = vmatpush.msra.mxu0 %v901
    %3049 = vmatpush.msra.mxu0 %v893
    %3050 = vmatpush.msra.mxu0 %v885
    %3051 = vmatpush.msra.mxu0 %v877
    %3052 = vmatpush.msra.mxu0 %v869
    %3053 = vmatmul.f32.gmra.mxu0 %v2635
    %v3054 = vpop.f32.mrf.mxu0
    %v3055 = vadd.f32 %v1383, %v3054
    %3056 = vdwg.mxu0
    %3057 = vmatpush.msra.mxu0 %v1117
    %3058 = vmatpush.msra.mxu0 %v1109
    %3059 = vmatpush.msra.mxu0 %v1101
    %3060 = vmatpush.msra.mxu0 %v1093
    %3061 = vmatpush.msra.mxu0 %v1085
    %3062 = vmatpush.msra.mxu0 %v1077
    %3063 = vmatpush.msra.mxu0 %v1069
    %3064 = vmatpush.msra.mxu0 %v1061
    %3065 = vmatpush.msra.mxu0 %v1053
    %3066 = vmatpush.msra.mxu0 %v1045
    %3067 = vmatpush.msra.mxu0 %v1037
    %3068 = vmatpush.msra.mxu0 %v1029
    %3069 = vmatpush.msra.mxu0 %v1021
    %3070 = vmatpush.msra.mxu0 %v1013
    %3071 = vmatpush.msra.mxu0 %v1005
    %3072 = vmatpush.msra.mxu0 %v997
    %3073 = vmatmul.f32.gmra.mxu0 %v2636
    %v3074 = vpop.f32.mrf.mxu0
    %v3075 = vadd.f32 %v3055, %v3074
    %3076 = vdwg.mxu0
    %3077 = vmatpush.msra.mxu0 %v1245
    %3078 = vmatpush.msra.mxu0 %v1237
    %3079 = vmatpush.msra.mxu0 %v1229
    %3080 = vmatpush.msra.mxu0 %v1221
    %3081 = vmatpush.msra.mxu0 %v1213
    %3082 = vmatpush.msra.mxu0 %v1205
    %3083 = vmatpush.msra.mxu0 %v1197
    %3084 = vmatpush.msra.mxu0 %v1189
    %3085 = vmatpush.msra.mxu0 %v1181
    %3086 = vmatpush.msra.mxu0 %v1173
    %3087 = vmatpush.msra.mxu0 %v1165
    %3088 = vmatpush.msra.mxu0 %v1157
    %3089 = vmatpush.msra.mxu0 %v1149
    %3090 = vmatpush.msra.mxu0 %v1141
    %3091 = vmatpush.msra.mxu0 %v1133
    %3092 = vmatpush.msra.mxu0 %v1125
    %3093 = vmatmul.f32.gmra.mxu0 %v2158
    %v3094 = vpop.f32.mrf.mxu0
    %v3095 = vadd.f32 %v3075, %v3094
    %3096 = vdwg.mxu0
    %3097 = vmatpush.msra.mxu0 %v1373
    %3098 = vmatpush.msra.mxu0 %v1365
    %3099 = vmatpush.msra.mxu0 %v1357
    %3100 = vmatpush.msra.mxu0 %v1349
    %3101 = vmatpush.msra.mxu0 %v1341
    %3102 = vmatpush.msra.mxu0 %v1333
    %3103 = vmatpush.msra.mxu0 %v1325
    %3104 = vmatpush.msra.mxu0 %v1317
    %3105 = vmatpush.msra.mxu0 %v1309
    %3106 = vmatpush.msra.mxu0 %v1301
    %3107 = vmatpush.msra.mxu0 %v1293
    %3108 = vmatpush.msra.mxu0 %v1285
    %3109 = vmatpush.msra.mxu0 %v1277
    %3110 = vmatpush.msra.mxu0 %v1269
    %3111 = vmatpush.msra.mxu0 %v1261
    %3112 = vmatpush.msra.mxu0 %v1253
    %3113 = vmatmul.f32.gmra.mxu0 %v2159
    %v3114 = vpop.f32.mrf.mxu0
    %v3115 = vadd.f32 %v3095, %v3114
    %3116 = vdwg.mxu0
    %3117 = vmatpush.msra.mxu0 %v990
    %3118 = vmatpush.msra.mxu0 %v982
    %3119 = vmatpush.msra.mxu0 %v974
    %3120 = vmatpush.msra.mxu0 %v966
    %3121 = vmatpush.msra.mxu0 %v958
    %3122 = vmatpush.msra.mxu0 %v950
    %3123 = vmatpush.msra.mxu0 %v942
    %3124 = vmatpush.msra.mxu0 %v934
    %3125 = vmatpush.msra.mxu0 %v926
    %3126 = vmatpush.msra.mxu0 %v918
    %3127 = vmatpush.msra.mxu0 %v910
    %3128 = vmatpush.msra.mxu0 %v902
    %3129 = vmatpush.msra.mxu0 %v894
    %3130 = vmatpush.msra.mxu0 %v886
    %3131 = vmatpush.msra.mxu0 %v878
    %3132 = vmatpush.msra.mxu0 %v870
    %3133 = vmatmul.f32.gmra.mxu0 %v2635
    %v3134 = vpop.f32.mrf.mxu0
    %v3135 = vadd.f32 %v1384, %v3134
    %3136 = vdwg.mxu0
    %3137 = vmatpush.msra.mxu0 %v1118
    %3138 = vmatpush.msra.mxu0 %v1110
    %3139 = vmatpush.msra.mxu0 %v1102
    %3140 = vmatpush.msra.mxu0 %v1094
    %3141 = vmatpush.msra.mxu0 %v1086
    %3142 = vmatpush.msra.mxu0 %v1078
    %3143 = vmatpush.msra.mxu0 %v1070
    %3144 = vmatpush.msra.mxu0 %v1062
    %3145 = vmatpush.msra.mxu0 %v1054
    %3146 = vmatpush.msra.mxu0 %v1046
    %3147 = vmatpush.msra.mxu0 %v1038
    %3148 = vmatpush.msra.mxu0 %v1030
    %3149 = vmatpush.msra.mxu0 %v1022
    %3150 = vmatpush.msra.mxu0 %v1014
    %3151 = vmatpush.msra.mxu0 %v1006
    %3152 = vmatpush.msra.mxu0 %v998
    %3153 = vmatmul.f32.gmra.mxu0 %v2636
    %v3154 = vpop.f32.mrf.mxu0
    %v3155 = vadd.f32 %v3135, %v3154
    %3156 = vdwg.mxu0
    %3157 = vmatpush.msra.mxu0 %v1246
    %3158 = vmatpush.msra.mxu0 %v1238
    %3159 = vmatpush.msra.mxu0 %v1230
    %3160 = vmatpush.msra.mxu0 %v1222
    %3161 = vmatpush.msra.mxu0 %v1214
    %3162 = vmatpush.msra.mxu0 %v1206
    %3163 = vmatpush.msra.mxu0 %v1198
    %3164 = vmatpush.msra.mxu0 %v1190
    %3165 = vmatpush.msra.mxu0 %v1182
    %3166 = vmatpush.msra.mxu0 %v1174
    %3167 = vmatpush.msra.mxu0 %v1166
    %3168 = vmatpush.msra.mxu0 %v1158
    %3169 = vmatpush.msra.mxu0 %v1150
    %3170 = vmatpush.msra.mxu0 %v1142
    %3171 = vmatpush.msra.mxu0 %v1134
    %3172 = vmatpush.msra.mxu0 %v1126
    %3173 = vmatmul.f32.gmra.mxu0 %v2158
    %v3174 = vpop.f32.mrf.mxu0
    %v3175 = vadd.f32 %v3155, %v3174
    %3176 = vdwg.mxu0
    %3177 = vmatpush.msra.mxu0 %v1374
    %3178 = vmatpush.msra.mxu0 %v1366
    %3179 = vmatpush.msra.mxu0 %v1358
    %3180 = vmatpush.msra.mxu0 %v1350
    %3181 = vmatpush.msra.mxu0 %v1342
    %3182 = vmatpush.msra.mxu0 %v1334
    %3183 = vmatpush.msra.mxu0 %v1326
    %3184 = vmatpush.msra.mxu0 %v1318
    %3185 = vmatpush.msra.mxu0 %v1310
    %3186 = vmatpush.msra.mxu0 %v1302
    %3187 = vmatpush.msra.mxu0 %v1294
    %3188 = vmatpush.msra.mxu0 %v1286
    %3189 = vmatpush.msra.mxu0 %v1278
    %3190 = vmatpush.msra.mxu0 %v1270
    %3191 = vmatpush.msra.mxu0 %v1262
    %3192 = vmatpush.msra.mxu0 %v1254
    %3193 = vmatmul.f32.gmra.mxu0 %v2159
    %v3194 = vpop.f32.mrf.mxu0
    %v3195 = vadd.f32 %v3175, %v3194
    %3196 = vdwg.mxu0
    %3197 = vmatpush.msra.mxu0 %v991
    %3198 = vmatpush.msra.mxu0 %v983
    %3199 = vmatpush.msra.mxu0 %v975
    %3200 = vmatpush.msra.mxu0 %v967
    %3201 = vmatpush.msra.mxu0 %v959
    %3202 = vmatpush.msra.mxu0 %v951
    %3203 = vmatpush.msra.mxu0 %v943
    %3204 = vmatpush.msra.mxu0 %v935
    %3205 = vmatpush.msra.mxu0 %v927
    %3206 = vmatpush.msra.mxu0 %v919
    %3207 = vmatpush.msra.mxu0 %v911
    %3208 = vmatpush.msra.mxu0 %v903
    %3209 = vmatpush.msra.mxu0 %v895
    %3210 = vmatpush.msra.mxu0 %v887
    %3211 = vmatpush.msra.mxu0 %v879
    %3212 = vmatpush.msra.mxu0 %v871
    %3213 = vmatmul.f32.gmra.mxu0 %v2635
    %v3214 = vpop.f32.mrf.mxu0
    %v3215 = vadd.f32 %v1385, %v3214
    %3216 = vdwg.mxu0
    %3217 = vmatpush.msra.mxu0 %v1119
    %3218 = vmatpush.msra.mxu0 %v1111
    %3219 = vmatpush.msra.mxu0 %v1103
    %3220 = vmatpush.msra.mxu0 %v1095
    %3221 = vmatpush.msra.mxu0 %v1087
    %3222 = vmatpush.msra.mxu0 %v1079
    %3223 = vmatpush.msra.mxu0 %v1071
    %3224 = vmatpush.msra.mxu0 %v1063
    %3225 = vmatpush.msra.mxu0 %v1055
    %3226 = vmatpush.msra.mxu0 %v1047
    %3227 = vmatpush.msra.mxu0 %v1039
    %3228 = vmatpush.msra.mxu0 %v1031
    %3229 = vmatpush.msra.mxu0 %v1023
    %3230 = vmatpush.msra.mxu0 %v1015
    %3231 = vmatpush.msra.mxu0 %v1007
    %3232 = vmatpush.msra.mxu0 %v999
    %3233 = vmatmul.f32.gmra.mxu0 %v2636
    %v3234 = vpop.f32.mrf.mxu0
    %v3235 = vadd.f32 %v3215, %v3234
    %3236 = vdwg.mxu0
    %3237 = vmatpush.msra.mxu0 %v1247
    %3238 = vmatpush.msra.mxu0 %v1239
    %3239 = vmatpush.msra.mxu0 %v1231
    %3240 = vmatpush.msra.mxu0 %v1223
    %3241 = vmatpush.msra.mxu0 %v1215
    %3242 = vmatpush.msra.mxu0 %v1207
    %3243 = vmatpush.msra.mxu0 %v1199
    %3244 = vmatpush.msra.mxu0 %v1191
    %3245 = vmatpush.msra.mxu0 %v1183
    %3246 = vmatpush.msra.mxu0 %v1175
    %3247 = vmatpush.msra.mxu0 %v1167
    %3248 = vmatpush.msra.mxu0 %v1159
    %3249 = vmatpush.msra.mxu0 %v1151
    %3250 = vmatpush.msra.mxu0 %v1143
    %3251 = vmatpush.msra.mxu0 %v1135
    %3252 = vmatpush.msra.mxu0 %v1127
    %3253 = vmatmul.f32.gmra.mxu0 %v2158
    %v3254 = vpop.f32.mrf.mxu0
    %v3255 = vadd.f32 %v3235, %v3254
    %3256 = vdwg.mxu0
    %3257 = vmatpush.msra.mxu0 %v1375
    %3258 = vmatpush.msra.mxu0 %v1367
    %3259 = vmatpush.msra.mxu0 %v1359
    %3260 = vmatpush.msra.mxu0 %v1351
    %3261 = vmatpush.msra.mxu0 %v1343
    %3262 = vmatpush.msra.mxu0 %v1335
    %3263 = vmatpush.msra.mxu0 %v1327
    %3264 = vmatpush.msra.mxu0 %v1319
    %3265 = vmatpush.msra.mxu0 %v1311
    %3266 = vmatpush.msra.mxu0 %v1303
    %3267 = vmatpush.msra.mxu0 %v1295
    %3268 = vmatpush.msra.mxu0 %v1287
    %3269 = vmatpush.msra.mxu0 %v1279
    %3270 = vmatpush.msra.mxu0 %v1271
    %3271 = vmatpush.msra.mxu0 %v1263
    %3272 = vmatpush.msra.mxu0 %v1255
    %3273 = vmatmul.f32.gmra.mxu0 %v2159
    %v3274 = vpop.f32.mrf.mxu0
    %v3275 = vadd.f32 %v3255, %v3274
    %3276 = vdwg.mxu0
    %v3277 = vxor.u32 %v2715, 2147483648
    %v3278 = vxor.u32 %v2795, 2147483648
    %v3279 = vmul.f32 %v3277, 1.442695
    %v3280 = vpow.pop %v3279
    %v3281 = vmul.f32 %v3278, 1.442695
    %v3282 = vpow.pop %v3281
    %v3283 = vadd.f32 %v3280, 1.0
    %v3284 = vadd.f32 %v3282, 1.0
    %v3285 = vrcp.pop %v3283
    %v3286 = vmul.f32 %v3283, %v3285
    %v3287 = vsub.f32 1.0, %v3286
    %v3288 = vmul.f32 %v3285, %v3287
    %v3289 = vadd.f32 %v3285, %v3288
    %vm3290 = vweird.f32 %v3283
    %vm3291 = vweird.f32 %v3285
    %vm3292 = vmor %vm3290, %vm3291
    %v3293 = vsel %vm3292, %v3285, %v3289
    %v3294 = vand.u32 2147483647, %v3283
    %vm3295 = vcmp.eq.f32.partialorder %v3294, 8.507059e+37
    %v3296 = vand.u32 %v3283, 2147483648
    %v3297 = vor.u32 1.1754944e-38, %v3296
    %v3298 = vsel %vm3295, %v3297, %v3293
    %v3299 = vmul.f32 1.0, %v3298
    %v3300 = vrcp.pop %v3284
    %v3301 = vmul.f32 %v3284, %v3300
    %v3302 = vsub.f32 1.0, %v3301
    %v3303 = vmul.f32 %v3300, %v3302
    %v3304 = vadd.f32 %v3300, %v3303
    %vm3305 = vweird.f32 %v3284
    %vm3306 = vweird.f32 %v3300
    %vm3307 = vmor %vm3305, %vm3306
    %v3308 = vsel %vm3307, %v3300, %v3304
    %v3309 = vand.u32 2147483647, %v3284
    %vm3310 = vcmp.eq.f32.partialorder %v3309, 8.507059e+37
    %v3311 = vand.u32 %v3284, 2147483648
    %v3312 = vor.u32 1.1754944e-38, %v3311
    %v3313 = vsel %vm3310, %v3312, %v3308
    %v3314 = vmul.f32 1.0, %v3313
    %v3315 = vxor.u32 %v2875, 2147483648
    %v3316 = vxor.u32 %v2955, 2147483648
    %v3317 = vmul.f32 %v3315, 1.442695
    %v3318 = vpow.pop %v3317
    %v3319 = vmul.f32 %v3316, 1.442695
    %v3320 = vpow.pop %v3319
    %v3321 = vadd.f32 %v3318, 1.0
    %v3322 = vadd.f32 %v3320, 1.0
    %v3323 = vrcp.pop %v3321
    %v3324 = vmul.f32 %v3321, %v3323
    %v3325 = vsub.f32 1.0, %v3324
    %v3326 = vmul.f32 %v3323, %v3325
    %v3327 = vadd.f32 %v3323, %v3326
    %vm3328 = vweird.f32 %v3321
    %vm3329 = vweird.f32 %v3323
    %vm3330 = vmor %vm3328, %vm3329
    %v3331 = vsel %vm3330, %v3323, %v3327
    %v3332 = vand.u32 2147483647, %v3321
    %vm3333 = vcmp.eq.f32.partialorder %v3332, 8.507059e+37
    %v3334 = vand.u32 %v3321, 2147483648
    %v3335 = vor.u32 1.1754944e-38, %v3334
    %v3336 = vsel %vm3333, %v3335, %v3331
    %v3337 = vmul.f32 1.0, %v3336
    %v3338 = vrcp.pop %v3322
    %v3339 = vmul.f32 %v3322, %v3338
    %v3340 = vsub.f32 1.0, %v3339
    %v3341 = vmul.f32 %v3338, %v3340
    %v3342 = vadd.f32 %v3338, %v3341
    %vm3343 = vweird.f32 %v3322
    %vm3344 = vweird.f32 %v3338
    %vm3345 = vmor %vm3343, %vm3344
    %v3346 = vsel %vm3345, %v3338, %v3342
    %v3347 = vand.u32 2147483647, %v3322
    %vm3348 = vcmp.eq.f32.partialorder %v3347, 8.507059e+37
    %v3349 = vand.u32 %v3322, 2147483648
    %v3350 = vor.u32 1.1754944e-38, %v3349
    %v3351 = vsel %vm3348, %v3350, %v3346
    %v3352 = vmul.f32 1.0, %v3351
    %v3353 = vtanh.pop %v3035
    %v3354 = vtanh.pop %v3115
    %v3355 = vxor.u32 %v3195, 2147483648
    %v3356 = vxor.u32 %v3275, 2147483648
    %v3357 = vmul.f32 %v3355, 1.442695
    %v3358 = vpow.pop %v3357
    %v3359 = vmul.f32 %v3356, 1.442695
    %v3360 = vpow.pop %v3359
    %v3361 = vadd.f32 %v3358, 1.0
    %v3362 = vadd.f32 %v3360, 1.0
    %v3363 = vrcp.pop %v3361
    %v3364 = vmul.f32 %v3361, %v3363
    %v3365 = vsub.f32 1.0, %v3364
    %v3366 = vmul.f32 %v3363, %v3365
    %v3367 = vadd.f32 %v3363, %v3366
    %vm3368 = vweird.f32 %v3361
    %vm3369 = vweird.f32 %v3363
    %vm3370 = vmor %vm3368, %vm3369
    %v3371 = vsel %vm3370, %v3363, %v3367
    %v3372 = vand.u32 2147483647, %v3361
    %vm3373 = vcmp.eq.f32.partialorder %v3372, 8.507059e+37
    %v3374 = vand.u32 %v3361, 2147483648
    %v3375 = vor.u32 1.1754944e-38, %v3374
    %v3376 = vsel %vm3373, %v3375, %v3371
    %v3377 = vmul.f32 1.0, %v3376
    %v3378 = vrcp.pop %v3362
    %v3379 = vmul.f32 %v3362, %v3378
    %v3380 = vsub.f32 1.0, %v3379
    %v3381 = vmul.f32 %v3378, %v3380
    %v3382 = vadd.f32 %v3378, %v3381
    %vm3383 = vweird.f32 %v3362
    %vm3384 = vweird.f32 %v3378
    %vm3385 = vmor %vm3383, %vm3384
    %v3386 = vsel %vm3385, %v3378, %v3382
    %v3387 = vand.u32 2147483647, %v3362
    %vm3388 = vcmp.eq.f32.partialorder %v3387, 8.507059e+37
    %v3389 = vand.u32 %v3362, 2147483648
    %v3390 = vor.u32 1.1754944e-38, %v3389
    %v3391 = vsel %vm3388, %v3390, %v3386
    %v3392 = vmul.f32 1.0, %v3391
    %v3393 = vmul.f32 %v3337, %v2154
    %v3394 = vmul.f32 %v3352, %v2155
    %v3395 = vmul.f32 %v3299, %v3353
    %v3396 = vmul.f32 %v3314, %v3354
    %v3397 = vadd.f32 %v3393, %v3395
    %v3398 = vadd.f32 %v3394, %v3396
    %v3399 = vtanh.pop %v3397
    %v3400 = vtanh.pop %v3398
    %v3401 = vmul.f32 %v3377, %v3399
    %v3402 = vmul.f32 %v3392, %v3400
    %s3403 = scalar_lea.vmem %s0, 16
    %v3404 = vld [vmem:[%s3403] sm:$0xff]
    %3406 = vset.pattern.permute.xlu0 0
    %3407 = vperm.xlu0 %3406, %v3404
    %v3408 = vpop.permute.xlu0 %3407
    %v3410 = vmul.f32 %v3408, %v104
    %v3411 = vmul.f32 %v3408, %v105
    %v3412 = vmul.f32 %v3408, %v106
    %v3413 = vmul.f32 %v3408, %v107
    %v3414 = vmul.f32 %v3408, %v108
    %v3415 = vmul.f32 %v3408, %v109
    %v3416 = vmul.f32 %v3408, %v110
    %v3417 = vmul.f32 %v3408, %v111
    %v3418 = vadd.f32 %v3410, %v130
    %v3419 = vadd.f32 %v3411, %v131
    %v3420 = vadd.f32 %v3412, %v132
    %v3421 = vadd.f32 %v3413, %v133
    %v3422 = vadd.f32 %v3414, %v134
    %v3423 = vadd.f32 %v3415, %v135
    %v3424 = vadd.f32 %v3416, %v136
    %v3425 = vadd.f32 %v3417, %v137
    %3426 = vmatpush.msra.mxu0 %v274
    %3427 = vmatpush.msra.mxu0 %v266
    %3428 = vmatpush.msra.mxu0 %v258
    %3429 = vmatpush.msra.mxu0 %v250
    %3430 = vmatpush.msra.mxu0 %v242
    %3431 = vmatpush.msra.mxu0 %v234
    %3432 = vmatpush.msra.mxu0 %v226
    %3433 = vmatpush.msra.mxu0 %v218
    %3434 = vmatpush.msra.mxu0 %v210
    %3435 = vmatpush.msra.mxu0 %v202
    %3436 = vmatpush.msra.mxu0 %v194
    %3437 = vmatpush.msra.mxu0 %v186
    %3438 = vmatpush.msra.mxu0 %v178
    %3439 = vmatpush.msra.mxu0 %v170
    %3440 = vmatpush.msra.mxu0 %v162
    %3441 = vmatpush.msra.mxu0 %v154
    %3442 = vmatmul.f32.gmra.mxu0 %v2635
    %v3443 = vpop.f32.mrf.mxu0
    %v3444 = vadd.f32 0.0, %v3443
    %3445 = vdwg.mxu0
    %3446 = vmatpush.msra.mxu0 %v402
    %3447 = vmatpush.msra.mxu0 %v394
    %3448 = vmatpush.msra.mxu0 %v386
    %3449 = vmatpush.msra.mxu0 %v378
    %3450 = vmatpush.msra.mxu0 %v370
    %3451 = vmatpush.msra.mxu0 %v362
    %3452 = vmatpush.msra.mxu0 %v354
    %3453 = vmatpush.msra.mxu0 %v346
    %3454 = vmatpush.msra.mxu0 %v338
    %3455 = vmatpush.msra.mxu0 %v330
    %3456 = vmatpush.msra.mxu0 %v322
    %3457 = vmatpush.msra.mxu0 %v314
    %3458 = vmatpush.msra.mxu0 %v306
    %3459 = vmatpush.msra.mxu0 %v298
    %3460 = vmatpush.msra.mxu0 %v290
    %3461 = vmatpush.msra.mxu0 %v282
    %3462 = vmatmul.f32.gmra.mxu0 %v2636
    %v3463 = vpop.f32.mrf.mxu0
    %v3464 = vadd.f32 %v3444, %v3463
    %3465 = vdwg.mxu0
    %3466 = vmatpush.msra.mxu0 %v275
    %3467 = vmatpush.msra.mxu0 %v267
    %3468 = vmatpush.msra.mxu0 %v259
    %3469 = vmatpush.msra.mxu0 %v251
    %3470 = vmatpush.msra.mxu0 %v243
    %3471 = vmatpush.msra.mxu0 %v235
    %3472 = vmatpush.msra.mxu0 %v227
    %3473 = vmatpush.msra.mxu0 %v219
    %3474 = vmatpush.msra.mxu0 %v211
    %3475 = vmatpush.msra.mxu0 %v203
    %3476 = vmatpush.msra.mxu0 %v195
    %3477 = vmatpush.msra.mxu0 %v187
    %3478 = vmatpush.msra.mxu0 %v179
    %3479 = vmatpush.msra.mxu0 %v171
    %3480 = vmatpush.msra.mxu0 %v163
    %3481 = vmatpush.msra.mxu0 %v155
    %3482 = vmatmul.f32.gmra.mxu0 %v2635
    %v3483 = vpop.f32.mrf.mxu0
    %v3484 = vadd.f32 0.0, %v3483
    %3485 = vdwg.mxu0
    %3486 = vmatpush.msra.mxu0 %v403
    %3487 = vmatpush.msra.mxu0 %v395
    %3488 = vmatpush.msra.mxu0 %v387
    %3489 = vmatpush.msra.mxu0 %v379
    %3490 = vmatpush.msra.mxu0 %v371
    %3491 = vmatpush.msra.mxu0 %v363
    %3492 = vmatpush.msra.mxu0 %v355
    %3493 = vmatpush.msra.mxu0 %v347
    %3494 = vmatpush.msra.mxu0 %v339
    %3495 = vmatpush.msra.mxu0 %v331
    %3496 = vmatpush.msra.mxu0 %v323
    %3497 = vmatpush.msra.mxu0 %v315
    %3498 = vmatpush.msra.mxu0 %v307
    %3499 = vmatpush.msra.mxu0 %v299
    %3500 = vmatpush.msra.mxu0 %v291
    %3501 = vmatpush.msra.mxu0 %v283
    %3502 = vmatmul.f32.gmra.mxu0 %v2636
    %v3503 = vpop.f32.mrf.mxu0
    %v3504 = vadd.f32 %v3484, %v3503
    %3505 = vdwg.mxu0
    %3506 = vmatpush.msra.mxu0 %v276
    %3507 = vmatpush.msra.mxu0 %v268
    %3508 = vmatpush.msra.mxu0 %v260
    %3509 = vmatpush.msra.mxu0 %v252
    %3510 = vmatpush.msra.mxu0 %v244
    %3511 = vmatpush.msra.mxu0 %v236
    %3512 = vmatpush.msra.mxu0 %v228
    %3513 = vmatpush.msra.mxu0 %v220
    %3514 = vmatpush.msra.mxu0 %v212
    %3515 = vmatpush.msra.mxu0 %v204
    %3516 = vmatpush.msra.mxu0 %v196
    %3517 = vmatpush.msra.mxu0 %v188
    %3518 = vmatpush.msra.mxu0 %v180
    %3519 = vmatpush.msra.mxu0 %v172
    %3520 = vmatpush.msra.mxu0 %v164
    %3521 = vmatpush.msra.mxu0 %v156
    %3522 = vmatmul.f32.gmra.mxu0 %v2635
    %v3523 = vpop.f32.mrf.mxu0
    %v3524 = vadd.f32 0.0, %v3523
    %3525 = vdwg.mxu0
    %3526 = vmatpush.msra.mxu0 %v404
    %3527 = vmatpush.msra.mxu0 %v396
    %3528 = vmatpush.msra.mxu0 %v388
    %3529 = vmatpush.msra.mxu0 %v380
    %3530 = vmatpush.msra.mxu0 %v372
    %3531 = vmatpush.msra.mxu0 %v364
    %3532 = vmatpush.msra.mxu0 %v356
    %3533 = vmatpush.msra.mxu0 %v348
    %3534 = vmatpush.msra.mxu0 %v340
    %3535 = vmatpush.msra.mxu0 %v332
    %3536 = vmatpush.msra.mxu0 %v324
    %3537 = vmatpush.msra.mxu0 %v316
    %3538 = vmatpush.msra.mxu0 %v308
    %3539 = vmatpush.msra.mxu0 %v300
    %3540 = vmatpush.msra.mxu0 %v292
    %3541 = vmatpush.msra.mxu0 %v284
    %3542 = vmatmul.f32.gmra.mxu0 %v2636
    %v3543 = vpop.f32.mrf.mxu0
    %v3544 = vadd.f32 %v3524, %v3543
    %3545 = vdwg.mxu0
    %3546 = vmatpush.msra.mxu0 %v277
    %3547 = vmatpush.msra.mxu0 %v269
    %3548 = vmatpush.msra.mxu0 %v261
    %3549 = vmatpush.msra.mxu0 %v253
    %3550 = vmatpush.msra.mxu0 %v245
    %3551 = vmatpush.msra.mxu0 %v237
    %3552 = vmatpush.msra.mxu0 %v229
    %3553 = vmatpush.msra.mxu0 %v221
    %3554 = vmatpush.msra.mxu0 %v213
    %3555 = vmatpush.msra.mxu0 %v205
    %3556 = vmatpush.msra.mxu0 %v197
    %3557 = vmatpush.msra.mxu0 %v189
    %3558 = vmatpush.msra.mxu0 %v181
    %3559 = vmatpush.msra.mxu0 %v173
    %3560 = vmatpush.msra.mxu0 %v165
    %3561 = vmatpush.msra.mxu0 %v157
    %3562 = vmatmul.f32.gmra.mxu0 %v2635
    %v3563 = vpop.f32.mrf.mxu0
    %v3564 = vadd.f32 0.0, %v3563
    %3565 = vdwg.mxu0
    %3566 = vmatpush.msra.mxu0 %v405
    %3567 = vmatpush.msra.mxu0 %v397
    %3568 = vmatpush.msra.mxu0 %v389
    %3569 = vmatpush.msra.mxu0 %v381
    %3570 = vmatpush.msra.mxu0 %v373
    %3571 = vmatpush.msra.mxu0 %v365
    %3572 = vmatpush.msra.mxu0 %v357
    %3573 = vmatpush.msra.mxu0 %v349
    %3574 = vmatpush.msra.mxu0 %v341
    %3575 = vmatpush.msra.mxu0 %v333
    %3576 = vmatpush.msra.mxu0 %v325
    %3577 = vmatpush.msra.mxu0 %v317
    %3578 = vmatpush.msra.mxu0 %v309
    %3579 = vmatpush.msra.mxu0 %v301
    %3580 = vmatpush.msra.mxu0 %v293
    %3581 = vmatpush.msra.mxu0 %v285
    %3582 = vmatmul.f32.gmra.mxu0 %v2636
    %v3583 = vpop.f32.mrf.mxu0
    %v3584 = vadd.f32 %v3564, %v3583
    %3585 = vdwg.mxu0
    %3586 = vmatpush.msra.mxu0 %v278
    %3587 = vmatpush.msra.mxu0 %v270
    %3588 = vmatpush.msra.mxu0 %v262
    %3589 = vmatpush.msra.mxu0 %v254
    %3590 = vmatpush.msra.mxu0 %v246
    %3591 = vmatpush.msra.mxu0 %v238
    %3592 = vmatpush.msra.mxu0 %v230
    %3593 = vmatpush.msra.mxu0 %v222
    %3594 = vmatpush.msra.mxu0 %v214
    %3595 = vmatpush.msra.mxu0 %v206
    %3596 = vmatpush.msra.mxu0 %v198
    %3597 = vmatpush.msra.mxu0 %v190
    %3598 = vmatpush.msra.mxu0 %v182
    %3599 = vmatpush.msra.mxu0 %v174
    %3600 = vmatpush.msra.mxu0 %v166
    %3601 = vmatpush.msra.mxu0 %v158
    %3602 = vmatmul.f32.gmra.mxu0 %v2635
    %v3603 = vpop.f32.mrf.mxu0
    %v3604 = vadd.f32 0.0, %v3603
    %3605 = vdwg.mxu0
    %3606 = vmatpush.msra.mxu0 %v406
    %3607 = vmatpush.msra.mxu0 %v398
    %3608 = vmatpush.msra.mxu0 %v390
    %3609 = vmatpush.msra.mxu0 %v382
    %3610 = vmatpush.msra.mxu0 %v374
    %3611 = vmatpush.msra.mxu0 %v366
    %3612 = vmatpush.msra.mxu0 %v358
    %3613 = vmatpush.msra.mxu0 %v350
    %3614 = vmatpush.msra.mxu0 %v342
    %3615 = vmatpush.msra.mxu0 %v334
    %3616 = vmatpush.msra.mxu0 %v326
    %3617 = vmatpush.msra.mxu0 %v318
    %3618 = vmatpush.msra.mxu0 %v310
    %3619 = vmatpush.msra.mxu0 %v302
    %3620 = vmatpush.msra.mxu0 %v294
    %3621 = vmatpush.msra.mxu0 %v286
    %3622 = vmatmul.f32.gmra.mxu0 %v2636
    %v3623 = vpop.f32.mrf.mxu0
    %v3624 = vadd.f32 %v3604, %v3623
    %3625 = vdwg.mxu0
    %3626 = vmatpush.msra.mxu0 %v279
    %3627 = vmatpush.msra.mxu0 %v271
    %3628 = vmatpush.msra.mxu0 %v263
    %3629 = vmatpush.msra.mxu0 %v255
    %3630 = vmatpush.msra.mxu0 %v247
    %3631 = vmatpush.msra.mxu0 %v239
    %3632 = vmatpush.msra.mxu0 %v231
    %3633 = vmatpush.msra.mxu0 %v223
    %3634 = vmatpush.msra.mxu0 %v215
    %3635 = vmatpush.msra.mxu0 %v207
    %3636 = vmatpush.msra.mxu0 %v199
    %3637 = vmatpush.msra.mxu0 %v191
    %3638 = vmatpush.msra.mxu0 %v183
    %3639 = vmatpush.msra.mxu0 %v175
    %3640 = vmatpush.msra.mxu0 %v167
    %3641 = vmatpush.msra.mxu0 %v159
    %3642 = vmatmul.f32.gmra.mxu0 %v2635
    %v3643 = vpop.f32.mrf.mxu0
    %v3644 = vadd.f32 0.0, %v3643
    %3645 = vdwg.mxu0
    %3646 = vmatpush.msra.mxu0 %v407
    %3647 = vmatpush.msra.mxu0 %v399
    %3648 = vmatpush.msra.mxu0 %v391
    %3649 = vmatpush.msra.mxu0 %v383
    %3650 = vmatpush.msra.mxu0 %v375
    %3651 = vmatpush.msra.mxu0 %v367
    %3652 = vmatpush.msra.mxu0 %v359
    %3653 = vmatpush.msra.mxu0 %v351
    %3654 = vmatpush.msra.mxu0 %v343
    %3655 = vmatpush.msra.mxu0 %v335
    %3656 = vmatpush.msra.mxu0 %v327
    %3657 = vmatpush.msra.mxu0 %v319
    %3658 = vmatpush.msra.mxu0 %v311
    %3659 = vmatpush.msra.mxu0 %v303
    %3660 = vmatpush.msra.mxu0 %v295
    %3661 = vmatpush.msra.mxu0 %v287
    %3662 = vmatmul.f32.gmra.mxu0 %v2636
    %v3663 = vpop.f32.mrf.mxu0
    %v3664 = vadd.f32 %v3644, %v3663
    %3665 = vdwg.mxu0
    %3666 = vmatpush.msra.mxu0 %v280
    %3667 = vmatpush.msra.mxu0 %v272
    %3668 = vmatpush.msra.mxu0 %v264
    %3669 = vmatpush.msra.mxu0 %v256
    %3670 = vmatpush.msra.mxu0 %v248
    %3671 = vmatpush.msra.mxu0 %v240
    %3672 = vmatpush.msra.mxu0 %v232
    %3673 = vmatpush.msra.mxu0 %v224
    %3674 = vmatpush.msra.mxu0 %v216
    %3675 = vmatpush.msra.mxu0 %v208
    %3676 = vmatpush.msra.mxu0 %v200
    %3677 = vmatpush.msra.mxu0 %v192
    %3678 = vmatpush.msra.mxu0 %v184
    %3679 = vmatpush.msra.mxu0 %v176
    %3680 = vmatpush.msra.mxu0 %v168
    %3681 = vmatpush.msra.mxu0 %v160
    %3682 = vmatmul.f32.gmra.mxu0 %v2635
    %v3683 = vpop.f32.mrf.mxu0
    %v3684 = vadd.f32 0.0, %v3683
    %3685 = vdwg.mxu0
    %3686 = vmatpush.msra.mxu0 %v408
    %3687 = vmatpush.msra.mxu0 %v400
    %3688 = vmatpush.msra.mxu0 %v392
    %3689 = vmatpush.msra.mxu0 %v384
    %3690 = vmatpush.msra.mxu0 %v376
    %3691 = vmatpush.msra.mxu0 %v368
    %3692 = vmatpush.msra.mxu0 %v360
    %3693 = vmatpush.msra.mxu0 %v352
    %3694 = vmatpush.msra.mxu0 %v344
    %3695 = vmatpush.msra.mxu0 %v336
    %3696 = vmatpush.msra.mxu0 %v328
    %3697 = vmatpush.msra.mxu0 %v320
    %3698 = vmatpush.msra.mxu0 %v312
    %3699 = vmatpush.msra.mxu0 %v304
    %3700 = vmatpush.msra.mxu0 %v296
    %3701 = vmatpush.msra.mxu0 %v288
    %3702 = vmatmul.f32.gmra.mxu0 %v2636
    %v3703 = vpop.f32.mrf.mxu0
    %v3704 = vadd.f32 %v3684, %v3703
    %3705 = vdwg.mxu0
    %3706 = vmatpush.msra.mxu0 %v281
    %3707 = vmatpush.msra.mxu0 %v273
    %3708 = vmatpush.msra.mxu0 %v265
    %3709 = vmatpush.msra.mxu0 %v257
    %3710 = vmatpush.msra.mxu0 %v249
    %3711 = vmatpush.msra.mxu0 %v241
    %3712 = vmatpush.msra.mxu0 %v233
    %3713 = vmatpush.msra.mxu0 %v225
    %3714 = vmatpush.msra.mxu0 %v217
    %3715 = vmatpush.msra.mxu0 %v209
    %3716 = vmatpush.msra.mxu0 %v201
    %3717 = vmatpush.msra.mxu0 %v193
    %3718 = vmatpush.msra.mxu0 %v185
    %3719 = vmatpush.msra.mxu0 %v177
    %3720 = vmatpush.msra.mxu0 %v169
    %3721 = vmatpush.msra.mxu0 %v161
    %3722 = vmatmul.f32.gmra.mxu0 %v2635
    %v3723 = vpop.f32.mrf.mxu0
    %v3724 = vadd.f32 0.0, %v3723
    %3725 = vdwg.mxu0
    %3726 = vmatpush.msra.mxu0 %v409
    %3727 = vmatpush.msra.mxu0 %v401
    %3728 = vmatpush.msra.mxu0 %v393
    %3729 = vmatpush.msra.mxu0 %v385
    %3730 = vmatpush.msra.mxu0 %v377
    %3731 = vmatpush.msra.mxu0 %v369
    %3732 = vmatpush.msra.mxu0 %v361
    %3733 = vmatpush.msra.mxu0 %v353
    %3734 = vmatpush.msra.mxu0 %v345
    %3735 = vmatpush.msra.mxu0 %v337
    %3736 = vmatpush.msra.mxu0 %v329
    %3737 = vmatpush.msra.mxu0 %v321
    %3738 = vmatpush.msra.mxu0 %v313
    %3739 = vmatpush.msra.mxu0 %v305
    %3740 = vmatpush.msra.mxu0 %v297
    %3741 = vmatpush.msra.mxu0 %v289
    %3742 = vmatmul.f32.gmra.mxu0 %v2636
    %v3743 = vpop.f32.mrf.mxu0
    %v3744 = vadd.f32 %v3724, %v3743
    %3745 = vdwg.mxu0
    %v3746 = vadd.f32 %v3418, %v3464
    %v3747 = vadd.f32 %v3419, %v3504
    %v3748 = vadd.f32 %v3420, %v3544
    %v3749 = vadd.f32 %v3421, %v3584
    %v3750 = vadd.f32 %v3422, %v3624
    %v3751 = vadd.f32 %v3423, %v3664
    %v3752 = vadd.f32 %v3424, %v3704
    %v3753 = vadd.f32 %v3425, %v3744
    %v3754 = vxor.u32 %v3746, 2147483648
    %v3755 = vxor.u32 %v3747, 2147483648
    %v3756 = vmul.f32 %v3754, 1.442695
    %v3757 = vpow.pop %v3756
    %v3758 = vmul.f32 %v3755, 1.442695
    %v3759 = vpow.pop %v3758
    %v3760 = vadd.f32 %v3757, 1.0
    %v3761 = vadd.f32 %v3759, 1.0
    %v3762 = vrcp.pop %v3760
    %v3763 = vmul.f32 %v3760, %v3762
    %v3764 = vsub.f32 1.0, %v3763
    %v3765 = vmul.f32 %v3762, %v3764
    %v3766 = vadd.f32 %v3762, %v3765
    %vm3767 = vweird.f32 %v3760
    %vm3768 = vweird.f32 %v3762
    %vm3769 = vmor %vm3767, %vm3768
    %v3770 = vsel %vm3769, %v3762, %v3766
    %v3771 = vand.u32 2147483647, %v3760
    %vm3772 = vcmp.eq.f32.partialorder %v3771, 8.507059e+37
    %v3773 = vand.u32 %v3760, 2147483648
    %v3774 = vor.u32 1.1754944e-38, %v3773
    %v3775 = vsel %vm3772, %v3774, %v3770
    %v3776 = vmul.f32 1.0, %v3775
    %v3777 = vrcp.pop %v3761
    %v3778 = vmul.f32 %v3761, %v3777
    %v3779 = vsub.f32 1.0, %v3778
    %v3780 = vmul.f32 %v3777, %v3779
    %v3781 = vadd.f32 %v3777, %v3780
    %vm3782 = vweird.f32 %v3761
    %vm3783 = vweird.f32 %v3777
    %vm3784 = vmor %vm3782, %vm3783
    %v3785 = vsel %vm3784, %v3777, %v3781
    %v3786 = vand.u32 2147483647, %v3761
    %vm3787 = vcmp.eq.f32.partialorder %v3786, 8.507059e+37
    %v3788 = vand.u32 %v3761, 2147483648
    %v3789 = vor.u32 1.1754944e-38, %v3788
    %v3790 = vsel %vm3787, %v3789, %v3785
    %v3791 = vmul.f32 1.0, %v3790
    %v3792 = vxor.u32 %v3748, 2147483648
    %v3793 = vxor.u32 %v3749, 2147483648
    %v3794 = vmul.f32 %v3792, 1.442695
    %v3795 = vpow.pop %v3794
    %v3796 = vmul.f32 %v3793, 1.442695
    %v3797 = vpow.pop %v3796
    %v3798 = vadd.f32 %v3795, 1.0
    %v3799 = vadd.f32 %v3797, 1.0
    %v3800 = vrcp.pop %v3798
    %v3801 = vmul.f32 %v3798, %v3800
    %v3802 = vsub.f32 1.0, %v3801
    %v3803 = vmul.f32 %v3800, %v3802
    %v3804 = vadd.f32 %v3800, %v3803
    %vm3805 = vweird.f32 %v3798
    %vm3806 = vweird.f32 %v3800
    %vm3807 = vmor %vm3805, %vm3806
    %v3808 = vsel %vm3807, %v3800, %v3804
    %v3809 = vand.u32 2147483647, %v3798
    %vm3810 = vcmp.eq.f32.partialorder %v3809, 8.507059e+37
    %v3811 = vand.u32 %v3798, 2147483648
    %v3812 = vor.u32 1.1754944e-38, %v3811
    %v3813 = vsel %vm3810, %v3812, %v3808
    %v3814 = vmul.f32 1.0, %v3813
    %v3815 = vrcp.pop %v3799
    %v3816 = vmul.f32 %v3799, %v3815
    %v3817 = vsub.f32 1.0, %v3816
    %v3818 = vmul.f32 %v3815, %v3817
    %v3819 = vadd.f32 %v3815, %v3818
    %vm3820 = vweird.f32 %v3799
    %vm3821 = vweird.f32 %v3815
    %vm3822 = vmor %vm3820, %vm3821
    %v3823 = vsel %vm3822, %v3815, %v3819
    %v3824 = vand.u32 2147483647, %v3799
    %vm3825 = vcmp.eq.f32.partialorder %v3824, 8.507059e+37
    %v3826 = vand.u32 %v3799, 2147483648
    %v3827 = vor.u32 1.1754944e-38, %v3826
    %v3828 = vsel %vm3825, %v3827, %v3823
    %v3829 = vmul.f32 1.0, %v3828
    %v3830 = vtanh.pop %v3750
    %v3831 = vtanh.pop %v3751
    %v3832 = vxor.u32 %v3752, 2147483648
    %v3833 = vxor.u32 %v3753, 2147483648
    %v3834 = vmul.f32 %v3832, 1.442695
    %v3835 = vpow.pop %v3834
    %v3836 = vmul.f32 %v3833, 1.442695
    %v3837 = vpow.pop %v3836
    %v3838 = vadd.f32 %v3835, 1.0
    %v3839 = vadd.f32 %v3837, 1.0
    %v3840 = vrcp.pop %v3838
    %v3841 = vmul.f32 %v3838, %v3840
    %v3842 = vsub.f32 1.0, %v3841
    %v3843 = vmul.f32 %v3840, %v3842
    %v3844 = vadd.f32 %v3840, %v3843
    %vm3845 = vweird.f32 %v3838
    %vm3846 = vweird.f32 %v3840
    %vm3847 = vmor %vm3845, %vm3846
    %v3848 = vsel %vm3847, %v3840, %v3844
    %v3849 = vand.u32 2147483647, %v3838
    %vm3850 = vcmp.eq.f32.partialorder %v3849, 8.507059e+37
    %v3851 = vand.u32 %v3838, 2147483648
    %v3852 = vor.u32 1.1754944e-38, %v3851
    %v3853 = vsel %vm3850, %v3852, %v3848
    %v3854 = vmul.f32 1.0, %v3853
    %v3855 = vrcp.pop %v3839
    %v3856 = vmul.f32 %v3839, %v3855
    %v3857 = vsub.f32 1.0, %v3856
    %v3858 = vmul.f32 %v3855, %v3857
    %v3859 = vadd.f32 %v3855, %v3858
    %vm3860 = vweird.f32 %v3839
    %vm3861 = vweird.f32 %v3855
    %vm3862 = vmor %vm3860, %vm3861
    %v3863 = vsel %vm3862, %v3855, %v3859
    %v3864 = vand.u32 2147483647, %v3839
    %vm3865 = vcmp.eq.f32.partialorder %v3864, 8.507059e+37
    %v3866 = vand.u32 %v3839, 2147483648
    %v3867 = vor.u32 1.1754944e-38, %v3866
    %v3868 = vsel %vm3865, %v3867, %v3863
    %v3869 = vmul.f32 1.0, %v3868
    %v3870 = vmul.f32 %v3814, %v2631
    %v3871 = vmul.f32 %v3829, %v2632
    %v3872 = vmul.f32 %v3776, %v3830
    %v3873 = vmul.f32 %v3791, %v3831
    %v3874 = vadd.f32 %v3870, %v3872
    %v3875 = vadd.f32 %v3871, %v3873
    %v3876 = vtanh.pop %v3874
    %v3877 = vtanh.pop %v3875
    %v3878 = vmul.f32 %v3854, %v3876
    %v3879 = vmul.f32 %v3869, %v3877
    %3880 = vmatpush.msra.mxu0 %v984
    %3881 = vmatpush.msra.mxu0 %v976
    %3882 = vmatpush.msra.mxu0 %v968
    %3883 = vmatpush.msra.mxu0 %v960
    %3884 = vmatpush.msra.mxu0 %v952
    %3885 = vmatpush.msra.mxu0 %v944
    %3886 = vmatpush.msra.mxu0 %v936
    %3887 = vmatpush.msra.mxu0 %v928
    %3888 = vmatpush.msra.mxu0 %v920
    %3889 = vmatpush.msra.mxu0 %v912
    %3890 = vmatpush.msra.mxu0 %v904
    %3891 = vmatpush.msra.mxu0 %v896
    %3892 = vmatpush.msra.mxu0 %v888
    %3893 = vmatpush.msra.mxu0 %v880
    %3894 = vmatpush.msra.mxu0 %v872
    %3895 = vmatpush.msra.mxu0 %v864
    %3896 = vmatmul.f32.gmra.mxu0 %v3878
    %v3897 = vpop.f32.mrf.mxu0
    %v3898 = vadd.f32 %v1378, %v3897
    %3899 = vdwg.mxu0
    %3900 = vmatpush.msra.mxu0 %v1112
    %3901 = vmatpush.msra.mxu0 %v1104
    %3902 = vmatpush.msra.mxu0 %v1096
    %3903 = vmatpush.msra.mxu0 %v1088
    %3904 = vmatpush.msra.mxu0 %v1080
    %3905 = vmatpush.msra.mxu0 %v1072
    %3906 = vmatpush.msra.mxu0 %v1064
    %3907 = vmatpush.msra.mxu0 %v1056
    %3908 = vmatpush.msra.mxu0 %v1048
    %3909 = vmatpush.msra.mxu0 %v1040
    %3910 = vmatpush.msra.mxu0 %v1032
    %3911 = vmatpush.msra.mxu0 %v1024
    %3912 = vmatpush.msra.mxu0 %v1016
    %3913 = vmatpush.msra.mxu0 %v1008
    %3914 = vmatpush.msra.mxu0 %v1000
    %3915 = vmatpush.msra.mxu0 %v992
    %3916 = vmatmul.f32.gmra.mxu0 %v3879
    %v3917 = vpop.f32.mrf.mxu0
    %v3918 = vadd.f32 %v3898, %v3917
    %3919 = vdwg.mxu0
    %3920 = vmatpush.msra.mxu0 %v1240
    %3921 = vmatpush.msra.mxu0 %v1232
    %3922 = vmatpush.msra.mxu0 %v1224
    %3923 = vmatpush.msra.mxu0 %v1216
    %3924 = vmatpush.msra.mxu0 %v1208
    %3925 = vmatpush.msra.mxu0 %v1200
    %3926 = vmatpush.msra.mxu0 %v1192
    %3927 = vmatpush.msra.mxu0 %v1184
    %3928 = vmatpush.msra.mxu0 %v1176
    %3929 = vmatpush.msra.mxu0 %v1168
    %3930 = vmatpush.msra.mxu0 %v1160
    %3931 = vmatpush.msra.mxu0 %v1152
    %3932 = vmatpush.msra.mxu0 %v1144
    %3933 = vmatpush.msra.mxu0 %v1136
    %3934 = vmatpush.msra.mxu0 %v1128
    %3935 = vmatpush.msra.mxu0 %v1120
    %3936 = vmatmul.f32.gmra.mxu0 %v3401
    %v3937 = vpop.f32.mrf.mxu0
    %v3938 = vadd.f32 %v3918, %v3937
    %3939 = vdwg.mxu0
    %3940 = vmatpush.msra.mxu0 %v1368
    %3941 = vmatpush.msra.mxu0 %v1360
    %3942 = vmatpush.msra.mxu0 %v1352
    %3943 = vmatpush.msra.mxu0 %v1344
    %3944 = vmatpush.msra.mxu0 %v1336
    %3945 = vmatpush.msra.mxu0 %v1328
    %3946 = vmatpush.msra.mxu0 %v1320
    %3947 = vmatpush.msra.mxu0 %v1312
    %3948 = vmatpush.msra.mxu0 %v1304
    %3949 = vmatpush.msra.mxu0 %v1296
    %3950 = vmatpush.msra.mxu0 %v1288
    %3951 = vmatpush.msra.mxu0 %v1280
    %3952 = vmatpush.msra.mxu0 %v1272
    %3953 = vmatpush.msra.mxu0 %v1264
    %3954 = vmatpush.msra.mxu0 %v1256
    %3955 = vmatpush.msra.mxu0 %v1248
    %3956 = vmatmul.f32.gmra.mxu0 %v3402
    %v3957 = vpop.f32.mrf.mxu0
    %v3958 = vadd.f32 %v3938, %v3957
    %3959 = vdwg.mxu0
    %3960 = vmatpush.msra.mxu0 %v985
    %3961 = vmatpush.msra.mxu0 %v977
    %3962 = vmatpush.msra.mxu0 %v969
    %3963 = vmatpush.msra.mxu0 %v961
    %3964 = vmatpush.msra.mxu0 %v953
    %3965 = vmatpush.msra.mxu0 %v945
    %3966 = vmatpush.msra.mxu0 %v937
    %3967 = vmatpush.msra.mxu0 %v929
    %3968 = vmatpush.msra.mxu0 %v921
    %3969 = vmatpush.msra.mxu0 %v913
    %3970 = vmatpush.msra.mxu0 %v905
    %3971 = vmatpush.msra.mxu0 %v897
    %3972 = vmatpush.msra.mxu0 %v889
    %3973 = vmatpush.msra.mxu0 %v881
    %3974 = vmatpush.msra.mxu0 %v873
    %3975 = vmatpush.msra.mxu0 %v865
    %3976 = vmatmul.f32.gmra.mxu0 %v3878
    %v3977 = vpop.f32.mrf.mxu0
    %v3978 = vadd.f32 %v1379, %v3977
    %3979 = vdwg.mxu0
    %3980 = vmatpush.msra.mxu0 %v1113
    %3981 = vmatpush.msra.mxu0 %v1105
    %3982 = vmatpush.msra.mxu0 %v1097
    %3983 = vmatpush.msra.mxu0 %v1089
    %3984 = vmatpush.msra.mxu0 %v1081
    %3985 = vmatpush.msra.mxu0 %v1073
    %3986 = vmatpush.msra.mxu0 %v1065
    %3987 = vmatpush.msra.mxu0 %v1057
    %3988 = vmatpush.msra.mxu0 %v1049
    %3989 = vmatpush.msra.mxu0 %v1041
    %3990 = vmatpush.msra.mxu0 %v1033
    %3991 = vmatpush.msra.mxu0 %v1025
    %3992 = vmatpush.msra.mxu0 %v1017
    %3993 = vmatpush.msra.mxu0 %v1009
    %3994 = vmatpush.msra.mxu0 %v1001
    %3995 = vmatpush.msra.mxu0 %v993
    %3996 = vmatmul.f32.gmra.mxu0 %v3879
    %v3997 = vpop.f32.mrf.mxu0
    %v3998 = vadd.f32 %v3978, %v3997
    %3999 = vdwg.mxu0
    %4000 = vmatpush.msra.mxu0 %v1241
    %4001 = vmatpush.msra.mxu0 %v1233
    %4002 = vmatpush.msra.mxu0 %v1225
    %4003 = vmatpush.msra.mxu0 %v1217
    %4004 = vmatpush.msra.mxu0 %v1209
    %4005 = vmatpush.msra.mxu0 %v1201
    %4006 = vmatpush.msra.mxu0 %v1193
    %4007 = vmatpush.msra.mxu0 %v1185
    %4008 = vmatpush.msra.mxu0 %v1177
    %4009 = vmatpush.msra.mxu0 %v1169
    %4010 = vmatpush.msra.mxu0 %v1161
    %4011 = vmatpush.msra.mxu0 %v1153
    %4012 = vmatpush.msra.mxu0 %v1145
    %4013 = vmatpush.msra.mxu0 %v1137
    %4014 = vmatpush.msra.mxu0 %v1129
    %4015 = vmatpush.msra.mxu0 %v1121
    %4016 = vmatmul.f32.gmra.mxu0 %v3401
    %v4017 = vpop.f32.mrf.mxu0
    %v4018 = vadd.f32 %v3998, %v4017
    %4019 = vdwg.mxu0
    %4020 = vmatpush.msra.mxu0 %v1369
    %4021 = vmatpush.msra.mxu0 %v1361
    %4022 = vmatpush.msra.mxu0 %v1353
    %4023 = vmatpush.msra.mxu0 %v1345
    %4024 = vmatpush.msra.mxu0 %v1337
    %4025 = vmatpush.msra.mxu0 %v1329
    %4026 = vmatpush.msra.mxu0 %v1321
    %4027 = vmatpush.msra.mxu0 %v1313
    %4028 = vmatpush.msra.mxu0 %v1305
    %4029 = vmatpush.msra.mxu0 %v1297
    %4030 = vmatpush.msra.mxu0 %v1289
    %4031 = vmatpush.msra.mxu0 %v1281
    %4032 = vmatpush.msra.mxu0 %v1273
    %4033 = vmatpush.msra.mxu0 %v1265
    %4034 = vmatpush.msra.mxu0 %v1257
    %4035 = vmatpush.msra.mxu0 %v1249
    %4036 = vmatmul.f32.gmra.mxu0 %v3402
    %v4037 = vpop.f32.mrf.mxu0
    %v4038 = vadd.f32 %v4018, %v4037
    %4039 = vdwg.mxu0
    %4040 = vmatpush.msra.mxu0 %v986
    %4041 = vmatpush.msra.mxu0 %v978
    %4042 = vmatpush.msra.mxu0 %v970
    %4043 = vmatpush.msra.mxu0 %v962
    %4044 = vmatpush.msra.mxu0 %v954
    %4045 = vmatpush.msra.mxu0 %v946
    %4046 = vmatpush.msra.mxu0 %v938
    %4047 = vmatpush.msra.mxu0 %v930
    %4048 = vmatpush.msra.mxu0 %v922
    %4049 = vmatpush.msra.mxu0 %v914
    %4050 = vmatpush.msra.mxu0 %v906
    %4051 = vmatpush.msra.mxu0 %v898
    %4052 = vmatpush.msra.mxu0 %v890
    %4053 = vmatpush.msra.mxu0 %v882
    %4054 = vmatpush.msra.mxu0 %v874
    %4055 = vmatpush.msra.mxu0 %v866
    %4056 = vmatmul.f32.gmra.mxu0 %v3878
    %v4057 = vpop.f32.mrf.mxu0
    %v4058 = vadd.f32 %v1380, %v4057
    %4059 = vdwg.mxu0
    %4060 = vmatpush.msra.mxu0 %v1114
    %4061 = vmatpush.msra.mxu0 %v1106
    %4062 = vmatpush.msra.mxu0 %v1098
    %4063 = vmatpush.msra.mxu0 %v1090
    %4064 = vmatpush.msra.mxu0 %v1082
    %4065 = vmatpush.msra.mxu0 %v1074
    %4066 = vmatpush.msra.mxu0 %v1066
    %4067 = vmatpush.msra.mxu0 %v1058
    %4068 = vmatpush.msra.mxu0 %v1050
    %4069 = vmatpush.msra.mxu0 %v1042
    %4070 = vmatpush.msra.mxu0 %v1034
    %4071 = vmatpush.msra.mxu0 %v1026
    %4072 = vmatpush.msra.mxu0 %v1018
    %4073 = vmatpush.msra.mxu0 %v1010
    %4074 = vmatpush.msra.mxu0 %v1002
    %4075 = vmatpush.msra.mxu0 %v994
    %4076 = vmatmul.f32.gmra.mxu0 %v3879
    %v4077 = vpop.f32.mrf.mxu0
    %v4078 = vadd.f32 %v4058, %v4077
    %4079 = vdwg.mxu0
    %4080 = vmatpush.msra.mxu0 %v1242
    %4081 = vmatpush.msra.mxu0 %v1234
    %4082 = vmatpush.msra.mxu0 %v1226
    %4083 = vmatpush.msra.mxu0 %v1218
    %4084 = vmatpush.msra.mxu0 %v1210
    %4085 = vmatpush.msra.mxu0 %v1202
    %4086 = vmatpush.msra.mxu0 %v1194
    %4087 = vmatpush.msra.mxu0 %v1186
    %4088 = vmatpush.msra.mxu0 %v1178
    %4089 = vmatpush.msra.mxu0 %v1170
    %4090 = vmatpush.msra.mxu0 %v1162
    %4091 = vmatpush.msra.mxu0 %v1154
    %4092 = vmatpush.msra.mxu0 %v1146
    %4093 = vmatpush.msra.mxu0 %v1138
    %4094 = vmatpush.msra.mxu0 %v1130
    %4095 = vmatpush.msra.mxu0 %v1122
    %4096 = vmatmul.f32.gmra.mxu0 %v3401
    %v4097 = vpop.f32.mrf.mxu0
    %v4098 = vadd.f32 %v4078, %v4097
    %4099 = vdwg.mxu0
    %4100 = vmatpush.msra.mxu0 %v1370
    %4101 = vmatpush.msra.mxu0 %v1362
    %4102 = vmatpush.msra.mxu0 %v1354
    %4103 = vmatpush.msra.mxu0 %v1346
    %4104 = vmatpush.msra.mxu0 %v1338
    %4105 = vmatpush.msra.mxu0 %v1330
    %4106 = vmatpush.msra.mxu0 %v1322
    %4107 = vmatpush.msra.mxu0 %v1314
    %4108 = vmatpush.msra.mxu0 %v1306
    %4109 = vmatpush.msra.mxu0 %v1298
    %4110 = vmatpush.msra.mxu0 %v1290
    %4111 = vmatpush.msra.mxu0 %v1282
    %4112 = vmatpush.msra.mxu0 %v1274
    %4113 = vmatpush.msra.mxu0 %v1266
    %4114 = vmatpush.msra.mxu0 %v1258
    %4115 = vmatpush.msra.mxu0 %v1250
    %4116 = vmatmul.f32.gmra.mxu0 %v3402
    %v4117 = vpop.f32.mrf.mxu0
    %v4118 = vadd.f32 %v4098, %v4117
    %4119 = vdwg.mxu0
    %4120 = vmatpush.msra.mxu0 %v987
    %4121 = vmatpush.msra.mxu0 %v979
    %4122 = vmatpush.msra.mxu0 %v971
    %4123 = vmatpush.msra.mxu0 %v963
    %4124 = vmatpush.msra.mxu0 %v955
    %4125 = vmatpush.msra.mxu0 %v947
    %4126 = vmatpush.msra.mxu0 %v939
    %4127 = vmatpush.msra.mxu0 %v931
    %4128 = vmatpush.msra.mxu0 %v923
    %4129 = vmatpush.msra.mxu0 %v915
    %4130 = vmatpush.msra.mxu0 %v907
    %4131 = vmatpush.msra.mxu0 %v899
    %4132 = vmatpush.msra.mxu0 %v891
    %4133 = vmatpush.msra.mxu0 %v883
    %4134 = vmatpush.msra.mxu0 %v875
    %4135 = vmatpush.msra.mxu0 %v867
    %4136 = vmatmul.f32.gmra.mxu0 %v3878
    %v4137 = vpop.f32.mrf.mxu0
    %v4138 = vadd.f32 %v1381, %v4137
    %4139 = vdwg.mxu0
    %4140 = vmatpush.msra.mxu0 %v1115
    %4141 = vmatpush.msra.mxu0 %v1107
    %4142 = vmatpush.msra.mxu0 %v1099
    %4143 = vmatpush.msra.mxu0 %v1091
    %4144 = vmatpush.msra.mxu0 %v1083
    %4145 = vmatpush.msra.mxu0 %v1075
    %4146 = vmatpush.msra.mxu0 %v1067
    %4147 = vmatpush.msra.mxu0 %v1059
    %4148 = vmatpush.msra.mxu0 %v1051
    %4149 = vmatpush.msra.mxu0 %v1043
    %4150 = vmatpush.msra.mxu0 %v1035
    %4151 = vmatpush.msra.mxu0 %v1027
    %4152 = vmatpush.msra.mxu0 %v1019
    %4153 = vmatpush.msra.mxu0 %v1011
    %4154 = vmatpush.msra.mxu0 %v1003
    %4155 = vmatpush.msra.mxu0 %v995
    %4156 = vmatmul.f32.gmra.mxu0 %v3879
    %v4157 = vpop.f32.mrf.mxu0
    %v4158 = vadd.f32 %v4138, %v4157
    %4159 = vdwg.mxu0
    %4160 = vmatpush.msra.mxu0 %v1243
    %4161 = vmatpush.msra.mxu0 %v1235
    %4162 = vmatpush.msra.mxu0 %v1227
    %4163 = vmatpush.msra.mxu0 %v1219
    %4164 = vmatpush.msra.mxu0 %v1211
    %4165 = vmatpush.msra.mxu0 %v1203
    %4166 = vmatpush.msra.mxu0 %v1195
    %4167 = vmatpush.msra.mxu0 %v1187
    %4168 = vmatpush.msra.mxu0 %v1179
    %4169 = vmatpush.msra.mxu0 %v1171
    %4170 = vmatpush.msra.mxu0 %v1163
    %4171 = vmatpush.msra.mxu0 %v1155
    %4172 = vmatpush.msra.mxu0 %v1147
    %4173 = vmatpush.msra.mxu0 %v1139
    %4174 = vmatpush.msra.mxu0 %v1131
    %4175 = vmatpush.msra.mxu0 %v1123
    %4176 = vmatmul.f32.gmra.mxu0 %v3401
    %v4177 = vpop.f32.mrf.mxu0
    %v4178 = vadd.f32 %v4158, %v4177
    %4179 = vdwg.mxu0
    %4180 = vmatpush.msra.mxu0 %v1371
    %4181 = vmatpush.msra.mxu0 %v1363
    %4182 = vmatpush.msra.mxu0 %v1355
    %4183 = vmatpush.msra.mxu0 %v1347
    %4184 = vmatpush.msra.mxu0 %v1339
    %4185 = vmatpush.msra.mxu0 %v1331
    %4186 = vmatpush.msra.mxu0 %v1323
    %4187 = vmatpush.msra.mxu0 %v1315
    %4188 = vmatpush.msra.mxu0 %v1307
    %4189 = vmatpush.msra.mxu0 %v1299
    %4190 = vmatpush.msra.mxu0 %v1291
    %4191 = vmatpush.msra.mxu0 %v1283
    %4192 = vmatpush.msra.mxu0 %v1275
    %4193 = vmatpush.msra.mxu0 %v1267
    %4194 = vmatpush.msra.mxu0 %v1259
    %4195 = vmatpush.msra.mxu0 %v1251
    %4196 = vmatmul.f32.gmra.mxu0 %v3402
    %v4197 = vpop.f32.mrf.mxu0
    %v4198 = vadd.f32 %v4178, %v4197
    %4199 = vdwg.mxu0
    %4200 = vmatpush.msra.mxu0 %v988
    %4201 = vmatpush.msra.mxu0 %v980
    %4202 = vmatpush.msra.mxu0 %v972
    %4203 = vmatpush.msra.mxu0 %v964
    %4204 = vmatpush.msra.mxu0 %v956
    %4205 = vmatpush.msra.mxu0 %v948
    %4206 = vmatpush.msra.mxu0 %v940
    %4207 = vmatpush.msra.mxu0 %v932
    %4208 = vmatpush.msra.mxu0 %v924
    %4209 = vmatpush.msra.mxu0 %v916
    %4210 = vmatpush.msra.mxu0 %v908
    %4211 = vmatpush.msra.mxu0 %v900
    %4212 = vmatpush.msra.mxu0 %v892
    %4213 = vmatpush.msra.mxu0 %v884
    %4214 = vmatpush.msra.mxu0 %v876
    %4215 = vmatpush.msra.mxu0 %v868
    %4216 = vmatmul.f32.gmra.mxu0 %v3878
    %v4217 = vpop.f32.mrf.mxu0
    %v4218 = vadd.f32 %v1382, %v4217
    %4219 = vdwg.mxu0
    %4220 = vmatpush.msra.mxu0 %v1116
    %4221 = vmatpush.msra.mxu0 %v1108
    %4222 = vmatpush.msra.mxu0 %v1100
    %4223 = vmatpush.msra.mxu0 %v1092
    %4224 = vmatpush.msra.mxu0 %v1084
    %4225 = vmatpush.msra.mxu0 %v1076
    %4226 = vmatpush.msra.mxu0 %v1068
    %4227 = vmatpush.msra.mxu0 %v1060
    %4228 = vmatpush.msra.mxu0 %v1052
    %4229 = vmatpush.msra.mxu0 %v1044
    %4230 = vmatpush.msra.mxu0 %v1036
    %4231 = vmatpush.msra.mxu0 %v1028
    %4232 = vmatpush.msra.mxu0 %v1020
    %4233 = vmatpush.msra.mxu0 %v1012
    %4234 = vmatpush.msra.mxu0 %v1004
    %4235 = vmatpush.msra.mxu0 %v996
    %4236 = vmatmul.f32.gmra.mxu0 %v3879
    %v4237 = vpop.f32.mrf.mxu0
    %v4238 = vadd.f32 %v4218, %v4237
    %4239 = vdwg.mxu0
    %4240 = vmatpush.msra.mxu0 %v1244
    %4241 = vmatpush.msra.mxu0 %v1236
    %4242 = vmatpush.msra.mxu0 %v1228
    %4243 = vmatpush.msra.mxu0 %v1220
    %4244 = vmatpush.msra.mxu0 %v1212
    %4245 = vmatpush.msra.mxu0 %v1204
    %4246 = vmatpush.msra.mxu0 %v1196
    %4247 = vmatpush.msra.mxu0 %v1188
    %4248 = vmatpush.msra.mxu0 %v1180
    %4249 = vmatpush.msra.mxu0 %v1172
    %4250 = vmatpush.msra.mxu0 %v1164
    %4251 = vmatpush.msra.mxu0 %v1156
    %4252 = vmatpush.msra.mxu0 %v1148
    %4253 = vmatpush.msra.mxu0 %v1140
    %4254 = vmatpush.msra.mxu0 %v1132
    %4255 = vmatpush.msra.mxu0 %v1124
    %4256 = vmatmul.f32.gmra.mxu0 %v3401
    %v4257 = vpop.f32.mrf.mxu0
    %v4258 = vadd.f32 %v4238, %v4257
    %4259 = vdwg.mxu0
    %4260 = vmatpush.msra.mxu0 %v1372
    %4261 = vmatpush.msra.mxu0 %v1364
    %4262 = vmatpush.msra.mxu0 %v1356
    %4263 = vmatpush.msra.mxu0 %v1348
    %4264 = vmatpush.msra.mxu0 %v1340
    %4265 = vmatpush.msra.mxu0 %v1332
    %4266 = vmatpush.msra.mxu0 %v1324
    %4267 = vmatpush.msra.mxu0 %v1316
    %4268 = vmatpush.msra.mxu0 %v1308
    %4269 = vmatpush.msra.mxu0 %v1300
    %4270 = vmatpush.msra.mxu0 %v1292
    %4271 = vmatpush.msra.mxu0 %v1284
    %4272 = vmatpush.msra.mxu0 %v1276
    %4273 = vmatpush.msra.mxu0 %v1268
    %4274 = vmatpush.msra.mxu0 %v1260
    %4275 = vmatpush.msra.mxu0 %v1252
    %4276 = vmatmul.f32.gmra.mxu0 %v3402
    %v4277 = vpop.f32.mrf.mxu0
    %v4278 = vadd.f32 %v4258, %v4277
    %4279 = vdwg.mxu0
    %4280 = vmatpush.msra.mxu0 %v989
    %4281 = vmatpush.msra.mxu0 %v981
    %4282 = vmatpush.msra.mxu0 %v973
    %4283 = vmatpush.msra.mxu0 %v965
    %4284 = vmatpush.msra.mxu0 %v957
    %4285 = vmatpush.msra.mxu0 %v949
    %4286 = vmatpush.msra.mxu0 %v941
    %4287 = vmatpush.msra.mxu0 %v933
    %4288 = vmatpush.msra.mxu0 %v925
    %4289 = vmatpush.msra.mxu0 %v917
    %4290 = vmatpush.msra.mxu0 %v909
    %4291 = vmatpush.msra.mxu0 %v901
    %4292 = vmatpush.msra.mxu0 %v893
    %4293 = vmatpush.msra.mxu0 %v885
    %4294 = vmatpush.msra.mxu0 %v877
    %4295 = vmatpush.msra.mxu0 %v869
    %4296 = vmatmul.f32.gmra.mxu0 %v3878
    %v4297 = vpop.f32.mrf.mxu0
    %v4298 = vadd.f32 %v1383, %v4297
    %4299 = vdwg.mxu0
    %4300 = vmatpush.msra.mxu0 %v1117
    %4301 = vmatpush.msra.mxu0 %v1109
    %4302 = vmatpush.msra.mxu0 %v1101
    %4303 = vmatpush.msra.mxu0 %v1093
    %4304 = vmatpush.msra.mxu0 %v1085
    %4305 = vmatpush.msra.mxu0 %v1077
    %4306 = vmatpush.msra.mxu0 %v1069
    %4307 = vmatpush.msra.mxu0 %v1061
    %4308 = vmatpush.msra.mxu0 %v1053
    %4309 = vmatpush.msra.mxu0 %v1045
    %4310 = vmatpush.msra.mxu0 %v1037
    %4311 = vmatpush.msra.mxu0 %v1029
    %4312 = vmatpush.msra.mxu0 %v1021
    %4313 = vmatpush.msra.mxu0 %v1013
    %4314 = vmatpush.msra.mxu0 %v1005
    %4315 = vmatpush.msra.mxu0 %v997
    %4316 = vmatmul.f32.gmra.mxu0 %v3879
    %v4317 = vpop.f32.mrf.mxu0
    %v4318 = vadd.f32 %v4298, %v4317
    %4319 = vdwg.mxu0
    %4320 = vmatpush.msra.mxu0 %v1245
    %4321 = vmatpush.msra.mxu0 %v1237
    %4322 = vmatpush.msra.mxu0 %v1229
    %4323 = vmatpush.msra.mxu0 %v1221
    %4324 = vmatpush.msra.mxu0 %v1213
    %4325 = vmatpush.msra.mxu0 %v1205
    %4326 = vmatpush.msra.mxu0 %v1197
    %4327 = vmatpush.msra.mxu0 %v1189
    %4328 = vmatpush.msra.mxu0 %v1181
    %4329 = vmatpush.msra.mxu0 %v1173
    %4330 = vmatpush.msra.mxu0 %v1165
    %4331 = vmatpush.msra.mxu0 %v1157
    %4332 = vmatpush.msra.mxu0 %v1149
    %4333 = vmatpush.msra.mxu0 %v1141
    %4334 = vmatpush.msra.mxu0 %v1133
    %4335 = vmatpush.msra.mxu0 %v1125
    %4336 = vmatmul.f32.gmra.mxu0 %v3401
    %v4337 = vpop.f32.mrf.mxu0
    %v4338 = vadd.f32 %v4318, %v4337
    %4339 = vdwg.mxu0
    %4340 = vmatpush.msra.mxu0 %v1373
    %4341 = vmatpush.msra.mxu0 %v1365
    %4342 = vmatpush.msra.mxu0 %v1357
    %4343 = vmatpush.msra.mxu0 %v1349
    %4344 = vmatpush.msra.mxu0 %v1341
    %4345 = vmatpush.msra.mxu0 %v1333
    %4346 = vmatpush.msra.mxu0 %v1325
    %4347 = vmatpush.msra.mxu0 %v1317
    %4348 = vmatpush.msra.mxu0 %v1309
    %4349 = vmatpush.msra.mxu0 %v1301
    %4350 = vmatpush.msra.mxu0 %v1293
    %4351 = vmatpush.msra.mxu0 %v1285
    %4352 = vmatpush.msra.mxu0 %v1277
    %4353 = vmatpush.msra.mxu0 %v1269
    %4354 = vmatpush.msra.mxu0 %v1261
    %4355 = vmatpush.msra.mxu0 %v1253
    %4356 = vmatmul.f32.gmra.mxu0 %v3402
    %v4357 = vpop.f32.mrf.mxu0
    %v4358 = vadd.f32 %v4338, %v4357
    %4359 = vdwg.mxu0
    %4360 = vmatpush.msra.mxu0 %v990
    %4361 = vmatpush.msra.mxu0 %v982
    %4362 = vmatpush.msra.mxu0 %v974
    %4363 = vmatpush.msra.mxu0 %v966
    %4364 = vmatpush.msra.mxu0 %v958
    %4365 = vmatpush.msra.mxu0 %v950
    %4366 = vmatpush.msra.mxu0 %v942
    %4367 = vmatpush.msra.mxu0 %v934
    %4368 = vmatpush.msra.mxu0 %v926
    %4369 = vmatpush.msra.mxu0 %v918
    %4370 = vmatpush.msra.mxu0 %v910
    %4371 = vmatpush.msra.mxu0 %v902
    %4372 = vmatpush.msra.mxu0 %v894
    %4373 = vmatpush.msra.mxu0 %v886
    %4374 = vmatpush.msra.mxu0 %v878
    %4375 = vmatpush.msra.mxu0 %v870
    %4376 = vmatmul.f32.gmra.mxu0 %v3878
    %v4377 = vpop.f32.mrf.mxu0
    %v4378 = vadd.f32 %v1384, %v4377
    %4379 = vdwg.mxu0
    %4380 = vmatpush.msra.mxu0 %v1118
    %4381 = vmatpush.msra.mxu0 %v1110
    %4382 = vmatpush.msra.mxu0 %v1102
    %4383 = vmatpush.msra.mxu0 %v1094
    %4384 = vmatpush.msra.mxu0 %v1086
    %4385 = vmatpush.msra.mxu0 %v1078
    %4386 = vmatpush.msra.mxu0 %v1070
    %4387 = vmatpush.msra.mxu0 %v1062
    %4388 = vmatpush.msra.mxu0 %v1054
    %4389 = vmatpush.msra.mxu0 %v1046
    %4390 = vmatpush.msra.mxu0 %v1038
    %4391 = vmatpush.msra.mxu0 %v1030
    %4392 = vmatpush.msra.mxu0 %v1022
    %4393 = vmatpush.msra.mxu0 %v1014
    %4394 = vmatpush.msra.mxu0 %v1006
    %4395 = vmatpush.msra.mxu0 %v998
    %4396 = vmatmul.f32.gmra.mxu0 %v3879
    %v4397 = vpop.f32.mrf.mxu0
    %v4398 = vadd.f32 %v4378, %v4397
    %4399 = vdwg.mxu0
    %4400 = vmatpush.msra.mxu0 %v1246
    %4401 = vmatpush.msra.mxu0 %v1238
    %4402 = vmatpush.msra.mxu0 %v1230
    %4403 = vmatpush.msra.mxu0 %v1222
    %4404 = vmatpush.msra.mxu0 %v1214
    %4405 = vmatpush.msra.mxu0 %v1206
    %4406 = vmatpush.msra.mxu0 %v1198
    %4407 = vmatpush.msra.mxu0 %v1190
    %4408 = vmatpush.msra.mxu0 %v1182
    %4409 = vmatpush.msra.mxu0 %v1174
    %4410 = vmatpush.msra.mxu0 %v1166
    %4411 = vmatpush.msra.mxu0 %v1158
    %4412 = vmatpush.msra.mxu0 %v1150
    %4413 = vmatpush.msra.mxu0 %v1142
    %4414 = vmatpush.msra.mxu0 %v1134
    %4415 = vmatpush.msra.mxu0 %v1126
    %4416 = vmatmul.f32.gmra.mxu0 %v3401
    %v4417 = vpop.f32.mrf.mxu0
    %v4418 = vadd.f32 %v4398, %v4417
    %4419 = vdwg.mxu0
    %4420 = vmatpush.msra.mxu0 %v1374
    %4421 = vmatpush.msra.mxu0 %v1366
    %4422 = vmatpush.msra.mxu0 %v1358
    %4423 = vmatpush.msra.mxu0 %v1350
    %4424 = vmatpush.msra.mxu0 %v1342
    %4425 = vmatpush.msra.mxu0 %v1334
    %4426 = vmatpush.msra.mxu0 %v1326
    %4427 = vmatpush.msra.mxu0 %v1318
    %4428 = vmatpush.msra.mxu0 %v1310
    %4429 = vmatpush.msra.mxu0 %v1302
    %4430 = vmatpush.msra.mxu0 %v1294
    %4431 = vmatpush.msra.mxu0 %v1286
    %4432 = vmatpush.msra.mxu0 %v1278
    %4433 = vmatpush.msra.mxu0 %v1270
    %4434 = vmatpush.msra.mxu0 %v1262
    %4435 = vmatpush.msra.mxu0 %v1254
    %4436 = vmatmul.f32.gmra.mxu0 %v3402
    %v4437 = vpop.f32.mrf.mxu0
    %v4438 = vadd.f32 %v4418, %v4437
    %4439 = vdwg.mxu0
    %4440 = vmatpush.msra.mxu0 %v991
    %4441 = vmatpush.msra.mxu0 %v983
    %4442 = vmatpush.msra.mxu0 %v975
    %4443 = vmatpush.msra.mxu0 %v967
    %4444 = vmatpush.msra.mxu0 %v959
    %4445 = vmatpush.msra.mxu0 %v951
    %4446 = vmatpush.msra.mxu0 %v943
    %4447 = vmatpush.msra.mxu0 %v935
    %4448 = vmatpush.msra.mxu0 %v927
    %4449 = vmatpush.msra.mxu0 %v919
    %4450 = vmatpush.msra.mxu0 %v911
    %4451 = vmatpush.msra.mxu0 %v903
    %4452 = vmatpush.msra.mxu0 %v895
    %4453 = vmatpush.msra.mxu0 %v887
    %4454 = vmatpush.msra.mxu0 %v879
    %4455 = vmatpush.msra.mxu0 %v871
    %4456 = vmatmul.f32.gmra.mxu0 %v3878
    %v4457 = vpop.f32.mrf.mxu0
    %v4458 = vadd.f32 %v1385, %v4457
    %4459 = vdwg.mxu0
    %4460 = vmatpush.msra.mxu0 %v1119
    %4461 = vmatpush.msra.mxu0 %v1111
    %4462 = vmatpush.msra.mxu0 %v1103
    %4463 = vmatpush.msra.mxu0 %v1095
    %4464 = vmatpush.msra.mxu0 %v1087
    %4465 = vmatpush.msra.mxu0 %v1079
    %4466 = vmatpush.msra.mxu0 %v1071
    %4467 = vmatpush.msra.mxu0 %v1063
    %4468 = vmatpush.msra.mxu0 %v1055
    %4469 = vmatpush.msra.mxu0 %v1047
    %4470 = vmatpush.msra.mxu0 %v1039
    %4471 = vmatpush.msra.mxu0 %v1031
    %4472 = vmatpush.msra.mxu0 %v1023
    %4473 = vmatpush.msra.mxu0 %v1015
    %4474 = vmatpush.msra.mxu0 %v1007
    %4475 = vmatpush.msra.mxu0 %v999
    %4476 = vmatmul.f32.gmra.mxu0 %v3879
    %v4477 = vpop.f32.mrf.mxu0
    %v4478 = vadd.f32 %v4458, %v4477
    %4479 = vdwg.mxu0
    %4480 = vmatpush.msra.mxu0 %v1247
    %4481 = vmatpush.msra.mxu0 %v1239
    %4482 = vmatpush.msra.mxu0 %v1231
    %4483 = vmatpush.msra.mxu0 %v1223
    %4484 = vmatpush.msra.mxu0 %v1215
    %4485 = vmatpush.msra.mxu0 %v1207
    %4486 = vmatpush.msra.mxu0 %v1199
    %4487 = vmatpush.msra.mxu0 %v1191
    %4488 = vmatpush.msra.mxu0 %v1183
    %4489 = vmatpush.msra.mxu0 %v1175
    %4490 = vmatpush.msra.mxu0 %v1167
    %4491 = vmatpush.msra.mxu0 %v1159
    %4492 = vmatpush.msra.mxu0 %v1151
    %4493 = vmatpush.msra.mxu0 %v1143
    %4494 = vmatpush.msra.mxu0 %v1135
    %4495 = vmatpush.msra.mxu0 %v1127
    %4496 = vmatmul.f32.gmra.mxu0 %v3401
    %v4497 = vpop.f32.mrf.mxu0
    %v4498 = vadd.f32 %v4478, %v4497
    %4499 = vdwg.mxu0
    %4500 = vmatpush.msra.mxu0 %v1375
    %4501 = vmatpush.msra.mxu0 %v1367
    %4502 = vmatpush.msra.mxu0 %v1359
    %4503 = vmatpush.msra.mxu0 %v1351
    %4504 = vmatpush.msra.mxu0 %v1343
    %4505 = vmatpush.msra.mxu0 %v1335
    %4506 = vmatpush.msra.mxu0 %v1327
    %4507 = vmatpush.msra.mxu0 %v1319
    %4508 = vmatpush.msra.mxu0 %v1311
    %4509 = vmatpush.msra.mxu0 %v1303
    %4510 = vmatpush.msra.mxu0 %v1295
    %4511 = vmatpush.msra.mxu0 %v1287
    %4512 = vmatpush.msra.mxu0 %v1279
    %4513 = vmatpush.msra.mxu0 %v1271
    %4514 = vmatpush.msra.mxu0 %v1263
    %4515 = vmatpush.msra.mxu0 %v1255
    %4516 = vmatmul.f32.gmra.mxu0 %v3402
    %v4517 = vpop.f32.mrf.mxu0
    %v4518 = vadd.f32 %v4498, %v4517
    %4519 = vdwg.mxu0
    %v4520 = vxor.u32 %v3958, 2147483648
    %v4521 = vxor.u32 %v4038, 2147483648
    %v4522 = vmul.f32 %v4520, 1.442695
    %v4523 = vpow.pop %v4522
    %v4524 = vmul.f32 %v4521, 1.442695
    %v4525 = vpow.pop %v4524
    %v4526 = vadd.f32 %v4523, 1.0
    %v4527 = vadd.f32 %v4525, 1.0
    %v4528 = vrcp.pop %v4526
    %v4529 = vmul.f32 %v4526, %v4528
    %v4530 = vsub.f32 1.0, %v4529
    %v4531 = vmul.f32 %v4528, %v4530
    %v4532 = vadd.f32 %v4528, %v4531
    %vm4533 = vweird.f32 %v4526
    %vm4534 = vweird.f32 %v4528
    %vm4535 = vmor %vm4533, %vm4534
    %v4536 = vsel %vm4535, %v4528, %v4532
    %v4537 = vand.u32 2147483647, %v4526
    %vm4538 = vcmp.eq.f32.partialorder %v4537, 8.507059e+37
    %v4539 = vand.u32 %v4526, 2147483648
    %v4540 = vor.u32 1.1754944e-38, %v4539
    %v4541 = vsel %vm4538, %v4540, %v4536
    %v4542 = vmul.f32 1.0, %v4541
    %v4543 = vrcp.pop %v4527
    %v4544 = vmul.f32 %v4527, %v4543
    %v4545 = vsub.f32 1.0, %v4544
    %v4546 = vmul.f32 %v4543, %v4545
    %v4547 = vadd.f32 %v4543, %v4546
    %vm4548 = vweird.f32 %v4527
    %vm4549 = vweird.f32 %v4543
    %vm4550 = vmor %vm4548, %vm4549
    %v4551 = vsel %vm4550, %v4543, %v4547
    %v4552 = vand.u32 2147483647, %v4527
    %vm4553 = vcmp.eq.f32.partialorder %v4552, 8.507059e+37
    %v4554 = vand.u32 %v4527, 2147483648
    %v4555 = vor.u32 1.1754944e-38, %v4554
    %v4556 = vsel %vm4553, %v4555, %v4551
    %v4557 = vmul.f32 1.0, %v4556
    %v4558 = vxor.u32 %v4118, 2147483648
    %v4559 = vxor.u32 %v4198, 2147483648
    %v4560 = vmul.f32 %v4558, 1.442695
    %v4561 = vpow.pop %v4560
    %v4562 = vmul.f32 %v4559, 1.442695
    %v4563 = vpow.pop %v4562
    %v4564 = vadd.f32 %v4561, 1.0
    %v4565 = vadd.f32 %v4563, 1.0
    %v4566 = vrcp.pop %v4564
    %v4567 = vmul.f32 %v4564, %v4566
    %v4568 = vsub.f32 1.0, %v4567
    %v4569 = vmul.f32 %v4566, %v4568
    %v4570 = vadd.f32 %v4566, %v4569
    %vm4571 = vweird.f32 %v4564
    %vm4572 = vweird.f32 %v4566
    %vm4573 = vmor %vm4571, %vm4572
    %v4574 = vsel %vm4573, %v4566, %v4570
    %v4575 = vand.u32 2147483647, %v4564
    %vm4576 = vcmp.eq.f32.partialorder %v4575, 8.507059e+37
    %v4577 = vand.u32 %v4564, 2147483648
    %v4578 = vor.u32 1.1754944e-38, %v4577
    %v4579 = vsel %vm4576, %v4578, %v4574
    %v4580 = vmul.f32 1.0, %v4579
    %v4581 = vrcp.pop %v4565
    %v4582 = vmul.f32 %v4565, %v4581
    %v4583 = vsub.f32 1.0, %v4582
    %v4584 = vmul.f32 %v4581, %v4583
    %v4585 = vadd.f32 %v4581, %v4584
    %vm4586 = vweird.f32 %v4565
    %vm4587 = vweird.f32 %v4581
    %vm4588 = vmor %vm4586, %vm4587
    %v4589 = vsel %vm4588, %v4581, %v4585
    %v4590 = vand.u32 2147483647, %v4565
    %vm4591 = vcmp.eq.f32.partialorder %v4590, 8.507059e+37
    %v4592 = vand.u32 %v4565, 2147483648
    %v4593 = vor.u32 1.1754944e-38, %v4592
    %v4594 = vsel %vm4591, %v4593, %v4589
    %v4595 = vmul.f32 1.0, %v4594
    %v4596 = vtanh.pop %v4278
    %v4597 = vtanh.pop %v4358
    %v4598 = vxor.u32 %v4438, 2147483648
    %v4599 = vxor.u32 %v4518, 2147483648
    %v4600 = vmul.f32 %v4598, 1.442695
    %v4601 = vpow.pop %v4600
    %v4602 = vmul.f32 %v4599, 1.442695
    %v4603 = vpow.pop %v4602
    %v4604 = vadd.f32 %v4601, 1.0
    %v4605 = vadd.f32 %v4603, 1.0
    %v4606 = vrcp.pop %v4604
    %v4607 = vmul.f32 %v4604, %v4606
    %v4608 = vsub.f32 1.0, %v4607
    %v4609 = vmul.f32 %v4606, %v4608
    %v4610 = vadd.f32 %v4606, %v4609
    %vm4611 = vweird.f32 %v4604
    %vm4612 = vweird.f32 %v4606
    %vm4613 = vmor %vm4611, %vm4612
    %v4614 = vsel %vm4613, %v4606, %v4610
    %v4615 = vand.u32 2147483647, %v4604
    %vm4616 = vcmp.eq.f32.partialorder %v4615, 8.507059e+37
    %v4617 = vand.u32 %v4604, 2147483648
    %v4618 = vor.u32 1.1754944e-38, %v4617
    %v4619 = vsel %vm4616, %v4618, %v4614
    %v4620 = vmul.f32 1.0, %v4619
    %v4621 = vrcp.pop %v4605
    %v4622 = vmul.f32 %v4605, %v4621
    %v4623 = vsub.f32 1.0, %v4622
    %v4624 = vmul.f32 %v4621, %v4623
    %v4625 = vadd.f32 %v4621, %v4624
    %vm4626 = vweird.f32 %v4605
    %vm4627 = vweird.f32 %v4621
    %vm4628 = vmor %vm4626, %vm4627
    %v4629 = vsel %vm4628, %v4621, %v4625
    %v4630 = vand.u32 2147483647, %v4605
    %vm4631 = vcmp.eq.f32.partialorder %v4630, 8.507059e+37
    %v4632 = vand.u32 %v4605, 2147483648
    %v4633 = vor.u32 1.1754944e-38, %v4632
    %v4634 = vsel %vm4631, %v4633, %v4629
    %v4635 = vmul.f32 1.0, %v4634
    %v4636 = vmul.f32 %v4580, %v3397
    %v4637 = vmul.f32 %v4595, %v3398
    %v4638 = vmul.f32 %v4542, %v4596
    %v4639 = vmul.f32 %v4557, %v4597
    %v4640 = vadd.f32 %v4636, %v4638
    %v4641 = vadd.f32 %v4637, %v4639
    %v4642 = vtanh.pop %v4640
    %v4643 = vtanh.pop %v4641
    %v4644 = vmul.f32 %v4620, %v4642
    %v4645 = vmul.f32 %v4635, %v4643
    %s4646 = scalar_lea.vmem %s0, 24
    %v4647 = vld [vmem:[%s4646] sm:$0xff]
    %4649 = vset.pattern.permute.xlu0 0
    %4650 = vperm.xlu0 %4649, %v4647
    %v4651 = vpop.permute.xlu0 %4650
    %v4653 = vmul.f32 %v4651, %v104
    %v4654 = vmul.f32 %v4651, %v105
    %v4655 = vmul.f32 %v4651, %v106
    %v4656 = vmul.f32 %v4651, %v107
    %v4657 = vmul.f32 %v4651, %v108
    %v4658 = vmul.f32 %v4651, %v109
    %v4659 = vmul.f32 %v4651, %v110
    %v4660 = vmul.f32 %v4651, %v111
    %v4661 = vadd.f32 %v4653, %v130
    %v4662 = vadd.f32 %v4654, %v131
    %v4663 = vadd.f32 %v4655, %v132
    %v4664 = vadd.f32 %v4656, %v133
    %v4665 = vadd.f32 %v4657, %v134
    %v4666 = vadd.f32 %v4658, %v135
    %v4667 = vadd.f32 %v4659, %v136
    %v4668 = vadd.f32 %v4660, %v137
    %4669 = vmatpush.msra.mxu0 %v274
    %4670 = vmatpush.msra.mxu0 %v266
    %4671 = vmatpush.msra.mxu0 %v258
    %4672 = vmatpush.msra.mxu0 %v250
    %4673 = vmatpush.msra.mxu0 %v242
    %4674 = vmatpush.msra.mxu0 %v234
    %4675 = vmatpush.msra.mxu0 %v226
    %4676 = vmatpush.msra.mxu0 %v218
    %4677 = vmatpush.msra.mxu0 %v210
    %4678 = vmatpush.msra.mxu0 %v202
    %4679 = vmatpush.msra.mxu0 %v194
    %4680 = vmatpush.msra.mxu0 %v186
    %4681 = vmatpush.msra.mxu0 %v178
    %4682 = vmatpush.msra.mxu0 %v170
    %4683 = vmatpush.msra.mxu0 %v162
    %4684 = vmatpush.msra.mxu0 %v154
    %4685 = vmatmul.f32.gmra.mxu0 %v3878
    %v4686 = vpop.f32.mrf.mxu0
    %v4687 = vadd.f32 0.0, %v4686
    %4688 = vdwg.mxu0
    %4689 = vmatpush.msra.mxu0 %v402
    %4690 = vmatpush.msra.mxu0 %v394
    %4691 = vmatpush.msra.mxu0 %v386
    %4692 = vmatpush.msra.mxu0 %v378
    %4693 = vmatpush.msra.mxu0 %v370
    %4694 = vmatpush.msra.mxu0 %v362
    %4695 = vmatpush.msra.mxu0 %v354
    %4696 = vmatpush.msra.mxu0 %v346
    %4697 = vmatpush.msra.mxu0 %v338
    %4698 = vmatpush.msra.mxu0 %v330
    %4699 = vmatpush.msra.mxu0 %v322
    %4700 = vmatpush.msra.mxu0 %v314
    %4701 = vmatpush.msra.mxu0 %v306
    %4702 = vmatpush.msra.mxu0 %v298
    %4703 = vmatpush.msra.mxu0 %v290
    %4704 = vmatpush.msra.mxu0 %v282
    %4705 = vmatmul.f32.gmra.mxu0 %v3879
    %v4706 = vpop.f32.mrf.mxu0
    %v4707 = vadd.f32 %v4687, %v4706
    %4708 = vdwg.mxu0
    %4709 = vmatpush.msra.mxu0 %v275
    %4710 = vmatpush.msra.mxu0 %v267
    %4711 = vmatpush.msra.mxu0 %v259
    %4712 = vmatpush.msra.mxu0 %v251
    %4713 = vmatpush.msra.mxu0 %v243
    %4714 = vmatpush.msra.mxu0 %v235
    %4715 = vmatpush.msra.mxu0 %v227
    %4716 = vmatpush.msra.mxu0 %v219
    %4717 = vmatpush.msra.mxu0 %v211
    %4718 = vmatpush.msra.mxu0 %v203
    %4719 = vmatpush.msra.mxu0 %v195
    %4720 = vmatpush.msra.mxu0 %v187
    %4721 = vmatpush.msra.mxu0 %v179
    %4722 = vmatpush.msra.mxu0 %v171
    %4723 = vmatpush.msra.mxu0 %v163
    %4724 = vmatpush.msra.mxu0 %v155
    %4725 = vmatmul.f32.gmra.mxu0 %v3878
    %v4726 = vpop.f32.mrf.mxu0
    %v4727 = vadd.f32 0.0, %v4726
    %4728 = vdwg.mxu0
    %4729 = vmatpush.msra.mxu0 %v403
    %4730 = vmatpush.msra.mxu0 %v395
    %4731 = vmatpush.msra.mxu0 %v387
    %4732 = vmatpush.msra.mxu0 %v379
    %4733 = vmatpush.msra.mxu0 %v371
    %4734 = vmatpush.msra.mxu0 %v363
    %4735 = vmatpush.msra.mxu0 %v355
    %4736 = vmatpush.msra.mxu0 %v347
    %4737 = vmatpush.msra.mxu0 %v339
    %4738 = vmatpush.msra.mxu0 %v331
    %4739 = vmatpush.msra.mxu0 %v323
    %4740 = vmatpush.msra.mxu0 %v315
    %4741 = vmatpush.msra.mxu0 %v307
    %4742 = vmatpush.msra.mxu0 %v299
    %4743 = vmatpush.msra.mxu0 %v291
    %4744 = vmatpush.msra.mxu0 %v283
    %4745 = vmatmul.f32.gmra.mxu0 %v3879
    %v4746 = vpop.f32.mrf.mxu0
    %v4747 = vadd.f32 %v4727, %v4746
    %4748 = vdwg.mxu0
    %4749 = vmatpush.msra.mxu0 %v276
    %4750 = vmatpush.msra.mxu0 %v268
    %4751 = vmatpush.msra.mxu0 %v260
    %4752 = vmatpush.msra.mxu0 %v252
    %4753 = vmatpush.msra.mxu0 %v244
    %4754 = vmatpush.msra.mxu0 %v236
    %4755 = vmatpush.msra.mxu0 %v228
    %4756 = vmatpush.msra.mxu0 %v220
    %4757 = vmatpush.msra.mxu0 %v212
    %4758 = vmatpush.msra.mxu0 %v204
    %4759 = vmatpush.msra.mxu0 %v196
    %4760 = vmatpush.msra.mxu0 %v188
    %4761 = vmatpush.msra.mxu0 %v180
    %4762 = vmatpush.msra.mxu0 %v172
    %4763 = vmatpush.msra.mxu0 %v164
    %4764 = vmatpush.msra.mxu0 %v156
    %4765 = vmatmul.f32.gmra.mxu0 %v3878
    %v4766 = vpop.f32.mrf.mxu0
    %v4767 = vadd.f32 0.0, %v4766
    %4768 = vdwg.mxu0
    %4769 = vmatpush.msra.mxu0 %v404
    %4770 = vmatpush.msra.mxu0 %v396
    %4771 = vmatpush.msra.mxu0 %v388
    %4772 = vmatpush.msra.mxu0 %v380
    %4773 = vmatpush.msra.mxu0 %v372
    %4774 = vmatpush.msra.mxu0 %v364
    %4775 = vmatpush.msra.mxu0 %v356
    %4776 = vmatpush.msra.mxu0 %v348
    %4777 = vmatpush.msra.mxu0 %v340
    %4778 = vmatpush.msra.mxu0 %v332
    %4779 = vmatpush.msra.mxu0 %v324
    %4780 = vmatpush.msra.mxu0 %v316
    %4781 = vmatpush.msra.mxu0 %v308
    %4782 = vmatpush.msra.mxu0 %v300
    %4783 = vmatpush.msra.mxu0 %v292
    %4784 = vmatpush.msra.mxu0 %v284
    %4785 = vmatmul.f32.gmra.mxu0 %v3879
    %v4786 = vpop.f32.mrf.mxu0
    %v4787 = vadd.f32 %v4767, %v4786
    %4788 = vdwg.mxu0
    %4789 = vmatpush.msra.mxu0 %v277
    %4790 = vmatpush.msra.mxu0 %v269
    %4791 = vmatpush.msra.mxu0 %v261
    %4792 = vmatpush.msra.mxu0 %v253
    %4793 = vmatpush.msra.mxu0 %v245
    %4794 = vmatpush.msra.mxu0 %v237
    %4795 = vmatpush.msra.mxu0 %v229
    %4796 = vmatpush.msra.mxu0 %v221
    %4797 = vmatpush.msra.mxu0 %v213
    %4798 = vmatpush.msra.mxu0 %v205
    %4799 = vmatpush.msra.mxu0 %v197
    %4800 = vmatpush.msra.mxu0 %v189
    %4801 = vmatpush.msra.mxu0 %v181
    %4802 = vmatpush.msra.mxu0 %v173
    %4803 = vmatpush.msra.mxu0 %v165
    %4804 = vmatpush.msra.mxu0 %v157
    %4805 = vmatmul.f32.gmra.mxu0 %v3878
    %v4806 = vpop.f32.mrf.mxu0
    %v4807 = vadd.f32 0.0, %v4806
    %4808 = vdwg.mxu0
    %4809 = vmatpush.msra.mxu0 %v405
    %4810 = vmatpush.msra.mxu0 %v397
    %4811 = vmatpush.msra.mxu0 %v389
    %4812 = vmatpush.msra.mxu0 %v381
    %4813 = vmatpush.msra.mxu0 %v373
    %4814 = vmatpush.msra.mxu0 %v365
    %4815 = vmatpush.msra.mxu0 %v357
    %4816 = vmatpush.msra.mxu0 %v349
    %4817 = vmatpush.msra.mxu0 %v341
    %4818 = vmatpush.msra.mxu0 %v333
    %4819 = vmatpush.msra.mxu0 %v325
    %4820 = vmatpush.msra.mxu0 %v317
    %4821 = vmatpush.msra.mxu0 %v309
    %4822 = vmatpush.msra.mxu0 %v301
    %4823 = vmatpush.msra.mxu0 %v293
    %4824 = vmatpush.msra.mxu0 %v285
    %4825 = vmatmul.f32.gmra.mxu0 %v3879
    %v4826 = vpop.f32.mrf.mxu0
    %v4827 = vadd.f32 %v4807, %v4826
    %4828 = vdwg.mxu0
    %4829 = vmatpush.msra.mxu0 %v278
    %4830 = vmatpush.msra.mxu0 %v270
    %4831 = vmatpush.msra.mxu0 %v262
    %4832 = vmatpush.msra.mxu0 %v254
    %4833 = vmatpush.msra.mxu0 %v246
    %4834 = vmatpush.msra.mxu0 %v238
    %4835 = vmatpush.msra.mxu0 %v230
    %4836 = vmatpush.msra.mxu0 %v222
    %4837 = vmatpush.msra.mxu0 %v214
    %4838 = vmatpush.msra.mxu0 %v206
    %4839 = vmatpush.msra.mxu0 %v198
    %4840 = vmatpush.msra.mxu0 %v190
    %4841 = vmatpush.msra.mxu0 %v182
    %4842 = vmatpush.msra.mxu0 %v174
    %4843 = vmatpush.msra.mxu0 %v166
    %4844 = vmatpush.msra.mxu0 %v158
    %4845 = vmatmul.f32.gmra.mxu0 %v3878
    %v4846 = vpop.f32.mrf.mxu0
    %v4847 = vadd.f32 0.0, %v4846
    %4848 = vdwg.mxu0
    %4849 = vmatpush.msra.mxu0 %v406
    %4850 = vmatpush.msra.mxu0 %v398
    %4851 = vmatpush.msra.mxu0 %v390
    %4852 = vmatpush.msra.mxu0 %v382
    %4853 = vmatpush.msra.mxu0 %v374
    %4854 = vmatpush.msra.mxu0 %v366
    %4855 = vmatpush.msra.mxu0 %v358
    %4856 = vmatpush.msra.mxu0 %v350
    %4857 = vmatpush.msra.mxu0 %v342
    %4858 = vmatpush.msra.mxu0 %v334
    %4859 = vmatpush.msra.mxu0 %v326
    %4860 = vmatpush.msra.mxu0 %v318
    %4861 = vmatpush.msra.mxu0 %v310
    %4862 = vmatpush.msra.mxu0 %v302
    %4863 = vmatpush.msra.mxu0 %v294
    %4864 = vmatpush.msra.mxu0 %v286
    %4865 = vmatmul.f32.gmra.mxu0 %v3879
    %v4866 = vpop.f32.mrf.mxu0
    %v4867 = vadd.f32 %v4847, %v4866
    %4868 = vdwg.mxu0
    %4869 = vmatpush.msra.mxu0 %v279
    %4870 = vmatpush.msra.mxu0 %v271
    %4871 = vmatpush.msra.mxu0 %v263
    %4872 = vmatpush.msra.mxu0 %v255
    %4873 = vmatpush.msra.mxu0 %v247
    %4874 = vmatpush.msra.mxu0 %v239
    %4875 = vmatpush.msra.mxu0 %v231
    %4876 = vmatpush.msra.mxu0 %v223
    %4877 = vmatpush.msra.mxu0 %v215
    %4878 = vmatpush.msra.mxu0 %v207
    %4879 = vmatpush.msra.mxu0 %v199
    %4880 = vmatpush.msra.mxu0 %v191
    %4881 = vmatpush.msra.mxu0 %v183
    %4882 = vmatpush.msra.mxu0 %v175
    %4883 = vmatpush.msra.mxu0 %v167
    %4884 = vmatpush.msra.mxu0 %v159
    %4885 = vmatmul.f32.gmra.mxu0 %v3878
    %v4886 = vpop.f32.mrf.mxu0
    %v4887 = vadd.f32 0.0, %v4886
    %4888 = vdwg.mxu0
    %4889 = vmatpush.msra.mxu0 %v407
    %4890 = vmatpush.msra.mxu0 %v399
    %4891 = vmatpush.msra.mxu0 %v391
    %4892 = vmatpush.msra.mxu0 %v383
    %4893 = vmatpush.msra.mxu0 %v375
    %4894 = vmatpush.msra.mxu0 %v367
    %4895 = vmatpush.msra.mxu0 %v359
    %4896 = vmatpush.msra.mxu0 %v351
    %4897 = vmatpush.msra.mxu0 %v343
    %4898 = vmatpush.msra.mxu0 %v335
    %4899 = vmatpush.msra.mxu0 %v327
    %4900 = vmatpush.msra.mxu0 %v319
    %4901 = vmatpush.msra.mxu0 %v311
    %4902 = vmatpush.msra.mxu0 %v303
    %4903 = vmatpush.msra.mxu0 %v295
    %4904 = vmatpush.msra.mxu0 %v287
    %4905 = vmatmul.f32.gmra.mxu0 %v3879
    %v4906 = vpop.f32.mrf.mxu0
    %v4907 = vadd.f32 %v4887, %v4906
    %4908 = vdwg.mxu0
    %4909 = vmatpush.msra.mxu0 %v280
    %4910 = vmatpush.msra.mxu0 %v272
    %4911 = vmatpush.msra.mxu0 %v264
    %4912 = vmatpush.msra.mxu0 %v256
    %4913 = vmatpush.msra.mxu0 %v248
    %4914 = vmatpush.msra.mxu0 %v240
    %4915 = vmatpush.msra.mxu0 %v232
    %4916 = vmatpush.msra.mxu0 %v224
    %4917 = vmatpush.msra.mxu0 %v216
    %4918 = vmatpush.msra.mxu0 %v208
    %4919 = vmatpush.msra.mxu0 %v200
    %4920 = vmatpush.msra.mxu0 %v192
    %4921 = vmatpush.msra.mxu0 %v184
    %4922 = vmatpush.msra.mxu0 %v176
    %4923 = vmatpush.msra.mxu0 %v168
    %4924 = vmatpush.msra.mxu0 %v160
    %4925 = vmatmul.f32.gmra.mxu0 %v3878
    %v4926 = vpop.f32.mrf.mxu0
    %v4927 = vadd.f32 0.0, %v4926
    %4928 = vdwg.mxu0
    %4929 = vmatpush.msra.mxu0 %v408
    %4930 = vmatpush.msra.mxu0 %v400
    %4931 = vmatpush.msra.mxu0 %v392
    %4932 = vmatpush.msra.mxu0 %v384
    %4933 = vmatpush.msra.mxu0 %v376
    %4934 = vmatpush.msra.mxu0 %v368
    %4935 = vmatpush.msra.mxu0 %v360
    %4936 = vmatpush.msra.mxu0 %v352
    %4937 = vmatpush.msra.mxu0 %v344
    %4938 = vmatpush.msra.mxu0 %v336
    %4939 = vmatpush.msra.mxu0 %v328
    %4940 = vmatpush.msra.mxu0 %v320
    %4941 = vmatpush.msra.mxu0 %v312
    %4942 = vmatpush.msra.mxu0 %v304
    %4943 = vmatpush.msra.mxu0 %v296
    %4944 = vmatpush.msra.mxu0 %v288
    %4945 = vmatmul.f32.gmra.mxu0 %v3879
    %v4946 = vpop.f32.mrf.mxu0
    %v4947 = vadd.f32 %v4927, %v4946
    %4948 = vdwg.mxu0
    %4949 = vmatpush.msra.mxu0 %v281
    %4950 = vmatpush.msra.mxu0 %v273
    %4951 = vmatpush.msra.mxu0 %v265
    %4952 = vmatpush.msra.mxu0 %v257
    %4953 = vmatpush.msra.mxu0 %v249
    %4954 = vmatpush.msra.mxu0 %v241
    %4955 = vmatpush.msra.mxu0 %v233
    %4956 = vmatpush.msra.mxu0 %v225
    %4957 = vmatpush.msra.mxu0 %v217
    %4958 = vmatpush.msra.mxu0 %v209
    %4959 = vmatpush.msra.mxu0 %v201
    %4960 = vmatpush.msra.mxu0 %v193
    %4961 = vmatpush.msra.mxu0 %v185
    %4962 = vmatpush.msra.mxu0 %v177
    %4963 = vmatpush.msra.mxu0 %v169
    %4964 = vmatpush.msra.mxu0 %v161
    %4965 = vmatmul.f32.gmra.mxu0 %v3878
    %v4966 = vpop.f32.mrf.mxu0
    %v4967 = vadd.f32 0.0, %v4966
    %4968 = vdwg.mxu0
    %4969 = vmatpush.msra.mxu0 %v409
    %4970 = vmatpush.msra.mxu0 %v401
    %4971 = vmatpush.msra.mxu0 %v393
    %4972 = vmatpush.msra.mxu0 %v385
    %4973 = vmatpush.msra.mxu0 %v377
    %4974 = vmatpush.msra.mxu0 %v369
    %4975 = vmatpush.msra.mxu0 %v361
    %4976 = vmatpush.msra.mxu0 %v353
    %4977 = vmatpush.msra.mxu0 %v345
    %4978 = vmatpush.msra.mxu0 %v337
    %4979 = vmatpush.msra.mxu0 %v329
    %4980 = vmatpush.msra.mxu0 %v321
    %4981 = vmatpush.msra.mxu0 %v313
    %4982 = vmatpush.msra.mxu0 %v305
    %4983 = vmatpush.msra.mxu0 %v297
    %4984 = vmatpush.msra.mxu0 %v289
    %4985 = vmatmul.f32.gmra.mxu0 %v3879
    %v4986 = vpop.f32.mrf.mxu0
    %v4987 = vadd.f32 %v4967, %v4986
    %4988 = vdwg.mxu0
    %v4989 = vadd.f32 %v4661, %v4707
    %v4990 = vadd.f32 %v4662, %v4747
    %v4991 = vadd.f32 %v4663, %v4787
    %v4992 = vadd.f32 %v4664, %v4827
    %v4993 = vadd.f32 %v4665, %v4867
    %v4994 = vadd.f32 %v4666, %v4907
    %v4995 = vadd.f32 %v4667, %v4947
    %v4996 = vadd.f32 %v4668, %v4987
    %v4997 = vxor.u32 %v4989, 2147483648
    %v4998 = vxor.u32 %v4990, 2147483648
    %v4999 = vmul.f32 %v4997, 1.442695
    %v5000 = vpow.pop %v4999
    %v5001 = vmul.f32 %v4998, 1.442695
    %v5002 = vpow.pop %v5001
    %v5003 = vadd.f32 %v5000, 1.0
    %v5004 = vadd.f32 %v5002, 1.0
    %v5005 = vrcp.pop %v5003
    %v5006 = vmul.f32 %v5003, %v5005
    %v5007 = vsub.f32 1.0, %v5006
    %v5008 = vmul.f32 %v5005, %v5007
    %v5009 = vadd.f32 %v5005, %v5008
    %vm5010 = vweird.f32 %v5003
    %vm5011 = vweird.f32 %v5005
    %vm5012 = vmor %vm5010, %vm5011
    %v5013 = vsel %vm5012, %v5005, %v5009
    %v5014 = vand.u32 2147483647, %v5003
    %vm5015 = vcmp.eq.f32.partialorder %v5014, 8.507059e+37
    %v5016 = vand.u32 %v5003, 2147483648
    %v5017 = vor.u32 1.1754944e-38, %v5016
    %v5018 = vsel %vm5015, %v5017, %v5013
    %v5019 = vmul.f32 1.0, %v5018
    %v5020 = vrcp.pop %v5004
    %v5021 = vmul.f32 %v5004, %v5020
    %v5022 = vsub.f32 1.0, %v5021
    %v5023 = vmul.f32 %v5020, %v5022
    %v5024 = vadd.f32 %v5020, %v5023
    %vm5025 = vweird.f32 %v5004
    %vm5026 = vweird.f32 %v5020
    %vm5027 = vmor %vm5025, %vm5026
    %v5028 = vsel %vm5027, %v5020, %v5024
    %v5029 = vand.u32 2147483647, %v5004
    %vm5030 = vcmp.eq.f32.partialorder %v5029, 8.507059e+37
    %v5031 = vand.u32 %v5004, 2147483648
    %v5032 = vor.u32 1.1754944e-38, %v5031
    %v5033 = vsel %vm5030, %v5032, %v5028
    %v5034 = vmul.f32 1.0, %v5033
    %v5035 = vxor.u32 %v4991, 2147483648
    %v5036 = vxor.u32 %v4992, 2147483648
    %v5037 = vmul.f32 %v5035, 1.442695
    %v5038 = vpow.pop %v5037
    %v5039 = vmul.f32 %v5036, 1.442695
    %v5040 = vpow.pop %v5039
    %v5041 = vadd.f32 %v5038, 1.0
    %v5042 = vadd.f32 %v5040, 1.0
    %v5043 = vrcp.pop %v5041
    %v5044 = vmul.f32 %v5041, %v5043
    %v5045 = vsub.f32 1.0, %v5044
    %v5046 = vmul.f32 %v5043, %v5045
    %v5047 = vadd.f32 %v5043, %v5046
    %vm5048 = vweird.f32 %v5041
    %vm5049 = vweird.f32 %v5043
    %vm5050 = vmor %vm5048, %vm5049
    %v5051 = vsel %vm5050, %v5043, %v5047
    %v5052 = vand.u32 2147483647, %v5041
    %vm5053 = vcmp.eq.f32.partialorder %v5052, 8.507059e+37
    %v5054 = vand.u32 %v5041, 2147483648
    %v5055 = vor.u32 1.1754944e-38, %v5054
    %v5056 = vsel %vm5053, %v5055, %v5051
    %v5057 = vmul.f32 1.0, %v5056
    %v5058 = vrcp.pop %v5042
    %v5059 = vmul.f32 %v5042, %v5058
    %v5060 = vsub.f32 1.0, %v5059
    %v5061 = vmul.f32 %v5058, %v5060
    %v5062 = vadd.f32 %v5058, %v5061
    %vm5063 = vweird.f32 %v5042
    %vm5064 = vweird.f32 %v5058
    %vm5065 = vmor %vm5063, %vm5064
    %v5066 = vsel %vm5065, %v5058, %v5062
    %v5067 = vand.u32 2147483647, %v5042
    %vm5068 = vcmp.eq.f32.partialorder %v5067, 8.507059e+37
    %v5069 = vand.u32 %v5042, 2147483648
    %v5070 = vor.u32 1.1754944e-38, %v5069
    %v5071 = vsel %vm5068, %v5070, %v5066
    %v5072 = vmul.f32 1.0, %v5071
    %v5073 = vtanh.pop %v4993
    %v5074 = vtanh.pop %v4994
    %v5075 = vxor.u32 %v4995, 2147483648
    %v5076 = vxor.u32 %v4996, 2147483648
    %v5077 = vmul.f32 %v5075, 1.442695
    %v5078 = vpow.pop %v5077
    %v5079 = vmul.f32 %v5076, 1.442695
    %v5080 = vpow.pop %v5079
    %v5081 = vadd.f32 %v5078, 1.0
    %v5082 = vadd.f32 %v5080, 1.0
    %v5083 = vrcp.pop %v5081
    %v5084 = vmul.f32 %v5081, %v5083
    %v5085 = vsub.f32 1.0, %v5084
    %v5086 = vmul.f32 %v5083, %v5085
    %v5087 = vadd.f32 %v5083, %v5086
    %vm5088 = vweird.f32 %v5081
    %vm5089 = vweird.f32 %v5083
    %vm5090 = vmor %vm5088, %vm5089
    %v5091 = vsel %vm5090, %v5083, %v5087
    %v5092 = vand.u32 2147483647, %v5081
    %vm5093 = vcmp.eq.f32.partialorder %v5092, 8.507059e+37
    %v5094 = vand.u32 %v5081, 2147483648
    %v5095 = vor.u32 1.1754944e-38, %v5094
    %v5096 = vsel %vm5093, %v5095, %v5091
    %v5097 = vmul.f32 1.0, %v5096
    %v5098 = vrcp.pop %v5082
    %v5099 = vmul.f32 %v5082, %v5098
    %v5100 = vsub.f32 1.0, %v5099
    %v5101 = vmul.f32 %v5098, %v5100
    %v5102 = vadd.f32 %v5098, %v5101
    %vm5103 = vweird.f32 %v5082
    %vm5104 = vweird.f32 %v5098
    %vm5105 = vmor %vm5103, %vm5104
    %v5106 = vsel %vm5105, %v5098, %v5102
    %v5107 = vand.u32 2147483647, %v5082
    %vm5108 = vcmp.eq.f32.partialorder %v5107, 8.507059e+37
    %v5109 = vand.u32 %v5082, 2147483648
    %v5110 = vor.u32 1.1754944e-38, %v5109
    %v5111 = vsel %vm5108, %v5110, %v5106
    %v5112 = vmul.f32 1.0, %v5111
    %v5113 = vmul.f32 %v5057, %v3874
    %v5114 = vmul.f32 %v5072, %v3875
    %v5115 = vmul.f32 %v5019, %v5073
    %v5116 = vmul.f32 %v5034, %v5074
    %v5117 = vadd.f32 %v5113, %v5115
    %v5118 = vadd.f32 %v5114, %v5116
    %v5119 = vtanh.pop %v5117
    %v5120 = vtanh.pop %v5118
    %v5121 = vmul.f32 %v5097, %v5119
    %v5122 = vmul.f32 %v5112, %v5120
    %5123 = vmatpush.msra.mxu0 %v984
    %5124 = vmatpush.msra.mxu0 %v976
    %5125 = vmatpush.msra.mxu0 %v968
    %5126 = vmatpush.msra.mxu0 %v960
    %5127 = vmatpush.msra.mxu0 %v952
    %5128 = vmatpush.msra.mxu0 %v944
    %5129 = vmatpush.msra.mxu0 %v936
    %5130 = vmatpush.msra.mxu0 %v928
    %5131 = vmatpush.msra.mxu0 %v920
    %5132 = vmatpush.msra.mxu0 %v912
    %5133 = vmatpush.msra.mxu0 %v904
    %5134 = vmatpush.msra.mxu0 %v896
    %5135 = vmatpush.msra.mxu0 %v888
    %5136 = vmatpush.msra.mxu0 %v880
    %5137 = vmatpush.msra.mxu0 %v872
    %5138 = vmatpush.msra.mxu0 %v864
    %5139 = vmatmul.f32.gmra.mxu0 %v5121
    %v5140 = vpop.f32.mrf.mxu0
    %v5141 = vadd.f32 %v1378, %v5140
    %5142 = vdwg.mxu0
    %5143 = vmatpush.msra.mxu0 %v1112
    %5144 = vmatpush.msra.mxu0 %v1104
    %5145 = vmatpush.msra.mxu0 %v1096
    %5146 = vmatpush.msra.mxu0 %v1088
    %5147 = vmatpush.msra.mxu0 %v1080
    %5148 = vmatpush.msra.mxu0 %v1072
    %5149 = vmatpush.msra.mxu0 %v1064
    %5150 = vmatpush.msra.mxu0 %v1056
    %5151 = vmatpush.msra.mxu0 %v1048
    %5152 = vmatpush.msra.mxu0 %v1040
    %5153 = vmatpush.msra.mxu0 %v1032
    %5154 = vmatpush.msra.mxu0 %v1024
    %5155 = vmatpush.msra.mxu0 %v1016
    %5156 = vmatpush.msra.mxu0 %v1008
    %5157 = vmatpush.msra.mxu0 %v1000
    %5158 = vmatpush.msra.mxu0 %v992
    %5159 = vmatmul.f32.gmra.mxu0 %v5122
    %v5160 = vpop.f32.mrf.mxu0
    %v5161 = vadd.f32 %v5141, %v5160
    %5162 = vdwg.mxu0
    %5163 = vmatpush.msra.mxu0 %v1240
    %5164 = vmatpush.msra.mxu0 %v1232
    %5165 = vmatpush.msra.mxu0 %v1224
    %5166 = vmatpush.msra.mxu0 %v1216
    %5167 = vmatpush.msra.mxu0 %v1208
    %5168 = vmatpush.msra.mxu0 %v1200
    %5169 = vmatpush.msra.mxu0 %v1192
    %5170 = vmatpush.msra.mxu0 %v1184
    %5171 = vmatpush.msra.mxu0 %v1176
    %5172 = vmatpush.msra.mxu0 %v1168
    %5173 = vmatpush.msra.mxu0 %v1160
    %5174 = vmatpush.msra.mxu0 %v1152
    %5175 = vmatpush.msra.mxu0 %v1144
    %5176 = vmatpush.msra.mxu0 %v1136
    %5177 = vmatpush.msra.mxu0 %v1128
    %5178 = vmatpush.msra.mxu0 %v1120
    %5179 = vmatmul.f32.gmra.mxu0 %v4644
    %v5180 = vpop.f32.mrf.mxu0
    %v5181 = vadd.f32 %v5161, %v5180
    %5182 = vdwg.mxu0
    %5183 = vmatpush.msra.mxu0 %v1368
    %5184 = vmatpush.msra.mxu0 %v1360
    %5185 = vmatpush.msra.mxu0 %v1352
    %5186 = vmatpush.msra.mxu0 %v1344
    %5187 = vmatpush.msra.mxu0 %v1336
    %5188 = vmatpush.msra.mxu0 %v1328
    %5189 = vmatpush.msra.mxu0 %v1320
    %5190 = vmatpush.msra.mxu0 %v1312
    %5191 = vmatpush.msra.mxu0 %v1304
    %5192 = vmatpush.msra.mxu0 %v1296
    %5193 = vmatpush.msra.mxu0 %v1288
    %5194 = vmatpush.msra.mxu0 %v1280
    %5195 = vmatpush.msra.mxu0 %v1272
    %5196 = vmatpush.msra.mxu0 %v1264
    %5197 = vmatpush.msra.mxu0 %v1256
    %5198 = vmatpush.msra.mxu0 %v1248
    %5199 = vmatmul.f32.gmra.mxu0 %v4645
    %v5200 = vpop.f32.mrf.mxu0
    %v5201 = vadd.f32 %v5181, %v5200
    %5202 = vdwg.mxu0
    %5203 = vmatpush.msra.mxu0 %v985
    %5204 = vmatpush.msra.mxu0 %v977
    %5205 = vmatpush.msra.mxu0 %v969
    %5206 = vmatpush.msra.mxu0 %v961
    %5207 = vmatpush.msra.mxu0 %v953
    %5208 = vmatpush.msra.mxu0 %v945
    %5209 = vmatpush.msra.mxu0 %v937
    %5210 = vmatpush.msra.mxu0 %v929
    %5211 = vmatpush.msra.mxu0 %v921
    %5212 = vmatpush.msra.mxu0 %v913
    %5213 = vmatpush.msra.mxu0 %v905
    %5214 = vmatpush.msra.mxu0 %v897
    %5215 = vmatpush.msra.mxu0 %v889
    %5216 = vmatpush.msra.mxu0 %v881
    %5217 = vmatpush.msra.mxu0 %v873
    %5218 = vmatpush.msra.mxu0 %v865
    %5219 = vmatmul.f32.gmra.mxu0 %v5121
    %v5220 = vpop.f32.mrf.mxu0
    %v5221 = vadd.f32 %v1379, %v5220
    %5222 = vdwg.mxu0
    %5223 = vmatpush.msra.mxu0 %v1113
    %5224 = vmatpush.msra.mxu0 %v1105
    %5225 = vmatpush.msra.mxu0 %v1097
    %5226 = vmatpush.msra.mxu0 %v1089
    %5227 = vmatpush.msra.mxu0 %v1081
    %5228 = vmatpush.msra.mxu0 %v1073
    %5229 = vmatpush.msra.mxu0 %v1065
    %5230 = vmatpush.msra.mxu0 %v1057
    %5231 = vmatpush.msra.mxu0 %v1049
    %5232 = vmatpush.msra.mxu0 %v1041
    %5233 = vmatpush.msra.mxu0 %v1033
    %5234 = vmatpush.msra.mxu0 %v1025
    %5235 = vmatpush.msra.mxu0 %v1017
    %5236 = vmatpush.msra.mxu0 %v1009
    %5237 = vmatpush.msra.mxu0 %v1001
    %5238 = vmatpush.msra.mxu0 %v993
    %5239 = vmatmul.f32.gmra.mxu0 %v5122
    %v5240 = vpop.f32.mrf.mxu0
    %v5241 = vadd.f32 %v5221, %v5240
    %5242 = vdwg.mxu0
    %5243 = vmatpush.msra.mxu0 %v1241
    %5244 = vmatpush.msra.mxu0 %v1233
    %5245 = vmatpush.msra.mxu0 %v1225
    %5246 = vmatpush.msra.mxu0 %v1217
    %5247 = vmatpush.msra.mxu0 %v1209
    %5248 = vmatpush.msra.mxu0 %v1201
    %5249 = vmatpush.msra.mxu0 %v1193
    %5250 = vmatpush.msra.mxu0 %v1185
    %5251 = vmatpush.msra.mxu0 %v1177
    %5252 = vmatpush.msra.mxu0 %v1169
    %5253 = vmatpush.msra.mxu0 %v1161
    %5254 = vmatpush.msra.mxu0 %v1153
    %5255 = vmatpush.msra.mxu0 %v1145
    %5256 = vmatpush.msra.mxu0 %v1137
    %5257 = vmatpush.msra.mxu0 %v1129
    %5258 = vmatpush.msra.mxu0 %v1121
    %5259 = vmatmul.f32.gmra.mxu0 %v4644
    %v5260 = vpop.f32.mrf.mxu0
    %v5261 = vadd.f32 %v5241, %v5260
    %5262 = vdwg.mxu0
    %5263 = vmatpush.msra.mxu0 %v1369
    %5264 = vmatpush.msra.mxu0 %v1361
    %5265 = vmatpush.msra.mxu0 %v1353
    %5266 = vmatpush.msra.mxu0 %v1345
    %5267 = vmatpush.msra.mxu0 %v1337
    %5268 = vmatpush.msra.mxu0 %v1329
    %5269 = vmatpush.msra.mxu0 %v1321
    %5270 = vmatpush.msra.mxu0 %v1313
    %5271 = vmatpush.msra.mxu0 %v1305
    %5272 = vmatpush.msra.mxu0 %v1297
    %5273 = vmatpush.msra.mxu0 %v1289
    %5274 = vmatpush.msra.mxu0 %v1281
    %5275 = vmatpush.msra.mxu0 %v1273
    %5276 = vmatpush.msra.mxu0 %v1265
    %5277 = vmatpush.msra.mxu0 %v1257
    %5278 = vmatpush.msra.mxu0 %v1249
    %5279 = vmatmul.f32.gmra.mxu0 %v4645
    %v5280 = vpop.f32.mrf.mxu0
    %v5281 = vadd.f32 %v5261, %v5280
    %5282 = vdwg.mxu0
    %5283 = vmatpush.msra.mxu0 %v986
    %5284 = vmatpush.msra.mxu0 %v978
    %5285 = vmatpush.msra.mxu0 %v970
    %5286 = vmatpush.msra.mxu0 %v962
    %5287 = vmatpush.msra.mxu0 %v954
    %5288 = vmatpush.msra.mxu0 %v946
    %5289 = vmatpush.msra.mxu0 %v938
    %5290 = vmatpush.msra.mxu0 %v930
    %5291 = vmatpush.msra.mxu0 %v922
    %5292 = vmatpush.msra.mxu0 %v914
    %5293 = vmatpush.msra.mxu0 %v906
    %5294 = vmatpush.msra.mxu0 %v898
    %5295 = vmatpush.msra.mxu0 %v890
    %5296 = vmatpush.msra.mxu0 %v882
    %5297 = vmatpush.msra.mxu0 %v874
    %5298 = vmatpush.msra.mxu0 %v866
    %5299 = vmatmul.f32.gmra.mxu0 %v5121
    %v5300 = vpop.f32.mrf.mxu0
    %v5301 = vadd.f32 %v1380, %v5300
    %5302 = vdwg.mxu0
    %5303 = vmatpush.msra.mxu0 %v1114
    %5304 = vmatpush.msra.mxu0 %v1106
    %5305 = vmatpush.msra.mxu0 %v1098
    %5306 = vmatpush.msra.mxu0 %v1090
    %5307 = vmatpush.msra.mxu0 %v1082
    %5308 = vmatpush.msra.mxu0 %v1074
    %5309 = vmatpush.msra.mxu0 %v1066
    %5310 = vmatpush.msra.mxu0 %v1058
    %5311 = vmatpush.msra.mxu0 %v1050
    %5312 = vmatpush.msra.mxu0 %v1042
    %5313 = vmatpush.msra.mxu0 %v1034
    %5314 = vmatpush.msra.mxu0 %v1026
    %5315 = vmatpush.msra.mxu0 %v1018
    %5316 = vmatpush.msra.mxu0 %v1010
    %5317 = vmatpush.msra.mxu0 %v1002
    %5318 = vmatpush.msra.mxu0 %v994
    %5319 = vmatmul.f32.gmra.mxu0 %v5122
    %v5320 = vpop.f32.mrf.mxu0
    %v5321 = vadd.f32 %v5301, %v5320
    %5322 = vdwg.mxu0
    %5323 = vmatpush.msra.mxu0 %v1242
    %5324 = vmatpush.msra.mxu0 %v1234
    %5325 = vmatpush.msra.mxu0 %v1226
    %5326 = vmatpush.msra.mxu0 %v1218
    %5327 = vmatpush.msra.mxu0 %v1210
    %5328 = vmatpush.msra.mxu0 %v1202
    %5329 = vmatpush.msra.mxu0 %v1194
    %5330 = vmatpush.msra.mxu0 %v1186
    %5331 = vmatpush.msra.mxu0 %v1178
    %5332 = vmatpush.msra.mxu0 %v1170
    %5333 = vmatpush.msra.mxu0 %v1162
    %5334 = vmatpush.msra.mxu0 %v1154
    %5335 = vmatpush.msra.mxu0 %v1146
    %5336 = vmatpush.msra.mxu0 %v1138
    %5337 = vmatpush.msra.mxu0 %v1130
    %5338 = vmatpush.msra.mxu0 %v1122
    %5339 = vmatmul.f32.gmra.mxu0 %v4644
    %v5340 = vpop.f32.mrf.mxu0
    %v5341 = vadd.f32 %v5321, %v5340
    %5342 = vdwg.mxu0
    %5343 = vmatpush.msra.mxu0 %v1370
    %5344 = vmatpush.msra.mxu0 %v1362
    %5345 = vmatpush.msra.mxu0 %v1354
    %5346 = vmatpush.msra.mxu0 %v1346
    %5347 = vmatpush.msra.mxu0 %v1338
    %5348 = vmatpush.msra.mxu0 %v1330
    %5349 = vmatpush.msra.mxu0 %v1322
    %5350 = vmatpush.msra.mxu0 %v1314
    %5351 = vmatpush.msra.mxu0 %v1306
    %5352 = vmatpush.msra.mxu0 %v1298
    %5353 = vmatpush.msra.mxu0 %v1290
    %5354 = vmatpush.msra.mxu0 %v1282
    %5355 = vmatpush.msra.mxu0 %v1274
    %5356 = vmatpush.msra.mxu0 %v1266
    %5357 = vmatpush.msra.mxu0 %v1258
    %5358 = vmatpush.msra.mxu0 %v1250
    %5359 = vmatmul.f32.gmra.mxu0 %v4645
    %v5360 = vpop.f32.mrf.mxu0
    %v5361 = vadd.f32 %v5341, %v5360
    %5362 = vdwg.mxu0
    %5363 = vmatpush.msra.mxu0 %v987
    %5364 = vmatpush.msra.mxu0 %v979
    %5365 = vmatpush.msra.mxu0 %v971
    %5366 = vmatpush.msra.mxu0 %v963
    %5367 = vmatpush.msra.mxu0 %v955
    %5368 = vmatpush.msra.mxu0 %v947
    %5369 = vmatpush.msra.mxu0 %v939
    %5370 = vmatpush.msra.mxu0 %v931
    %5371 = vmatpush.msra.mxu0 %v923
    %5372 = vmatpush.msra.mxu0 %v915
    %5373 = vmatpush.msra.mxu0 %v907
    %5374 = vmatpush.msra.mxu0 %v899
    %5375 = vmatpush.msra.mxu0 %v891
    %5376 = vmatpush.msra.mxu0 %v883
    %5377 = vmatpush.msra.mxu0 %v875
    %5378 = vmatpush.msra.mxu0 %v867
    %5379 = vmatmul.f32.gmra.mxu0 %v5121
    %v5380 = vpop.f32.mrf.mxu0
    %v5381 = vadd.f32 %v1381, %v5380
    %5382 = vdwg.mxu0
    %5383 = vmatpush.msra.mxu0 %v1115
    %5384 = vmatpush.msra.mxu0 %v1107
    %5385 = vmatpush.msra.mxu0 %v1099
    %5386 = vmatpush.msra.mxu0 %v1091
    %5387 = vmatpush.msra.mxu0 %v1083
    %5388 = vmatpush.msra.mxu0 %v1075
    %5389 = vmatpush.msra.mxu0 %v1067
    %5390 = vmatpush.msra.mxu0 %v1059
    %5391 = vmatpush.msra.mxu0 %v1051
    %5392 = vmatpush.msra.mxu0 %v1043
    %5393 = vmatpush.msra.mxu0 %v1035
    %5394 = vmatpush.msra.mxu0 %v1027
    %5395 = vmatpush.msra.mxu0 %v1019
    %5396 = vmatpush.msra.mxu0 %v1011
    %5397 = vmatpush.msra.mxu0 %v1003
    %5398 = vmatpush.msra.mxu0 %v995
    %5399 = vmatmul.f32.gmra.mxu0 %v5122
    %v5400 = vpop.f32.mrf.mxu0
    %v5401 = vadd.f32 %v5381, %v5400
    %5402 = vdwg.mxu0
    %5403 = vmatpush.msra.mxu0 %v1243
    %5404 = vmatpush.msra.mxu0 %v1235
    %5405 = vmatpush.msra.mxu0 %v1227
    %5406 = vmatpush.msra.mxu0 %v1219
    %5407 = vmatpush.msra.mxu0 %v1211
    %5408 = vmatpush.msra.mxu0 %v1203
    %5409 = vmatpush.msra.mxu0 %v1195
    %5410 = vmatpush.msra.mxu0 %v1187
    %5411 = vmatpush.msra.mxu0 %v1179
    %5412 = vmatpush.msra.mxu0 %v1171
    %5413 = vmatpush.msra.mxu0 %v1163
    %5414 = vmatpush.msra.mxu0 %v1155
    %5415 = vmatpush.msra.mxu0 %v1147
    %5416 = vmatpush.msra.mxu0 %v1139
    %5417 = vmatpush.msra.mxu0 %v1131
    %5418 = vmatpush.msra.mxu0 %v1123
    %5419 = vmatmul.f32.gmra.mxu0 %v4644
    %v5420 = vpop.f32.mrf.mxu0
    %v5421 = vadd.f32 %v5401, %v5420
    %5422 = vdwg.mxu0
    %5423 = vmatpush.msra.mxu0 %v1371
    %5424 = vmatpush.msra.mxu0 %v1363
    %5425 = vmatpush.msra.mxu0 %v1355
    %5426 = vmatpush.msra.mxu0 %v1347
    %5427 = vmatpush.msra.mxu0 %v1339
    %5428 = vmatpush.msra.mxu0 %v1331
    %5429 = vmatpush.msra.mxu0 %v1323
    %5430 = vmatpush.msra.mxu0 %v1315
    %5431 = vmatpush.msra.mxu0 %v1307
    %5432 = vmatpush.msra.mxu0 %v1299
    %5433 = vmatpush.msra.mxu0 %v1291
    %5434 = vmatpush.msra.mxu0 %v1283
    %5435 = vmatpush.msra.mxu0 %v1275
    %5436 = vmatpush.msra.mxu0 %v1267
    %5437 = vmatpush.msra.mxu0 %v1259
    %5438 = vmatpush.msra.mxu0 %v1251
    %5439 = vmatmul.f32.gmra.mxu0 %v4645
    %v5440 = vpop.f32.mrf.mxu0
    %v5441 = vadd.f32 %v5421, %v5440
    %5442 = vdwg.mxu0
    %5443 = vmatpush.msra.mxu0 %v988
    %5444 = vmatpush.msra.mxu0 %v980
    %5445 = vmatpush.msra.mxu0 %v972
    %5446 = vmatpush.msra.mxu0 %v964
    %5447 = vmatpush.msra.mxu0 %v956
    %5448 = vmatpush.msra.mxu0 %v948
    %5449 = vmatpush.msra.mxu0 %v940
    %5450 = vmatpush.msra.mxu0 %v932
    %5451 = vmatpush.msra.mxu0 %v924
    %5452 = vmatpush.msra.mxu0 %v916
    %5453 = vmatpush.msra.mxu0 %v908
    %5454 = vmatpush.msra.mxu0 %v900
    %5455 = vmatpush.msra.mxu0 %v892
    %5456 = vmatpush.msra.mxu0 %v884
    %5457 = vmatpush.msra.mxu0 %v876
    %5458 = vmatpush.msra.mxu0 %v868
    %5459 = vmatmul.f32.gmra.mxu0 %v5121
    %v5460 = vpop.f32.mrf.mxu0
    %v5461 = vadd.f32 %v1382, %v5460
    %5462 = vdwg.mxu0
    %5463 = vmatpush.msra.mxu0 %v1116
    %5464 = vmatpush.msra.mxu0 %v1108
    %5465 = vmatpush.msra.mxu0 %v1100
    %5466 = vmatpush.msra.mxu0 %v1092
    %5467 = vmatpush.msra.mxu0 %v1084
    %5468 = vmatpush.msra.mxu0 %v1076
    %5469 = vmatpush.msra.mxu0 %v1068
    %5470 = vmatpush.msra.mxu0 %v1060
    %5471 = vmatpush.msra.mxu0 %v1052
    %5472 = vmatpush.msra.mxu0 %v1044
    %5473 = vmatpush.msra.mxu0 %v1036
    %5474 = vmatpush.msra.mxu0 %v1028
    %5475 = vmatpush.msra.mxu0 %v1020
    %5476 = vmatpush.msra.mxu0 %v1012
    %5477 = vmatpush.msra.mxu0 %v1004
    %5478 = vmatpush.msra.mxu0 %v996
    %5479 = vmatmul.f32.gmra.mxu0 %v5122
    %v5480 = vpop.f32.mrf.mxu0
    %v5481 = vadd.f32 %v5461, %v5480
    %5482 = vdwg.mxu0
    %5483 = vmatpush.msra.mxu0 %v1244
    %5484 = vmatpush.msra.mxu0 %v1236
    %5485 = vmatpush.msra.mxu0 %v1228
    %5486 = vmatpush.msra.mxu0 %v1220
    %5487 = vmatpush.msra.mxu0 %v1212
    %5488 = vmatpush.msra.mxu0 %v1204
    %5489 = vmatpush.msra.mxu0 %v1196
    %5490 = vmatpush.msra.mxu0 %v1188
    %5491 = vmatpush.msra.mxu0 %v1180
    %5492 = vmatpush.msra.mxu0 %v1172
    %5493 = vmatpush.msra.mxu0 %v1164
    %5494 = vmatpush.msra.mxu0 %v1156
    %5495 = vmatpush.msra.mxu0 %v1148
    %5496 = vmatpush.msra.mxu0 %v1140
    %5497 = vmatpush.msra.mxu0 %v1132
    %5498 = vmatpush.msra.mxu0 %v1124
    %5499 = vmatmul.f32.gmra.mxu0 %v4644
    %v5500 = vpop.f32.mrf.mxu0
    %v5501 = vadd.f32 %v5481, %v5500
    %5502 = vdwg.mxu0
    %5503 = vmatpush.msra.mxu0 %v1372
    %5504 = vmatpush.msra.mxu0 %v1364
    %5505 = vmatpush.msra.mxu0 %v1356
    %5506 = vmatpush.msra.mxu0 %v1348
    %5507 = vmatpush.msra.mxu0 %v1340
    %5508 = vmatpush.msra.mxu0 %v1332
    %5509 = vmatpush.msra.mxu0 %v1324
    %5510 = vmatpush.msra.mxu0 %v1316
    %5511 = vmatpush.msra.mxu0 %v1308
    %5512 = vmatpush.msra.mxu0 %v1300
    %5513 = vmatpush.msra.mxu0 %v1292
    %5514 = vmatpush.msra.mxu0 %v1284
    %5515 = vmatpush.msra.mxu0 %v1276
    %5516 = vmatpush.msra.mxu0 %v1268
    %5517 = vmatpush.msra.mxu0 %v1260
    %5518 = vmatpush.msra.mxu0 %v1252
    %5519 = vmatmul.f32.gmra.mxu0 %v4645
    %v5520 = vpop.f32.mrf.mxu0
    %v5521 = vadd.f32 %v5501, %v5520
    %5522 = vdwg.mxu0
    %5523 = vmatpush.msra.mxu0 %v989
    %5524 = vmatpush.msra.mxu0 %v981
    %5525 = vmatpush.msra.mxu0 %v973
    %5526 = vmatpush.msra.mxu0 %v965
    %5527 = vmatpush.msra.mxu0 %v957
    %5528 = vmatpush.msra.mxu0 %v949
    %5529 = vmatpush.msra.mxu0 %v941
    %5530 = vmatpush.msra.mxu0 %v933
    %5531 = vmatpush.msra.mxu0 %v925
    %5532 = vmatpush.msra.mxu0 %v917
    %5533 = vmatpush.msra.mxu0 %v909
    %5534 = vmatpush.msra.mxu0 %v901
    %5535 = vmatpush.msra.mxu0 %v893
    %5536 = vmatpush.msra.mxu0 %v885
    %5537 = vmatpush.msra.mxu0 %v877
    %5538 = vmatpush.msra.mxu0 %v869
    %5539 = vmatmul.f32.gmra.mxu0 %v5121
    %v5540 = vpop.f32.mrf.mxu0
    %v5541 = vadd.f32 %v1383, %v5540
    %5542 = vdwg.mxu0
    %5543 = vmatpush.msra.mxu0 %v1117
    %5544 = vmatpush.msra.mxu0 %v1109
    %5545 = vmatpush.msra.mxu0 %v1101
    %5546 = vmatpush.msra.mxu0 %v1093
    %5547 = vmatpush.msra.mxu0 %v1085
    %5548 = vmatpush.msra.mxu0 %v1077
    %5549 = vmatpush.msra.mxu0 %v1069
    %5550 = vmatpush.msra.mxu0 %v1061
    %5551 = vmatpush.msra.mxu0 %v1053
    %5552 = vmatpush.msra.mxu0 %v1045
    %5553 = vmatpush.msra.mxu0 %v1037
    %5554 = vmatpush.msra.mxu0 %v1029
    %5555 = vmatpush.msra.mxu0 %v1021
    %5556 = vmatpush.msra.mxu0 %v1013
    %5557 = vmatpush.msra.mxu0 %v1005
    %5558 = vmatpush.msra.mxu0 %v997
    %5559 = vmatmul.f32.gmra.mxu0 %v5122
    %v5560 = vpop.f32.mrf.mxu0
    %v5561 = vadd.f32 %v5541, %v5560
    %5562 = vdwg.mxu0
    %5563 = vmatpush.msra.mxu0 %v1245
    %5564 = vmatpush.msra.mxu0 %v1237
    %5565 = vmatpush.msra.mxu0 %v1229
    %5566 = vmatpush.msra.mxu0 %v1221
    %5567 = vmatpush.msra.mxu0 %v1213
    %5568 = vmatpush.msra.mxu0 %v1205
    %5569 = vmatpush.msra.mxu0 %v1197
    %5570 = vmatpush.msra.mxu0 %v1189
    %5571 = vmatpush.msra.mxu0 %v1181
    %5572 = vmatpush.msra.mxu0 %v1173
    %5573 = vmatpush.msra.mxu0 %v1165
    %5574 = vmatpush.msra.mxu0 %v1157
    %5575 = vmatpush.msra.mxu0 %v1149
    %5576 = vmatpush.msra.mxu0 %v1141
    %5577 = vmatpush.msra.mxu0 %v1133
    %5578 = vmatpush.msra.mxu0 %v1125
    %5579 = vmatmul.f32.gmra.mxu0 %v4644
    %v5580 = vpop.f32.mrf.mxu0
    %v5581 = vadd.f32 %v5561, %v5580
    %5582 = vdwg.mxu0
    %5583 = vmatpush.msra.mxu0 %v1373
    %5584 = vmatpush.msra.mxu0 %v1365
    %5585 = vmatpush.msra.mxu0 %v1357
    %5586 = vmatpush.msra.mxu0 %v1349
    %5587 = vmatpush.msra.mxu0 %v1341
    %5588 = vmatpush.msra.mxu0 %v1333
    %5589 = vmatpush.msra.mxu0 %v1325
    %5590 = vmatpush.msra.mxu0 %v1317
    %5591 = vmatpush.msra.mxu0 %v1309
    %5592 = vmatpush.msra.mxu0 %v1301
    %5593 = vmatpush.msra.mxu0 %v1293
    %5594 = vmatpush.msra.mxu0 %v1285
    %5595 = vmatpush.msra.mxu0 %v1277
    %5596 = vmatpush.msra.mxu0 %v1269
    %5597 = vmatpush.msra.mxu0 %v1261
    %5598 = vmatpush.msra.mxu0 %v1253
    %5599 = vmatmul.f32.gmra.mxu0 %v4645
    %v5600 = vpop.f32.mrf.mxu0
    %v5601 = vadd.f32 %v5581, %v5600
    %5602 = vdwg.mxu0
    %5603 = vmatpush.msra.mxu0 %v990
    %5604 = vmatpush.msra.mxu0 %v982
    %5605 = vmatpush.msra.mxu0 %v974
    %5606 = vmatpush.msra.mxu0 %v966
    %5607 = vmatpush.msra.mxu0 %v958
    %5608 = vmatpush.msra.mxu0 %v950
    %5609 = vmatpush.msra.mxu0 %v942
    %5610 = vmatpush.msra.mxu0 %v934
    %5611 = vmatpush.msra.mxu0 %v926
    %5612 = vmatpush.msra.mxu0 %v918
    %5613 = vmatpush.msra.mxu0 %v910
    %5614 = vmatpush.msra.mxu0 %v902
    %5615 = vmatpush.msra.mxu0 %v894
    %5616 = vmatpush.msra.mxu0 %v886
    %5617 = vmatpush.msra.mxu0 %v878
    %5618 = vmatpush.msra.mxu0 %v870
    %5619 = vmatmul.f32.gmra.mxu0 %v5121
    %v5620 = vpop.f32.mrf.mxu0
    %v5621 = vadd.f32 %v1384, %v5620
    %5622 = vdwg.mxu0
    %5623 = vmatpush.msra.mxu0 %v1118
    %5624 = vmatpush.msra.mxu0 %v1110
    %5625 = vmatpush.msra.mxu0 %v1102
    %5626 = vmatpush.msra.mxu0 %v1094
    %5627 = vmatpush.msra.mxu0 %v1086
    %5628 = vmatpush.msra.mxu0 %v1078
    %5629 = vmatpush.msra.mxu0 %v1070
    %5630 = vmatpush.msra.mxu0 %v1062
    %5631 = vmatpush.msra.mxu0 %v1054
    %5632 = vmatpush.msra.mxu0 %v1046
    %5633 = vmatpush.msra.mxu0 %v1038
    %5634 = vmatpush.msra.mxu0 %v1030
    %5635 = vmatpush.msra.mxu0 %v1022
    %5636 = vmatpush.msra.mxu0 %v1014
    %5637 = vmatpush.msra.mxu0 %v1006
    %5638 = vmatpush.msra.mxu0 %v998
    %5639 = vmatmul.f32.gmra.mxu0 %v5122
    %v5640 = vpop.f32.mrf.mxu0
    %v5641 = vadd.f32 %v5621, %v5640
    %5642 = vdwg.mxu0
    %5643 = vmatpush.msra.mxu0 %v1246
    %5644 = vmatpush.msra.mxu0 %v1238
    %5645 = vmatpush.msra.mxu0 %v1230
    %5646 = vmatpush.msra.mxu0 %v1222
    %5647 = vmatpush.msra.mxu0 %v1214
    %5648 = vmatpush.msra.mxu0 %v1206
    %5649 = vmatpush.msra.mxu0 %v1198
    %5650 = vmatpush.msra.mxu0 %v1190
    %5651 = vmatpush.msra.mxu0 %v1182
    %5652 = vmatpush.msra.mxu0 %v1174
    %5653 = vmatpush.msra.mxu0 %v1166
    %5654 = vmatpush.msra.mxu0 %v1158
    %5655 = vmatpush.msra.mxu0 %v1150
    %5656 = vmatpush.msra.mxu0 %v1142
    %5657 = vmatpush.msra.mxu0 %v1134
    %5658 = vmatpush.msra.mxu0 %v1126
    %5659 = vmatmul.f32.gmra.mxu0 %v4644
    %v5660 = vpop.f32.mrf.mxu0
    %v5661 = vadd.f32 %v5641, %v5660
    %5662 = vdwg.mxu0
    %5663 = vmatpush.msra.mxu0 %v1374
    %5664 = vmatpush.msra.mxu0 %v1366
    %5665 = vmatpush.msra.mxu0 %v1358
    %5666 = vmatpush.msra.mxu0 %v1350
    %5667 = vmatpush.msra.mxu0 %v1342
    %5668 = vmatpush.msra.mxu0 %v1334
    %5669 = vmatpush.msra.mxu0 %v1326
    %5670 = vmatpush.msra.mxu0 %v1318
    %5671 = vmatpush.msra.mxu0 %v1310
    %5672 = vmatpush.msra.mxu0 %v1302
    %5673 = vmatpush.msra.mxu0 %v1294
    %5674 = vmatpush.msra.mxu0 %v1286
    %5675 = vmatpush.msra.mxu0 %v1278
    %5676 = vmatpush.msra.mxu0 %v1270
    %5677 = vmatpush.msra.mxu0 %v1262
    %5678 = vmatpush.msra.mxu0 %v1254
    %5679 = vmatmul.f32.gmra.mxu0 %v4645
    %v5680 = vpop.f32.mrf.mxu0
    %v5681 = vadd.f32 %v5661, %v5680
    %5682 = vdwg.mxu0
    %5683 = vmatpush.msra.mxu0 %v991
    %5684 = vmatpush.msra.mxu0 %v983
    %5685 = vmatpush.msra.mxu0 %v975
    %5686 = vmatpush.msra.mxu0 %v967
    %5687 = vmatpush.msra.mxu0 %v959
    %5688 = vmatpush.msra.mxu0 %v951
    %5689 = vmatpush.msra.mxu0 %v943
    %5690 = vmatpush.msra.mxu0 %v935
    %5691 = vmatpush.msra.mxu0 %v927
    %5692 = vmatpush.msra.mxu0 %v919
    %5693 = vmatpush.msra.mxu0 %v911
    %5694 = vmatpush.msra.mxu0 %v903
    %5695 = vmatpush.msra.mxu0 %v895
    %5696 = vmatpush.msra.mxu0 %v887
    %5697 = vmatpush.msra.mxu0 %v879
    %5698 = vmatpush.msra.mxu0 %v871
    %5699 = vmatmul.f32.gmra.mxu0 %v5121
    %v5700 = vpop.f32.mrf.mxu0
    %v5701 = vadd.f32 %v1385, %v5700
    %5702 = vdwg.mxu0
    %5703 = vmatpush.msra.mxu0 %v1119
    %5704 = vmatpush.msra.mxu0 %v1111
    %5705 = vmatpush.msra.mxu0 %v1103
    %5706 = vmatpush.msra.mxu0 %v1095
    %5707 = vmatpush.msra.mxu0 %v1087
    %5708 = vmatpush.msra.mxu0 %v1079
    %5709 = vmatpush.msra.mxu0 %v1071
    %5710 = vmatpush.msra.mxu0 %v1063
    %5711 = vmatpush.msra.mxu0 %v1055
    %5712 = vmatpush.msra.mxu0 %v1047
    %5713 = vmatpush.msra.mxu0 %v1039
    %5714 = vmatpush.msra.mxu0 %v1031
    %5715 = vmatpush.msra.mxu0 %v1023
    %5716 = vmatpush.msra.mxu0 %v1015
    %5717 = vmatpush.msra.mxu0 %v1007
    %5718 = vmatpush.msra.mxu0 %v999
    %5719 = vmatmul.f32.gmra.mxu0 %v5122
    %v5720 = vpop.f32.mrf.mxu0
    %v5721 = vadd.f32 %v5701, %v5720
    %5722 = vdwg.mxu0
    %5723 = vmatpush.msra.mxu0 %v1247
    %5724 = vmatpush.msra.mxu0 %v1239
    %5725 = vmatpush.msra.mxu0 %v1231
    %5726 = vmatpush.msra.mxu0 %v1223
    %5727 = vmatpush.msra.mxu0 %v1215
    %5728 = vmatpush.msra.mxu0 %v1207
    %5729 = vmatpush.msra.mxu0 %v1199
    %5730 = vmatpush.msra.mxu0 %v1191
    %5731 = vmatpush.msra.mxu0 %v1183
    %5732 = vmatpush.msra.mxu0 %v1175
    %5733 = vmatpush.msra.mxu0 %v1167
    %5734 = vmatpush.msra.mxu0 %v1159
    %5735 = vmatpush.msra.mxu0 %v1151
    %5736 = vmatpush.msra.mxu0 %v1143
    %5737 = vmatpush.msra.mxu0 %v1135
    %5738 = vmatpush.msra.mxu0 %v1127
    %5739 = vmatmul.f32.gmra.mxu0 %v4644
    %v5740 = vpop.f32.mrf.mxu0
    %v5741 = vadd.f32 %v5721, %v5740
    %5742 = vdwg.mxu0
    %5743 = vmatpush.msra.mxu0 %v1375
    %5744 = vmatpush.msra.mxu0 %v1367
    %5745 = vmatpush.msra.mxu0 %v1359
    %5746 = vmatpush.msra.mxu0 %v1351
    %5747 = vmatpush.msra.mxu0 %v1343
    %5748 = vmatpush.msra.mxu0 %v1335
    %5749 = vmatpush.msra.mxu0 %v1327
    %5750 = vmatpush.msra.mxu0 %v1319
    %5751 = vmatpush.msra.mxu0 %v1311
    %5752 = vmatpush.msra.mxu0 %v1303
    %5753 = vmatpush.msra.mxu0 %v1295
    %5754 = vmatpush.msra.mxu0 %v1287
    %5755 = vmatpush.msra.mxu0 %v1279
    %5756 = vmatpush.msra.mxu0 %v1271
    %5757 = vmatpush.msra.mxu0 %v1263
    %5758 = vmatpush.msra.mxu0 %v1255
    %5759 = vmatmul.f32.gmra.mxu0 %v4645
    %v5760 = vpop.f32.mrf.mxu0
    %v5761 = vadd.f32 %v5741, %v5760
    %5762 = vdwg.mxu0
    %v5763 = vxor.u32 %v5201, 2147483648
    %v5764 = vxor.u32 %v5281, 2147483648
    %v5765 = vmul.f32 %v5763, 1.442695
    %v5766 = vpow.pop %v5765
    %v5767 = vmul.f32 %v5764, 1.442695
    %v5768 = vpow.pop %v5767
    %v5769 = vadd.f32 %v5766, 1.0
    %v5770 = vadd.f32 %v5768, 1.0
    %v5771 = vrcp.pop %v5769
    %v5772 = vmul.f32 %v5769, %v5771
    %v5773 = vsub.f32 1.0, %v5772
    %v5774 = vmul.f32 %v5771, %v5773
    %v5775 = vadd.f32 %v5771, %v5774
    %vm5776 = vweird.f32 %v5769
    %vm5777 = vweird.f32 %v5771
    %vm5778 = vmor %vm5776, %vm5777
    %v5779 = vsel %vm5778, %v5771, %v5775
    %v5780 = vand.u32 2147483647, %v5769
    %vm5781 = vcmp.eq.f32.partialorder %v5780, 8.507059e+37
    %v5782 = vand.u32 %v5769, 2147483648
    %v5783 = vor.u32 1.1754944e-38, %v5782
    %v5784 = vsel %vm5781, %v5783, %v5779
    %v5785 = vmul.f32 1.0, %v5784
    %v5786 = vrcp.pop %v5770
    %v5787 = vmul.f32 %v5770, %v5786
    %v5788 = vsub.f32 1.0, %v5787
    %v5789 = vmul.f32 %v5786, %v5788
    %v5790 = vadd.f32 %v5786, %v5789
    %vm5791 = vweird.f32 %v5770
    %vm5792 = vweird.f32 %v5786
    %vm5793 = vmor %vm5791, %vm5792
    %v5794 = vsel %vm5793, %v5786, %v5790
    %v5795 = vand.u32 2147483647, %v5770
    %vm5796 = vcmp.eq.f32.partialorder %v5795, 8.507059e+37
    %v5797 = vand.u32 %v5770, 2147483648
    %v5798 = vor.u32 1.1754944e-38, %v5797
    %v5799 = vsel %vm5796, %v5798, %v5794
    %v5800 = vmul.f32 1.0, %v5799
    %v5801 = vxor.u32 %v5361, 2147483648
    %v5802 = vxor.u32 %v5441, 2147483648
    %v5803 = vmul.f32 %v5801, 1.442695
    %v5804 = vpow.pop %v5803
    %v5805 = vmul.f32 %v5802, 1.442695
    %v5806 = vpow.pop %v5805
    %v5807 = vadd.f32 %v5804, 1.0
    %v5808 = vadd.f32 %v5806, 1.0
    %v5809 = vrcp.pop %v5807
    %v5810 = vmul.f32 %v5807, %v5809
    %v5811 = vsub.f32 1.0, %v5810
    %v5812 = vmul.f32 %v5809, %v5811
    %v5813 = vadd.f32 %v5809, %v5812
    %vm5814 = vweird.f32 %v5807
    %vm5815 = vweird.f32 %v5809
    %vm5816 = vmor %vm5814, %vm5815
    %v5817 = vsel %vm5816, %v5809, %v5813
    %v5818 = vand.u32 2147483647, %v5807
    %vm5819 = vcmp.eq.f32.partialorder %v5818, 8.507059e+37
    %v5820 = vand.u32 %v5807, 2147483648
    %v5821 = vor.u32 1.1754944e-38, %v5820
    %v5822 = vsel %vm5819, %v5821, %v5817
    %v5823 = vmul.f32 1.0, %v5822
    %v5824 = vrcp.pop %v5808
    %v5825 = vmul.f32 %v5808, %v5824
    %v5826 = vsub.f32 1.0, %v5825
    %v5827 = vmul.f32 %v5824, %v5826
    %v5828 = vadd.f32 %v5824, %v5827
    %vm5829 = vweird.f32 %v5808
    %vm5830 = vweird.f32 %v5824
    %vm5831 = vmor %vm5829, %vm5830
    %v5832 = vsel %vm5831, %v5824, %v5828
    %v5833 = vand.u32 2147483647, %v5808
    %vm5834 = vcmp.eq.f32.partialorder %v5833, 8.507059e+37
    %v5835 = vand.u32 %v5808, 2147483648
    %v5836 = vor.u32 1.1754944e-38, %v5835
    %v5837 = vsel %vm5834, %v5836, %v5832
    %v5838 = vmul.f32 1.0, %v5837
    %v5839 = vtanh.pop %v5521
    %v5840 = vtanh.pop %v5601
    %v5841 = vxor.u32 %v5681, 2147483648
    %v5842 = vxor.u32 %v5761, 2147483648
    %v5843 = vmul.f32 %v5841, 1.442695
    %v5844 = vpow.pop %v5843
    %v5845 = vmul.f32 %v5842, 1.442695
    %v5846 = vpow.pop %v5845
    %v5847 = vadd.f32 %v5844, 1.0
    %v5848 = vadd.f32 %v5846, 1.0
    %v5849 = vrcp.pop %v5847
    %v5850 = vmul.f32 %v5847, %v5849
    %v5851 = vsub.f32 1.0, %v5850
    %v5852 = vmul.f32 %v5849, %v5851
    %v5853 = vadd.f32 %v5849, %v5852
    %vm5854 = vweird.f32 %v5847
    %vm5855 = vweird.f32 %v5849
    %vm5856 = vmor %vm5854, %vm5855
    %v5857 = vsel %vm5856, %v5849, %v5853
    %v5858 = vand.u32 2147483647, %v5847
    %vm5859 = vcmp.eq.f32.partialorder %v5858, 8.507059e+37
    %v5860 = vand.u32 %v5847, 2147483648
    %v5861 = vor.u32 1.1754944e-38, %v5860
    %v5862 = vsel %vm5859, %v5861, %v5857
    %v5863 = vmul.f32 1.0, %v5862
    %v5864 = vrcp.pop %v5848
    %v5865 = vmul.f32 %v5848, %v5864
    %v5866 = vsub.f32 1.0, %v5865
    %v5867 = vmul.f32 %v5864, %v5866
    %v5868 = vadd.f32 %v5864, %v5867
    %vm5869 = vweird.f32 %v5848
    %vm5870 = vweird.f32 %v5864
    %vm5871 = vmor %vm5869, %vm5870
    %v5872 = vsel %vm5871, %v5864, %v5868
    %v5873 = vand.u32 2147483647, %v5848
    %vm5874 = vcmp.eq.f32.partialorder %v5873, 8.507059e+37
    %v5875 = vand.u32 %v5848, 2147483648
    %v5876 = vor.u32 1.1754944e-38, %v5875
    %v5877 = vsel %vm5874, %v5876, %v5872
    %v5878 = vmul.f32 1.0, %v5877
    %v5879 = vmul.f32 %v5823, %v4640
    %v5880 = vmul.f32 %v5838, %v4641
    %v5881 = vmul.f32 %v5785, %v5839
    %v5882 = vmul.f32 %v5800, %v5840
    %v5883 = vadd.f32 %v5879, %v5881
    %v5884 = vadd.f32 %v5880, %v5882
    %v5885 = vtanh.pop %v5883
    %v5886 = vtanh.pop %v5884
    %v5887 = vmul.f32 %v5863, %v5885
    %v5888 = vmul.f32 %v5878, %v5886
    %s5889 = scalar_lea.vmem %s0, 32
    %v5890 = vld [vmem:[%s5889] sm:$0xff]
    %5892 = vset.pattern.permute.xlu0 0
    %5893 = vperm.xlu0 %5892, %v5890
    %v5894 = vpop.permute.xlu0 %5893
    %v5896 = vmul.f32 %v5894, %v104
    %v5897 = vmul.f32 %v5894, %v105
    %v5898 = vmul.f32 %v5894, %v106
    %v5899 = vmul.f32 %v5894, %v107
    %v5900 = vmul.f32 %v5894, %v108
    %v5901 = vmul.f32 %v5894, %v109
    %v5902 = vmul.f32 %v5894, %v110
    %v5903 = vmul.f32 %v5894, %v111
    %v5904 = vadd.f32 %v5896, %v130
    %v5905 = vadd.f32 %v5897, %v131
    %v5906 = vadd.f32 %v5898, %v132
    %v5907 = vadd.f32 %v5899, %v133
    %v5908 = vadd.f32 %v5900, %v134
    %v5909 = vadd.f32 %v5901, %v135
    %v5910 = vadd.f32 %v5902, %v136
    %v5911 = vadd.f32 %v5903, %v137
    %5912 = vmatpush.msra.mxu0 %v274
    %5913 = vmatpush.msra.mxu0 %v266
    %5914 = vmatpush.msra.mxu0 %v258
    %5915 = vmatpush.msra.mxu0 %v250
    %5916 = vmatpush.msra.mxu0 %v242
    %5917 = vmatpush.msra.mxu0 %v234
    %5918 = vmatpush.msra.mxu0 %v226
    %5919 = vmatpush.msra.mxu0 %v218
    %5920 = vmatpush.msra.mxu0 %v210
    %5921 = vmatpush.msra.mxu0 %v202
    %5922 = vmatpush.msra.mxu0 %v194
    %5923 = vmatpush.msra.mxu0 %v186
    %5924 = vmatpush.msra.mxu0 %v178
    %5925 = vmatpush.msra.mxu0 %v170
    %5926 = vmatpush.msra.mxu0 %v162
    %5927 = vmatpush.msra.mxu0 %v154
    %5928 = vmatmul.f32.gmra.mxu0 %v5121
    %v5929 = vpop.f32.mrf.mxu0
    %v5930 = vadd.f32 0.0, %v5929
    %5931 = vdwg.mxu0
    %5932 = vmatpush.msra.mxu0 %v402
    %5933 = vmatpush.msra.mxu0 %v394
    %5934 = vmatpush.msra.mxu0 %v386
    %5935 = vmatpush.msra.mxu0 %v378
    %5936 = vmatpush.msra.mxu0 %v370
    %5937 = vmatpush.msra.mxu0 %v362
    %5938 = vmatpush.msra.mxu0 %v354
    %5939 = vmatpush.msra.mxu0 %v346
    %5940 = vmatpush.msra.mxu0 %v338
    %5941 = vmatpush.msra.mxu0 %v330
    %5942 = vmatpush.msra.mxu0 %v322
    %5943 = vmatpush.msra.mxu0 %v314
    %5944 = vmatpush.msra.mxu0 %v306
    %5945 = vmatpush.msra.mxu0 %v298
    %5946 = vmatpush.msra.mxu0 %v290
    %5947 = vmatpush.msra.mxu0 %v282
    %5948 = vmatmul.f32.gmra.mxu0 %v5122
    %v5949 = vpop.f32.mrf.mxu0
    %v5950 = vadd.f32 %v5930, %v5949
    %5951 = vdwg.mxu0
    %5952 = vmatpush.msra.mxu0 %v275
    %5953 = vmatpush.msra.mxu0 %v267
    %5954 = vmatpush.msra.mxu0 %v259
    %5955 = vmatpush.msra.mxu0 %v251
    %5956 = vmatpush.msra.mxu0 %v243
    %5957 = vmatpush.msra.mxu0 %v235
    %5958 = vmatpush.msra.mxu0 %v227
    %5959 = vmatpush.msra.mxu0 %v219
    %5960 = vmatpush.msra.mxu0 %v211
    %5961 = vmatpush.msra.mxu0 %v203
    %5962 = vmatpush.msra.mxu0 %v195
    %5963 = vmatpush.msra.mxu0 %v187
    %5964 = vmatpush.msra.mxu0 %v179
    %5965 = vmatpush.msra.mxu0 %v171
    %5966 = vmatpush.msra.mxu0 %v163
    %5967 = vmatpush.msra.mxu0 %v155
    %5968 = vmatmul.f32.gmra.mxu0 %v5121
    %v5969 = vpop.f32.mrf.mxu0
    %v5970 = vadd.f32 0.0, %v5969
    %5971 = vdwg.mxu0
    %5972 = vmatpush.msra.mxu0 %v403
    %5973 = vmatpush.msra.mxu0 %v395
    %5974 = vmatpush.msra.mxu0 %v387
    %5975 = vmatpush.msra.mxu0 %v379
    %5976 = vmatpush.msra.mxu0 %v371
    %5977 = vmatpush.msra.mxu0 %v363
    %5978 = vmatpush.msra.mxu0 %v355
    %5979 = vmatpush.msra.mxu0 %v347
    %5980 = vmatpush.msra.mxu0 %v339
    %5981 = vmatpush.msra.mxu0 %v331
    %5982 = vmatpush.msra.mxu0 %v323
    %5983 = vmatpush.msra.mxu0 %v315
    %5984 = vmatpush.msra.mxu0 %v307
    %5985 = vmatpush.msra.mxu0 %v299
    %5986 = vmatpush.msra.mxu0 %v291
    %5987 = vmatpush.msra.mxu0 %v283
    %5988 = vmatmul.f32.gmra.mxu0 %v5122
    %v5989 = vpop.f32.mrf.mxu0
    %v5990 = vadd.f32 %v5970, %v5989
    %5991 = vdwg.mxu0
    %5992 = vmatpush.msra.mxu0 %v276
    %5993 = vmatpush.msra.mxu0 %v268
    %5994 = vmatpush.msra.mxu0 %v260
    %5995 = vmatpush.msra.mxu0 %v252
    %5996 = vmatpush.msra.mxu0 %v244
    %5997 = vmatpush.msra.mxu0 %v236
    %5998 = vmatpush.msra.mxu0 %v228
    %5999 = vmatpush.msra.mxu0 %v220
    %6000 = vmatpush.msra.mxu0 %v212
    %6001 = vmatpush.msra.mxu0 %v204
    %6002 = vmatpush.msra.mxu0 %v196
    %6003 = vmatpush.msra.mxu0 %v188
    %6004 = vmatpush.msra.mxu0 %v180
    %6005 = vmatpush.msra.mxu0 %v172
    %6006 = vmatpush.msra.mxu0 %v164
    %6007 = vmatpush.msra.mxu0 %v156
    %6008 = vmatmul.f32.gmra.mxu0 %v5121
    %v6009 = vpop.f32.mrf.mxu0
    %v6010 = vadd.f32 0.0, %v6009
    %6011 = vdwg.mxu0
    %6012 = vmatpush.msra.mxu0 %v404
    %6013 = vmatpush.msra.mxu0 %v396
    %6014 = vmatpush.msra.mxu0 %v388
    %6015 = vmatpush.msra.mxu0 %v380
    %6016 = vmatpush.msra.mxu0 %v372
    %6017 = vmatpush.msra.mxu0 %v364
    %6018 = vmatpush.msra.mxu0 %v356
    %6019 = vmatpush.msra.mxu0 %v348
    %6020 = vmatpush.msra.mxu0 %v340
    %6021 = vmatpush.msra.mxu0 %v332
    %6022 = vmatpush.msra.mxu0 %v324
    %6023 = vmatpush.msra.mxu0 %v316
    %6024 = vmatpush.msra.mxu0 %v308
    %6025 = vmatpush.msra.mxu0 %v300
    %6026 = vmatpush.msra.mxu0 %v292
    %6027 = vmatpush.msra.mxu0 %v284
    %6028 = vmatmul.f32.gmra.mxu0 %v5122
    %v6029 = vpop.f32.mrf.mxu0
    %v6030 = vadd.f32 %v6010, %v6029
    %6031 = vdwg.mxu0
    %6032 = vmatpush.msra.mxu0 %v277
    %6033 = vmatpush.msra.mxu0 %v269
    %6034 = vmatpush.msra.mxu0 %v261
    %6035 = vmatpush.msra.mxu0 %v253
    %6036 = vmatpush.msra.mxu0 %v245
    %6037 = vmatpush.msra.mxu0 %v237
    %6038 = vmatpush.msra.mxu0 %v229
    %6039 = vmatpush.msra.mxu0 %v221
    %6040 = vmatpush.msra.mxu0 %v213
    %6041 = vmatpush.msra.mxu0 %v205
    %6042 = vmatpush.msra.mxu0 %v197
    %6043 = vmatpush.msra.mxu0 %v189
    %6044 = vmatpush.msra.mxu0 %v181
    %6045 = vmatpush.msra.mxu0 %v173
    %6046 = vmatpush.msra.mxu0 %v165
    %6047 = vmatpush.msra.mxu0 %v157
    %6048 = vmatmul.f32.gmra.mxu0 %v5121
    %v6049 = vpop.f32.mrf.mxu0
    %v6050 = vadd.f32 0.0, %v6049
    %6051 = vdwg.mxu0
    %6052 = vmatpush.msra.mxu0 %v405
    %6053 = vmatpush.msra.mxu0 %v397
    %6054 = vmatpush.msra.mxu0 %v389
    %6055 = vmatpush.msra.mxu0 %v381
    %6056 = vmatpush.msra.mxu0 %v373
    %6057 = vmatpush.msra.mxu0 %v365
    %6058 = vmatpush.msra.mxu0 %v357
    %6059 = vmatpush.msra.mxu0 %v349
    %6060 = vmatpush.msra.mxu0 %v341
    %6061 = vmatpush.msra.mxu0 %v333
    %6062 = vmatpush.msra.mxu0 %v325
    %6063 = vmatpush.msra.mxu0 %v317
    %6064 = vmatpush.msra.mxu0 %v309
    %6065 = vmatpush.msra.mxu0 %v301
    %6066 = vmatpush.msra.mxu0 %v293
    %6067 = vmatpush.msra.mxu0 %v285
    %6068 = vmatmul.f32.gmra.mxu0 %v5122
    %v6069 = vpop.f32.mrf.mxu0
    %v6070 = vadd.f32 %v6050, %v6069
    %6071 = vdwg.mxu0
    %6072 = vmatpush.msra.mxu0 %v278
    %6073 = vmatpush.msra.mxu0 %v270
    %6074 = vmatpush.msra.mxu0 %v262
    %6075 = vmatpush.msra.mxu0 %v254
    %6076 = vmatpush.msra.mxu0 %v246
    %6077 = vmatpush.msra.mxu0 %v238
    %6078 = vmatpush.msra.mxu0 %v230
    %6079 = vmatpush.msra.mxu0 %v222
    %6080 = vmatpush.msra.mxu0 %v214
    %6081 = vmatpush.msra.mxu0 %v206
    %6082 = vmatpush.msra.mxu0 %v198
    %6083 = vmatpush.msra.mxu0 %v190
    %6084 = vmatpush.msra.mxu0 %v182
    %6085 = vmatpush.msra.mxu0 %v174
    %6086 = vmatpush.msra.mxu0 %v166
    %6087 = vmatpush.msra.mxu0 %v158
    %6088 = vmatmul.f32.gmra.mxu0 %v5121
    %v6089 = vpop.f32.mrf.mxu0
    %v6090 = vadd.f32 0.0, %v6089
    %6091 = vdwg.mxu0
    %6092 = vmatpush.msra.mxu0 %v406
    %6093 = vmatpush.msra.mxu0 %v398
    %6094 = vmatpush.msra.mxu0 %v390
    %6095 = vmatpush.msra.mxu0 %v382
    %6096 = vmatpush.msra.mxu0 %v374
    %6097 = vmatpush.msra.mxu0 %v366
    %6098 = vmatpush.msra.mxu0 %v358
    %6099 = vmatpush.msra.mxu0 %v350
    %6100 = vmatpush.msra.mxu0 %v342
    %6101 = vmatpush.msra.mxu0 %v334
    %6102 = vmatpush.msra.mxu0 %v326
    %6103 = vmatpush.msra.mxu0 %v318
    %6104 = vmatpush.msra.mxu0 %v310
    %6105 = vmatpush.msra.mxu0 %v302
    %6106 = vmatpush.msra.mxu0 %v294
    %6107 = vmatpush.msra.mxu0 %v286
    %6108 = vmatmul.f32.gmra.mxu0 %v5122
    %v6109 = vpop.f32.mrf.mxu0
    %v6110 = vadd.f32 %v6090, %v6109
    %6111 = vdwg.mxu0
    %6112 = vmatpush.msra.mxu0 %v279
    %6113 = vmatpush.msra.mxu0 %v271
    %6114 = vmatpush.msra.mxu0 %v263
    %6115 = vmatpush.msra.mxu0 %v255
    %6116 = vmatpush.msra.mxu0 %v247
    %6117 = vmatpush.msra.mxu0 %v239
    %6118 = vmatpush.msra.mxu0 %v231
    %6119 = vmatpush.msra.mxu0 %v223
    %6120 = vmatpush.msra.mxu0 %v215
    %6121 = vmatpush.msra.mxu0 %v207
    %6122 = vmatpush.msra.mxu0 %v199
    %6123 = vmatpush.msra.mxu0 %v191
    %6124 = vmatpush.msra.mxu0 %v183
    %6125 = vmatpush.msra.mxu0 %v175
    %6126 = vmatpush.msra.mxu0 %v167
    %6127 = vmatpush.msra.mxu0 %v159
    %6128 = vmatmul.f32.gmra.mxu0 %v5121
    %v6129 = vpop.f32.mrf.mxu0
    %v6130 = vadd.f32 0.0, %v6129
    %6131 = vdwg.mxu0
    %6132 = vmatpush.msra.mxu0 %v407
    %6133 = vmatpush.msra.mxu0 %v399
    %6134 = vmatpush.msra.mxu0 %v391
    %6135 = vmatpush.msra.mxu0 %v383
    %6136 = vmatpush.msra.mxu0 %v375
    %6137 = vmatpush.msra.mxu0 %v367
    %6138 = vmatpush.msra.mxu0 %v359
    %6139 = vmatpush.msra.mxu0 %v351
    %6140 = vmatpush.msra.mxu0 %v343
    %6141 = vmatpush.msra.mxu0 %v335
    %6142 = vmatpush.msra.mxu0 %v327
    %6143 = vmatpush.msra.mxu0 %v319
    %6144 = vmatpush.msra.mxu0 %v311
    %6145 = vmatpush.msra.mxu0 %v303
    %6146 = vmatpush.msra.mxu0 %v295
    %6147 = vmatpush.msra.mxu0 %v287
    %6148 = vmatmul.f32.gmra.mxu0 %v5122
    %v6149 = vpop.f32.mrf.mxu0
    %v6150 = vadd.f32 %v6130, %v6149
    %6151 = vdwg.mxu0
    %6152 = vmatpush.msra.mxu0 %v280
    %6153 = vmatpush.msra.mxu0 %v272
    %6154 = vmatpush.msra.mxu0 %v264
    %6155 = vmatpush.msra.mxu0 %v256
    %6156 = vmatpush.msra.mxu0 %v248
    %6157 = vmatpush.msra.mxu0 %v240
    %6158 = vmatpush.msra.mxu0 %v232
    %6159 = vmatpush.msra.mxu0 %v224
    %6160 = vmatpush.msra.mxu0 %v216
    %6161 = vmatpush.msra.mxu0 %v208
    %6162 = vmatpush.msra.mxu0 %v200
    %6163 = vmatpush.msra.mxu0 %v192
    %6164 = vmatpush.msra.mxu0 %v184
    %6165 = vmatpush.msra.mxu0 %v176
    %6166 = vmatpush.msra.mxu0 %v168
    %6167 = vmatpush.msra.mxu0 %v160
    %6168 = vmatmul.f32.gmra.mxu0 %v5121
    %v6169 = vpop.f32.mrf.mxu0
    %v6170 = vadd.f32 0.0, %v6169
    %6171 = vdwg.mxu0
    %6172 = vmatpush.msra.mxu0 %v408
    %6173 = vmatpush.msra.mxu0 %v400
    %6174 = vmatpush.msra.mxu0 %v392
    %6175 = vmatpush.msra.mxu0 %v384
    %6176 = vmatpush.msra.mxu0 %v376
    %6177 = vmatpush.msra.mxu0 %v368
    %6178 = vmatpush.msra.mxu0 %v360
    %6179 = vmatpush.msra.mxu0 %v352
    %6180 = vmatpush.msra.mxu0 %v344
    %6181 = vmatpush.msra.mxu0 %v336
    %6182 = vmatpush.msra.mxu0 %v328
    %6183 = vmatpush.msra.mxu0 %v320
    %6184 = vmatpush.msra.mxu0 %v312
    %6185 = vmatpush.msra.mxu0 %v304
    %6186 = vmatpush.msra.mxu0 %v296
    %6187 = vmatpush.msra.mxu0 %v288
    %6188 = vmatmul.f32.gmra.mxu0 %v5122
    %v6189 = vpop.f32.mrf.mxu0
    %v6190 = vadd.f32 %v6170, %v6189
    %6191 = vdwg.mxu0
    %6192 = vmatpush.msra.mxu0 %v281
    %6193 = vmatpush.msra.mxu0 %v273
    %6194 = vmatpush.msra.mxu0 %v265
    %6195 = vmatpush.msra.mxu0 %v257
    %6196 = vmatpush.msra.mxu0 %v249
    %6197 = vmatpush.msra.mxu0 %v241
    %6198 = vmatpush.msra.mxu0 %v233
    %6199 = vmatpush.msra.mxu0 %v225
    %6200 = vmatpush.msra.mxu0 %v217
    %6201 = vmatpush.msra.mxu0 %v209
    %6202 = vmatpush.msra.mxu0 %v201
    %6203 = vmatpush.msra.mxu0 %v193
    %6204 = vmatpush.msra.mxu0 %v185
    %6205 = vmatpush.msra.mxu0 %v177
    %6206 = vmatpush.msra.mxu0 %v169
    %6207 = vmatpush.msra.mxu0 %v161
    %6208 = vmatmul.f32.gmra.mxu0 %v5121
    %v6209 = vpop.f32.mrf.mxu0
    %v6210 = vadd.f32 0.0, %v6209
    %6211 = vdwg.mxu0
    %6212 = vmatpush.msra.mxu0 %v409
    %6213 = vmatpush.msra.mxu0 %v401
    %6214 = vmatpush.msra.mxu0 %v393
    %6215 = vmatpush.msra.mxu0 %v385
    %6216 = vmatpush.msra.mxu0 %v377
    %6217 = vmatpush.msra.mxu0 %v369
    %6218 = vmatpush.msra.mxu0 %v361
    %6219 = vmatpush.msra.mxu0 %v353
    %6220 = vmatpush.msra.mxu0 %v345
    %6221 = vmatpush.msra.mxu0 %v337
    %6222 = vmatpush.msra.mxu0 %v329
    %6223 = vmatpush.msra.mxu0 %v321
    %6224 = vmatpush.msra.mxu0 %v313
    %6225 = vmatpush.msra.mxu0 %v305
    %6226 = vmatpush.msra.mxu0 %v297
    %6227 = vmatpush.msra.mxu0 %v289
    %6228 = vmatmul.f32.gmra.mxu0 %v5122
    %v6229 = vpop.f32.mrf.mxu0
    %v6230 = vadd.f32 %v6210, %v6229
    %6231 = vdwg.mxu0
    %v6232 = vadd.f32 %v5904, %v5950
    %v6233 = vadd.f32 %v5905, %v5990
    %v6234 = vadd.f32 %v5906, %v6030
    %v6235 = vadd.f32 %v5907, %v6070
    %v6236 = vadd.f32 %v5908, %v6110
    %v6237 = vadd.f32 %v5909, %v6150
    %v6238 = vadd.f32 %v5910, %v6190
    %v6239 = vadd.f32 %v5911, %v6230
    %v6240 = vxor.u32 %v6232, 2147483648
    %v6241 = vxor.u32 %v6233, 2147483648
    %v6242 = vmul.f32 %v6240, 1.442695
    %v6243 = vpow.pop %v6242
    %v6244 = vmul.f32 %v6241, 1.442695
    %v6245 = vpow.pop %v6244
    %v6246 = vadd.f32 %v6243, 1.0
    %v6247 = vadd.f32 %v6245, 1.0
    %v6248 = vrcp.pop %v6246
    %v6249 = vmul.f32 %v6246, %v6248
    %v6250 = vsub.f32 1.0, %v6249
    %v6251 = vmul.f32 %v6248, %v6250
    %v6252 = vadd.f32 %v6248, %v6251
    %vm6253 = vweird.f32 %v6246
    %vm6254 = vweird.f32 %v6248
    %vm6255 = vmor %vm6253, %vm6254
    %v6256 = vsel %vm6255, %v6248, %v6252
    %v6257 = vand.u32 2147483647, %v6246
    %vm6258 = vcmp.eq.f32.partialorder %v6257, 8.507059e+37
    %v6259 = vand.u32 %v6246, 2147483648
    %v6260 = vor.u32 1.1754944e-38, %v6259
    %v6261 = vsel %vm6258, %v6260, %v6256
    %v6262 = vmul.f32 1.0, %v6261
    %v6263 = vrcp.pop %v6247
    %v6264 = vmul.f32 %v6247, %v6263
    %v6265 = vsub.f32 1.0, %v6264
    %v6266 = vmul.f32 %v6263, %v6265
    %v6267 = vadd.f32 %v6263, %v6266
    %vm6268 = vweird.f32 %v6247
    %vm6269 = vweird.f32 %v6263
    %vm6270 = vmor %vm6268, %vm6269
    %v6271 = vsel %vm6270, %v6263, %v6267
    %v6272 = vand.u32 2147483647, %v6247
    %vm6273 = vcmp.eq.f32.partialorder %v6272, 8.507059e+37
    %v6274 = vand.u32 %v6247, 2147483648
    %v6275 = vor.u32 1.1754944e-38, %v6274
    %v6276 = vsel %vm6273, %v6275, %v6271
    %v6277 = vmul.f32 1.0, %v6276
    %v6278 = vxor.u32 %v6234, 2147483648
    %v6279 = vxor.u32 %v6235, 2147483648
    %v6280 = vmul.f32 %v6278, 1.442695
    %v6281 = vpow.pop %v6280
    %v6282 = vmul.f32 %v6279, 1.442695
    %v6283 = vpow.pop %v6282
    %v6284 = vadd.f32 %v6281, 1.0
    %v6285 = vadd.f32 %v6283, 1.0
    %v6286 = vrcp.pop %v6284
    %v6287 = vmul.f32 %v6284, %v6286
    %v6288 = vsub.f32 1.0, %v6287
    %v6289 = vmul.f32 %v6286, %v6288
    %v6290 = vadd.f32 %v6286, %v6289
    %vm6291 = vweird.f32 %v6284
    %vm6292 = vweird.f32 %v6286
    %vm6293 = vmor %vm6291, %vm6292
    %v6294 = vsel %vm6293, %v6286, %v6290
    %v6295 = vand.u32 2147483647, %v6284
    %vm6296 = vcmp.eq.f32.partialorder %v6295, 8.507059e+37
    %v6297 = vand.u32 %v6284, 2147483648
    %v6298 = vor.u32 1.1754944e-38, %v6297
    %v6299 = vsel %vm6296, %v6298, %v6294
    %v6300 = vmul.f32 1.0, %v6299
    %v6301 = vrcp.pop %v6285
    %v6302 = vmul.f32 %v6285, %v6301
    %v6303 = vsub.f32 1.0, %v6302
    %v6304 = vmul.f32 %v6301, %v6303
    %v6305 = vadd.f32 %v6301, %v6304
    %vm6306 = vweird.f32 %v6285
    %vm6307 = vweird.f32 %v6301
    %vm6308 = vmor %vm6306, %vm6307
    %v6309 = vsel %vm6308, %v6301, %v6305
    %v6310 = vand.u32 2147483647, %v6285
    %vm6311 = vcmp.eq.f32.partialorder %v6310, 8.507059e+37
    %v6312 = vand.u32 %v6285, 2147483648
    %v6313 = vor.u32 1.1754944e-38, %v6312
    %v6314 = vsel %vm6311, %v6313, %v6309
    %v6315 = vmul.f32 1.0, %v6314
    %v6316 = vtanh.pop %v6236
    %v6317 = vtanh.pop %v6237
    %v6318 = vxor.u32 %v6238, 2147483648
    %v6319 = vxor.u32 %v6239, 2147483648
    %v6320 = vmul.f32 %v6318, 1.442695
    %v6321 = vpow.pop %v6320
    %v6322 = vmul.f32 %v6319, 1.442695
    %v6323 = vpow.pop %v6322
    %v6324 = vadd.f32 %v6321, 1.0
    %v6325 = vadd.f32 %v6323, 1.0
    %v6326 = vrcp.pop %v6324
    %v6327 = vmul.f32 %v6324, %v6326
    %v6328 = vsub.f32 1.0, %v6327
    %v6329 = vmul.f32 %v6326, %v6328
    %v6330 = vadd.f32 %v6326, %v6329
    %vm6331 = vweird.f32 %v6324
    %vm6332 = vweird.f32 %v6326
    %vm6333 = vmor %vm6331, %vm6332
    %v6334 = vsel %vm6333, %v6326, %v6330
    %v6335 = vand.u32 2147483647, %v6324
    %vm6336 = vcmp.eq.f32.partialorder %v6335, 8.507059e+37
    %v6337 = vand.u32 %v6324, 2147483648
    %v6338 = vor.u32 1.1754944e-38, %v6337
    %v6339 = vsel %vm6336, %v6338, %v6334
    %v6340 = vmul.f32 1.0, %v6339
    %v6341 = vrcp.pop %v6325
    %v6342 = vmul.f32 %v6325, %v6341
    %v6343 = vsub.f32 1.0, %v6342
    %v6344 = vmul.f32 %v6341, %v6343
    %v6345 = vadd.f32 %v6341, %v6344
    %vm6346 = vweird.f32 %v6325
    %vm6347 = vweird.f32 %v6341
    %vm6348 = vmor %vm6346, %vm6347
    %v6349 = vsel %vm6348, %v6341, %v6345
    %v6350 = vand.u32 2147483647, %v6325
    %vm6351 = vcmp.eq.f32.partialorder %v6350, 8.507059e+37
    %v6352 = vand.u32 %v6325, 2147483648
    %v6353 = vor.u32 1.1754944e-38, %v6352
    %v6354 = vsel %vm6351, %v6353, %v6349
    %v6355 = vmul.f32 1.0, %v6354
    %v6356 = vmul.f32 %v6300, %v5117
    %v6357 = vmul.f32 %v6315, %v5118
    %v6358 = vmul.f32 %v6262, %v6316
    %v6359 = vmul.f32 %v6277, %v6317
    %v6360 = vadd.f32 %v6356, %v6358
    %v6361 = vadd.f32 %v6357, %v6359
    %v6362 = vtanh.pop %v6360
    %v6363 = vtanh.pop %v6361
    %v6364 = vmul.f32 %v6340, %v6362
    %v6365 = vmul.f32 %v6355, %v6363
    %6366 = vmatpush.msra.mxu0 %v984
    %6367 = vmatpush.msra.mxu0 %v976
    %6368 = vmatpush.msra.mxu0 %v968
    %6369 = vmatpush.msra.mxu0 %v960
    %6370 = vmatpush.msra.mxu0 %v952
    %6371 = vmatpush.msra.mxu0 %v944
    %6372 = vmatpush.msra.mxu0 %v936
    %6373 = vmatpush.msra.mxu0 %v928
    %6374 = vmatpush.msra.mxu0 %v920
    %6375 = vmatpush.msra.mxu0 %v912
    %6376 = vmatpush.msra.mxu0 %v904
    %6377 = vmatpush.msra.mxu0 %v896
    %6378 = vmatpush.msra.mxu0 %v888
    %6379 = vmatpush.msra.mxu0 %v880
    %6380 = vmatpush.msra.mxu0 %v872
    %6381 = vmatpush.msra.mxu0 %v864
    %6382 = vmatmul.f32.gmra.mxu0 %v6364
    %v6383 = vpop.f32.mrf.mxu0
    %v6384 = vadd.f32 %v1378, %v6383
    %6385 = vdwg.mxu0
    %6386 = vmatpush.msra.mxu0 %v1112
    %6387 = vmatpush.msra.mxu0 %v1104
    %6388 = vmatpush.msra.mxu0 %v1096
    %6389 = vmatpush.msra.mxu0 %v1088
    %6390 = vmatpush.msra.mxu0 %v1080
    %6391 = vmatpush.msra.mxu0 %v1072
    %6392 = vmatpush.msra.mxu0 %v1064
    %6393 = vmatpush.msra.mxu0 %v1056
    %6394 = vmatpush.msra.mxu0 %v1048
    %6395 = vmatpush.msra.mxu0 %v1040
    %6396 = vmatpush.msra.mxu0 %v1032
    %6397 = vmatpush.msra.mxu0 %v1024
    %6398 = vmatpush.msra.mxu0 %v1016
    %6399 = vmatpush.msra.mxu0 %v1008
    %6400 = vmatpush.msra.mxu0 %v1000
    %6401 = vmatpush.msra.mxu0 %v992
    %6402 = vmatmul.f32.gmra.mxu0 %v6365
    %v6403 = vpop.f32.mrf.mxu0
    %v6404 = vadd.f32 %v6384, %v6403
    %6405 = vdwg.mxu0
    %6406 = vmatpush.msra.mxu0 %v1240
    %6407 = vmatpush.msra.mxu0 %v1232
    %6408 = vmatpush.msra.mxu0 %v1224
    %6409 = vmatpush.msra.mxu0 %v1216
    %6410 = vmatpush.msra.mxu0 %v1208
    %6411 = vmatpush.msra.mxu0 %v1200
    %6412 = vmatpush.msra.mxu0 %v1192
    %6413 = vmatpush.msra.mxu0 %v1184
    %6414 = vmatpush.msra.mxu0 %v1176
    %6415 = vmatpush.msra.mxu0 %v1168
    %6416 = vmatpush.msra.mxu0 %v1160
    %6417 = vmatpush.msra.mxu0 %v1152
    %6418 = vmatpush.msra.mxu0 %v1144
    %6419 = vmatpush.msra.mxu0 %v1136
    %6420 = vmatpush.msra.mxu0 %v1128
    %6421 = vmatpush.msra.mxu0 %v1120
    %6422 = vmatmul.f32.gmra.mxu0 %v5887
    %v6423 = vpop.f32.mrf.mxu0
    %v6424 = vadd.f32 %v6404, %v6423
    %6425 = vdwg.mxu0
    %6426 = vmatpush.msra.mxu0 %v1368
    %6427 = vmatpush.msra.mxu0 %v1360
    %6428 = vmatpush.msra.mxu0 %v1352
    %6429 = vmatpush.msra.mxu0 %v1344
    %6430 = vmatpush.msra.mxu0 %v1336
    %6431 = vmatpush.msra.mxu0 %v1328
    %6432 = vmatpush.msra.mxu0 %v1320
    %6433 = vmatpush.msra.mxu0 %v1312
    %6434 = vmatpush.msra.mxu0 %v1304
    %6435 = vmatpush.msra.mxu0 %v1296
    %6436 = vmatpush.msra.mxu0 %v1288
    %6437 = vmatpush.msra.mxu0 %v1280
    %6438 = vmatpush.msra.mxu0 %v1272
    %6439 = vmatpush.msra.mxu0 %v1264
    %6440 = vmatpush.msra.mxu0 %v1256
    %6441 = vmatpush.msra.mxu0 %v1248
    %6442 = vmatmul.f32.gmra.mxu0 %v5888
    %v6443 = vpop.f32.mrf.mxu0
    %v6444 = vadd.f32 %v6424, %v6443
    %6445 = vdwg.mxu0
    %6446 = vmatpush.msra.mxu0 %v985
    %6447 = vmatpush.msra.mxu0 %v977
    %6448 = vmatpush.msra.mxu0 %v969
    %6449 = vmatpush.msra.mxu0 %v961
    %6450 = vmatpush.msra.mxu0 %v953
    %6451 = vmatpush.msra.mxu0 %v945
    %6452 = vmatpush.msra.mxu0 %v937
    %6453 = vmatpush.msra.mxu0 %v929
    %6454 = vmatpush.msra.mxu0 %v921
    %6455 = vmatpush.msra.mxu0 %v913
    %6456 = vmatpush.msra.mxu0 %v905
    %6457 = vmatpush.msra.mxu0 %v897
    %6458 = vmatpush.msra.mxu0 %v889
    %6459 = vmatpush.msra.mxu0 %v881
    %6460 = vmatpush.msra.mxu0 %v873
    %6461 = vmatpush.msra.mxu0 %v865
    %6462 = vmatmul.f32.gmra.mxu0 %v6364
    %v6463 = vpop.f32.mrf.mxu0
    %v6464 = vadd.f32 %v1379, %v6463
    %6465 = vdwg.mxu0
    %6466 = vmatpush.msra.mxu0 %v1113
    %6467 = vmatpush.msra.mxu0 %v1105
    %6468 = vmatpush.msra.mxu0 %v1097
    %6469 = vmatpush.msra.mxu0 %v1089
    %6470 = vmatpush.msra.mxu0 %v1081
    %6471 = vmatpush.msra.mxu0 %v1073
    %6472 = vmatpush.msra.mxu0 %v1065
    %6473 = vmatpush.msra.mxu0 %v1057
    %6474 = vmatpush.msra.mxu0 %v1049
    %6475 = vmatpush.msra.mxu0 %v1041
    %6476 = vmatpush.msra.mxu0 %v1033
    %6477 = vmatpush.msra.mxu0 %v1025
    %6478 = vmatpush.msra.mxu0 %v1017
    %6479 = vmatpush.msra.mxu0 %v1009
    %6480 = vmatpush.msra.mxu0 %v1001
    %6481 = vmatpush.msra.mxu0 %v993
    %6482 = vmatmul.f32.gmra.mxu0 %v6365
    %v6483 = vpop.f32.mrf.mxu0
    %v6484 = vadd.f32 %v6464, %v6483
    %6485 = vdwg.mxu0
    %6486 = vmatpush.msra.mxu0 %v1241
    %6487 = vmatpush.msra.mxu0 %v1233
    %6488 = vmatpush.msra.mxu0 %v1225
    %6489 = vmatpush.msra.mxu0 %v1217
    %6490 = vmatpush.msra.mxu0 %v1209
    %6491 = vmatpush.msra.mxu0 %v1201
    %6492 = vmatpush.msra.mxu0 %v1193
    %6493 = vmatpush.msra.mxu0 %v1185
    %6494 = vmatpush.msra.mxu0 %v1177
    %6495 = vmatpush.msra.mxu0 %v1169
    %6496 = vmatpush.msra.mxu0 %v1161
    %6497 = vmatpush.msra.mxu0 %v1153
    %6498 = vmatpush.msra.mxu0 %v1145
    %6499 = vmatpush.msra.mxu0 %v1137
    %6500 = vmatpush.msra.mxu0 %v1129
    %6501 = vmatpush.msra.mxu0 %v1121
    %6502 = vmatmul.f32.gmra.mxu0 %v5887
    %v6503 = vpop.f32.mrf.mxu0
    %v6504 = vadd.f32 %v6484, %v6503
    %6505 = vdwg.mxu0
    %6506 = vmatpush.msra.mxu0 %v1369
    %6507 = vmatpush.msra.mxu0 %v1361
    %6508 = vmatpush.msra.mxu0 %v1353
    %6509 = vmatpush.msra.mxu0 %v1345
    %6510 = vmatpush.msra.mxu0 %v1337
    %6511 = vmatpush.msra.mxu0 %v1329
    %6512 = vmatpush.msra.mxu0 %v1321
    %6513 = vmatpush.msra.mxu0 %v1313
    %6514 = vmatpush.msra.mxu0 %v1305
    %6515 = vmatpush.msra.mxu0 %v1297
    %6516 = vmatpush.msra.mxu0 %v1289
    %6517 = vmatpush.msra.mxu0 %v1281
    %6518 = vmatpush.msra.mxu0 %v1273
    %6519 = vmatpush.msra.mxu0 %v1265
    %6520 = vmatpush.msra.mxu0 %v1257
    %6521 = vmatpush.msra.mxu0 %v1249
    %6522 = vmatmul.f32.gmra.mxu0 %v5888
    %v6523 = vpop.f32.mrf.mxu0
    %v6524 = vadd.f32 %v6504, %v6523
    %6525 = vdwg.mxu0
    %6526 = vmatpush.msra.mxu0 %v986
    %6527 = vmatpush.msra.mxu0 %v978
    %6528 = vmatpush.msra.mxu0 %v970
    %6529 = vmatpush.msra.mxu0 %v962
    %6530 = vmatpush.msra.mxu0 %v954
    %6531 = vmatpush.msra.mxu0 %v946
    %6532 = vmatpush.msra.mxu0 %v938
    %6533 = vmatpush.msra.mxu0 %v930
    %6534 = vmatpush.msra.mxu0 %v922
    %6535 = vmatpush.msra.mxu0 %v914
    %6536 = vmatpush.msra.mxu0 %v906
    %6537 = vmatpush.msra.mxu0 %v898
    %6538 = vmatpush.msra.mxu0 %v890
    %6539 = vmatpush.msra.mxu0 %v882
    %6540 = vmatpush.msra.mxu0 %v874
    %6541 = vmatpush.msra.mxu0 %v866
    %6542 = vmatmul.f32.gmra.mxu0 %v6364
    %v6543 = vpop.f32.mrf.mxu0
    %v6544 = vadd.f32 %v1380, %v6543
    %6545 = vdwg.mxu0
    %6546 = vmatpush.msra.mxu0 %v1114
    %6547 = vmatpush.msra.mxu0 %v1106
    %6548 = vmatpush.msra.mxu0 %v1098
    %6549 = vmatpush.msra.mxu0 %v1090
    %6550 = vmatpush.msra.mxu0 %v1082
    %6551 = vmatpush.msra.mxu0 %v1074
    %6552 = vmatpush.msra.mxu0 %v1066
    %6553 = vmatpush.msra.mxu0 %v1058
    %6554 = vmatpush.msra.mxu0 %v1050
    %6555 = vmatpush.msra.mxu0 %v1042
    %6556 = vmatpush.msra.mxu0 %v1034
    %6557 = vmatpush.msra.mxu0 %v1026
    %6558 = vmatpush.msra.mxu0 %v1018
    %6559 = vmatpush.msra.mxu0 %v1010
    %6560 = vmatpush.msra.mxu0 %v1002
    %6561 = vmatpush.msra.mxu0 %v994
    %6562 = vmatmul.f32.gmra.mxu0 %v6365
    %v6563 = vpop.f32.mrf.mxu0
    %v6564 = vadd.f32 %v6544, %v6563
    %6565 = vdwg.mxu0
    %6566 = vmatpush.msra.mxu0 %v1242
    %6567 = vmatpush.msra.mxu0 %v1234
    %6568 = vmatpush.msra.mxu0 %v1226
    %6569 = vmatpush.msra.mxu0 %v1218
    %6570 = vmatpush.msra.mxu0 %v1210
    %6571 = vmatpush.msra.mxu0 %v1202
    %6572 = vmatpush.msra.mxu0 %v1194
    %6573 = vmatpush.msra.mxu0 %v1186
    %6574 = vmatpush.msra.mxu0 %v1178
    %6575 = vmatpush.msra.mxu0 %v1170
    %6576 = vmatpush.msra.mxu0 %v1162
    %6577 = vmatpush.msra.mxu0 %v1154
    %6578 = vmatpush.msra.mxu0 %v1146
    %6579 = vmatpush.msra.mxu0 %v1138
    %6580 = vmatpush.msra.mxu0 %v1130
    %6581 = vmatpush.msra.mxu0 %v1122
    %6582 = vmatmul.f32.gmra.mxu0 %v5887
    %v6583 = vpop.f32.mrf.mxu0
    %v6584 = vadd.f32 %v6564, %v6583
    %6585 = vdwg.mxu0
    %6586 = vmatpush.msra.mxu0 %v1370
    %6587 = vmatpush.msra.mxu0 %v1362
    %6588 = vmatpush.msra.mxu0 %v1354
    %6589 = vmatpush.msra.mxu0 %v1346
    %6590 = vmatpush.msra.mxu0 %v1338
    %6591 = vmatpush.msra.mxu0 %v1330
    %6592 = vmatpush.msra.mxu0 %v1322
    %6593 = vmatpush.msra.mxu0 %v1314
    %6594 = vmatpush.msra.mxu0 %v1306
    %6595 = vmatpush.msra.mxu0 %v1298
    %6596 = vmatpush.msra.mxu0 %v1290
    %6597 = vmatpush.msra.mxu0 %v1282
    %6598 = vmatpush.msra.mxu0 %v1274
    %6599 = vmatpush.msra.mxu0 %v1266
    %6600 = vmatpush.msra.mxu0 %v1258
    %6601 = vmatpush.msra.mxu0 %v1250
    %6602 = vmatmul.f32.gmra.mxu0 %v5888
    %v6603 = vpop.f32.mrf.mxu0
    %v6604 = vadd.f32 %v6584, %v6603
    %6605 = vdwg.mxu0
    %6606 = vmatpush.msra.mxu0 %v987
    %6607 = vmatpush.msra.mxu0 %v979
    %6608 = vmatpush.msra.mxu0 %v971
    %6609 = vmatpush.msra.mxu0 %v963
    %6610 = vmatpush.msra.mxu0 %v955
    %6611 = vmatpush.msra.mxu0 %v947
    %6612 = vmatpush.msra.mxu0 %v939
    %6613 = vmatpush.msra.mxu0 %v931
    %6614 = vmatpush.msra.mxu0 %v923
    %6615 = vmatpush.msra.mxu0 %v915
    %6616 = vmatpush.msra.mxu0 %v907
    %6617 = vmatpush.msra.mxu0 %v899
    %6618 = vmatpush.msra.mxu0 %v891
    %6619 = vmatpush.msra.mxu0 %v883
    %6620 = vmatpush.msra.mxu0 %v875
    %6621 = vmatpush.msra.mxu0 %v867
    %6622 = vmatmul.f32.gmra.mxu0 %v6364
    %v6623 = vpop.f32.mrf.mxu0
    %v6624 = vadd.f32 %v1381, %v6623
    %6625 = vdwg.mxu0
    %6626 = vmatpush.msra.mxu0 %v1115
    %6627 = vmatpush.msra.mxu0 %v1107
    %6628 = vmatpush.msra.mxu0 %v1099
    %6629 = vmatpush.msra.mxu0 %v1091
    %6630 = vmatpush.msra.mxu0 %v1083
    %6631 = vmatpush.msra.mxu0 %v1075
    %6632 = vmatpush.msra.mxu0 %v1067
    %6633 = vmatpush.msra.mxu0 %v1059
    %6634 = vmatpush.msra.mxu0 %v1051
    %6635 = vmatpush.msra.mxu0 %v1043
    %6636 = vmatpush.msra.mxu0 %v1035
    %6637 = vmatpush.msra.mxu0 %v1027
    %6638 = vmatpush.msra.mxu0 %v1019
    %6639 = vmatpush.msra.mxu0 %v1011
    %6640 = vmatpush.msra.mxu0 %v1003
    %6641 = vmatpush.msra.mxu0 %v995
    %6642 = vmatmul.f32.gmra.mxu0 %v6365
    %v6643 = vpop.f32.mrf.mxu0
    %v6644 = vadd.f32 %v6624, %v6643
    %6645 = vdwg.mxu0
    %6646 = vmatpush.msra.mxu0 %v1243
    %6647 = vmatpush.msra.mxu0 %v1235
    %6648 = vmatpush.msra.mxu0 %v1227
    %6649 = vmatpush.msra.mxu0 %v1219
    %6650 = vmatpush.msra.mxu0 %v1211
    %6651 = vmatpush.msra.mxu0 %v1203
    %6652 = vmatpush.msra.mxu0 %v1195
    %6653 = vmatpush.msra.mxu0 %v1187
    %6654 = vmatpush.msra.mxu0 %v1179
    %6655 = vmatpush.msra.mxu0 %v1171
    %6656 = vmatpush.msra.mxu0 %v1163
    %6657 = vmatpush.msra.mxu0 %v1155
    %6658 = vmatpush.msra.mxu0 %v1147
    %6659 = vmatpush.msra.mxu0 %v1139
    %6660 = vmatpush.msra.mxu0 %v1131
    %6661 = vmatpush.msra.mxu0 %v1123
    %6662 = vmatmul.f32.gmra.mxu0 %v5887
    %v6663 = vpop.f32.mrf.mxu0
    %v6664 = vadd.f32 %v6644, %v6663
    %6665 = vdwg.mxu0
    %6666 = vmatpush.msra.mxu0 %v1371
    %6667 = vmatpush.msra.mxu0 %v1363
    %6668 = vmatpush.msra.mxu0 %v1355
    %6669 = vmatpush.msra.mxu0 %v1347
    %6670 = vmatpush.msra.mxu0 %v1339
    %6671 = vmatpush.msra.mxu0 %v1331
    %6672 = vmatpush.msra.mxu0 %v1323
    %6673 = vmatpush.msra.mxu0 %v1315
    %6674 = vmatpush.msra.mxu0 %v1307
    %6675 = vmatpush.msra.mxu0 %v1299
    %6676 = vmatpush.msra.mxu0 %v1291
    %6677 = vmatpush.msra.mxu0 %v1283
    %6678 = vmatpush.msra.mxu0 %v1275
    %6679 = vmatpush.msra.mxu0 %v1267
    %6680 = vmatpush.msra.mxu0 %v1259
    %6681 = vmatpush.msra.mxu0 %v1251
    %6682 = vmatmul.f32.gmra.mxu0 %v5888
    %v6683 = vpop.f32.mrf.mxu0
    %v6684 = vadd.f32 %v6664, %v6683
    %6685 = vdwg.mxu0
    %6686 = vmatpush.msra.mxu0 %v988
    %6687 = vmatpush.msra.mxu0 %v980
    %6688 = vmatpush.msra.mxu0 %v972
    %6689 = vmatpush.msra.mxu0 %v964
    %6690 = vmatpush.msra.mxu0 %v956
    %6691 = vmatpush.msra.mxu0 %v948
    %6692 = vmatpush.msra.mxu0 %v940
    %6693 = vmatpush.msra.mxu0 %v932
    %6694 = vmatpush.msra.mxu0 %v924
    %6695 = vmatpush.msra.mxu0 %v916
    %6696 = vmatpush.msra.mxu0 %v908
    %6697 = vmatpush.msra.mxu0 %v900
    %6698 = vmatpush.msra.mxu0 %v892
    %6699 = vmatpush.msra.mxu0 %v884
    %6700 = vmatpush.msra.mxu0 %v876
    %6701 = vmatpush.msra.mxu0 %v868
    %6702 = vmatmul.f32.gmra.mxu0 %v6364
    %v6703 = vpop.f32.mrf.mxu0
    %v6704 = vadd.f32 %v1382, %v6703
    %6705 = vdwg.mxu0
    %6706 = vmatpush.msra.mxu0 %v1116
    %6707 = vmatpush.msra.mxu0 %v1108
    %6708 = vmatpush.msra.mxu0 %v1100
    %6709 = vmatpush.msra.mxu0 %v1092
    %6710 = vmatpush.msra.mxu0 %v1084
    %6711 = vmatpush.msra.mxu0 %v1076
    %6712 = vmatpush.msra.mxu0 %v1068
    %6713 = vmatpush.msra.mxu0 %v1060
    %6714 = vmatpush.msra.mxu0 %v1052
    %6715 = vmatpush.msra.mxu0 %v1044
    %6716 = vmatpush.msra.mxu0 %v1036
    %6717 = vmatpush.msra.mxu0 %v1028
    %6718 = vmatpush.msra.mxu0 %v1020
    %6719 = vmatpush.msra.mxu0 %v1012
    %6720 = vmatpush.msra.mxu0 %v1004
    %6721 = vmatpush.msra.mxu0 %v996
    %6722 = vmatmul.f32.gmra.mxu0 %v6365
    %v6723 = vpop.f32.mrf.mxu0
    %v6724 = vadd.f32 %v6704, %v6723
    %6725 = vdwg.mxu0
    %6726 = vmatpush.msra.mxu0 %v1244
    %6727 = vmatpush.msra.mxu0 %v1236
    %6728 = vmatpush.msra.mxu0 %v1228
    %6729 = vmatpush.msra.mxu0 %v1220
    %6730 = vmatpush.msra.mxu0 %v1212
    %6731 = vmatpush.msra.mxu0 %v1204
    %6732 = vmatpush.msra.mxu0 %v1196
    %6733 = vmatpush.msra.mxu0 %v1188
    %6734 = vmatpush.msra.mxu0 %v1180
    %6735 = vmatpush.msra.mxu0 %v1172
    %6736 = vmatpush.msra.mxu0 %v1164
    %6737 = vmatpush.msra.mxu0 %v1156
    %6738 = vmatpush.msra.mxu0 %v1148
    %6739 = vmatpush.msra.mxu0 %v1140
    %6740 = vmatpush.msra.mxu0 %v1132
    %6741 = vmatpush.msra.mxu0 %v1124
    %6742 = vmatmul.f32.gmra.mxu0 %v5887
    %v6743 = vpop.f32.mrf.mxu0
    %v6744 = vadd.f32 %v6724, %v6743
    %6745 = vdwg.mxu0
    %6746 = vmatpush.msra.mxu0 %v1372
    %6747 = vmatpush.msra.mxu0 %v1364
    %6748 = vmatpush.msra.mxu0 %v1356
    %6749 = vmatpush.msra.mxu0 %v1348
    %6750 = vmatpush.msra.mxu0 %v1340
    %6751 = vmatpush.msra.mxu0 %v1332
    %6752 = vmatpush.msra.mxu0 %v1324
    %6753 = vmatpush.msra.mxu0 %v1316
    %6754 = vmatpush.msra.mxu0 %v1308
    %6755 = vmatpush.msra.mxu0 %v1300
    %6756 = vmatpush.msra.mxu0 %v1292
    %6757 = vmatpush.msra.mxu0 %v1284
    %6758 = vmatpush.msra.mxu0 %v1276
    %6759 = vmatpush.msra.mxu0 %v1268
    %6760 = vmatpush.msra.mxu0 %v1260
    %6761 = vmatpush.msra.mxu0 %v1252
    %6762 = vmatmul.f32.gmra.mxu0 %v5888
    %v6763 = vpop.f32.mrf.mxu0
    %v6764 = vadd.f32 %v6744, %v6763
    %6765 = vdwg.mxu0
    %6766 = vmatpush.msra.mxu0 %v989
    %6767 = vmatpush.msra.mxu0 %v981
    %6768 = vmatpush.msra.mxu0 %v973
    %6769 = vmatpush.msra.mxu0 %v965
    %6770 = vmatpush.msra.mxu0 %v957
    %6771 = vmatpush.msra.mxu0 %v949
    %6772 = vmatpush.msra.mxu0 %v941
    %6773 = vmatpush.msra.mxu0 %v933
    %6774 = vmatpush.msra.mxu0 %v925
    %6775 = vmatpush.msra.mxu0 %v917
    %6776 = vmatpush.msra.mxu0 %v909
    %6777 = vmatpush.msra.mxu0 %v901
    %6778 = vmatpush.msra.mxu0 %v893
    %6779 = vmatpush.msra.mxu0 %v885
    %6780 = vmatpush.msra.mxu0 %v877
    %6781 = vmatpush.msra.mxu0 %v869
    %6782 = vmatmul.f32.gmra.mxu0 %v6364
    %v6783 = vpop.f32.mrf.mxu0
    %v6784 = vadd.f32 %v1383, %v6783
    %6785 = vdwg.mxu0
    %6786 = vmatpush.msra.mxu0 %v1117
    %6787 = vmatpush.msra.mxu0 %v1109
    %6788 = vmatpush.msra.mxu0 %v1101
    %6789 = vmatpush.msra.mxu0 %v1093
    %6790 = vmatpush.msra.mxu0 %v1085
    %6791 = vmatpush.msra.mxu0 %v1077
    %6792 = vmatpush.msra.mxu0 %v1069
    %6793 = vmatpush.msra.mxu0 %v1061
    %6794 = vmatpush.msra.mxu0 %v1053
    %6795 = vmatpush.msra.mxu0 %v1045
    %6796 = vmatpush.msra.mxu0 %v1037
    %6797 = vmatpush.msra.mxu0 %v1029
    %6798 = vmatpush.msra.mxu0 %v1021
    %6799 = vmatpush.msra.mxu0 %v1013
    %6800 = vmatpush.msra.mxu0 %v1005
    %6801 = vmatpush.msra.mxu0 %v997
    %6802 = vmatmul.f32.gmra.mxu0 %v6365
    %v6803 = vpop.f32.mrf.mxu0
    %v6804 = vadd.f32 %v6784, %v6803
    %6805 = vdwg.mxu0
    %6806 = vmatpush.msra.mxu0 %v1245
    %6807 = vmatpush.msra.mxu0 %v1237
    %6808 = vmatpush.msra.mxu0 %v1229
    %6809 = vmatpush.msra.mxu0 %v1221
    %6810 = vmatpush.msra.mxu0 %v1213
    %6811 = vmatpush.msra.mxu0 %v1205
    %6812 = vmatpush.msra.mxu0 %v1197
    %6813 = vmatpush.msra.mxu0 %v1189
    %6814 = vmatpush.msra.mxu0 %v1181
    %6815 = vmatpush.msra.mxu0 %v1173
    %6816 = vmatpush.msra.mxu0 %v1165
    %6817 = vmatpush.msra.mxu0 %v1157
    %6818 = vmatpush.msra.mxu0 %v1149
    %6819 = vmatpush.msra.mxu0 %v1141
    %6820 = vmatpush.msra.mxu0 %v1133
    %6821 = vmatpush.msra.mxu0 %v1125
    %6822 = vmatmul.f32.gmra.mxu0 %v5887
    %v6823 = vpop.f32.mrf.mxu0
    %v6824 = vadd.f32 %v6804, %v6823
    %6825 = vdwg.mxu0
    %6826 = vmatpush.msra.mxu0 %v1373
    %6827 = vmatpush.msra.mxu0 %v1365
    %6828 = vmatpush.msra.mxu0 %v1357
    %6829 = vmatpush.msra.mxu0 %v1349
    %6830 = vmatpush.msra.mxu0 %v1341
    %6831 = vmatpush.msra.mxu0 %v1333
    %6832 = vmatpush.msra.mxu0 %v1325
    %6833 = vmatpush.msra.mxu0 %v1317
    %6834 = vmatpush.msra.mxu0 %v1309
    %6835 = vmatpush.msra.mxu0 %v1301
    %6836 = vmatpush.msra.mxu0 %v1293
    %6837 = vmatpush.msra.mxu0 %v1285
    %6838 = vmatpush.msra.mxu0 %v1277
    %6839 = vmatpush.msra.mxu0 %v1269
    %6840 = vmatpush.msra.mxu0 %v1261
    %6841 = vmatpush.msra.mxu0 %v1253
    %6842 = vmatmul.f32.gmra.mxu0 %v5888
    %v6843 = vpop.f32.mrf.mxu0
    %v6844 = vadd.f32 %v6824, %v6843
    %6845 = vdwg.mxu0
    %6846 = vmatpush.msra.mxu0 %v990
    %6847 = vmatpush.msra.mxu0 %v982
    %6848 = vmatpush.msra.mxu0 %v974
    %6849 = vmatpush.msra.mxu0 %v966
    %6850 = vmatpush.msra.mxu0 %v958
    %6851 = vmatpush.msra.mxu0 %v950
    %6852 = vmatpush.msra.mxu0 %v942
    %6853 = vmatpush.msra.mxu0 %v934
    %6854 = vmatpush.msra.mxu0 %v926
    %6855 = vmatpush.msra.mxu0 %v918
    %6856 = vmatpush.msra.mxu0 %v910
    %6857 = vmatpush.msra.mxu0 %v902
    %6858 = vmatpush.msra.mxu0 %v894
    %6859 = vmatpush.msra.mxu0 %v886
    %6860 = vmatpush.msra.mxu0 %v878
    %6861 = vmatpush.msra.mxu0 %v870
    %6862 = vmatmul.f32.gmra.mxu0 %v6364
    %v6863 = vpop.f32.mrf.mxu0
    %v6864 = vadd.f32 %v1384, %v6863
    %6865 = vdwg.mxu0
    %6866 = vmatpush.msra.mxu0 %v1118
    %6867 = vmatpush.msra.mxu0 %v1110
    %6868 = vmatpush.msra.mxu0 %v1102
    %6869 = vmatpush.msra.mxu0 %v1094
    %6870 = vmatpush.msra.mxu0 %v1086
    %6871 = vmatpush.msra.mxu0 %v1078
    %6872 = vmatpush.msra.mxu0 %v1070
    %6873 = vmatpush.msra.mxu0 %v1062
    %6874 = vmatpush.msra.mxu0 %v1054
    %6875 = vmatpush.msra.mxu0 %v1046
    %6876 = vmatpush.msra.mxu0 %v1038
    %6877 = vmatpush.msra.mxu0 %v1030
    %6878 = vmatpush.msra.mxu0 %v1022
    %6879 = vmatpush.msra.mxu0 %v1014
    %6880 = vmatpush.msra.mxu0 %v1006
    %6881 = vmatpush.msra.mxu0 %v998
    %6882 = vmatmul.f32.gmra.mxu0 %v6365
    %v6883 = vpop.f32.mrf.mxu0
    %v6884 = vadd.f32 %v6864, %v6883
    %6885 = vdwg.mxu0
    %6886 = vmatpush.msra.mxu0 %v1246
    %6887 = vmatpush.msra.mxu0 %v1238
    %6888 = vmatpush.msra.mxu0 %v1230
    %6889 = vmatpush.msra.mxu0 %v1222
    %6890 = vmatpush.msra.mxu0 %v1214
    %6891 = vmatpush.msra.mxu0 %v1206
    %6892 = vmatpush.msra.mxu0 %v1198
    %6893 = vmatpush.msra.mxu0 %v1190
    %6894 = vmatpush.msra.mxu0 %v1182
    %6895 = vmatpush.msra.mxu0 %v1174
    %6896 = vmatpush.msra.mxu0 %v1166
    %6897 = vmatpush.msra.mxu0 %v1158
    %6898 = vmatpush.msra.mxu0 %v1150
    %6899 = vmatpush.msra.mxu0 %v1142
    %6900 = vmatpush.msra.mxu0 %v1134
    %6901 = vmatpush.msra.mxu0 %v1126
    %6902 = vmatmul.f32.gmra.mxu0 %v5887
    %v6903 = vpop.f32.mrf.mxu0
    %v6904 = vadd.f32 %v6884, %v6903
    %6905 = vdwg.mxu0
    %6906 = vmatpush.msra.mxu0 %v1374
    %6907 = vmatpush.msra.mxu0 %v1366
    %6908 = vmatpush.msra.mxu0 %v1358
    %6909 = vmatpush.msra.mxu0 %v1350
    %6910 = vmatpush.msra.mxu0 %v1342
    %6911 = vmatpush.msra.mxu0 %v1334
    %6912 = vmatpush.msra.mxu0 %v1326
    %6913 = vmatpush.msra.mxu0 %v1318
    %6914 = vmatpush.msra.mxu0 %v1310
    %6915 = vmatpush.msra.mxu0 %v1302
    %6916 = vmatpush.msra.mxu0 %v1294
    %6917 = vmatpush.msra.mxu0 %v1286
    %6918 = vmatpush.msra.mxu0 %v1278
    %6919 = vmatpush.msra.mxu0 %v1270
    %6920 = vmatpush.msra.mxu0 %v1262
    %6921 = vmatpush.msra.mxu0 %v1254
    %6922 = vmatmul.f32.gmra.mxu0 %v5888
    %v6923 = vpop.f32.mrf.mxu0
    %v6924 = vadd.f32 %v6904, %v6923
    %6925 = vdwg.mxu0
    %6926 = vmatpush.msra.mxu0 %v991
    %6927 = vmatpush.msra.mxu0 %v983
    %6928 = vmatpush.msra.mxu0 %v975
    %6929 = vmatpush.msra.mxu0 %v967
    %6930 = vmatpush.msra.mxu0 %v959
    %6931 = vmatpush.msra.mxu0 %v951
    %6932 = vmatpush.msra.mxu0 %v943
    %6933 = vmatpush.msra.mxu0 %v935
    %6934 = vmatpush.msra.mxu0 %v927
    %6935 = vmatpush.msra.mxu0 %v919
    %6936 = vmatpush.msra.mxu0 %v911
    %6937 = vmatpush.msra.mxu0 %v903
    %6938 = vmatpush.msra.mxu0 %v895
    %6939 = vmatpush.msra.mxu0 %v887
    %6940 = vmatpush.msra.mxu0 %v879
    %6941 = vmatpush.msra.mxu0 %v871
    %6942 = vmatmul.f32.gmra.mxu0 %v6364
    %v6943 = vpop.f32.mrf.mxu0
    %v6944 = vadd.f32 %v1385, %v6943
    %6945 = vdwg.mxu0
    %6946 = vmatpush.msra.mxu0 %v1119
    %6947 = vmatpush.msra.mxu0 %v1111
    %6948 = vmatpush.msra.mxu0 %v1103
    %6949 = vmatpush.msra.mxu0 %v1095
    %6950 = vmatpush.msra.mxu0 %v1087
    %6951 = vmatpush.msra.mxu0 %v1079
    %6952 = vmatpush.msra.mxu0 %v1071
    %6953 = vmatpush.msra.mxu0 %v1063
    %6954 = vmatpush.msra.mxu0 %v1055
    %6955 = vmatpush.msra.mxu0 %v1047
    %6956 = vmatpush.msra.mxu0 %v1039
    %6957 = vmatpush.msra.mxu0 %v1031
    %6958 = vmatpush.msra.mxu0 %v1023
    %6959 = vmatpush.msra.mxu0 %v1015
    %6960 = vmatpush.msra.mxu0 %v1007
    %6961 = vmatpush.msra.mxu0 %v999
    %6962 = vmatmul.f32.gmra.mxu0 %v6365
    %v6963 = vpop.f32.mrf.mxu0
    %v6964 = vadd.f32 %v6944, %v6963
    %6965 = vdwg.mxu0
    %6966 = vmatpush.msra.mxu0 %v1247
    %6967 = vmatpush.msra.mxu0 %v1239
    %6968 = vmatpush.msra.mxu0 %v1231
    %6969 = vmatpush.msra.mxu0 %v1223
    %6970 = vmatpush.msra.mxu0 %v1215
    %6971 = vmatpush.msra.mxu0 %v1207
    %6972 = vmatpush.msra.mxu0 %v1199
    %6973 = vmatpush.msra.mxu0 %v1191
    %6974 = vmatpush.msra.mxu0 %v1183
    %6975 = vmatpush.msra.mxu0 %v1175
    %6976 = vmatpush.msra.mxu0 %v1167
    %6977 = vmatpush.msra.mxu0 %v1159
    %6978 = vmatpush.msra.mxu0 %v1151
    %6979 = vmatpush.msra.mxu0 %v1143
    %6980 = vmatpush.msra.mxu0 %v1135
    %6981 = vmatpush.msra.mxu0 %v1127
    %6982 = vmatmul.f32.gmra.mxu0 %v5887
    %v6983 = vpop.f32.mrf.mxu0
    %v6984 = vadd.f32 %v6964, %v6983
    %6985 = vdwg.mxu0
    %6986 = vmatpush.msra.mxu0 %v1375
    %6987 = vmatpush.msra.mxu0 %v1367
    %6988 = vmatpush.msra.mxu0 %v1359
    %6989 = vmatpush.msra.mxu0 %v1351
    %6990 = vmatpush.msra.mxu0 %v1343
    %6991 = vmatpush.msra.mxu0 %v1335
    %6992 = vmatpush.msra.mxu0 %v1327
    %6993 = vmatpush.msra.mxu0 %v1319
    %6994 = vmatpush.msra.mxu0 %v1311
    %6995 = vmatpush.msra.mxu0 %v1303
    %6996 = vmatpush.msra.mxu0 %v1295
    %6997 = vmatpush.msra.mxu0 %v1287
    %6998 = vmatpush.msra.mxu0 %v1279
    %6999 = vmatpush.msra.mxu0 %v1271
    %7000 = vmatpush.msra.mxu0 %v1263
    %7001 = vmatpush.msra.mxu0 %v1255
    %7002 = vmatmul.f32.gmra.mxu0 %v5888
    %v7003 = vpop.f32.mrf.mxu0
    %v7004 = vadd.f32 %v6984, %v7003
    %7005 = vdwg.mxu0
    %v7006 = vxor.u32 %v6444, 2147483648
    %v7007 = vxor.u32 %v6524, 2147483648
    %v7008 = vmul.f32 %v7006, 1.442695
    %v7009 = vpow.pop %v7008
    %v7010 = vmul.f32 %v7007, 1.442695
    %v7011 = vpow.pop %v7010
    %v7012 = vadd.f32 %v7009, 1.0
    %v7013 = vadd.f32 %v7011, 1.0
    %v7014 = vrcp.pop %v7012
    %v7015 = vmul.f32 %v7012, %v7014
    %v7016 = vsub.f32 1.0, %v7015
    %v7017 = vmul.f32 %v7014, %v7016
    %v7018 = vadd.f32 %v7014, %v7017
    %vm7019 = vweird.f32 %v7012
    %vm7020 = vweird.f32 %v7014
    %vm7021 = vmor %vm7019, %vm7020
    %v7022 = vsel %vm7021, %v7014, %v7018
    %v7023 = vand.u32 2147483647, %v7012
    %vm7024 = vcmp.eq.f32.partialorder %v7023, 8.507059e+37
    %v7025 = vand.u32 %v7012, 2147483648
    %v7026 = vor.u32 1.1754944e-38, %v7025
    %v7027 = vsel %vm7024, %v7026, %v7022
    %v7028 = vmul.f32 1.0, %v7027
    %v7029 = vrcp.pop %v7013
    %v7030 = vmul.f32 %v7013, %v7029
    %v7031 = vsub.f32 1.0, %v7030
    %v7032 = vmul.f32 %v7029, %v7031
    %v7033 = vadd.f32 %v7029, %v7032
    %vm7034 = vweird.f32 %v7013
    %vm7035 = vweird.f32 %v7029
    %vm7036 = vmor %vm7034, %vm7035
    %v7037 = vsel %vm7036, %v7029, %v7033
    %v7038 = vand.u32 2147483647, %v7013
    %vm7039 = vcmp.eq.f32.partialorder %v7038, 8.507059e+37
    %v7040 = vand.u32 %v7013, 2147483648
    %v7041 = vor.u32 1.1754944e-38, %v7040
    %v7042 = vsel %vm7039, %v7041, %v7037
    %v7043 = vmul.f32 1.0, %v7042
    %v7044 = vxor.u32 %v6604, 2147483648
    %v7045 = vxor.u32 %v6684, 2147483648
    %v7046 = vmul.f32 %v7044, 1.442695
    %v7047 = vpow.pop %v7046
    %v7048 = vmul.f32 %v7045, 1.442695
    %v7049 = vpow.pop %v7048
    %v7050 = vadd.f32 %v7047, 1.0
    %v7051 = vadd.f32 %v7049, 1.0
    %v7052 = vrcp.pop %v7050
    %v7053 = vmul.f32 %v7050, %v7052
    %v7054 = vsub.f32 1.0, %v7053
    %v7055 = vmul.f32 %v7052, %v7054
    %v7056 = vadd.f32 %v7052, %v7055
    %vm7057 = vweird.f32 %v7050
    %vm7058 = vweird.f32 %v7052
    %vm7059 = vmor %vm7057, %vm7058
    %v7060 = vsel %vm7059, %v7052, %v7056
    %v7061 = vand.u32 2147483647, %v7050
    %vm7062 = vcmp.eq.f32.partialorder %v7061, 8.507059e+37
    %v7063 = vand.u32 %v7050, 2147483648
    %v7064 = vor.u32 1.1754944e-38, %v7063
    %v7065 = vsel %vm7062, %v7064, %v7060
    %v7066 = vmul.f32 1.0, %v7065
    %v7067 = vrcp.pop %v7051
    %v7068 = vmul.f32 %v7051, %v7067
    %v7069 = vsub.f32 1.0, %v7068
    %v7070 = vmul.f32 %v7067, %v7069
    %v7071 = vadd.f32 %v7067, %v7070
    %vm7072 = vweird.f32 %v7051
    %vm7073 = vweird.f32 %v7067
    %vm7074 = vmor %vm7072, %vm7073
    %v7075 = vsel %vm7074, %v7067, %v7071
    %v7076 = vand.u32 2147483647, %v7051
    %vm7077 = vcmp.eq.f32.partialorder %v7076, 8.507059e+37
    %v7078 = vand.u32 %v7051, 2147483648
    %v7079 = vor.u32 1.1754944e-38, %v7078
    %v7080 = vsel %vm7077, %v7079, %v7075
    %v7081 = vmul.f32 1.0, %v7080
    %v7082 = vtanh.pop %v6764
    %v7083 = vtanh.pop %v6844
    %v7084 = vxor.u32 %v6924, 2147483648
    %v7085 = vxor.u32 %v7004, 2147483648
    %v7086 = vmul.f32 %v7084, 1.442695
    %v7087 = vpow.pop %v7086
    %v7088 = vmul.f32 %v7085, 1.442695
    %v7089 = vpow.pop %v7088
    %v7090 = vadd.f32 %v7087, 1.0
    %v7091 = vadd.f32 %v7089, 1.0
    %v7092 = vrcp.pop %v7090
    %v7093 = vmul.f32 %v7090, %v7092
    %v7094 = vsub.f32 1.0, %v7093
    %v7095 = vmul.f32 %v7092, %v7094
    %v7096 = vadd.f32 %v7092, %v7095
    %vm7097 = vweird.f32 %v7090
    %vm7098 = vweird.f32 %v7092
    %vm7099 = vmor %vm7097, %vm7098
    %v7100 = vsel %vm7099, %v7092, %v7096
    %v7101 = vand.u32 2147483647, %v7090
    %vm7102 = vcmp.eq.f32.partialorder %v7101, 8.507059e+37
    %v7103 = vand.u32 %v7090, 2147483648
    %v7104 = vor.u32 1.1754944e-38, %v7103
    %v7105 = vsel %vm7102, %v7104, %v7100
    %v7106 = vmul.f32 1.0, %v7105
    %v7107 = vrcp.pop %v7091
    %v7108 = vmul.f32 %v7091, %v7107
    %v7109 = vsub.f32 1.0, %v7108
    %v7110 = vmul.f32 %v7107, %v7109
    %v7111 = vadd.f32 %v7107, %v7110
    %vm7112 = vweird.f32 %v7091
    %vm7113 = vweird.f32 %v7107
    %vm7114 = vmor %vm7112, %vm7113
    %v7115 = vsel %vm7114, %v7107, %v7111
    %v7116 = vand.u32 2147483647, %v7091
    %vm7117 = vcmp.eq.f32.partialorder %v7116, 8.507059e+37
    %v7118 = vand.u32 %v7091, 2147483648
    %v7119 = vor.u32 1.1754944e-38, %v7118
    %v7120 = vsel %vm7117, %v7119, %v7115
    %v7121 = vmul.f32 1.0, %v7120
    %v7122 = vmul.f32 %v7066, %v5883
    %v7123 = vmul.f32 %v7081, %v5884
    %v7124 = vmul.f32 %v7028, %v7082
    %v7125 = vmul.f32 %v7043, %v7083
    %v7126 = vadd.f32 %v7122, %v7124
    %v7127 = vadd.f32 %v7123, %v7125
    %v7128 = vtanh.pop %v7126
    %v7129 = vtanh.pop %v7127
    %v7130 = vmul.f32 %v7106, %v7128
    %v7131 = vmul.f32 %v7121, %v7129
    %s7132 = scalar_lea.vmem %s0, 40
    %v7133 = vld [vmem:[%s7132] sm:$0xff]
    %7135 = vset.pattern.permute.xlu0 0
    %7136 = vperm.xlu0 %7135, %v7133
    %v7137 = vpop.permute.xlu0 %7136
    %v7139 = vmul.f32 %v7137, %v104
    %v7140 = vmul.f32 %v7137, %v105
    %v7141 = vmul.f32 %v7137, %v106
    %v7142 = vmul.f32 %v7137, %v107
    %v7143 = vmul.f32 %v7137, %v108
    %v7144 = vmul.f32 %v7137, %v109
    %v7145 = vmul.f32 %v7137, %v110
    %v7146 = vmul.f32 %v7137, %v111
    %v7147 = vadd.f32 %v7139, %v130
    %v7148 = vadd.f32 %v7140, %v131
    %v7149 = vadd.f32 %v7141, %v132
    %v7150 = vadd.f32 %v7142, %v133
    %v7151 = vadd.f32 %v7143, %v134
    %v7152 = vadd.f32 %v7144, %v135
    %v7153 = vadd.f32 %v7145, %v136
    %v7154 = vadd.f32 %v7146, %v137
    %7155 = vmatpush.msra.mxu0 %v274
    %7156 = vmatpush.msra.mxu0 %v266
    %7157 = vmatpush.msra.mxu0 %v258
    %7158 = vmatpush.msra.mxu0 %v250
    %7159 = vmatpush.msra.mxu0 %v242
    %7160 = vmatpush.msra.mxu0 %v234
    %7161 = vmatpush.msra.mxu0 %v226
    %7162 = vmatpush.msra.mxu0 %v218
    %7163 = vmatpush.msra.mxu0 %v210
    %7164 = vmatpush.msra.mxu0 %v202
    %7165 = vmatpush.msra.mxu0 %v194
    %7166 = vmatpush.msra.mxu0 %v186
    %7167 = vmatpush.msra.mxu0 %v178
    %7168 = vmatpush.msra.mxu0 %v170
    %7169 = vmatpush.msra.mxu0 %v162
    %7170 = vmatpush.msra.mxu0 %v154
    %7171 = vmatmul.f32.gmra.mxu0 %v6364
    %v7172 = vpop.f32.mrf.mxu0
    %v7173 = vadd.f32 0.0, %v7172
    %7174 = vdwg.mxu0
    %7175 = vmatpush.msra.mxu0 %v402
    %7176 = vmatpush.msra.mxu0 %v394
    %7177 = vmatpush.msra.mxu0 %v386
    %7178 = vmatpush.msra.mxu0 %v378
    %7179 = vmatpush.msra.mxu0 %v370
    %7180 = vmatpush.msra.mxu0 %v362
    %7181 = vmatpush.msra.mxu0 %v354
    %7182 = vmatpush.msra.mxu0 %v346
    %7183 = vmatpush.msra.mxu0 %v338
    %7184 = vmatpush.msra.mxu0 %v330
    %7185 = vmatpush.msra.mxu0 %v322
    %7186 = vmatpush.msra.mxu0 %v314
    %7187 = vmatpush.msra.mxu0 %v306
    %7188 = vmatpush.msra.mxu0 %v298
    %7189 = vmatpush.msra.mxu0 %v290
    %7190 = vmatpush.msra.mxu0 %v282
    %7191 = vmatmul.f32.gmra.mxu0 %v6365
    %v7192 = vpop.f32.mrf.mxu0
    %v7193 = vadd.f32 %v7173, %v7192
    %7194 = vdwg.mxu0
    %7195 = vmatpush.msra.mxu0 %v275
    %7196 = vmatpush.msra.mxu0 %v267
    %7197 = vmatpush.msra.mxu0 %v259
    %7198 = vmatpush.msra.mxu0 %v251
    %7199 = vmatpush.msra.mxu0 %v243
    %7200 = vmatpush.msra.mxu0 %v235
    %7201 = vmatpush.msra.mxu0 %v227
    %7202 = vmatpush.msra.mxu0 %v219
    %7203 = vmatpush.msra.mxu0 %v211
    %7204 = vmatpush.msra.mxu0 %v203
    %7205 = vmatpush.msra.mxu0 %v195
    %7206 = vmatpush.msra.mxu0 %v187
    %7207 = vmatpush.msra.mxu0 %v179
    %7208 = vmatpush.msra.mxu0 %v171
    %7209 = vmatpush.msra.mxu0 %v163
    %7210 = vmatpush.msra.mxu0 %v155
    %7211 = vmatmul.f32.gmra.mxu0 %v6364
    %v7212 = vpop.f32.mrf.mxu0
    %v7213 = vadd.f32 0.0, %v7212
    %7214 = vdwg.mxu0
    %7215 = vmatpush.msra.mxu0 %v403
    %7216 = vmatpush.msra.mxu0 %v395
    %7217 = vmatpush.msra.mxu0 %v387
    %7218 = vmatpush.msra.mxu0 %v379
    %7219 = vmatpush.msra.mxu0 %v371
    %7220 = vmatpush.msra.mxu0 %v363
    %7221 = vmatpush.msra.mxu0 %v355
    %7222 = vmatpush.msra.mxu0 %v347
    %7223 = vmatpush.msra.mxu0 %v339
    %7224 = vmatpush.msra.mxu0 %v331
    %7225 = vmatpush.msra.mxu0 %v323
    %7226 = vmatpush.msra.mxu0 %v315
    %7227 = vmatpush.msra.mxu0 %v307
    %7228 = vmatpush.msra.mxu0 %v299
    %7229 = vmatpush.msra.mxu0 %v291
    %7230 = vmatpush.msra.mxu0 %v283
    %7231 = vmatmul.f32.gmra.mxu0 %v6365
    %v7232 = vpop.f32.mrf.mxu0
    %v7233 = vadd.f32 %v7213, %v7232
    %7234 = vdwg.mxu0
    %7235 = vmatpush.msra.mxu0 %v276
    %7236 = vmatpush.msra.mxu0 %v268
    %7237 = vmatpush.msra.mxu0 %v260
    %7238 = vmatpush.msra.mxu0 %v252
    %7239 = vmatpush.msra.mxu0 %v244
    %7240 = vmatpush.msra.mxu0 %v236
    %7241 = vmatpush.msra.mxu0 %v228
    %7242 = vmatpush.msra.mxu0 %v220
    %7243 = vmatpush.msra.mxu0 %v212
    %7244 = vmatpush.msra.mxu0 %v204
    %7245 = vmatpush.msra.mxu0 %v196
    %7246 = vmatpush.msra.mxu0 %v188
    %7247 = vmatpush.msra.mxu0 %v180
    %7248 = vmatpush.msra.mxu0 %v172
    %7249 = vmatpush.msra.mxu0 %v164
    %7250 = vmatpush.msra.mxu0 %v156
    %7251 = vmatmul.f32.gmra.mxu0 %v6364
    %v7252 = vpop.f32.mrf.mxu0
    %v7253 = vadd.f32 0.0, %v7252
    %7254 = vdwg.mxu0
    %7255 = vmatpush.msra.mxu0 %v404
    %7256 = vmatpush.msra.mxu0 %v396
    %7257 = vmatpush.msra.mxu0 %v388
    %7258 = vmatpush.msra.mxu0 %v380
    %7259 = vmatpush.msra.mxu0 %v372
    %7260 = vmatpush.msra.mxu0 %v364
    %7261 = vmatpush.msra.mxu0 %v356
    %7262 = vmatpush.msra.mxu0 %v348
    %7263 = vmatpush.msra.mxu0 %v340
    %7264 = vmatpush.msra.mxu0 %v332
    %7265 = vmatpush.msra.mxu0 %v324
    %7266 = vmatpush.msra.mxu0 %v316
    %7267 = vmatpush.msra.mxu0 %v308
    %7268 = vmatpush.msra.mxu0 %v300
    %7269 = vmatpush.msra.mxu0 %v292
    %7270 = vmatpush.msra.mxu0 %v284
    %7271 = vmatmul.f32.gmra.mxu0 %v6365
    %v7272 = vpop.f32.mrf.mxu0
    %v7273 = vadd.f32 %v7253, %v7272
    %7274 = vdwg.mxu0
    %7275 = vmatpush.msra.mxu0 %v277
    %7276 = vmatpush.msra.mxu0 %v269
    %7277 = vmatpush.msra.mxu0 %v261
    %7278 = vmatpush.msra.mxu0 %v253
    %7279 = vmatpush.msra.mxu0 %v245
    %7280 = vmatpush.msra.mxu0 %v237
    %7281 = vmatpush.msra.mxu0 %v229
    %7282 = vmatpush.msra.mxu0 %v221
    %7283 = vmatpush.msra.mxu0 %v213
    %7284 = vmatpush.msra.mxu0 %v205
    %7285 = vmatpush.msra.mxu0 %v197
    %7286 = vmatpush.msra.mxu0 %v189
    %7287 = vmatpush.msra.mxu0 %v181
    %7288 = vmatpush.msra.mxu0 %v173
    %7289 = vmatpush.msra.mxu0 %v165
    %7290 = vmatpush.msra.mxu0 %v157
    %7291 = vmatmul.f32.gmra.mxu0 %v6364
    %v7292 = vpop.f32.mrf.mxu0
    %v7293 = vadd.f32 0.0, %v7292
    %7294 = vdwg.mxu0
    %7295 = vmatpush.msra.mxu0 %v405
    %7296 = vmatpush.msra.mxu0 %v397
    %7297 = vmatpush.msra.mxu0 %v389
    %7298 = vmatpush.msra.mxu0 %v381
    %7299 = vmatpush.msra.mxu0 %v373
    %7300 = vmatpush.msra.mxu0 %v365
    %7301 = vmatpush.msra.mxu0 %v357
    %7302 = vmatpush.msra.mxu0 %v349
    %7303 = vmatpush.msra.mxu0 %v341
    %7304 = vmatpush.msra.mxu0 %v333
    %7305 = vmatpush.msra.mxu0 %v325
    %7306 = vmatpush.msra.mxu0 %v317
    %7307 = vmatpush.msra.mxu0 %v309
    %7308 = vmatpush.msra.mxu0 %v301
    %7309 = vmatpush.msra.mxu0 %v293
    %7310 = vmatpush.msra.mxu0 %v285
    %7311 = vmatmul.f32.gmra.mxu0 %v6365
    %v7312 = vpop.f32.mrf.mxu0
    %v7313 = vadd.f32 %v7293, %v7312
    %7314 = vdwg.mxu0
    %7315 = vmatpush.msra.mxu0 %v278
    %7316 = vmatpush.msra.mxu0 %v270
    %7317 = vmatpush.msra.mxu0 %v262
    %7318 = vmatpush.msra.mxu0 %v254
    %7319 = vmatpush.msra.mxu0 %v246
    %7320 = vmatpush.msra.mxu0 %v238
    %7321 = vmatpush.msra.mxu0 %v230
    %7322 = vmatpush.msra.mxu0 %v222
    %7323 = vmatpush.msra.mxu0 %v214
    %7324 = vmatpush.msra.mxu0 %v206
    %7325 = vmatpush.msra.mxu0 %v198
    %7326 = vmatpush.msra.mxu0 %v190
    %7327 = vmatpush.msra.mxu0 %v182
    %7328 = vmatpush.msra.mxu0 %v174
    %7329 = vmatpush.msra.mxu0 %v166
    %7330 = vmatpush.msra.mxu0 %v158
    %7331 = vmatmul.f32.gmra.mxu0 %v6364
    %v7332 = vpop.f32.mrf.mxu0
    %v7333 = vadd.f32 0.0, %v7332
    %7334 = vdwg.mxu0
    %7335 = vmatpush.msra.mxu0 %v406
    %7336 = vmatpush.msra.mxu0 %v398
    %7337 = vmatpush.msra.mxu0 %v390
    %7338 = vmatpush.msra.mxu0 %v382
    %7339 = vmatpush.msra.mxu0 %v374
    %7340 = vmatpush.msra.mxu0 %v366
    %7341 = vmatpush.msra.mxu0 %v358
    %7342 = vmatpush.msra.mxu0 %v350
    %7343 = vmatpush.msra.mxu0 %v342
    %7344 = vmatpush.msra.mxu0 %v334
    %7345 = vmatpush.msra.mxu0 %v326
    %7346 = vmatpush.msra.mxu0 %v318
    %7347 = vmatpush.msra.mxu0 %v310
    %7348 = vmatpush.msra.mxu0 %v302
    %7349 = vmatpush.msra.mxu0 %v294
    %7350 = vmatpush.msra.mxu0 %v286
    %7351 = vmatmul.f32.gmra.mxu0 %v6365
    %v7352 = vpop.f32.mrf.mxu0
    %v7353 = vadd.f32 %v7333, %v7352
    %7354 = vdwg.mxu0
    %7355 = vmatpush.msra.mxu0 %v279
    %7356 = vmatpush.msra.mxu0 %v271
    %7357 = vmatpush.msra.mxu0 %v263
    %7358 = vmatpush.msra.mxu0 %v255
    %7359 = vmatpush.msra.mxu0 %v247
    %7360 = vmatpush.msra.mxu0 %v239
    %7361 = vmatpush.msra.mxu0 %v231
    %7362 = vmatpush.msra.mxu0 %v223
    %7363 = vmatpush.msra.mxu0 %v215
    %7364 = vmatpush.msra.mxu0 %v207
    %7365 = vmatpush.msra.mxu0 %v199
    %7366 = vmatpush.msra.mxu0 %v191
    %7367 = vmatpush.msra.mxu0 %v183
    %7368 = vmatpush.msra.mxu0 %v175
    %7369 = vmatpush.msra.mxu0 %v167
    %7370 = vmatpush.msra.mxu0 %v159
    %7371 = vmatmul.f32.gmra.mxu0 %v6364
    %v7372 = vpop.f32.mrf.mxu0
    %v7373 = vadd.f32 0.0, %v7372
    %7374 = vdwg.mxu0
    %7375 = vmatpush.msra.mxu0 %v407
    %7376 = vmatpush.msra.mxu0 %v399
    %7377 = vmatpush.msra.mxu0 %v391
    %7378 = vmatpush.msra.mxu0 %v383
    %7379 = vmatpush.msra.mxu0 %v375
    %7380 = vmatpush.msra.mxu0 %v367
    %7381 = vmatpush.msra.mxu0 %v359
    %7382 = vmatpush.msra.mxu0 %v351
    %7383 = vmatpush.msra.mxu0 %v343
    %7384 = vmatpush.msra.mxu0 %v335
    %7385 = vmatpush.msra.mxu0 %v327
    %7386 = vmatpush.msra.mxu0 %v319
    %7387 = vmatpush.msra.mxu0 %v311
    %7388 = vmatpush.msra.mxu0 %v303
    %7389 = vmatpush.msra.mxu0 %v295
    %7390 = vmatpush.msra.mxu0 %v287
    %7391 = vmatmul.f32.gmra.mxu0 %v6365
    %v7392 = vpop.f32.mrf.mxu0
    %v7393 = vadd.f32 %v7373, %v7392
    %7394 = vdwg.mxu0
    %7395 = vmatpush.msra.mxu0 %v280
    %7396 = vmatpush.msra.mxu0 %v272
    %7397 = vmatpush.msra.mxu0 %v264
    %7398 = vmatpush.msra.mxu0 %v256
    %7399 = vmatpush.msra.mxu0 %v248
    %7400 = vmatpush.msra.mxu0 %v240
    %7401 = vmatpush.msra.mxu0 %v232
    %7402 = vmatpush.msra.mxu0 %v224
    %7403 = vmatpush.msra.mxu0 %v216
    %7404 = vmatpush.msra.mxu0 %v208
    %7405 = vmatpush.msra.mxu0 %v200
    %7406 = vmatpush.msra.mxu0 %v192
    %7407 = vmatpush.msra.mxu0 %v184
    %7408 = vmatpush.msra.mxu0 %v176
    %7409 = vmatpush.msra.mxu0 %v168
    %7410 = vmatpush.msra.mxu0 %v160
    %7411 = vmatmul.f32.gmra.mxu0 %v6364
    %v7412 = vpop.f32.mrf.mxu0
    %v7413 = vadd.f32 0.0, %v7412
    %7414 = vdwg.mxu0
    %7415 = vmatpush.msra.mxu0 %v408
    %7416 = vmatpush.msra.mxu0 %v400
    %7417 = vmatpush.msra.mxu0 %v392
    %7418 = vmatpush.msra.mxu0 %v384
    %7419 = vmatpush.msra.mxu0 %v376
    %7420 = vmatpush.msra.mxu0 %v368
    %7421 = vmatpush.msra.mxu0 %v360
    %7422 = vmatpush.msra.mxu0 %v352
    %7423 = vmatpush.msra.mxu0 %v344
    %7424 = vmatpush.msra.mxu0 %v336
    %7425 = vmatpush.msra.mxu0 %v328
    %7426 = vmatpush.msra.mxu0 %v320
    %7427 = vmatpush.msra.mxu0 %v312
    %7428 = vmatpush.msra.mxu0 %v304
    %7429 = vmatpush.msra.mxu0 %v296
    %7430 = vmatpush.msra.mxu0 %v288
    %7431 = vmatmul.f32.gmra.mxu0 %v6365
    %v7432 = vpop.f32.mrf.mxu0
    %v7433 = vadd.f32 %v7413, %v7432
    %7434 = vdwg.mxu0
    %7435 = vmatpush.msra.mxu0 %v281
    %7436 = vmatpush.msra.mxu0 %v273
    %7437 = vmatpush.msra.mxu0 %v265
    %7438 = vmatpush.msra.mxu0 %v257
    %7439 = vmatpush.msra.mxu0 %v249
    %7440 = vmatpush.msra.mxu0 %v241
    %7441 = vmatpush.msra.mxu0 %v233
    %7442 = vmatpush.msra.mxu0 %v225
    %7443 = vmatpush.msra.mxu0 %v217
    %7444 = vmatpush.msra.mxu0 %v209
    %7445 = vmatpush.msra.mxu0 %v201
    %7446 = vmatpush.msra.mxu0 %v193
    %7447 = vmatpush.msra.mxu0 %v185
    %7448 = vmatpush.msra.mxu0 %v177
    %7449 = vmatpush.msra.mxu0 %v169
    %7450 = vmatpush.msra.mxu0 %v161
    %7451 = vmatmul.f32.gmra.mxu0 %v6364
    %v7452 = vpop.f32.mrf.mxu0
    %v7453 = vadd.f32 0.0, %v7452
    %7454 = vdwg.mxu0
    %7455 = vmatpush.msra.mxu0 %v409
    %7456 = vmatpush.msra.mxu0 %v401
    %7457 = vmatpush.msra.mxu0 %v393
    %7458 = vmatpush.msra.mxu0 %v385
    %7459 = vmatpush.msra.mxu0 %v377
    %7460 = vmatpush.msra.mxu0 %v369
    %7461 = vmatpush.msra.mxu0 %v361
    %7462 = vmatpush.msra.mxu0 %v353
    %7463 = vmatpush.msra.mxu0 %v345
    %7464 = vmatpush.msra.mxu0 %v337
    %7465 = vmatpush.msra.mxu0 %v329
    %7466 = vmatpush.msra.mxu0 %v321
    %7467 = vmatpush.msra.mxu0 %v313
    %7468 = vmatpush.msra.mxu0 %v305
    %7469 = vmatpush.msra.mxu0 %v297
    %7470 = vmatpush.msra.mxu0 %v289
    %7471 = vmatmul.f32.gmra.mxu0 %v6365
    %v7472 = vpop.f32.mrf.mxu0
    %v7473 = vadd.f32 %v7453, %v7472
    %7474 = vdwg.mxu0
    %v7475 = vadd.f32 %v7147, %v7193
    %v7476 = vadd.f32 %v7148, %v7233
    %v7477 = vadd.f32 %v7149, %v7273
    %v7478 = vadd.f32 %v7150, %v7313
    %v7479 = vadd.f32 %v7151, %v7353
    %v7480 = vadd.f32 %v7152, %v7393
    %v7481 = vadd.f32 %v7153, %v7433
    %v7482 = vadd.f32 %v7154, %v7473
    %v7483 = vxor.u32 %v7475, 2147483648
    %v7484 = vxor.u32 %v7476, 2147483648
    %v7485 = vmul.f32 %v7483, 1.442695
    %v7486 = vpow.pop %v7485
    %v7487 = vmul.f32 %v7484, 1.442695
    %v7488 = vpow.pop %v7487
    %v7489 = vadd.f32 %v7486, 1.0
    %v7490 = vadd.f32 %v7488, 1.0
    %v7491 = vrcp.pop %v7489
    %v7492 = vmul.f32 %v7489, %v7491
    %v7493 = vsub.f32 1.0, %v7492
    %v7494 = vmul.f32 %v7491, %v7493
    %v7495 = vadd.f32 %v7491, %v7494
    %vm7496 = vweird.f32 %v7489
    %vm7497 = vweird.f32 %v7491
    %vm7498 = vmor %vm7496, %vm7497
    %v7499 = vsel %vm7498, %v7491, %v7495
    %v7500 = vand.u32 2147483647, %v7489
    %vm7501 = vcmp.eq.f32.partialorder %v7500, 8.507059e+37
    %v7502 = vand.u32 %v7489, 2147483648
    %v7503 = vor.u32 1.1754944e-38, %v7502
    %v7504 = vsel %vm7501, %v7503, %v7499
    %v7505 = vmul.f32 1.0, %v7504
    %v7506 = vrcp.pop %v7490
    %v7507 = vmul.f32 %v7490, %v7506
    %v7508 = vsub.f32 1.0, %v7507
    %v7509 = vmul.f32 %v7506, %v7508
    %v7510 = vadd.f32 %v7506, %v7509
    %vm7511 = vweird.f32 %v7490
    %vm7512 = vweird.f32 %v7506
    %vm7513 = vmor %vm7511, %vm7512
    %v7514 = vsel %vm7513, %v7506, %v7510
    %v7515 = vand.u32 2147483647, %v7490
    %vm7516 = vcmp.eq.f32.partialorder %v7515, 8.507059e+37
    %v7517 = vand.u32 %v7490, 2147483648
    %v7518 = vor.u32 1.1754944e-38, %v7517
    %v7519 = vsel %vm7516, %v7518, %v7514
    %v7520 = vmul.f32 1.0, %v7519
    %v7521 = vxor.u32 %v7477, 2147483648
    %v7522 = vxor.u32 %v7478, 2147483648
    %v7523 = vmul.f32 %v7521, 1.442695
    %v7524 = vpow.pop %v7523
    %v7525 = vmul.f32 %v7522, 1.442695
    %v7526 = vpow.pop %v7525
    %v7527 = vadd.f32 %v7524, 1.0
    %v7528 = vadd.f32 %v7526, 1.0
    %v7529 = vrcp.pop %v7527
    %v7530 = vmul.f32 %v7527, %v7529
    %v7531 = vsub.f32 1.0, %v7530
    %v7532 = vmul.f32 %v7529, %v7531
    %v7533 = vadd.f32 %v7529, %v7532
    %vm7534 = vweird.f32 %v7527
    %vm7535 = vweird.f32 %v7529
    %vm7536 = vmor %vm7534, %vm7535
    %v7537 = vsel %vm7536, %v7529, %v7533
    %v7538 = vand.u32 2147483647, %v7527
    %vm7539 = vcmp.eq.f32.partialorder %v7538, 8.507059e+37
    %v7540 = vand.u32 %v7527, 2147483648
    %v7541 = vor.u32 1.1754944e-38, %v7540
    %v7542 = vsel %vm7539, %v7541, %v7537
    %v7543 = vmul.f32 1.0, %v7542
    %v7544 = vrcp.pop %v7528
    %v7545 = vmul.f32 %v7528, %v7544
    %v7546 = vsub.f32 1.0, %v7545
    %v7547 = vmul.f32 %v7544, %v7546
    %v7548 = vadd.f32 %v7544, %v7547
    %vm7549 = vweird.f32 %v7528
    %vm7550 = vweird.f32 %v7544
    %vm7551 = vmor %vm7549, %vm7550
    %v7552 = vsel %vm7551, %v7544, %v7548
    %v7553 = vand.u32 2147483647, %v7528
    %vm7554 = vcmp.eq.f32.partialorder %v7553, 8.507059e+37
    %v7555 = vand.u32 %v7528, 2147483648
    %v7556 = vor.u32 1.1754944e-38, %v7555
    %v7557 = vsel %vm7554, %v7556, %v7552
    %v7558 = vmul.f32 1.0, %v7557
    %v7559 = vtanh.pop %v7479
    %v7560 = vtanh.pop %v7480
    %v7561 = vxor.u32 %v7481, 2147483648
    %v7562 = vxor.u32 %v7482, 2147483648
    %v7563 = vmul.f32 %v7561, 1.442695
    %v7564 = vpow.pop %v7563
    %v7565 = vmul.f32 %v7562, 1.442695
    %v7566 = vpow.pop %v7565
    %v7567 = vadd.f32 %v7564, 1.0
    %v7568 = vadd.f32 %v7566, 1.0
    %v7569 = vrcp.pop %v7567
    %v7570 = vmul.f32 %v7567, %v7569
    %v7571 = vsub.f32 1.0, %v7570
    %v7572 = vmul.f32 %v7569, %v7571
    %v7573 = vadd.f32 %v7569, %v7572
    %vm7574 = vweird.f32 %v7567
    %vm7575 = vweird.f32 %v7569
    %vm7576 = vmor %vm7574, %vm7575
    %v7577 = vsel %vm7576, %v7569, %v7573
    %v7578 = vand.u32 2147483647, %v7567
    %vm7579 = vcmp.eq.f32.partialorder %v7578, 8.507059e+37
    %v7580 = vand.u32 %v7567, 2147483648
    %v7581 = vor.u32 1.1754944e-38, %v7580
    %v7582 = vsel %vm7579, %v7581, %v7577
    %v7583 = vmul.f32 1.0, %v7582
    %v7584 = vrcp.pop %v7568
    %v7585 = vmul.f32 %v7568, %v7584
    %v7586 = vsub.f32 1.0, %v7585
    %v7587 = vmul.f32 %v7584, %v7586
    %v7588 = vadd.f32 %v7584, %v7587
    %vm7589 = vweird.f32 %v7568
    %vm7590 = vweird.f32 %v7584
    %vm7591 = vmor %vm7589, %vm7590
    %v7592 = vsel %vm7591, %v7584, %v7588
    %v7593 = vand.u32 2147483647, %v7568
    %vm7594 = vcmp.eq.f32.partialorder %v7593, 8.507059e+37
    %v7595 = vand.u32 %v7568, 2147483648
    %v7596 = vor.u32 1.1754944e-38, %v7595
    %v7597 = vsel %vm7594, %v7596, %v7592
    %v7598 = vmul.f32 1.0, %v7597
    %v7599 = vmul.f32 %v7543, %v6360
    %v7600 = vmul.f32 %v7558, %v6361
    %v7601 = vmul.f32 %v7505, %v7559
    %v7602 = vmul.f32 %v7520, %v7560
    %v7603 = vadd.f32 %v7599, %v7601
    %v7604 = vadd.f32 %v7600, %v7602
    %v7605 = vtanh.pop %v7603
    %v7606 = vtanh.pop %v7604
    %v7607 = vmul.f32 %v7583, %v7605
    %v7608 = vmul.f32 %v7598, %v7606
    %7609 = vmatpush.msra.mxu0 %v984
    %7610 = vmatpush.msra.mxu0 %v976
    %7611 = vmatpush.msra.mxu0 %v968
    %7612 = vmatpush.msra.mxu0 %v960
    %7613 = vmatpush.msra.mxu0 %v952
    %7614 = vmatpush.msra.mxu0 %v944
    %7615 = vmatpush.msra.mxu0 %v936
    %7616 = vmatpush.msra.mxu0 %v928
    %7617 = vmatpush.msra.mxu0 %v920
    %7618 = vmatpush.msra.mxu0 %v912
    %7619 = vmatpush.msra.mxu0 %v904
    %7620 = vmatpush.msra.mxu0 %v896
    %7621 = vmatpush.msra.mxu0 %v888
    %7622 = vmatpush.msra.mxu0 %v880
    %7623 = vmatpush.msra.mxu0 %v872
    %7624 = vmatpush.msra.mxu0 %v864
    %7625 = vmatmul.f32.gmra.mxu0 %v7607
    %v7626 = vpop.f32.mrf.mxu0
    %v7627 = vadd.f32 %v1378, %v7626
    %7628 = vdwg.mxu0
    %7629 = vmatpush.msra.mxu0 %v1112
    %7630 = vmatpush.msra.mxu0 %v1104
    %7631 = vmatpush.msra.mxu0 %v1096
    %7632 = vmatpush.msra.mxu0 %v1088
    %7633 = vmatpush.msra.mxu0 %v1080
    %7634 = vmatpush.msra.mxu0 %v1072
    %7635 = vmatpush.msra.mxu0 %v1064
    %7636 = vmatpush.msra.mxu0 %v1056
    %7637 = vmatpush.msra.mxu0 %v1048
    %7638 = vmatpush.msra.mxu0 %v1040
    %7639 = vmatpush.msra.mxu0 %v1032
    %7640 = vmatpush.msra.mxu0 %v1024
    %7641 = vmatpush.msra.mxu0 %v1016
    %7642 = vmatpush.msra.mxu0 %v1008
    %7643 = vmatpush.msra.mxu0 %v1000
    %7644 = vmatpush.msra.mxu0 %v992
    %7645 = vmatmul.f32.gmra.mxu0 %v7608
    %v7646 = vpop.f32.mrf.mxu0
    %v7647 = vadd.f32 %v7627, %v7646
    %7648 = vdwg.mxu0
    %7649 = vmatpush.msra.mxu0 %v1240
    %7650 = vmatpush.msra.mxu0 %v1232
    %7651 = vmatpush.msra.mxu0 %v1224
    %7652 = vmatpush.msra.mxu0 %v1216
    %7653 = vmatpush.msra.mxu0 %v1208
    %7654 = vmatpush.msra.mxu0 %v1200
    %7655 = vmatpush.msra.mxu0 %v1192
    %7656 = vmatpush.msra.mxu0 %v1184
    %7657 = vmatpush.msra.mxu0 %v1176
    %7658 = vmatpush.msra.mxu0 %v1168
    %7659 = vmatpush.msra.mxu0 %v1160
    %7660 = vmatpush.msra.mxu0 %v1152
    %7661 = vmatpush.msra.mxu0 %v1144
    %7662 = vmatpush.msra.mxu0 %v1136
    %7663 = vmatpush.msra.mxu0 %v1128
    %7664 = vmatpush.msra.mxu0 %v1120
    %7665 = vmatmul.f32.gmra.mxu0 %v7130
    %v7666 = vpop.f32.mrf.mxu0
    %v7667 = vadd.f32 %v7647, %v7666
    %7668 = vdwg.mxu0
    %7669 = vmatpush.msra.mxu0 %v1368
    %7670 = vmatpush.msra.mxu0 %v1360
    %7671 = vmatpush.msra.mxu0 %v1352
    %7672 = vmatpush.msra.mxu0 %v1344
    %7673 = vmatpush.msra.mxu0 %v1336
    %7674 = vmatpush.msra.mxu0 %v1328
    %7675 = vmatpush.msra.mxu0 %v1320
    %7676 = vmatpush.msra.mxu0 %v1312
    %7677 = vmatpush.msra.mxu0 %v1304
    %7678 = vmatpush.msra.mxu0 %v1296
    %7679 = vmatpush.msra.mxu0 %v1288
    %7680 = vmatpush.msra.mxu0 %v1280
    %7681 = vmatpush.msra.mxu0 %v1272
    %7682 = vmatpush.msra.mxu0 %v1264
    %7683 = vmatpush.msra.mxu0 %v1256
    %7684 = vmatpush.msra.mxu0 %v1248
    %7685 = vmatmul.f32.gmra.mxu0 %v7131
    %v7686 = vpop.f32.mrf.mxu0
    %v7687 = vadd.f32 %v7667, %v7686
    %7688 = vdwg.mxu0
    %7689 = vmatpush.msra.mxu0 %v985
    %7690 = vmatpush.msra.mxu0 %v977
    %7691 = vmatpush.msra.mxu0 %v969
    %7692 = vmatpush.msra.mxu0 %v961
    %7693 = vmatpush.msra.mxu0 %v953
    %7694 = vmatpush.msra.mxu0 %v945
    %7695 = vmatpush.msra.mxu0 %v937
    %7696 = vmatpush.msra.mxu0 %v929
    %7697 = vmatpush.msra.mxu0 %v921
    %7698 = vmatpush.msra.mxu0 %v913
    %7699 = vmatpush.msra.mxu0 %v905
    %7700 = vmatpush.msra.mxu0 %v897
    %7701 = vmatpush.msra.mxu0 %v889
    %7702 = vmatpush.msra.mxu0 %v881
    %7703 = vmatpush.msra.mxu0 %v873
    %7704 = vmatpush.msra.mxu0 %v865
    %7705 = vmatmul.f32.gmra.mxu0 %v7607
    %v7706 = vpop.f32.mrf.mxu0
    %v7707 = vadd.f32 %v1379, %v7706
    %7708 = vdwg.mxu0
    %7709 = vmatpush.msra.mxu0 %v1113
    %7710 = vmatpush.msra.mxu0 %v1105
    %7711 = vmatpush.msra.mxu0 %v1097
    %7712 = vmatpush.msra.mxu0 %v1089
    %7713 = vmatpush.msra.mxu0 %v1081
    %7714 = vmatpush.msra.mxu0 %v1073
    %7715 = vmatpush.msra.mxu0 %v1065
    %7716 = vmatpush.msra.mxu0 %v1057
    %7717 = vmatpush.msra.mxu0 %v1049
    %7718 = vmatpush.msra.mxu0 %v1041
    %7719 = vmatpush.msra.mxu0 %v1033
    %7720 = vmatpush.msra.mxu0 %v1025
    %7721 = vmatpush.msra.mxu0 %v1017
    %7722 = vmatpush.msra.mxu0 %v1009
    %7723 = vmatpush.msra.mxu0 %v1001
    %7724 = vmatpush.msra.mxu0 %v993
    %7725 = vmatmul.f32.gmra.mxu0 %v7608
    %v7726 = vpop.f32.mrf.mxu0
    %v7727 = vadd.f32 %v7707, %v7726
    %7728 = vdwg.mxu0
    %7729 = vmatpush.msra.mxu0 %v1241
    %7730 = vmatpush.msra.mxu0 %v1233
    %7731 = vmatpush.msra.mxu0 %v1225
    %7732 = vmatpush.msra.mxu0 %v1217
    %7733 = vmatpush.msra.mxu0 %v1209
    %7734 = vmatpush.msra.mxu0 %v1201
    %7735 = vmatpush.msra.mxu0 %v1193
    %7736 = vmatpush.msra.mxu0 %v1185
    %7737 = vmatpush.msra.mxu0 %v1177
    %7738 = vmatpush.msra.mxu0 %v1169
    %7739 = vmatpush.msra.mxu0 %v1161
    %7740 = vmatpush.msra.mxu0 %v1153
    %7741 = vmatpush.msra.mxu0 %v1145
    %7742 = vmatpush.msra.mxu0 %v1137
    %7743 = vmatpush.msra.mxu0 %v1129
    %7744 = vmatpush.msra.mxu0 %v1121
    %7745 = vmatmul.f32.gmra.mxu0 %v7130
    %v7746 = vpop.f32.mrf.mxu0
    %v7747 = vadd.f32 %v7727, %v7746
    %7748 = vdwg.mxu0
    %7749 = vmatpush.msra.mxu0 %v1369
    %7750 = vmatpush.msra.mxu0 %v1361
    %7751 = vmatpush.msra.mxu0 %v1353
    %7752 = vmatpush.msra.mxu0 %v1345
    %7753 = vmatpush.msra.mxu0 %v1337
    %7754 = vmatpush.msra.mxu0 %v1329
    %7755 = vmatpush.msra.mxu0 %v1321
    %7756 = vmatpush.msra.mxu0 %v1313
    %7757 = vmatpush.msra.mxu0 %v1305
    %7758 = vmatpush.msra.mxu0 %v1297
    %7759 = vmatpush.msra.mxu0 %v1289
    %7760 = vmatpush.msra.mxu0 %v1281
    %7761 = vmatpush.msra.mxu0 %v1273
    %7762 = vmatpush.msra.mxu0 %v1265
    %7763 = vmatpush.msra.mxu0 %v1257
    %7764 = vmatpush.msra.mxu0 %v1249
    %7765 = vmatmul.f32.gmra.mxu0 %v7131
    %v7766 = vpop.f32.mrf.mxu0
    %v7767 = vadd.f32 %v7747, %v7766
    %7768 = vdwg.mxu0
    %7769 = vmatpush.msra.mxu0 %v986
    %7770 = vmatpush.msra.mxu0 %v978
    %7771 = vmatpush.msra.mxu0 %v970
    %7772 = vmatpush.msra.mxu0 %v962
    %7773 = vmatpush.msra.mxu0 %v954
    %7774 = vmatpush.msra.mxu0 %v946
    %7775 = vmatpush.msra.mxu0 %v938
    %7776 = vmatpush.msra.mxu0 %v930
    %7777 = vmatpush.msra.mxu0 %v922
    %7778 = vmatpush.msra.mxu0 %v914
    %7779 = vmatpush.msra.mxu0 %v906
    %7780 = vmatpush.msra.mxu0 %v898
    %7781 = vmatpush.msra.mxu0 %v890
    %7782 = vmatpush.msra.mxu0 %v882
    %7783 = vmatpush.msra.mxu0 %v874
    %7784 = vmatpush.msra.mxu0 %v866
    %7785 = vmatmul.f32.gmra.mxu0 %v7607
    %v7786 = vpop.f32.mrf.mxu0
    %v7787 = vadd.f32 %v1380, %v7786
    %7788 = vdwg.mxu0
    %7789 = vmatpush.msra.mxu0 %v1114
    %7790 = vmatpush.msra.mxu0 %v1106
    %7791 = vmatpush.msra.mxu0 %v1098
    %7792 = vmatpush.msra.mxu0 %v1090
    %7793 = vmatpush.msra.mxu0 %v1082
    %7794 = vmatpush.msra.mxu0 %v1074
    %7795 = vmatpush.msra.mxu0 %v1066
    %7796 = vmatpush.msra.mxu0 %v1058
    %7797 = vmatpush.msra.mxu0 %v1050
    %7798 = vmatpush.msra.mxu0 %v1042
    %7799 = vmatpush.msra.mxu0 %v1034
    %7800 = vmatpush.msra.mxu0 %v1026
    %7801 = vmatpush.msra.mxu0 %v1018
    %7802 = vmatpush.msra.mxu0 %v1010
    %7803 = vmatpush.msra.mxu0 %v1002
    %7804 = vmatpush.msra.mxu0 %v994
    %7805 = vmatmul.f32.gmra.mxu0 %v7608
    %v7806 = vpop.f32.mrf.mxu0
    %v7807 = vadd.f32 %v7787, %v7806
    %7808 = vdwg.mxu0
    %7809 = vmatpush.msra.mxu0 %v1242
    %7810 = vmatpush.msra.mxu0 %v1234
    %7811 = vmatpush.msra.mxu0 %v1226
    %7812 = vmatpush.msra.mxu0 %v1218
    %7813 = vmatpush.msra.mxu0 %v1210
    %7814 = vmatpush.msra.mxu0 %v1202
    %7815 = vmatpush.msra.mxu0 %v1194
    %7816 = vmatpush.msra.mxu0 %v1186
    %7817 = vmatpush.msra.mxu0 %v1178
    %7818 = vmatpush.msra.mxu0 %v1170
    %7819 = vmatpush.msra.mxu0 %v1162
    %7820 = vmatpush.msra.mxu0 %v1154
    %7821 = vmatpush.msra.mxu0 %v1146
    %7822 = vmatpush.msra.mxu0 %v1138
    %7823 = vmatpush.msra.mxu0 %v1130
    %7824 = vmatpush.msra.mxu0 %v1122
    %7825 = vmatmul.f32.gmra.mxu0 %v7130
    %v7826 = vpop.f32.mrf.mxu0
    %v7827 = vadd.f32 %v7807, %v7826
    %7828 = vdwg.mxu0
    %7829 = vmatpush.msra.mxu0 %v1370
    %7830 = vmatpush.msra.mxu0 %v1362
    %7831 = vmatpush.msra.mxu0 %v1354
    %7832 = vmatpush.msra.mxu0 %v1346
    %7833 = vmatpush.msra.mxu0 %v1338
    %7834 = vmatpush.msra.mxu0 %v1330
    %7835 = vmatpush.msra.mxu0 %v1322
    %7836 = vmatpush.msra.mxu0 %v1314
    %7837 = vmatpush.msra.mxu0 %v1306
    %7838 = vmatpush.msra.mxu0 %v1298
    %7839 = vmatpush.msra.mxu0 %v1290
    %7840 = vmatpush.msra.mxu0 %v1282
    %7841 = vmatpush.msra.mxu0 %v1274
    %7842 = vmatpush.msra.mxu0 %v1266
    %7843 = vmatpush.msra.mxu0 %v1258
    %7844 = vmatpush.msra.mxu0 %v1250
    %7845 = vmatmul.f32.gmra.mxu0 %v7131
    %v7846 = vpop.f32.mrf.mxu0
    %v7847 = vadd.f32 %v7827, %v7846
    %7848 = vdwg.mxu0
    %7849 = vmatpush.msra.mxu0 %v987
    %7850 = vmatpush.msra.mxu0 %v979
    %7851 = vmatpush.msra.mxu0 %v971
    %7852 = vmatpush.msra.mxu0 %v963
    %7853 = vmatpush.msra.mxu0 %v955
    %7854 = vmatpush.msra.mxu0 %v947
    %7855 = vmatpush.msra.mxu0 %v939
    %7856 = vmatpush.msra.mxu0 %v931
    %7857 = vmatpush.msra.mxu0 %v923
    %7858 = vmatpush.msra.mxu0 %v915
    %7859 = vmatpush.msra.mxu0 %v907
    %7860 = vmatpush.msra.mxu0 %v899
    %7861 = vmatpush.msra.mxu0 %v891
    %7862 = vmatpush.msra.mxu0 %v883
    %7863 = vmatpush.msra.mxu0 %v875
    %7864 = vmatpush.msra.mxu0 %v867
    %7865 = vmatmul.f32.gmra.mxu0 %v7607
    %v7866 = vpop.f32.mrf.mxu0
    %v7867 = vadd.f32 %v1381, %v7866
    %7868 = vdwg.mxu0
    %7869 = vmatpush.msra.mxu0 %v1115
    %7870 = vmatpush.msra.mxu0 %v1107
    %7871 = vmatpush.msra.mxu0 %v1099
    %7872 = vmatpush.msra.mxu0 %v1091
    %7873 = vmatpush.msra.mxu0 %v1083
    %7874 = vmatpush.msra.mxu0 %v1075
    %7875 = vmatpush.msra.mxu0 %v1067
    %7876 = vmatpush.msra.mxu0 %v1059
    %7877 = vmatpush.msra.mxu0 %v1051
    %7878 = vmatpush.msra.mxu0 %v1043
    %7879 = vmatpush.msra.mxu0 %v1035
    %7880 = vmatpush.msra.mxu0 %v1027
    %7881 = vmatpush.msra.mxu0 %v1019
    %7882 = vmatpush.msra.mxu0 %v1011
    %7883 = vmatpush.msra.mxu0 %v1003
    %7884 = vmatpush.msra.mxu0 %v995
    %7885 = vmatmul.f32.gmra.mxu0 %v7608
    %v7886 = vpop.f32.mrf.mxu0
    %v7887 = vadd.f32 %v7867, %v7886
    %7888 = vdwg.mxu0
    %7889 = vmatpush.msra.mxu0 %v1243
    %7890 = vmatpush.msra.mxu0 %v1235
    %7891 = vmatpush.msra.mxu0 %v1227
    %7892 = vmatpush.msra.mxu0 %v1219
    %7893 = vmatpush.msra.mxu0 %v1211
    %7894 = vmatpush.msra.mxu0 %v1203
    %7895 = vmatpush.msra.mxu0 %v1195
    %7896 = vmatpush.msra.mxu0 %v1187
    %7897 = vmatpush.msra.mxu0 %v1179
    %7898 = vmatpush.msra.mxu0 %v1171
    %7899 = vmatpush.msra.mxu0 %v1163
    %7900 = vmatpush.msra.mxu0 %v1155
    %7901 = vmatpush.msra.mxu0 %v1147
    %7902 = vmatpush.msra.mxu0 %v1139
    %7903 = vmatpush.msra.mxu0 %v1131
    %7904 = vmatpush.msra.mxu0 %v1123
    %7905 = vmatmul.f32.gmra.mxu0 %v7130
    %v7906 = vpop.f32.mrf.mxu0
    %v7907 = vadd.f32 %v7887, %v7906
    %7908 = vdwg.mxu0
    %7909 = vmatpush.msra.mxu0 %v1371
    %7910 = vmatpush.msra.mxu0 %v1363
    %7911 = vmatpush.msra.mxu0 %v1355
    %7912 = vmatpush.msra.mxu0 %v1347
    %7913 = vmatpush.msra.mxu0 %v1339
    %7914 = vmatpush.msra.mxu0 %v1331
    %7915 = vmatpush.msra.mxu0 %v1323
    %7916 = vmatpush.msra.mxu0 %v1315
    %7917 = vmatpush.msra.mxu0 %v1307
    %7918 = vmatpush.msra.mxu0 %v1299
    %7919 = vmatpush.msra.mxu0 %v1291
    %7920 = vmatpush.msra.mxu0 %v1283
    %7921 = vmatpush.msra.mxu0 %v1275
    %7922 = vmatpush.msra.mxu0 %v1267
    %7923 = vmatpush.msra.mxu0 %v1259
    %7924 = vmatpush.msra.mxu0 %v1251
    %7925 = vmatmul.f32.gmra.mxu0 %v7131
    %v7926 = vpop.f32.mrf.mxu0
    %v7927 = vadd.f32 %v7907, %v7926
    %7928 = vdwg.mxu0
    %7929 = vmatpush.msra.mxu0 %v988
    %7930 = vmatpush.msra.mxu0 %v980
    %7931 = vmatpush.msra.mxu0 %v972
    %7932 = vmatpush.msra.mxu0 %v964
    %7933 = vmatpush.msra.mxu0 %v956
    %7934 = vmatpush.msra.mxu0 %v948
    %7935 = vmatpush.msra.mxu0 %v940
    %7936 = vmatpush.msra.mxu0 %v932
    %7937 = vmatpush.msra.mxu0 %v924
    %7938 = vmatpush.msra.mxu0 %v916
    %7939 = vmatpush.msra.mxu0 %v908
    %7940 = vmatpush.msra.mxu0 %v900
    %7941 = vmatpush.msra.mxu0 %v892
    %7942 = vmatpush.msra.mxu0 %v884
    %7943 = vmatpush.msra.mxu0 %v876
    %7944 = vmatpush.msra.mxu0 %v868
    %7945 = vmatmul.f32.gmra.mxu0 %v7607
    %v7946 = vpop.f32.mrf.mxu0
    %v7947 = vadd.f32 %v1382, %v7946
    %7948 = vdwg.mxu0
    %7949 = vmatpush.msra.mxu0 %v1116
    %7950 = vmatpush.msra.mxu0 %v1108
    %7951 = vmatpush.msra.mxu0 %v1100
    %7952 = vmatpush.msra.mxu0 %v1092
    %7953 = vmatpush.msra.mxu0 %v1084
    %7954 = vmatpush.msra.mxu0 %v1076
    %7955 = vmatpush.msra.mxu0 %v1068
    %7956 = vmatpush.msra.mxu0 %v1060
    %7957 = vmatpush.msra.mxu0 %v1052
    %7958 = vmatpush.msra.mxu0 %v1044
    %7959 = vmatpush.msra.mxu0 %v1036
    %7960 = vmatpush.msra.mxu0 %v1028
    %7961 = vmatpush.msra.mxu0 %v1020
    %7962 = vmatpush.msra.mxu0 %v1012
    %7963 = vmatpush.msra.mxu0 %v1004
    %7964 = vmatpush.msra.mxu0 %v996
    %7965 = vmatmul.f32.gmra.mxu0 %v7608
    %v7966 = vpop.f32.mrf.mxu0
    %v7967 = vadd.f32 %v7947, %v7966
    %7968 = vdwg.mxu0
    %7969 = vmatpush.msra.mxu0 %v1244
    %7970 = vmatpush.msra.mxu0 %v1236
    %7971 = vmatpush.msra.mxu0 %v1228
    %7972 = vmatpush.msra.mxu0 %v1220
    %7973 = vmatpush.msra.mxu0 %v1212
    %7974 = vmatpush.msra.mxu0 %v1204
    %7975 = vmatpush.msra.mxu0 %v1196
    %7976 = vmatpush.msra.mxu0 %v1188
    %7977 = vmatpush.msra.mxu0 %v1180
    %7978 = vmatpush.msra.mxu0 %v1172
    %7979 = vmatpush.msra.mxu0 %v1164
    %7980 = vmatpush.msra.mxu0 %v1156
    %7981 = vmatpush.msra.mxu0 %v1148
    %7982 = vmatpush.msra.mxu0 %v1140
    %7983 = vmatpush.msra.mxu0 %v1132
    %7984 = vmatpush.msra.mxu0 %v1124
    %7985 = vmatmul.f32.gmra.mxu0 %v7130
    %v7986 = vpop.f32.mrf.mxu0
    %v7987 = vadd.f32 %v7967, %v7986
    %7988 = vdwg.mxu0
    %7989 = vmatpush.msra.mxu0 %v1372
    %7990 = vmatpush.msra.mxu0 %v1364
    %7991 = vmatpush.msra.mxu0 %v1356
    %7992 = vmatpush.msra.mxu0 %v1348
    %7993 = vmatpush.msra.mxu0 %v1340
    %7994 = vmatpush.msra.mxu0 %v1332
    %7995 = vmatpush.msra.mxu0 %v1324
    %7996 = vmatpush.msra.mxu0 %v1316
    %7997 = vmatpush.msra.mxu0 %v1308
    %7998 = vmatpush.msra.mxu0 %v1300
    %7999 = vmatpush.msra.mxu0 %v1292
    %8000 = vmatpush.msra.mxu0 %v1284
    %8001 = vmatpush.msra.mxu0 %v1276
    %8002 = vmatpush.msra.mxu0 %v1268
    %8003 = vmatpush.msra.mxu0 %v1260
    %8004 = vmatpush.msra.mxu0 %v1252
    %8005 = vmatmul.f32.gmra.mxu0 %v7131
    %v8006 = vpop.f32.mrf.mxu0
    %v8007 = vadd.f32 %v7987, %v8006
    %8008 = vdwg.mxu0
    %8009 = vmatpush.msra.mxu0 %v989
    %8010 = vmatpush.msra.mxu0 %v981
    %8011 = vmatpush.msra.mxu0 %v973
    %8012 = vmatpush.msra.mxu0 %v965
    %8013 = vmatpush.msra.mxu0 %v957
    %8014 = vmatpush.msra.mxu0 %v949
    %8015 = vmatpush.msra.mxu0 %v941
    %8016 = vmatpush.msra.mxu0 %v933
    %8017 = vmatpush.msra.mxu0 %v925
    %8018 = vmatpush.msra.mxu0 %v917
    %8019 = vmatpush.msra.mxu0 %v909
    %8020 = vmatpush.msra.mxu0 %v901
    %8021 = vmatpush.msra.mxu0 %v893
    %8022 = vmatpush.msra.mxu0 %v885
    %8023 = vmatpush.msra.mxu0 %v877
    %8024 = vmatpush.msra.mxu0 %v869
    %8025 = vmatmul.f32.gmra.mxu0 %v7607
    %v8026 = vpop.f32.mrf.mxu0
    %v8027 = vadd.f32 %v1383, %v8026
    %8028 = vdwg.mxu0
    %8029 = vmatpush.msra.mxu0 %v1117
    %8030 = vmatpush.msra.mxu0 %v1109
    %8031 = vmatpush.msra.mxu0 %v1101
    %8032 = vmatpush.msra.mxu0 %v1093
    %8033 = vmatpush.msra.mxu0 %v1085
    %8034 = vmatpush.msra.mxu0 %v1077
    %8035 = vmatpush.msra.mxu0 %v1069
    %8036 = vmatpush.msra.mxu0 %v1061
    %8037 = vmatpush.msra.mxu0 %v1053
    %8038 = vmatpush.msra.mxu0 %v1045
    %8039 = vmatpush.msra.mxu0 %v1037
    %8040 = vmatpush.msra.mxu0 %v1029
    %8041 = vmatpush.msra.mxu0 %v1021
    %8042 = vmatpush.msra.mxu0 %v1013
    %8043 = vmatpush.msra.mxu0 %v1005
    %8044 = vmatpush.msra.mxu0 %v997
    %8045 = vmatmul.f32.gmra.mxu0 %v7608
    %v8046 = vpop.f32.mrf.mxu0
    %v8047 = vadd.f32 %v8027, %v8046
    %8048 = vdwg.mxu0
    %8049 = vmatpush.msra.mxu0 %v1245
    %8050 = vmatpush.msra.mxu0 %v1237
    %8051 = vmatpush.msra.mxu0 %v1229
    %8052 = vmatpush.msra.mxu0 %v1221
    %8053 = vmatpush.msra.mxu0 %v1213
    %8054 = vmatpush.msra.mxu0 %v1205
    %8055 = vmatpush.msra.mxu0 %v1197
    %8056 = vmatpush.msra.mxu0 %v1189
    %8057 = vmatpush.msra.mxu0 %v1181
    %8058 = vmatpush.msra.mxu0 %v1173
    %8059 = vmatpush.msra.mxu0 %v1165
    %8060 = vmatpush.msra.mxu0 %v1157
    %8061 = vmatpush.msra.mxu0 %v1149
    %8062 = vmatpush.msra.mxu0 %v1141
    %8063 = vmatpush.msra.mxu0 %v1133
    %8064 = vmatpush.msra.mxu0 %v1125
    %8065 = vmatmul.f32.gmra.mxu0 %v7130
    %v8066 = vpop.f32.mrf.mxu0
    %v8067 = vadd.f32 %v8047, %v8066
    %8068 = vdwg.mxu0
    %8069 = vmatpush.msra.mxu0 %v1373
    %8070 = vmatpush.msra.mxu0 %v1365
    %8071 = vmatpush.msra.mxu0 %v1357
    %8072 = vmatpush.msra.mxu0 %v1349
    %8073 = vmatpush.msra.mxu0 %v1341
    %8074 = vmatpush.msra.mxu0 %v1333
    %8075 = vmatpush.msra.mxu0 %v1325
    %8076 = vmatpush.msra.mxu0 %v1317
    %8077 = vmatpush.msra.mxu0 %v1309
    %8078 = vmatpush.msra.mxu0 %v1301
    %8079 = vmatpush.msra.mxu0 %v1293
    %8080 = vmatpush.msra.mxu0 %v1285
    %8081 = vmatpush.msra.mxu0 %v1277
    %8082 = vmatpush.msra.mxu0 %v1269
    %8083 = vmatpush.msra.mxu0 %v1261
    %8084 = vmatpush.msra.mxu0 %v1253
    %8085 = vmatmul.f32.gmra.mxu0 %v7131
    %v8086 = vpop.f32.mrf.mxu0
    %v8087 = vadd.f32 %v8067, %v8086
    %8088 = vdwg.mxu0
    %8089 = vmatpush.msra.mxu0 %v990
    %8090 = vmatpush.msra.mxu0 %v982
    %8091 = vmatpush.msra.mxu0 %v974
    %8092 = vmatpush.msra.mxu0 %v966
    %8093 = vmatpush.msra.mxu0 %v958
    %8094 = vmatpush.msra.mxu0 %v950
    %8095 = vmatpush.msra.mxu0 %v942
    %8096 = vmatpush.msra.mxu0 %v934
    %8097 = vmatpush.msra.mxu0 %v926
    %8098 = vmatpush.msra.mxu0 %v918
    %8099 = vmatpush.msra.mxu0 %v910
    %8100 = vmatpush.msra.mxu0 %v902
    %8101 = vmatpush.msra.mxu0 %v894
    %8102 = vmatpush.msra.mxu0 %v886
    %8103 = vmatpush.msra.mxu0 %v878
    %8104 = vmatpush.msra.mxu0 %v870
    %8105 = vmatmul.f32.gmra.mxu0 %v7607
    %v8106 = vpop.f32.mrf.mxu0
    %v8107 = vadd.f32 %v1384, %v8106
    %8108 = vdwg.mxu0
    %8109 = vmatpush.msra.mxu0 %v1118
    %8110 = vmatpush.msra.mxu0 %v1110
    %8111 = vmatpush.msra.mxu0 %v1102
    %8112 = vmatpush.msra.mxu0 %v1094
    %8113 = vmatpush.msra.mxu0 %v1086
    %8114 = vmatpush.msra.mxu0 %v1078
    %8115 = vmatpush.msra.mxu0 %v1070
    %8116 = vmatpush.msra.mxu0 %v1062
    %8117 = vmatpush.msra.mxu0 %v1054
    %8118 = vmatpush.msra.mxu0 %v1046
    %8119 = vmatpush.msra.mxu0 %v1038
    %8120 = vmatpush.msra.mxu0 %v1030
    %8121 = vmatpush.msra.mxu0 %v1022
    %8122 = vmatpush.msra.mxu0 %v1014
    %8123 = vmatpush.msra.mxu0 %v1006
    %8124 = vmatpush.msra.mxu0 %v998
    %8125 = vmatmul.f32.gmra.mxu0 %v7608
    %v8126 = vpop.f32.mrf.mxu0
    %v8127 = vadd.f32 %v8107, %v8126
    %8128 = vdwg.mxu0
    %8129 = vmatpush.msra.mxu0 %v1246
    %8130 = vmatpush.msra.mxu0 %v1238
    %8131 = vmatpush.msra.mxu0 %v1230
    %8132 = vmatpush.msra.mxu0 %v1222
    %8133 = vmatpush.msra.mxu0 %v1214
    %8134 = vmatpush.msra.mxu0 %v1206
    %8135 = vmatpush.msra.mxu0 %v1198
    %8136 = vmatpush.msra.mxu0 %v1190
    %8137 = vmatpush.msra.mxu0 %v1182
    %8138 = vmatpush.msra.mxu0 %v1174
    %8139 = vmatpush.msra.mxu0 %v1166
    %8140 = vmatpush.msra.mxu0 %v1158
    %8141 = vmatpush.msra.mxu0 %v1150
    %8142 = vmatpush.msra.mxu0 %v1142
    %8143 = vmatpush.msra.mxu0 %v1134
    %8144 = vmatpush.msra.mxu0 %v1126
    %8145 = vmatmul.f32.gmra.mxu0 %v7130
    %v8146 = vpop.f32.mrf.mxu0
    %v8147 = vadd.f32 %v8127, %v8146
    %8148 = vdwg.mxu0
    %8149 = vmatpush.msra.mxu0 %v1374
    %8150 = vmatpush.msra.mxu0 %v1366
    %8151 = vmatpush.msra.mxu0 %v1358
    %8152 = vmatpush.msra.mxu0 %v1350
    %8153 = vmatpush.msra.mxu0 %v1342
    %8154 = vmatpush.msra.mxu0 %v1334
    %8155 = vmatpush.msra.mxu0 %v1326
    %8156 = vmatpush.msra.mxu0 %v1318
    %8157 = vmatpush.msra.mxu0 %v1310
    %8158 = vmatpush.msra.mxu0 %v1302
    %8159 = vmatpush.msra.mxu0 %v1294
    %8160 = vmatpush.msra.mxu0 %v1286
    %8161 = vmatpush.msra.mxu0 %v1278
    %8162 = vmatpush.msra.mxu0 %v1270
    %8163 = vmatpush.msra.mxu0 %v1262
    %8164 = vmatpush.msra.mxu0 %v1254
    %8165 = vmatmul.f32.gmra.mxu0 %v7131
    %v8166 = vpop.f32.mrf.mxu0
    %v8167 = vadd.f32 %v8147, %v8166
    %8168 = vdwg.mxu0
    %8169 = vmatpush.msra.mxu0 %v991
    %8170 = vmatpush.msra.mxu0 %v983
    %8171 = vmatpush.msra.mxu0 %v975
    %8172 = vmatpush.msra.mxu0 %v967
    %8173 = vmatpush.msra.mxu0 %v959
    %8174 = vmatpush.msra.mxu0 %v951
    %8175 = vmatpush.msra.mxu0 %v943
    %8176 = vmatpush.msra.mxu0 %v935
    %8177 = vmatpush.msra.mxu0 %v927
    %8178 = vmatpush.msra.mxu0 %v919
    %8179 = vmatpush.msra.mxu0 %v911
    %8180 = vmatpush.msra.mxu0 %v903
    %8181 = vmatpush.msra.mxu0 %v895
    %8182 = vmatpush.msra.mxu0 %v887
    %8183 = vmatpush.msra.mxu0 %v879
    %8184 = vmatpush.msra.mxu0 %v871
    %8185 = vmatmul.f32.gmra.mxu0 %v7607
    %v8186 = vpop.f32.mrf.mxu0
    %v8187 = vadd.f32 %v1385, %v8186
    %8188 = vdwg.mxu0
    %8189 = vmatpush.msra.mxu0 %v1119
    %8190 = vmatpush.msra.mxu0 %v1111
    %8191 = vmatpush.msra.mxu0 %v1103
    %8192 = vmatpush.msra.mxu0 %v1095
    %8193 = vmatpush.msra.mxu0 %v1087
    %8194 = vmatpush.msra.mxu0 %v1079
    %8195 = vmatpush.msra.mxu0 %v1071
    %8196 = vmatpush.msra.mxu0 %v1063
    %8197 = vmatpush.msra.mxu0 %v1055
    %8198 = vmatpush.msra.mxu0 %v1047
    %8199 = vmatpush.msra.mxu0 %v1039
    %8200 = vmatpush.msra.mxu0 %v1031
    %8201 = vmatpush.msra.mxu0 %v1023
    %8202 = vmatpush.msra.mxu0 %v1015
    %8203 = vmatpush.msra.mxu0 %v1007
    %8204 = vmatpush.msra.mxu0 %v999
    %8205 = vmatmul.f32.gmra.mxu0 %v7608
    %v8206 = vpop.f32.mrf.mxu0
    %v8207 = vadd.f32 %v8187, %v8206
    %8208 = vdwg.mxu0
    %8209 = vmatpush.msra.mxu0 %v1247
    %8210 = vmatpush.msra.mxu0 %v1239
    %8211 = vmatpush.msra.mxu0 %v1231
    %8212 = vmatpush.msra.mxu0 %v1223
    %8213 = vmatpush.msra.mxu0 %v1215
    %8214 = vmatpush.msra.mxu0 %v1207
    %8215 = vmatpush.msra.mxu0 %v1199
    %8216 = vmatpush.msra.mxu0 %v1191
    %8217 = vmatpush.msra.mxu0 %v1183
    %8218 = vmatpush.msra.mxu0 %v1175
    %8219 = vmatpush.msra.mxu0 %v1167
    %8220 = vmatpush.msra.mxu0 %v1159
    %8221 = vmatpush.msra.mxu0 %v1151
    %8222 = vmatpush.msra.mxu0 %v1143
    %8223 = vmatpush.msra.mxu0 %v1135
    %8224 = vmatpush.msra.mxu0 %v1127
    %8225 = vmatmul.f32.gmra.mxu0 %v7130
    %v8226 = vpop.f32.mrf.mxu0
    %v8227 = vadd.f32 %v8207, %v8226
    %8228 = vdwg.mxu0
    %8229 = vmatpush.msra.mxu0 %v1375
    %8230 = vmatpush.msra.mxu0 %v1367
    %8231 = vmatpush.msra.mxu0 %v1359
    %8232 = vmatpush.msra.mxu0 %v1351
    %8233 = vmatpush.msra.mxu0 %v1343
    %8234 = vmatpush.msra.mxu0 %v1335
    %8235 = vmatpush.msra.mxu0 %v1327
    %8236 = vmatpush.msra.mxu0 %v1319
    %8237 = vmatpush.msra.mxu0 %v1311
    %8238 = vmatpush.msra.mxu0 %v1303
    %8239 = vmatpush.msra.mxu0 %v1295
    %8240 = vmatpush.msra.mxu0 %v1287
    %8241 = vmatpush.msra.mxu0 %v1279
    %8242 = vmatpush.msra.mxu0 %v1271
    %8243 = vmatpush.msra.mxu0 %v1263
    %8244 = vmatpush.msra.mxu0 %v1255
    %8245 = vmatmul.f32.gmra.mxu0 %v7131
    %v8246 = vpop.f32.mrf.mxu0
    %v8247 = vadd.f32 %v8227, %v8246
    %8248 = vdwg.mxu0
    %v8249 = vxor.u32 %v7687, 2147483648
    %v8250 = vxor.u32 %v7767, 2147483648
    %v8251 = vmul.f32 %v8249, 1.442695
    %v8252 = vpow.pop %v8251
    %v8253 = vmul.f32 %v8250, 1.442695
    %v8254 = vpow.pop %v8253
    %v8255 = vadd.f32 %v8252, 1.0
    %v8256 = vadd.f32 %v8254, 1.0
    %v8257 = vrcp.pop %v8255
    %v8258 = vmul.f32 %v8255, %v8257
    %v8259 = vsub.f32 1.0, %v8258
    %v8260 = vmul.f32 %v8257, %v8259
    %v8261 = vadd.f32 %v8257, %v8260
    %vm8262 = vweird.f32 %v8255
    %vm8263 = vweird.f32 %v8257
    %vm8264 = vmor %vm8262, %vm8263
    %v8265 = vsel %vm8264, %v8257, %v8261
    %v8266 = vand.u32 2147483647, %v8255
    %vm8267 = vcmp.eq.f32.partialorder %v8266, 8.507059e+37
    %v8268 = vand.u32 %v8255, 2147483648
    %v8269 = vor.u32 1.1754944e-38, %v8268
    %v8270 = vsel %vm8267, %v8269, %v8265
    %v8271 = vmul.f32 1.0, %v8270
    %v8272 = vrcp.pop %v8256
    %v8273 = vmul.f32 %v8256, %v8272
    %v8274 = vsub.f32 1.0, %v8273
    %v8275 = vmul.f32 %v8272, %v8274
    %v8276 = vadd.f32 %v8272, %v8275
    %vm8277 = vweird.f32 %v8256
    %vm8278 = vweird.f32 %v8272
    %vm8279 = vmor %vm8277, %vm8278
    %v8280 = vsel %vm8279, %v8272, %v8276
    %v8281 = vand.u32 2147483647, %v8256
    %vm8282 = vcmp.eq.f32.partialorder %v8281, 8.507059e+37
    %v8283 = vand.u32 %v8256, 2147483648
    %v8284 = vor.u32 1.1754944e-38, %v8283
    %v8285 = vsel %vm8282, %v8284, %v8280
    %v8286 = vmul.f32 1.0, %v8285
    %v8287 = vxor.u32 %v7847, 2147483648
    %v8288 = vxor.u32 %v7927, 2147483648
    %v8289 = vmul.f32 %v8287, 1.442695
    %v8290 = vpow.pop %v8289
    %v8291 = vmul.f32 %v8288, 1.442695
    %v8292 = vpow.pop %v8291
    %v8293 = vadd.f32 %v8290, 1.0
    %v8294 = vadd.f32 %v8292, 1.0
    %v8295 = vrcp.pop %v8293
    %v8296 = vmul.f32 %v8293, %v8295
    %v8297 = vsub.f32 1.0, %v8296
    %v8298 = vmul.f32 %v8295, %v8297
    %v8299 = vadd.f32 %v8295, %v8298
    %vm8300 = vweird.f32 %v8293
    %vm8301 = vweird.f32 %v8295
    %vm8302 = vmor %vm8300, %vm8301
    %v8303 = vsel %vm8302, %v8295, %v8299
    %v8304 = vand.u32 2147483647, %v8293
    %vm8305 = vcmp.eq.f32.partialorder %v8304, 8.507059e+37
    %v8306 = vand.u32 %v8293, 2147483648
    %v8307 = vor.u32 1.1754944e-38, %v8306
    %v8308 = vsel %vm8305, %v8307, %v8303
    %v8309 = vmul.f32 1.0, %v8308
    %v8310 = vrcp.pop %v8294
    %v8311 = vmul.f32 %v8294, %v8310
    %v8312 = vsub.f32 1.0, %v8311
    %v8313 = vmul.f32 %v8310, %v8312
    %v8314 = vadd.f32 %v8310, %v8313
    %vm8315 = vweird.f32 %v8294
    %vm8316 = vweird.f32 %v8310
    %vm8317 = vmor %vm8315, %vm8316
    %v8318 = vsel %vm8317, %v8310, %v8314
    %v8319 = vand.u32 2147483647, %v8294
    %vm8320 = vcmp.eq.f32.partialorder %v8319, 8.507059e+37
    %v8321 = vand.u32 %v8294, 2147483648
    %v8322 = vor.u32 1.1754944e-38, %v8321
    %v8323 = vsel %vm8320, %v8322, %v8318
    %v8324 = vmul.f32 1.0, %v8323
    %v8325 = vtanh.pop %v8007
    %v8326 = vtanh.pop %v8087
    %v8327 = vxor.u32 %v8167, 2147483648
    %v8328 = vxor.u32 %v8247, 2147483648
    %v8329 = vmul.f32 %v8327, 1.442695
    %v8330 = vpow.pop %v8329
    %v8331 = vmul.f32 %v8328, 1.442695
    %v8332 = vpow.pop %v8331
    %v8333 = vadd.f32 %v8330, 1.0
    %v8334 = vadd.f32 %v8332, 1.0
    %v8335 = vrcp.pop %v8333
    %v8336 = vmul.f32 %v8333, %v8335
    %v8337 = vsub.f32 1.0, %v8336
    %v8338 = vmul.f32 %v8335, %v8337
    %v8339 = vadd.f32 %v8335, %v8338
    %vm8340 = vweird.f32 %v8333
    %vm8341 = vweird.f32 %v8335
    %vm8342 = vmor %vm8340, %vm8341
    %v8343 = vsel %vm8342, %v8335, %v8339
    %v8344 = vand.u32 2147483647, %v8333
    %vm8345 = vcmp.eq.f32.partialorder %v8344, 8.507059e+37
    %v8346 = vand.u32 %v8333, 2147483648
    %v8347 = vor.u32 1.1754944e-38, %v8346
    %v8348 = vsel %vm8345, %v8347, %v8343
    %v8349 = vmul.f32 1.0, %v8348
    %v8350 = vrcp.pop %v8334
    %v8351 = vmul.f32 %v8334, %v8350
    %v8352 = vsub.f32 1.0, %v8351
    %v8353 = vmul.f32 %v8350, %v8352
    %v8354 = vadd.f32 %v8350, %v8353
    %vm8355 = vweird.f32 %v8334
    %vm8356 = vweird.f32 %v8350
    %vm8357 = vmor %vm8355, %vm8356
    %v8358 = vsel %vm8357, %v8350, %v8354
    %v8359 = vand.u32 2147483647, %v8334
    %vm8360 = vcmp.eq.f32.partialorder %v8359, 8.507059e+37
    %v8361 = vand.u32 %v8334, 2147483648
    %v8362 = vor.u32 1.1754944e-38, %v8361
    %v8363 = vsel %vm8360, %v8362, %v8358
    %v8364 = vmul.f32 1.0, %v8363
    %v8365 = vmul.f32 %v8309, %v7126
    %v8366 = vmul.f32 %v8324, %v7127
    %v8367 = vmul.f32 %v8271, %v8325
    %v8368 = vmul.f32 %v8286, %v8326
    %v8369 = vadd.f32 %v8365, %v8367
    %v8370 = vadd.f32 %v8366, %v8368
    %v8371 = vtanh.pop %v8369
    %v8372 = vtanh.pop %v8370
    %v8373 = vmul.f32 %v8349, %v8371
    %v8374 = vmul.f32 %v8364, %v8372
    %s8375 = scalar_lea.vmem %s0, 48
    %v8376 = vld [vmem:[%s8375] sm:$0xff]
    %8378 = vset.pattern.permute.xlu0 0
    %8379 = vperm.xlu0 %8378, %v8376
    %v8380 = vpop.permute.xlu0 %8379
    %v8382 = vmul.f32 %v8380, %v104
    %v8383 = vmul.f32 %v8380, %v105
    %v8384 = vmul.f32 %v8380, %v106
    %v8385 = vmul.f32 %v8380, %v107
    %v8386 = vmul.f32 %v8380, %v108
    %v8387 = vmul.f32 %v8380, %v109
    %v8388 = vmul.f32 %v8380, %v110
    %v8389 = vmul.f32 %v8380, %v111
    %v8390 = vadd.f32 %v8382, %v130
    %v8391 = vadd.f32 %v8383, %v131
    %v8392 = vadd.f32 %v8384, %v132
    %v8393 = vadd.f32 %v8385, %v133
    %v8394 = vadd.f32 %v8386, %v134
    %v8395 = vadd.f32 %v8387, %v135
    %v8396 = vadd.f32 %v8388, %v136
    %v8397 = vadd.f32 %v8389, %v137
    %8398 = vmatpush.msra.mxu0 %v274
    %8399 = vmatpush.msra.mxu0 %v266
    %8400 = vmatpush.msra.mxu0 %v258
    %8401 = vmatpush.msra.mxu0 %v250
    %8402 = vmatpush.msra.mxu0 %v242
    %8403 = vmatpush.msra.mxu0 %v234
    %8404 = vmatpush.msra.mxu0 %v226
    %8405 = vmatpush.msra.mxu0 %v218
    %8406 = vmatpush.msra.mxu0 %v210
    %8407 = vmatpush.msra.mxu0 %v202
    %8408 = vmatpush.msra.mxu0 %v194
    %8409 = vmatpush.msra.mxu0 %v186
    %8410 = vmatpush.msra.mxu0 %v178
    %8411 = vmatpush.msra.mxu0 %v170
    %8412 = vmatpush.msra.mxu0 %v162
    %8413 = vmatpush.msra.mxu0 %v154
    %8414 = vmatmul.f32.gmra.mxu0 %v7607
    %v8415 = vpop.f32.mrf.mxu0
    %v8416 = vadd.f32 0.0, %v8415
    %8417 = vdwg.mxu0
    %8418 = vmatpush.msra.mxu0 %v402
    %8419 = vmatpush.msra.mxu0 %v394
    %8420 = vmatpush.msra.mxu0 %v386
    %8421 = vmatpush.msra.mxu0 %v378
    %8422 = vmatpush.msra.mxu0 %v370
    %8423 = vmatpush.msra.mxu0 %v362
    %8424 = vmatpush.msra.mxu0 %v354
    %8425 = vmatpush.msra.mxu0 %v346
    %8426 = vmatpush.msra.mxu0 %v338
    %8427 = vmatpush.msra.mxu0 %v330
    %8428 = vmatpush.msra.mxu0 %v322
    %8429 = vmatpush.msra.mxu0 %v314
    %8430 = vmatpush.msra.mxu0 %v306
    %8431 = vmatpush.msra.mxu0 %v298
    %8432 = vmatpush.msra.mxu0 %v290
    %8433 = vmatpush.msra.mxu0 %v282
    %8434 = vmatmul.f32.gmra.mxu0 %v7608
    %v8435 = vpop.f32.mrf.mxu0
    %v8436 = vadd.f32 %v8416, %v8435
    %8437 = vdwg.mxu0
    %8438 = vmatpush.msra.mxu0 %v275
    %8439 = vmatpush.msra.mxu0 %v267
    %8440 = vmatpush.msra.mxu0 %v259
    %8441 = vmatpush.msra.mxu0 %v251
    %8442 = vmatpush.msra.mxu0 %v243
    %8443 = vmatpush.msra.mxu0 %v235
    %8444 = vmatpush.msra.mxu0 %v227
    %8445 = vmatpush.msra.mxu0 %v219
    %8446 = vmatpush.msra.mxu0 %v211
    %8447 = vmatpush.msra.mxu0 %v203
    %8448 = vmatpush.msra.mxu0 %v195
    %8449 = vmatpush.msra.mxu0 %v187
    %8450 = vmatpush.msra.mxu0 %v179
    %8451 = vmatpush.msra.mxu0 %v171
    %8452 = vmatpush.msra.mxu0 %v163
    %8453 = vmatpush.msra.mxu0 %v155
    %8454 = vmatmul.f32.gmra.mxu0 %v7607
    %v8455 = vpop.f32.mrf.mxu0
    %v8456 = vadd.f32 0.0, %v8455
    %8457 = vdwg.mxu0
    %8458 = vmatpush.msra.mxu0 %v403
    %8459 = vmatpush.msra.mxu0 %v395
    %8460 = vmatpush.msra.mxu0 %v387
    %8461 = vmatpush.msra.mxu0 %v379
    %8462 = vmatpush.msra.mxu0 %v371
    %8463 = vmatpush.msra.mxu0 %v363
    %8464 = vmatpush.msra.mxu0 %v355
    %8465 = vmatpush.msra.mxu0 %v347
    %8466 = vmatpush.msra.mxu0 %v339
    %8467 = vmatpush.msra.mxu0 %v331
    %8468 = vmatpush.msra.mxu0 %v323
    %8469 = vmatpush.msra.mxu0 %v315
    %8470 = vmatpush.msra.mxu0 %v307
    %8471 = vmatpush.msra.mxu0 %v299
    %8472 = vmatpush.msra.mxu0 %v291
    %8473 = vmatpush.msra.mxu0 %v283
    %8474 = vmatmul.f32.gmra.mxu0 %v7608
    %v8475 = vpop.f32.mrf.mxu0
    %v8476 = vadd.f32 %v8456, %v8475
    %8477 = vdwg.mxu0
    %8478 = vmatpush.msra.mxu0 %v276
    %8479 = vmatpush.msra.mxu0 %v268
    %8480 = vmatpush.msra.mxu0 %v260
    %8481 = vmatpush.msra.mxu0 %v252
    %8482 = vmatpush.msra.mxu0 %v244
    %8483 = vmatpush.msra.mxu0 %v236
    %8484 = vmatpush.msra.mxu0 %v228
    %8485 = vmatpush.msra.mxu0 %v220
    %8486 = vmatpush.msra.mxu0 %v212
    %8487 = vmatpush.msra.mxu0 %v204
    %8488 = vmatpush.msra.mxu0 %v196
    %8489 = vmatpush.msra.mxu0 %v188
    %8490 = vmatpush.msra.mxu0 %v180
    %8491 = vmatpush.msra.mxu0 %v172
    %8492 = vmatpush.msra.mxu0 %v164
    %8493 = vmatpush.msra.mxu0 %v156
    %8494 = vmatmul.f32.gmra.mxu0 %v7607
    %v8495 = vpop.f32.mrf.mxu0
    %v8496 = vadd.f32 0.0, %v8495
    %8497 = vdwg.mxu0
    %8498 = vmatpush.msra.mxu0 %v404
    %8499 = vmatpush.msra.mxu0 %v396
    %8500 = vmatpush.msra.mxu0 %v388
    %8501 = vmatpush.msra.mxu0 %v380
    %8502 = vmatpush.msra.mxu0 %v372
    %8503 = vmatpush.msra.mxu0 %v364
    %8504 = vmatpush.msra.mxu0 %v356
    %8505 = vmatpush.msra.mxu0 %v348
    %8506 = vmatpush.msra.mxu0 %v340
    %8507 = vmatpush.msra.mxu0 %v332
    %8508 = vmatpush.msra.mxu0 %v324
    %8509 = vmatpush.msra.mxu0 %v316
    %8510 = vmatpush.msra.mxu0 %v308
    %8511 = vmatpush.msra.mxu0 %v300
    %8512 = vmatpush.msra.mxu0 %v292
    %8513 = vmatpush.msra.mxu0 %v284
    %8514 = vmatmul.f32.gmra.mxu0 %v7608
    %v8515 = vpop.f32.mrf.mxu0
    %v8516 = vadd.f32 %v8496, %v8515
    %8517 = vdwg.mxu0
    %8518 = vmatpush.msra.mxu0 %v277
    %8519 = vmatpush.msra.mxu0 %v269
    %8520 = vmatpush.msra.mxu0 %v261
    %8521 = vmatpush.msra.mxu0 %v253
    %8522 = vmatpush.msra.mxu0 %v245
    %8523 = vmatpush.msra.mxu0 %v237
    %8524 = vmatpush.msra.mxu0 %v229
    %8525 = vmatpush.msra.mxu0 %v221
    %8526 = vmatpush.msra.mxu0 %v213
    %8527 = vmatpush.msra.mxu0 %v205
    %8528 = vmatpush.msra.mxu0 %v197
    %8529 = vmatpush.msra.mxu0 %v189
    %8530 = vmatpush.msra.mxu0 %v181
    %8531 = vmatpush.msra.mxu0 %v173
    %8532 = vmatpush.msra.mxu0 %v165
    %8533 = vmatpush.msra.mxu0 %v157
    %8534 = vmatmul.f32.gmra.mxu0 %v7607
    %v8535 = vpop.f32.mrf.mxu0
    %v8536 = vadd.f32 0.0, %v8535
    %8537 = vdwg.mxu0
    %8538 = vmatpush.msra.mxu0 %v405
    %8539 = vmatpush.msra.mxu0 %v397
    %8540 = vmatpush.msra.mxu0 %v389
    %8541 = vmatpush.msra.mxu0 %v381
    %8542 = vmatpush.msra.mxu0 %v373
    %8543 = vmatpush.msra.mxu0 %v365
    %8544 = vmatpush.msra.mxu0 %v357
    %8545 = vmatpush.msra.mxu0 %v349
    %8546 = vmatpush.msra.mxu0 %v341
    %8547 = vmatpush.msra.mxu0 %v333
    %8548 = vmatpush.msra.mxu0 %v325
    %8549 = vmatpush.msra.mxu0 %v317
    %8550 = vmatpush.msra.mxu0 %v309
    %8551 = vmatpush.msra.mxu0 %v301
    %8552 = vmatpush.msra.mxu0 %v293
    %8553 = vmatpush.msra.mxu0 %v285
    %8554 = vmatmul.f32.gmra.mxu0 %v7608
    %v8555 = vpop.f32.mrf.mxu0
    %v8556 = vadd.f32 %v8536, %v8555
    %8557 = vdwg.mxu0
    %8558 = vmatpush.msra.mxu0 %v278
    %8559 = vmatpush.msra.mxu0 %v270
    %8560 = vmatpush.msra.mxu0 %v262
    %8561 = vmatpush.msra.mxu0 %v254
    %8562 = vmatpush.msra.mxu0 %v246
    %8563 = vmatpush.msra.mxu0 %v238
    %8564 = vmatpush.msra.mxu0 %v230
    %8565 = vmatpush.msra.mxu0 %v222
    %8566 = vmatpush.msra.mxu0 %v214
    %8567 = vmatpush.msra.mxu0 %v206
    %8568 = vmatpush.msra.mxu0 %v198
    %8569 = vmatpush.msra.mxu0 %v190
    %8570 = vmatpush.msra.mxu0 %v182
    %8571 = vmatpush.msra.mxu0 %v174
    %8572 = vmatpush.msra.mxu0 %v166
    %8573 = vmatpush.msra.mxu0 %v158
    %8574 = vmatmul.f32.gmra.mxu0 %v7607
    %v8575 = vpop.f32.mrf.mxu0
    %v8576 = vadd.f32 0.0, %v8575
    %8577 = vdwg.mxu0
    %8578 = vmatpush.msra.mxu0 %v406
    %8579 = vmatpush.msra.mxu0 %v398
    %8580 = vmatpush.msra.mxu0 %v390
    %8581 = vmatpush.msra.mxu0 %v382
    %8582 = vmatpush.msra.mxu0 %v374
    %8583 = vmatpush.msra.mxu0 %v366
    %8584 = vmatpush.msra.mxu0 %v358
    %8585 = vmatpush.msra.mxu0 %v350
    %8586 = vmatpush.msra.mxu0 %v342
    %8587 = vmatpush.msra.mxu0 %v334
    %8588 = vmatpush.msra.mxu0 %v326
    %8589 = vmatpush.msra.mxu0 %v318
    %8590 = vmatpush.msra.mxu0 %v310
    %8591 = vmatpush.msra.mxu0 %v302
    %8592 = vmatpush.msra.mxu0 %v294
    %8593 = vmatpush.msra.mxu0 %v286
    %8594 = vmatmul.f32.gmra.mxu0 %v7608
    %v8595 = vpop.f32.mrf.mxu0
    %v8596 = vadd.f32 %v8576, %v8595
    %8597 = vdwg.mxu0
    %8598 = vmatpush.msra.mxu0 %v279
    %8599 = vmatpush.msra.mxu0 %v271
    %8600 = vmatpush.msra.mxu0 %v263
    %8601 = vmatpush.msra.mxu0 %v255
    %8602 = vmatpush.msra.mxu0 %v247
    %8603 = vmatpush.msra.mxu0 %v239
    %8604 = vmatpush.msra.mxu0 %v231
    %8605 = vmatpush.msra.mxu0 %v223
    %8606 = vmatpush.msra.mxu0 %v215
    %8607 = vmatpush.msra.mxu0 %v207
    %8608 = vmatpush.msra.mxu0 %v199
    %8609 = vmatpush.msra.mxu0 %v191
    %8610 = vmatpush.msra.mxu0 %v183
    %8611 = vmatpush.msra.mxu0 %v175
    %8612 = vmatpush.msra.mxu0 %v167
    %8613 = vmatpush.msra.mxu0 %v159
    %8614 = vmatmul.f32.gmra.mxu0 %v7607
    %v8615 = vpop.f32.mrf.mxu0
    %v8616 = vadd.f32 0.0, %v8615
    %8617 = vdwg.mxu0
    %8618 = vmatpush.msra.mxu0 %v407
    %8619 = vmatpush.msra.mxu0 %v399
    %8620 = vmatpush.msra.mxu0 %v391
    %8621 = vmatpush.msra.mxu0 %v383
    %8622 = vmatpush.msra.mxu0 %v375
    %8623 = vmatpush.msra.mxu0 %v367
    %8624 = vmatpush.msra.mxu0 %v359
    %8625 = vmatpush.msra.mxu0 %v351
    %8626 = vmatpush.msra.mxu0 %v343
    %8627 = vmatpush.msra.mxu0 %v335
    %8628 = vmatpush.msra.mxu0 %v327
    %8629 = vmatpush.msra.mxu0 %v319
    %8630 = vmatpush.msra.mxu0 %v311
    %8631 = vmatpush.msra.mxu0 %v303
    %8632 = vmatpush.msra.mxu0 %v295
    %8633 = vmatpush.msra.mxu0 %v287
    %8634 = vmatmul.f32.gmra.mxu0 %v7608
    %v8635 = vpop.f32.mrf.mxu0
    %v8636 = vadd.f32 %v8616, %v8635
    %8637 = vdwg.mxu0
    %8638 = vmatpush.msra.mxu0 %v280
    %8639 = vmatpush.msra.mxu0 %v272
    %8640 = vmatpush.msra.mxu0 %v264
    %8641 = vmatpush.msra.mxu0 %v256
    %8642 = vmatpush.msra.mxu0 %v248
    %8643 = vmatpush.msra.mxu0 %v240
    %8644 = vmatpush.msra.mxu0 %v232
    %8645 = vmatpush.msra.mxu0 %v224
    %8646 = vmatpush.msra.mxu0 %v216
    %8647 = vmatpush.msra.mxu0 %v208
    %8648 = vmatpush.msra.mxu0 %v200
    %8649 = vmatpush.msra.mxu0 %v192
    %8650 = vmatpush.msra.mxu0 %v184
    %8651 = vmatpush.msra.mxu0 %v176
    %8652 = vmatpush.msra.mxu0 %v168
    %8653 = vmatpush.msra.mxu0 %v160
    %8654 = vmatmul.f32.gmra.mxu0 %v7607
    %v8655 = vpop.f32.mrf.mxu0
    %v8656 = vadd.f32 0.0, %v8655
    %8657 = vdwg.mxu0
    %8658 = vmatpush.msra.mxu0 %v408
    %8659 = vmatpush.msra.mxu0 %v400
    %8660 = vmatpush.msra.mxu0 %v392
    %8661 = vmatpush.msra.mxu0 %v384
    %8662 = vmatpush.msra.mxu0 %v376
    %8663 = vmatpush.msra.mxu0 %v368
    %8664 = vmatpush.msra.mxu0 %v360
    %8665 = vmatpush.msra.mxu0 %v352
    %8666 = vmatpush.msra.mxu0 %v344
    %8667 = vmatpush.msra.mxu0 %v336
    %8668 = vmatpush.msra.mxu0 %v328
    %8669 = vmatpush.msra.mxu0 %v320
    %8670 = vmatpush.msra.mxu0 %v312
    %8671 = vmatpush.msra.mxu0 %v304
    %8672 = vmatpush.msra.mxu0 %v296
    %8673 = vmatpush.msra.mxu0 %v288
    %8674 = vmatmul.f32.gmra.mxu0 %v7608
    %v8675 = vpop.f32.mrf.mxu0
    %v8676 = vadd.f32 %v8656, %v8675
    %8677 = vdwg.mxu0
    %8678 = vmatpush.msra.mxu0 %v281
    %8679 = vmatpush.msra.mxu0 %v273
    %8680 = vmatpush.msra.mxu0 %v265
    %8681 = vmatpush.msra.mxu0 %v257
    %8682 = vmatpush.msra.mxu0 %v249
    %8683 = vmatpush.msra.mxu0 %v241
    %8684 = vmatpush.msra.mxu0 %v233
    %8685 = vmatpush.msra.mxu0 %v225
    %8686 = vmatpush.msra.mxu0 %v217
    %8687 = vmatpush.msra.mxu0 %v209
    %8688 = vmatpush.msra.mxu0 %v201
    %8689 = vmatpush.msra.mxu0 %v193
    %8690 = vmatpush.msra.mxu0 %v185
    %8691 = vmatpush.msra.mxu0 %v177
    %8692 = vmatpush.msra.mxu0 %v169
    %8693 = vmatpush.msra.mxu0 %v161
    %8694 = vmatmul.f32.gmra.mxu0 %v7607
    %v8695 = vpop.f32.mrf.mxu0
    %v8696 = vadd.f32 0.0, %v8695
    %8697 = vdwg.mxu0
    %8698 = vmatpush.msra.mxu0 %v409
    %8699 = vmatpush.msra.mxu0 %v401
    %8700 = vmatpush.msra.mxu0 %v393
    %8701 = vmatpush.msra.mxu0 %v385
    %8702 = vmatpush.msra.mxu0 %v377
    %8703 = vmatpush.msra.mxu0 %v369
    %8704 = vmatpush.msra.mxu0 %v361
    %8705 = vmatpush.msra.mxu0 %v353
    %8706 = vmatpush.msra.mxu0 %v345
    %8707 = vmatpush.msra.mxu0 %v337
    %8708 = vmatpush.msra.mxu0 %v329
    %8709 = vmatpush.msra.mxu0 %v321
    %8710 = vmatpush.msra.mxu0 %v313
    %8711 = vmatpush.msra.mxu0 %v305
    %8712 = vmatpush.msra.mxu0 %v297
    %8713 = vmatpush.msra.mxu0 %v289
    %8714 = vmatmul.f32.gmra.mxu0 %v7608
    %v8715 = vpop.f32.mrf.mxu0
    %v8716 = vadd.f32 %v8696, %v8715
    %8717 = vdwg.mxu0
    %v8718 = vadd.f32 %v8390, %v8436
    %v8719 = vadd.f32 %v8391, %v8476
    %v8720 = vadd.f32 %v8392, %v8516
    %v8721 = vadd.f32 %v8393, %v8556
    %v8722 = vadd.f32 %v8394, %v8596
    %v8723 = vadd.f32 %v8395, %v8636
    %v8724 = vadd.f32 %v8396, %v8676
    %v8725 = vadd.f32 %v8397, %v8716
    %v8726 = vxor.u32 %v8718, 2147483648
    %v8727 = vxor.u32 %v8719, 2147483648
    %v8728 = vmul.f32 %v8726, 1.442695
    %v8729 = vpow.pop %v8728
    %v8730 = vmul.f32 %v8727, 1.442695
    %v8731 = vpow.pop %v8730
    %v8732 = vadd.f32 %v8729, 1.0
    %v8733 = vadd.f32 %v8731, 1.0
    %v8734 = vrcp.pop %v8732
    %v8735 = vmul.f32 %v8732, %v8734
    %v8736 = vsub.f32 1.0, %v8735
    %v8737 = vmul.f32 %v8734, %v8736
    %v8738 = vadd.f32 %v8734, %v8737
    %vm8739 = vweird.f32 %v8732
    %vm8740 = vweird.f32 %v8734
    %vm8741 = vmor %vm8739, %vm8740
    %v8742 = vsel %vm8741, %v8734, %v8738
    %v8743 = vand.u32 2147483647, %v8732
    %vm8744 = vcmp.eq.f32.partialorder %v8743, 8.507059e+37
    %v8745 = vand.u32 %v8732, 2147483648
    %v8746 = vor.u32 1.1754944e-38, %v8745
    %v8747 = vsel %vm8744, %v8746, %v8742
    %v8748 = vmul.f32 1.0, %v8747
    %v8749 = vrcp.pop %v8733
    %v8750 = vmul.f32 %v8733, %v8749
    %v8751 = vsub.f32 1.0, %v8750
    %v8752 = vmul.f32 %v8749, %v8751
    %v8753 = vadd.f32 %v8749, %v8752
    %vm8754 = vweird.f32 %v8733
    %vm8755 = vweird.f32 %v8749
    %vm8756 = vmor %vm8754, %vm8755
    %v8757 = vsel %vm8756, %v8749, %v8753
    %v8758 = vand.u32 2147483647, %v8733
    %vm8759 = vcmp.eq.f32.partialorder %v8758, 8.507059e+37
    %v8760 = vand.u32 %v8733, 2147483648
    %v8761 = vor.u32 1.1754944e-38, %v8760
    %v8762 = vsel %vm8759, %v8761, %v8757
    %v8763 = vmul.f32 1.0, %v8762
    %v8764 = vxor.u32 %v8720, 2147483648
    %v8765 = vxor.u32 %v8721, 2147483648
    %v8766 = vmul.f32 %v8764, 1.442695
    %v8767 = vpow.pop %v8766
    %v8768 = vmul.f32 %v8765, 1.442695
    %v8769 = vpow.pop %v8768
    %v8770 = vadd.f32 %v8767, 1.0
    %v8771 = vadd.f32 %v8769, 1.0
    %v8772 = vrcp.pop %v8770
    %v8773 = vmul.f32 %v8770, %v8772
    %v8774 = vsub.f32 1.0, %v8773
    %v8775 = vmul.f32 %v8772, %v8774
    %v8776 = vadd.f32 %v8772, %v8775
    %vm8777 = vweird.f32 %v8770
    %vm8778 = vweird.f32 %v8772
    %vm8779 = vmor %vm8777, %vm8778
    %v8780 = vsel %vm8779, %v8772, %v8776
    %v8781 = vand.u32 2147483647, %v8770
    %vm8782 = vcmp.eq.f32.partialorder %v8781, 8.507059e+37
    %v8783 = vand.u32 %v8770, 2147483648
    %v8784 = vor.u32 1.1754944e-38, %v8783
    %v8785 = vsel %vm8782, %v8784, %v8780
    %v8786 = vmul.f32 1.0, %v8785
    %v8787 = vrcp.pop %v8771
    %v8788 = vmul.f32 %v8771, %v8787
    %v8789 = vsub.f32 1.0, %v8788
    %v8790 = vmul.f32 %v8787, %v8789
    %v8791 = vadd.f32 %v8787, %v8790
    %vm8792 = vweird.f32 %v8771
    %vm8793 = vweird.f32 %v8787
    %vm8794 = vmor %vm8792, %vm8793
    %v8795 = vsel %vm8794, %v8787, %v8791
    %v8796 = vand.u32 2147483647, %v8771
    %vm8797 = vcmp.eq.f32.partialorder %v8796, 8.507059e+37
    %v8798 = vand.u32 %v8771, 2147483648
    %v8799 = vor.u32 1.1754944e-38, %v8798
    %v8800 = vsel %vm8797, %v8799, %v8795
    %v8801 = vmul.f32 1.0, %v8800
    %v8802 = vtanh.pop %v8722
    %v8803 = vtanh.pop %v8723
    %v8804 = vxor.u32 %v8724, 2147483648
    %v8805 = vxor.u32 %v8725, 2147483648
    %v8806 = vmul.f32 %v8804, 1.442695
    %v8807 = vpow.pop %v8806
    %v8808 = vmul.f32 %v8805, 1.442695
    %v8809 = vpow.pop %v8808
    %v8810 = vadd.f32 %v8807, 1.0
    %v8811 = vadd.f32 %v8809, 1.0
    %v8812 = vrcp.pop %v8810
    %v8813 = vmul.f32 %v8810, %v8812
    %v8814 = vsub.f32 1.0, %v8813
    %v8815 = vmul.f32 %v8812, %v8814
    %v8816 = vadd.f32 %v8812, %v8815
    %vm8817 = vweird.f32 %v8810
    %vm8818 = vweird.f32 %v8812
    %vm8819 = vmor %vm8817, %vm8818
    %v8820 = vsel %vm8819, %v8812, %v8816
    %v8821 = vand.u32 2147483647, %v8810
    %vm8822 = vcmp.eq.f32.partialorder %v8821, 8.507059e+37
    %v8823 = vand.u32 %v8810, 2147483648
    %v8824 = vor.u32 1.1754944e-38, %v8823
    %v8825 = vsel %vm8822, %v8824, %v8820
    %v8826 = vmul.f32 1.0, %v8825
    %v8827 = vrcp.pop %v8811
    %v8828 = vmul.f32 %v8811, %v8827
    %v8829 = vsub.f32 1.0, %v8828
    %v8830 = vmul.f32 %v8827, %v8829
    %v8831 = vadd.f32 %v8827, %v8830
    %vm8832 = vweird.f32 %v8811
    %vm8833 = vweird.f32 %v8827
    %vm8834 = vmor %vm8832, %vm8833
    %v8835 = vsel %vm8834, %v8827, %v8831
    %v8836 = vand.u32 2147483647, %v8811
    %vm8837 = vcmp.eq.f32.partialorder %v8836, 8.507059e+37
    %v8838 = vand.u32 %v8811, 2147483648
    %v8839 = vor.u32 1.1754944e-38, %v8838
    %v8840 = vsel %vm8837, %v8839, %v8835
    %v8841 = vmul.f32 1.0, %v8840
    %v8842 = vmul.f32 %v8786, %v7603
    %v8843 = vmul.f32 %v8801, %v7604
    %v8844 = vmul.f32 %v8748, %v8802
    %v8845 = vmul.f32 %v8763, %v8803
    %v8846 = vadd.f32 %v8842, %v8844
    %v8847 = vadd.f32 %v8843, %v8845
    %v8848 = vtanh.pop %v8846
    %v8849 = vtanh.pop %v8847
    %v8850 = vmul.f32 %v8826, %v8848
    %v8851 = vmul.f32 %v8841, %v8849
    %8852 = vmatpush.msra.mxu0 %v984
    %8853 = vmatpush.msra.mxu0 %v976
    %8854 = vmatpush.msra.mxu0 %v968
    %8855 = vmatpush.msra.mxu0 %v960
    %8856 = vmatpush.msra.mxu0 %v952
    %8857 = vmatpush.msra.mxu0 %v944
    %8858 = vmatpush.msra.mxu0 %v936
    %8859 = vmatpush.msra.mxu0 %v928
    %8860 = vmatpush.msra.mxu0 %v920
    %8861 = vmatpush.msra.mxu0 %v912
    %8862 = vmatpush.msra.mxu0 %v904
    %8863 = vmatpush.msra.mxu0 %v896
    %8864 = vmatpush.msra.mxu0 %v888
    %8865 = vmatpush.msra.mxu0 %v880
    %8866 = vmatpush.msra.mxu0 %v872
    %8867 = vmatpush.msra.mxu0 %v864
    %8868 = vmatmul.f32.gmra.mxu0 %v8850
    %v8869 = vpop.f32.mrf.mxu0
    %v8870 = vadd.f32 %v1378, %v8869
    %8871 = vdwg.mxu0
    %8872 = vmatpush.msra.mxu0 %v1112
    %8873 = vmatpush.msra.mxu0 %v1104
    %8874 = vmatpush.msra.mxu0 %v1096
    %8875 = vmatpush.msra.mxu0 %v1088
    %8876 = vmatpush.msra.mxu0 %v1080
    %8877 = vmatpush.msra.mxu0 %v1072
    %8878 = vmatpush.msra.mxu0 %v1064
    %8879 = vmatpush.msra.mxu0 %v1056
    %8880 = vmatpush.msra.mxu0 %v1048
    %8881 = vmatpush.msra.mxu0 %v1040
    %8882 = vmatpush.msra.mxu0 %v1032
    %8883 = vmatpush.msra.mxu0 %v1024
    %8884 = vmatpush.msra.mxu0 %v1016
    %8885 = vmatpush.msra.mxu0 %v1008
    %8886 = vmatpush.msra.mxu0 %v1000
    %8887 = vmatpush.msra.mxu0 %v992
    %8888 = vmatmul.f32.gmra.mxu0 %v8851
    %v8889 = vpop.f32.mrf.mxu0
    %v8890 = vadd.f32 %v8870, %v8889
    %8891 = vdwg.mxu0
    %8892 = vmatpush.msra.mxu0 %v1240
    %8893 = vmatpush.msra.mxu0 %v1232
    %8894 = vmatpush.msra.mxu0 %v1224
    %8895 = vmatpush.msra.mxu0 %v1216
    %8896 = vmatpush.msra.mxu0 %v1208
    %8897 = vmatpush.msra.mxu0 %v1200
    %8898 = vmatpush.msra.mxu0 %v1192
    %8899 = vmatpush.msra.mxu0 %v1184
    %8900 = vmatpush.msra.mxu0 %v1176
    %8901 = vmatpush.msra.mxu0 %v1168
    %8902 = vmatpush.msra.mxu0 %v1160
    %8903 = vmatpush.msra.mxu0 %v1152
    %8904 = vmatpush.msra.mxu0 %v1144
    %8905 = vmatpush.msra.mxu0 %v1136
    %8906 = vmatpush.msra.mxu0 %v1128
    %8907 = vmatpush.msra.mxu0 %v1120
    %8908 = vmatmul.f32.gmra.mxu0 %v8373
    %v8909 = vpop.f32.mrf.mxu0
    %v8910 = vadd.f32 %v8890, %v8909
    %8911 = vdwg.mxu0
    %8912 = vmatpush.msra.mxu0 %v1368
    %8913 = vmatpush.msra.mxu0 %v1360
    %8914 = vmatpush.msra.mxu0 %v1352
    %8915 = vmatpush.msra.mxu0 %v1344
    %8916 = vmatpush.msra.mxu0 %v1336
    %8917 = vmatpush.msra.mxu0 %v1328
    %8918 = vmatpush.msra.mxu0 %v1320
    %8919 = vmatpush.msra.mxu0 %v1312
    %8920 = vmatpush.msra.mxu0 %v1304
    %8921 = vmatpush.msra.mxu0 %v1296
    %8922 = vmatpush.msra.mxu0 %v1288
    %8923 = vmatpush.msra.mxu0 %v1280
    %8924 = vmatpush.msra.mxu0 %v1272
    %8925 = vmatpush.msra.mxu0 %v1264
    %8926 = vmatpush.msra.mxu0 %v1256
    %8927 = vmatpush.msra.mxu0 %v1248
    %8928 = vmatmul.f32.gmra.mxu0 %v8374
    %v8929 = vpop.f32.mrf.mxu0
    %v8930 = vadd.f32 %v8910, %v8929
    %8931 = vdwg.mxu0
    %8932 = vmatpush.msra.mxu0 %v985
    %8933 = vmatpush.msra.mxu0 %v977
    %8934 = vmatpush.msra.mxu0 %v969
    %8935 = vmatpush.msra.mxu0 %v961
    %8936 = vmatpush.msra.mxu0 %v953
    %8937 = vmatpush.msra.mxu0 %v945
    %8938 = vmatpush.msra.mxu0 %v937
    %8939 = vmatpush.msra.mxu0 %v929
    %8940 = vmatpush.msra.mxu0 %v921
    %8941 = vmatpush.msra.mxu0 %v913
    %8942 = vmatpush.msra.mxu0 %v905
    %8943 = vmatpush.msra.mxu0 %v897
    %8944 = vmatpush.msra.mxu0 %v889
    %8945 = vmatpush.msra.mxu0 %v881
    %8946 = vmatpush.msra.mxu0 %v873
    %8947 = vmatpush.msra.mxu0 %v865
    %8948 = vmatmul.f32.gmra.mxu0 %v8850
    %v8949 = vpop.f32.mrf.mxu0
    %v8950 = vadd.f32 %v1379, %v8949
    %8951 = vdwg.mxu0
    %8952 = vmatpush.msra.mxu0 %v1113
    %8953 = vmatpush.msra.mxu0 %v1105
    %8954 = vmatpush.msra.mxu0 %v1097
    %8955 = vmatpush.msra.mxu0 %v1089
    %8956 = vmatpush.msra.mxu0 %v1081
    %8957 = vmatpush.msra.mxu0 %v1073
    %8958 = vmatpush.msra.mxu0 %v1065
    %8959 = vmatpush.msra.mxu0 %v1057
    %8960 = vmatpush.msra.mxu0 %v1049
    %8961 = vmatpush.msra.mxu0 %v1041
    %8962 = vmatpush.msra.mxu0 %v1033
    %8963 = vmatpush.msra.mxu0 %v1025
    %8964 = vmatpush.msra.mxu0 %v1017
    %8965 = vmatpush.msra.mxu0 %v1009
    %8966 = vmatpush.msra.mxu0 %v1001
    %8967 = vmatpush.msra.mxu0 %v993
    %8968 = vmatmul.f32.gmra.mxu0 %v8851
    %v8969 = vpop.f32.mrf.mxu0
    %v8970 = vadd.f32 %v8950, %v8969
    %8971 = vdwg.mxu0
    %8972 = vmatpush.msra.mxu0 %v1241
    %8973 = vmatpush.msra.mxu0 %v1233
    %8974 = vmatpush.msra.mxu0 %v1225
    %8975 = vmatpush.msra.mxu0 %v1217
    %8976 = vmatpush.msra.mxu0 %v1209
    %8977 = vmatpush.msra.mxu0 %v1201
    %8978 = vmatpush.msra.mxu0 %v1193
    %8979 = vmatpush.msra.mxu0 %v1185
    %8980 = vmatpush.msra.mxu0 %v1177
    %8981 = vmatpush.msra.mxu0 %v1169
    %8982 = vmatpush.msra.mxu0 %v1161
    %8983 = vmatpush.msra.mxu0 %v1153
    %8984 = vmatpush.msra.mxu0 %v1145
    %8985 = vmatpush.msra.mxu0 %v1137
    %8986 = vmatpush.msra.mxu0 %v1129
    %8987 = vmatpush.msra.mxu0 %v1121
    %8988 = vmatmul.f32.gmra.mxu0 %v8373
    %v8989 = vpop.f32.mrf.mxu0
    %v8990 = vadd.f32 %v8970, %v8989
    %8991 = vdwg.mxu0
    %8992 = vmatpush.msra.mxu0 %v1369
    %8993 = vmatpush.msra.mxu0 %v1361
    %8994 = vmatpush.msra.mxu0 %v1353
    %8995 = vmatpush.msra.mxu0 %v1345
    %8996 = vmatpush.msra.mxu0 %v1337
    %8997 = vmatpush.msra.mxu0 %v1329
    %8998 = vmatpush.msra.mxu0 %v1321
    %8999 = vmatpush.msra.mxu0 %v1313
    %9000 = vmatpush.msra.mxu0 %v1305
    %9001 = vmatpush.msra.mxu0 %v1297
    %9002 = vmatpush.msra.mxu0 %v1289
    %9003 = vmatpush.msra.mxu0 %v1281
    %9004 = vmatpush.msra.mxu0 %v1273
    %9005 = vmatpush.msra.mxu0 %v1265
    %9006 = vmatpush.msra.mxu0 %v1257
    %9007 = vmatpush.msra.mxu0 %v1249
    %9008 = vmatmul.f32.gmra.mxu0 %v8374
    %v9009 = vpop.f32.mrf.mxu0
    %v9010 = vadd.f32 %v8990, %v9009
    %9011 = vdwg.mxu0
    %9012 = vmatpush.msra.mxu0 %v986
    %9013 = vmatpush.msra.mxu0 %v978
    %9014 = vmatpush.msra.mxu0 %v970
    %9015 = vmatpush.msra.mxu0 %v962
    %9016 = vmatpush.msra.mxu0 %v954
    %9017 = vmatpush.msra.mxu0 %v946
    %9018 = vmatpush.msra.mxu0 %v938
    %9019 = vmatpush.msra.mxu0 %v930
    %9020 = vmatpush.msra.mxu0 %v922
    %9021 = vmatpush.msra.mxu0 %v914
    %9022 = vmatpush.msra.mxu0 %v906
    %9023 = vmatpush.msra.mxu0 %v898
    %9024 = vmatpush.msra.mxu0 %v890
    %9025 = vmatpush.msra.mxu0 %v882
    %9026 = vmatpush.msra.mxu0 %v874
    %9027 = vmatpush.msra.mxu0 %v866
    %9028 = vmatmul.f32.gmra.mxu0 %v8850
    %v9029 = vpop.f32.mrf.mxu0
    %v9030 = vadd.f32 %v1380, %v9029
    %9031 = vdwg.mxu0
    %9032 = vmatpush.msra.mxu0 %v1114
    %9033 = vmatpush.msra.mxu0 %v1106
    %9034 = vmatpush.msra.mxu0 %v1098
    %9035 = vmatpush.msra.mxu0 %v1090
    %9036 = vmatpush.msra.mxu0 %v1082
    %9037 = vmatpush.msra.mxu0 %v1074
    %9038 = vmatpush.msra.mxu0 %v1066
    %9039 = vmatpush.msra.mxu0 %v1058
    %9040 = vmatpush.msra.mxu0 %v1050
    %9041 = vmatpush.msra.mxu0 %v1042
    %9042 = vmatpush.msra.mxu0 %v1034
    %9043 = vmatpush.msra.mxu0 %v1026
    %9044 = vmatpush.msra.mxu0 %v1018
    %9045 = vmatpush.msra.mxu0 %v1010
    %9046 = vmatpush.msra.mxu0 %v1002
    %9047 = vmatpush.msra.mxu0 %v994
    %9048 = vmatmul.f32.gmra.mxu0 %v8851
    %v9049 = vpop.f32.mrf.mxu0
    %v9050 = vadd.f32 %v9030, %v9049
    %9051 = vdwg.mxu0
    %9052 = vmatpush.msra.mxu0 %v1242
    %9053 = vmatpush.msra.mxu0 %v1234
    %9054 = vmatpush.msra.mxu0 %v1226
    %9055 = vmatpush.msra.mxu0 %v1218
    %9056 = vmatpush.msra.mxu0 %v1210
    %9057 = vmatpush.msra.mxu0 %v1202
    %9058 = vmatpush.msra.mxu0 %v1194
    %9059 = vmatpush.msra.mxu0 %v1186
    %9060 = vmatpush.msra.mxu0 %v1178
    %9061 = vmatpush.msra.mxu0 %v1170
    %9062 = vmatpush.msra.mxu0 %v1162
    %9063 = vmatpush.msra.mxu0 %v1154
    %9064 = vmatpush.msra.mxu0 %v1146
    %9065 = vmatpush.msra.mxu0 %v1138
    %9066 = vmatpush.msra.mxu0 %v1130
    %9067 = vmatpush.msra.mxu0 %v1122
    %9068 = vmatmul.f32.gmra.mxu0 %v8373
    %v9069 = vpop.f32.mrf.mxu0
    %v9070 = vadd.f32 %v9050, %v9069
    %9071 = vdwg.mxu0
    %9072 = vmatpush.msra.mxu0 %v1370
    %9073 = vmatpush.msra.mxu0 %v1362
    %9074 = vmatpush.msra.mxu0 %v1354
    %9075 = vmatpush.msra.mxu0 %v1346
    %9076 = vmatpush.msra.mxu0 %v1338
    %9077 = vmatpush.msra.mxu0 %v1330
    %9078 = vmatpush.msra.mxu0 %v1322
    %9079 = vmatpush.msra.mxu0 %v1314
    %9080 = vmatpush.msra.mxu0 %v1306
    %9081 = vmatpush.msra.mxu0 %v1298
    %9082 = vmatpush.msra.mxu0 %v1290
    %9083 = vmatpush.msra.mxu0 %v1282
    %9084 = vmatpush.msra.mxu0 %v1274
    %9085 = vmatpush.msra.mxu0 %v1266
    %9086 = vmatpush.msra.mxu0 %v1258
    %9087 = vmatpush.msra.mxu0 %v1250
    %9088 = vmatmul.f32.gmra.mxu0 %v8374
    %v9089 = vpop.f32.mrf.mxu0
    %v9090 = vadd.f32 %v9070, %v9089
    %9091 = vdwg.mxu0
    %9092 = vmatpush.msra.mxu0 %v987
    %9093 = vmatpush.msra.mxu0 %v979
    %9094 = vmatpush.msra.mxu0 %v971
    %9095 = vmatpush.msra.mxu0 %v963
    %9096 = vmatpush.msra.mxu0 %v955
    %9097 = vmatpush.msra.mxu0 %v947
    %9098 = vmatpush.msra.mxu0 %v939
    %9099 = vmatpush.msra.mxu0 %v931
    %9100 = vmatpush.msra.mxu0 %v923
    %9101 = vmatpush.msra.mxu0 %v915
    %9102 = vmatpush.msra.mxu0 %v907
    %9103 = vmatpush.msra.mxu0 %v899
    %9104 = vmatpush.msra.mxu0 %v891
    %9105 = vmatpush.msra.mxu0 %v883
    %9106 = vmatpush.msra.mxu0 %v875
    %9107 = vmatpush.msra.mxu0 %v867
    %9108 = vmatmul.f32.gmra.mxu0 %v8850
    %v9109 = vpop.f32.mrf.mxu0
    %v9110 = vadd.f32 %v1381, %v9109
    %9111 = vdwg.mxu0
    %9112 = vmatpush.msra.mxu0 %v1115
    %9113 = vmatpush.msra.mxu0 %v1107
    %9114 = vmatpush.msra.mxu0 %v1099
    %9115 = vmatpush.msra.mxu0 %v1091
    %9116 = vmatpush.msra.mxu0 %v1083
    %9117 = vmatpush.msra.mxu0 %v1075
    %9118 = vmatpush.msra.mxu0 %v1067
    %9119 = vmatpush.msra.mxu0 %v1059
    %9120 = vmatpush.msra.mxu0 %v1051
    %9121 = vmatpush.msra.mxu0 %v1043
    %9122 = vmatpush.msra.mxu0 %v1035
    %9123 = vmatpush.msra.mxu0 %v1027
    %9124 = vmatpush.msra.mxu0 %v1019
    %9125 = vmatpush.msra.mxu0 %v1011
    %9126 = vmatpush.msra.mxu0 %v1003
    %9127 = vmatpush.msra.mxu0 %v995
    %9128 = vmatmul.f32.gmra.mxu0 %v8851
    %v9129 = vpop.f32.mrf.mxu0
    %v9130 = vadd.f32 %v9110, %v9129
    %9131 = vdwg.mxu0
    %9132 = vmatpush.msra.mxu0 %v1243
    %9133 = vmatpush.msra.mxu0 %v1235
    %9134 = vmatpush.msra.mxu0 %v1227
    %9135 = vmatpush.msra.mxu0 %v1219
    %9136 = vmatpush.msra.mxu0 %v1211
    %9137 = vmatpush.msra.mxu0 %v1203
    %9138 = vmatpush.msra.mxu0 %v1195
    %9139 = vmatpush.msra.mxu0 %v1187
    %9140 = vmatpush.msra.mxu0 %v1179
    %9141 = vmatpush.msra.mxu0 %v1171
    %9142 = vmatpush.msra.mxu0 %v1163
    %9143 = vmatpush.msra.mxu0 %v1155
    %9144 = vmatpush.msra.mxu0 %v1147
    %9145 = vmatpush.msra.mxu0 %v1139
    %9146 = vmatpush.msra.mxu0 %v1131
    %9147 = vmatpush.msra.mxu0 %v1123
    %9148 = vmatmul.f32.gmra.mxu0 %v8373
    %v9149 = vpop.f32.mrf.mxu0
    %v9150 = vadd.f32 %v9130, %v9149
    %9151 = vdwg.mxu0
    %9152 = vmatpush.msra.mxu0 %v1371
    %9153 = vmatpush.msra.mxu0 %v1363
    %9154 = vmatpush.msra.mxu0 %v1355
    %9155 = vmatpush.msra.mxu0 %v1347
    %9156 = vmatpush.msra.mxu0 %v1339
    %9157 = vmatpush.msra.mxu0 %v1331
    %9158 = vmatpush.msra.mxu0 %v1323
    %9159 = vmatpush.msra.mxu0 %v1315
    %9160 = vmatpush.msra.mxu0 %v1307
    %9161 = vmatpush.msra.mxu0 %v1299
    %9162 = vmatpush.msra.mxu0 %v1291
    %9163 = vmatpush.msra.mxu0 %v1283
    %9164 = vmatpush.msra.mxu0 %v1275
    %9165 = vmatpush.msra.mxu0 %v1267
    %9166 = vmatpush.msra.mxu0 %v1259
    %9167 = vmatpush.msra.mxu0 %v1251
    %9168 = vmatmul.f32.gmra.mxu0 %v8374
    %v9169 = vpop.f32.mrf.mxu0
    %v9170 = vadd.f32 %v9150, %v9169
    %9171 = vdwg.mxu0
    %9172 = vmatpush.msra.mxu0 %v988
    %9173 = vmatpush.msra.mxu0 %v980
    %9174 = vmatpush.msra.mxu0 %v972
    %9175 = vmatpush.msra.mxu0 %v964
    %9176 = vmatpush.msra.mxu0 %v956
    %9177 = vmatpush.msra.mxu0 %v948
    %9178 = vmatpush.msra.mxu0 %v940
    %9179 = vmatpush.msra.mxu0 %v932
    %9180 = vmatpush.msra.mxu0 %v924
    %9181 = vmatpush.msra.mxu0 %v916
    %9182 = vmatpush.msra.mxu0 %v908
    %9183 = vmatpush.msra.mxu0 %v900
    %9184 = vmatpush.msra.mxu0 %v892
    %9185 = vmatpush.msra.mxu0 %v884
    %9186 = vmatpush.msra.mxu0 %v876
    %9187 = vmatpush.msra.mxu0 %v868
    %9188 = vmatmul.f32.gmra.mxu0 %v8850
    %v9189 = vpop.f32.mrf.mxu0
    %v9190 = vadd.f32 %v1382, %v9189
    %9191 = vdwg.mxu0
    %9192 = vmatpush.msra.mxu0 %v1116
    %9193 = vmatpush.msra.mxu0 %v1108
    %9194 = vmatpush.msra.mxu0 %v1100
    %9195 = vmatpush.msra.mxu0 %v1092
    %9196 = vmatpush.msra.mxu0 %v1084
    %9197 = vmatpush.msra.mxu0 %v1076
    %9198 = vmatpush.msra.mxu0 %v1068
    %9199 = vmatpush.msra.mxu0 %v1060
    %9200 = vmatpush.msra.mxu0 %v1052
    %9201 = vmatpush.msra.mxu0 %v1044
    %9202 = vmatpush.msra.mxu0 %v1036
    %9203 = vmatpush.msra.mxu0 %v1028
    %9204 = vmatpush.msra.mxu0 %v1020
    %9205 = vmatpush.msra.mxu0 %v1012
    %9206 = vmatpush.msra.mxu0 %v1004
    %9207 = vmatpush.msra.mxu0 %v996
    %9208 = vmatmul.f32.gmra.mxu0 %v8851
    %v9209 = vpop.f32.mrf.mxu0
    %v9210 = vadd.f32 %v9190, %v9209
    %9211 = vdwg.mxu0
    %9212 = vmatpush.msra.mxu0 %v1244
    %9213 = vmatpush.msra.mxu0 %v1236
    %9214 = vmatpush.msra.mxu0 %v1228
    %9215 = vmatpush.msra.mxu0 %v1220
    %9216 = vmatpush.msra.mxu0 %v1212
    %9217 = vmatpush.msra.mxu0 %v1204
    %9218 = vmatpush.msra.mxu0 %v1196
    %9219 = vmatpush.msra.mxu0 %v1188
    %9220 = vmatpush.msra.mxu0 %v1180
    %9221 = vmatpush.msra.mxu0 %v1172
    %9222 = vmatpush.msra.mxu0 %v1164
    %9223 = vmatpush.msra.mxu0 %v1156
    %9224 = vmatpush.msra.mxu0 %v1148
    %9225 = vmatpush.msra.mxu0 %v1140
    %9226 = vmatpush.msra.mxu0 %v1132
    %9227 = vmatpush.msra.mxu0 %v1124
    %9228 = vmatmul.f32.gmra.mxu0 %v8373
    %v9229 = vpop.f32.mrf.mxu0
    %v9230 = vadd.f32 %v9210, %v9229
    %9231 = vdwg.mxu0
    %9232 = vmatpush.msra.mxu0 %v1372
    %9233 = vmatpush.msra.mxu0 %v1364
    %9234 = vmatpush.msra.mxu0 %v1356
    %9235 = vmatpush.msra.mxu0 %v1348
    %9236 = vmatpush.msra.mxu0 %v1340
    %9237 = vmatpush.msra.mxu0 %v1332
    %9238 = vmatpush.msra.mxu0 %v1324
    %9239 = vmatpush.msra.mxu0 %v1316
    %9240 = vmatpush.msra.mxu0 %v1308
    %9241 = vmatpush.msra.mxu0 %v1300
    %9242 = vmatpush.msra.mxu0 %v1292
    %9243 = vmatpush.msra.mxu0 %v1284
    %9244 = vmatpush.msra.mxu0 %v1276
    %9245 = vmatpush.msra.mxu0 %v1268
    %9246 = vmatpush.msra.mxu0 %v1260
    %9247 = vmatpush.msra.mxu0 %v1252
    %9248 = vmatmul.f32.gmra.mxu0 %v8374
    %v9249 = vpop.f32.mrf.mxu0
    %v9250 = vadd.f32 %v9230, %v9249
    %9251 = vdwg.mxu0
    %9252 = vmatpush.msra.mxu0 %v989
    %9253 = vmatpush.msra.mxu0 %v981
    %9254 = vmatpush.msra.mxu0 %v973
    %9255 = vmatpush.msra.mxu0 %v965
    %9256 = vmatpush.msra.mxu0 %v957
    %9257 = vmatpush.msra.mxu0 %v949
    %9258 = vmatpush.msra.mxu0 %v941
    %9259 = vmatpush.msra.mxu0 %v933
    %9260 = vmatpush.msra.mxu0 %v925
    %9261 = vmatpush.msra.mxu0 %v917
    %9262 = vmatpush.msra.mxu0 %v909
    %9263 = vmatpush.msra.mxu0 %v901
    %9264 = vmatpush.msra.mxu0 %v893
    %9265 = vmatpush.msra.mxu0 %v885
    %9266 = vmatpush.msra.mxu0 %v877
    %9267 = vmatpush.msra.mxu0 %v869
    %9268 = vmatmul.f32.gmra.mxu0 %v8850
    %v9269 = vpop.f32.mrf.mxu0
    %v9270 = vadd.f32 %v1383, %v9269
    %9271 = vdwg.mxu0
    %9272 = vmatpush.msra.mxu0 %v1117
    %9273 = vmatpush.msra.mxu0 %v1109
    %9274 = vmatpush.msra.mxu0 %v1101
    %9275 = vmatpush.msra.mxu0 %v1093
    %9276 = vmatpush.msra.mxu0 %v1085
    %9277 = vmatpush.msra.mxu0 %v1077
    %9278 = vmatpush.msra.mxu0 %v1069
    %9279 = vmatpush.msra.mxu0 %v1061
    %9280 = vmatpush.msra.mxu0 %v1053
    %9281 = vmatpush.msra.mxu0 %v1045
    %9282 = vmatpush.msra.mxu0 %v1037
    %9283 = vmatpush.msra.mxu0 %v1029
    %9284 = vmatpush.msra.mxu0 %v1021
    %9285 = vmatpush.msra.mxu0 %v1013
    %9286 = vmatpush.msra.mxu0 %v1005
    %9287 = vmatpush.msra.mxu0 %v997
    %9288 = vmatmul.f32.gmra.mxu0 %v8851
    %v9289 = vpop.f32.mrf.mxu0
    %v9290 = vadd.f32 %v9270, %v9289
    %9291 = vdwg.mxu0
    %9292 = vmatpush.msra.mxu0 %v1245
    %9293 = vmatpush.msra.mxu0 %v1237
    %9294 = vmatpush.msra.mxu0 %v1229
    %9295 = vmatpush.msra.mxu0 %v1221
    %9296 = vmatpush.msra.mxu0 %v1213
    %9297 = vmatpush.msra.mxu0 %v1205
    %9298 = vmatpush.msra.mxu0 %v1197
    %9299 = vmatpush.msra.mxu0 %v1189
    %9300 = vmatpush.msra.mxu0 %v1181
    %9301 = vmatpush.msra.mxu0 %v1173
    %9302 = vmatpush.msra.mxu0 %v1165
    %9303 = vmatpush.msra.mxu0 %v1157
    %9304 = vmatpush.msra.mxu0 %v1149
    %9305 = vmatpush.msra.mxu0 %v1141
    %9306 = vmatpush.msra.mxu0 %v1133
    %9307 = vmatpush.msra.mxu0 %v1125
    %9308 = vmatmul.f32.gmra.mxu0 %v8373
    %v9309 = vpop.f32.mrf.mxu0
    %v9310 = vadd.f32 %v9290, %v9309
    %9311 = vdwg.mxu0
    %9312 = vmatpush.msra.mxu0 %v1373
    %9313 = vmatpush.msra.mxu0 %v1365
    %9314 = vmatpush.msra.mxu0 %v1357
    %9315 = vmatpush.msra.mxu0 %v1349
    %9316 = vmatpush.msra.mxu0 %v1341
    %9317 = vmatpush.msra.mxu0 %v1333
    %9318 = vmatpush.msra.mxu0 %v1325
    %9319 = vmatpush.msra.mxu0 %v1317
    %9320 = vmatpush.msra.mxu0 %v1309
    %9321 = vmatpush.msra.mxu0 %v1301
    %9322 = vmatpush.msra.mxu0 %v1293
    %9323 = vmatpush.msra.mxu0 %v1285
    %9324 = vmatpush.msra.mxu0 %v1277
    %9325 = vmatpush.msra.mxu0 %v1269
    %9326 = vmatpush.msra.mxu0 %v1261
    %9327 = vmatpush.msra.mxu0 %v1253
    %9328 = vmatmul.f32.gmra.mxu0 %v8374
    %v9329 = vpop.f32.mrf.mxu0
    %v9330 = vadd.f32 %v9310, %v9329
    %9331 = vdwg.mxu0
    %9332 = vmatpush.msra.mxu0 %v990
    %9333 = vmatpush.msra.mxu0 %v982
    %9334 = vmatpush.msra.mxu0 %v974
    %9335 = vmatpush.msra.mxu0 %v966
    %9336 = vmatpush.msra.mxu0 %v958
    %9337 = vmatpush.msra.mxu0 %v950
    %9338 = vmatpush.msra.mxu0 %v942
    %9339 = vmatpush.msra.mxu0 %v934
    %9340 = vmatpush.msra.mxu0 %v926
    %9341 = vmatpush.msra.mxu0 %v918
    %9342 = vmatpush.msra.mxu0 %v910
    %9343 = vmatpush.msra.mxu0 %v902
    %9344 = vmatpush.msra.mxu0 %v894
    %9345 = vmatpush.msra.mxu0 %v886
    %9346 = vmatpush.msra.mxu0 %v878
    %9347 = vmatpush.msra.mxu0 %v870
    %9348 = vmatmul.f32.gmra.mxu0 %v8850
    %v9349 = vpop.f32.mrf.mxu0
    %v9350 = vadd.f32 %v1384, %v9349
    %9351 = vdwg.mxu0
    %9352 = vmatpush.msra.mxu0 %v1118
    %9353 = vmatpush.msra.mxu0 %v1110
    %9354 = vmatpush.msra.mxu0 %v1102
    %9355 = vmatpush.msra.mxu0 %v1094
    %9356 = vmatpush.msra.mxu0 %v1086
    %9357 = vmatpush.msra.mxu0 %v1078
    %9358 = vmatpush.msra.mxu0 %v1070
    %9359 = vmatpush.msra.mxu0 %v1062
    %9360 = vmatpush.msra.mxu0 %v1054
    %9361 = vmatpush.msra.mxu0 %v1046
    %9362 = vmatpush.msra.mxu0 %v1038
    %9363 = vmatpush.msra.mxu0 %v1030
    %9364 = vmatpush.msra.mxu0 %v1022
    %9365 = vmatpush.msra.mxu0 %v1014
    %9366 = vmatpush.msra.mxu0 %v1006
    %9367 = vmatpush.msra.mxu0 %v998
    %9368 = vmatmul.f32.gmra.mxu0 %v8851
    %v9369 = vpop.f32.mrf.mxu0
    %v9370 = vadd.f32 %v9350, %v9369
    %9371 = vdwg.mxu0
    %9372 = vmatpush.msra.mxu0 %v1246
    %9373 = vmatpush.msra.mxu0 %v1238
    %9374 = vmatpush.msra.mxu0 %v1230
    %9375 = vmatpush.msra.mxu0 %v1222
    %9376 = vmatpush.msra.mxu0 %v1214
    %9377 = vmatpush.msra.mxu0 %v1206
    %9378 = vmatpush.msra.mxu0 %v1198
    %9379 = vmatpush.msra.mxu0 %v1190
    %9380 = vmatpush.msra.mxu0 %v1182
    %9381 = vmatpush.msra.mxu0 %v1174
    %9382 = vmatpush.msra.mxu0 %v1166
    %9383 = vmatpush.msra.mxu0 %v1158
    %9384 = vmatpush.msra.mxu0 %v1150
    %9385 = vmatpush.msra.mxu0 %v1142
    %9386 = vmatpush.msra.mxu0 %v1134
    %9387 = vmatpush.msra.mxu0 %v1126
    %9388 = vmatmul.f32.gmra.mxu0 %v8373
    %v9389 = vpop.f32.mrf.mxu0
    %v9390 = vadd.f32 %v9370, %v9389
    %9391 = vdwg.mxu0
    %9392 = vmatpush.msra.mxu0 %v1374
    %9393 = vmatpush.msra.mxu0 %v1366
    %9394 = vmatpush.msra.mxu0 %v1358
    %9395 = vmatpush.msra.mxu0 %v1350
    %9396 = vmatpush.msra.mxu0 %v1342
    %9397 = vmatpush.msra.mxu0 %v1334
    %9398 = vmatpush.msra.mxu0 %v1326
    %9399 = vmatpush.msra.mxu0 %v1318
    %9400 = vmatpush.msra.mxu0 %v1310
    %9401 = vmatpush.msra.mxu0 %v1302
    %9402 = vmatpush.msra.mxu0 %v1294
    %9403 = vmatpush.msra.mxu0 %v1286
    %9404 = vmatpush.msra.mxu0 %v1278
    %9405 = vmatpush.msra.mxu0 %v1270
    %9406 = vmatpush.msra.mxu0 %v1262
    %9407 = vmatpush.msra.mxu0 %v1254
    %9408 = vmatmul.f32.gmra.mxu0 %v8374
    %v9409 = vpop.f32.mrf.mxu0
    %v9410 = vadd.f32 %v9390, %v9409
    %9411 = vdwg.mxu0
    %9412 = vmatpush.msra.mxu0 %v991
    %9413 = vmatpush.msra.mxu0 %v983
    %9414 = vmatpush.msra.mxu0 %v975
    %9415 = vmatpush.msra.mxu0 %v967
    %9416 = vmatpush.msra.mxu0 %v959
    %9417 = vmatpush.msra.mxu0 %v951
    %9418 = vmatpush.msra.mxu0 %v943
    %9419 = vmatpush.msra.mxu0 %v935
    %9420 = vmatpush.msra.mxu0 %v927
    %9421 = vmatpush.msra.mxu0 %v919
    %9422 = vmatpush.msra.mxu0 %v911
    %9423 = vmatpush.msra.mxu0 %v903
    %9424 = vmatpush.msra.mxu0 %v895
    %9425 = vmatpush.msra.mxu0 %v887
    %9426 = vmatpush.msra.mxu0 %v879
    %9427 = vmatpush.msra.mxu0 %v871
    %9428 = vmatmul.f32.gmra.mxu0 %v8850
    %v9429 = vpop.f32.mrf.mxu0
    %v9430 = vadd.f32 %v1385, %v9429
    %9431 = vdwg.mxu0
    %9432 = vmatpush.msra.mxu0 %v1119
    %9433 = vmatpush.msra.mxu0 %v1111
    %9434 = vmatpush.msra.mxu0 %v1103
    %9435 = vmatpush.msra.mxu0 %v1095
    %9436 = vmatpush.msra.mxu0 %v1087
    %9437 = vmatpush.msra.mxu0 %v1079
    %9438 = vmatpush.msra.mxu0 %v1071
    %9439 = vmatpush.msra.mxu0 %v1063
    %9440 = vmatpush.msra.mxu0 %v1055
    %9441 = vmatpush.msra.mxu0 %v1047
    %9442 = vmatpush.msra.mxu0 %v1039
    %9443 = vmatpush.msra.mxu0 %v1031
    %9444 = vmatpush.msra.mxu0 %v1023
    %9445 = vmatpush.msra.mxu0 %v1015
    %9446 = vmatpush.msra.mxu0 %v1007
    %9447 = vmatpush.msra.mxu0 %v999
    %9448 = vmatmul.f32.gmra.mxu0 %v8851
    %v9449 = vpop.f32.mrf.mxu0
    %v9450 = vadd.f32 %v9430, %v9449
    %9451 = vdwg.mxu0
    %9452 = vmatpush.msra.mxu0 %v1247
    %9453 = vmatpush.msra.mxu0 %v1239
    %9454 = vmatpush.msra.mxu0 %v1231
    %9455 = vmatpush.msra.mxu0 %v1223
    %9456 = vmatpush.msra.mxu0 %v1215
    %9457 = vmatpush.msra.mxu0 %v1207
    %9458 = vmatpush.msra.mxu0 %v1199
    %9459 = vmatpush.msra.mxu0 %v1191
    %9460 = vmatpush.msra.mxu0 %v1183
    %9461 = vmatpush.msra.mxu0 %v1175
    %9462 = vmatpush.msra.mxu0 %v1167
    %9463 = vmatpush.msra.mxu0 %v1159
    %9464 = vmatpush.msra.mxu0 %v1151
    %9465 = vmatpush.msra.mxu0 %v1143
    %9466 = vmatpush.msra.mxu0 %v1135
    %9467 = vmatpush.msra.mxu0 %v1127
    %9468 = vmatmul.f32.gmra.mxu0 %v8373
    %v9469 = vpop.f32.mrf.mxu0
    %v9470 = vadd.f32 %v9450, %v9469
    %9471 = vdwg.mxu0
    %9472 = vmatpush.msra.mxu0 %v1375
    %9473 = vmatpush.msra.mxu0 %v1367
    %9474 = vmatpush.msra.mxu0 %v1359
    %9475 = vmatpush.msra.mxu0 %v1351
    %9476 = vmatpush.msra.mxu0 %v1343
    %9477 = vmatpush.msra.mxu0 %v1335
    %9478 = vmatpush.msra.mxu0 %v1327
    %9479 = vmatpush.msra.mxu0 %v1319
    %9480 = vmatpush.msra.mxu0 %v1311
    %9481 = vmatpush.msra.mxu0 %v1303
    %9482 = vmatpush.msra.mxu0 %v1295
    %9483 = vmatpush.msra.mxu0 %v1287
    %9484 = vmatpush.msra.mxu0 %v1279
    %9485 = vmatpush.msra.mxu0 %v1271
    %9486 = vmatpush.msra.mxu0 %v1263
    %9487 = vmatpush.msra.mxu0 %v1255
    %9488 = vmatmul.f32.gmra.mxu0 %v8374
    %v9489 = vpop.f32.mrf.mxu0
    %v9490 = vadd.f32 %v9470, %v9489
    %9491 = vdwg.mxu0
    %v9492 = vxor.u32 %v8930, 2147483648
    %v9493 = vxor.u32 %v9010, 2147483648
    %v9494 = vmul.f32 %v9492, 1.442695
    %v9495 = vpow.pop %v9494
    %v9496 = vmul.f32 %v9493, 1.442695
    %v9497 = vpow.pop %v9496
    %v9498 = vadd.f32 %v9495, 1.0
    %v9499 = vadd.f32 %v9497, 1.0
    %v9500 = vrcp.pop %v9498
    %v9501 = vmul.f32 %v9498, %v9500
    %v9502 = vsub.f32 1.0, %v9501
    %v9503 = vmul.f32 %v9500, %v9502
    %v9504 = vadd.f32 %v9500, %v9503
    %vm9505 = vweird.f32 %v9498
    %vm9506 = vweird.f32 %v9500
    %vm9507 = vmor %vm9505, %vm9506
    %v9508 = vsel %vm9507, %v9500, %v9504
    %v9509 = vand.u32 2147483647, %v9498
    %vm9510 = vcmp.eq.f32.partialorder %v9509, 8.507059e+37
    %v9511 = vand.u32 %v9498, 2147483648
    %v9512 = vor.u32 1.1754944e-38, %v9511
    %v9513 = vsel %vm9510, %v9512, %v9508
    %v9514 = vmul.f32 1.0, %v9513
    %v9515 = vrcp.pop %v9499
    %v9516 = vmul.f32 %v9499, %v9515
    %v9517 = vsub.f32 1.0, %v9516
    %v9518 = vmul.f32 %v9515, %v9517
    %v9519 = vadd.f32 %v9515, %v9518
    %vm9520 = vweird.f32 %v9499
    %vm9521 = vweird.f32 %v9515
    %vm9522 = vmor %vm9520, %vm9521
    %v9523 = vsel %vm9522, %v9515, %v9519
    %v9524 = vand.u32 2147483647, %v9499
    %vm9525 = vcmp.eq.f32.partialorder %v9524, 8.507059e+37
    %v9526 = vand.u32 %v9499, 2147483648
    %v9527 = vor.u32 1.1754944e-38, %v9526
    %v9528 = vsel %vm9525, %v9527, %v9523
    %v9529 = vmul.f32 1.0, %v9528
    %v9530 = vxor.u32 %v9090, 2147483648
    %v9531 = vxor.u32 %v9170, 2147483648
    %v9532 = vmul.f32 %v9530, 1.442695
    %v9533 = vpow.pop %v9532
    %v9534 = vmul.f32 %v9531, 1.442695
    %v9535 = vpow.pop %v9534
    %v9536 = vadd.f32 %v9533, 1.0
    %v9537 = vadd.f32 %v9535, 1.0
    %v9538 = vrcp.pop %v9536
    %v9539 = vmul.f32 %v9536, %v9538
    %v9540 = vsub.f32 1.0, %v9539
    %v9541 = vmul.f32 %v9538, %v9540
    %v9542 = vadd.f32 %v9538, %v9541
    %vm9543 = vweird.f32 %v9536
    %vm9544 = vweird.f32 %v9538
    %vm9545 = vmor %vm9543, %vm9544
    %v9546 = vsel %vm9545, %v9538, %v9542
    %v9547 = vand.u32 2147483647, %v9536
    %vm9548 = vcmp.eq.f32.partialorder %v9547, 8.507059e+37
    %v9549 = vand.u32 %v9536, 2147483648
    %v9550 = vor.u32 1.1754944e-38, %v9549
    %v9551 = vsel %vm9548, %v9550, %v9546
    %v9552 = vmul.f32 1.0, %v9551
    %v9553 = vrcp.pop %v9537
    %v9554 = vmul.f32 %v9537, %v9553
    %v9555 = vsub.f32 1.0, %v9554
    %v9556 = vmul.f32 %v9553, %v9555
    %v9557 = vadd.f32 %v9553, %v9556
    %vm9558 = vweird.f32 %v9537
    %vm9559 = vweird.f32 %v9553
    %vm9560 = vmor %vm9558, %vm9559
    %v9561 = vsel %vm9560, %v9553, %v9557
    %v9562 = vand.u32 2147483647, %v9537
    %vm9563 = vcmp.eq.f32.partialorder %v9562, 8.507059e+37
    %v9564 = vand.u32 %v9537, 2147483648
    %v9565 = vor.u32 1.1754944e-38, %v9564
    %v9566 = vsel %vm9563, %v9565, %v9561
    %v9567 = vmul.f32 1.0, %v9566
    %v9568 = vtanh.pop %v9250
    %v9569 = vtanh.pop %v9330
    %v9570 = vxor.u32 %v9410, 2147483648
    %v9571 = vxor.u32 %v9490, 2147483648
    %v9572 = vmul.f32 %v9570, 1.442695
    %v9573 = vpow.pop %v9572
    %v9574 = vmul.f32 %v9571, 1.442695
    %v9575 = vpow.pop %v9574
    %v9576 = vadd.f32 %v9573, 1.0
    %v9577 = vadd.f32 %v9575, 1.0
    %v9578 = vrcp.pop %v9576
    %v9579 = vmul.f32 %v9576, %v9578
    %v9580 = vsub.f32 1.0, %v9579
    %v9581 = vmul.f32 %v9578, %v9580
    %v9582 = vadd.f32 %v9578, %v9581
    %vm9583 = vweird.f32 %v9576
    %vm9584 = vweird.f32 %v9578
    %vm9585 = vmor %vm9583, %vm9584
    %v9586 = vsel %vm9585, %v9578, %v9582
    %v9587 = vand.u32 2147483647, %v9576
    %vm9588 = vcmp.eq.f32.partialorder %v9587, 8.507059e+37
    %v9589 = vand.u32 %v9576, 2147483648
    %v9590 = vor.u32 1.1754944e-38, %v9589
    %v9591 = vsel %vm9588, %v9590, %v9586
    %v9592 = vmul.f32 1.0, %v9591
    %v9593 = vrcp.pop %v9577
    %v9594 = vmul.f32 %v9577, %v9593
    %v9595 = vsub.f32 1.0, %v9594
    %v9596 = vmul.f32 %v9593, %v9595
    %v9597 = vadd.f32 %v9593, %v9596
    %vm9598 = vweird.f32 %v9577
    %vm9599 = vweird.f32 %v9593
    %vm9600 = vmor %vm9598, %vm9599
    %v9601 = vsel %vm9600, %v9593, %v9597
    %v9602 = vand.u32 2147483647, %v9577
    %vm9603 = vcmp.eq.f32.partialorder %v9602, 8.507059e+37
    %v9604 = vand.u32 %v9577, 2147483648
    %v9605 = vor.u32 1.1754944e-38, %v9604
    %v9606 = vsel %vm9603, %v9605, %v9601
    %v9607 = vmul.f32 1.0, %v9606
    %v9608 = vmul.f32 %v9552, %v8369
    %v9609 = vmul.f32 %v9567, %v8370
    %v9610 = vmul.f32 %v9514, %v9568
    %v9611 = vmul.f32 %v9529, %v9569
    %v9612 = vadd.f32 %v9608, %v9610
    %v9613 = vadd.f32 %v9609, %v9611
    %v9614 = vtanh.pop %v9612
    %v9615 = vtanh.pop %v9613
    %v9616 = vmul.f32 %v9592, %v9614
    %v9617 = vmul.f32 %v9607, %v9615
    %s9618 = scalar_lea.vmem %s0, 56
    %v9619 = vld [vmem:[%s9618] sm:$0xff]
    %9621 = vset.pattern.permute.xlu0 0
    %9622 = vperm.xlu0 %9621, %v9619
    %v9623 = vpop.permute.xlu0 %9622
    %v9625 = vmul.f32 %v9623, %v104
    %v9626 = vmul.f32 %v9623, %v105
    %v9627 = vmul.f32 %v9623, %v106
    %v9628 = vmul.f32 %v9623, %v107
    %v9629 = vmul.f32 %v9623, %v108
    %v9630 = vmul.f32 %v9623, %v109
    %v9631 = vmul.f32 %v9623, %v110
    %v9632 = vmul.f32 %v9623, %v111
    %v9633 = vadd.f32 %v9625, %v130
    %v9634 = vadd.f32 %v9626, %v131
    %v9635 = vadd.f32 %v9627, %v132
    %v9636 = vadd.f32 %v9628, %v133
    %v9637 = vadd.f32 %v9629, %v134
    %v9638 = vadd.f32 %v9630, %v135
    %v9639 = vadd.f32 %v9631, %v136
    %v9640 = vadd.f32 %v9632, %v137
    %9641 = vmatpush.msra.mxu0 %v274
    %9642 = vmatpush.msra.mxu0 %v266
    %9643 = vmatpush.msra.mxu0 %v258
    %9644 = vmatpush.msra.mxu0 %v250
    %9645 = vmatpush.msra.mxu0 %v242
    %9646 = vmatpush.msra.mxu0 %v234
    %9647 = vmatpush.msra.mxu0 %v226
    %9648 = vmatpush.msra.mxu0 %v218
    %9649 = vmatpush.msra.mxu0 %v210
    %9650 = vmatpush.msra.mxu0 %v202
    %9651 = vmatpush.msra.mxu0 %v194
    %9652 = vmatpush.msra.mxu0 %v186
    %9653 = vmatpush.msra.mxu0 %v178
    %9654 = vmatpush.msra.mxu0 %v170
    %9655 = vmatpush.msra.mxu0 %v162
    %9656 = vmatpush.msra.mxu0 %v154
    %9657 = vmatmul.f32.gmra.mxu0 %v8850
    %v9658 = vpop.f32.mrf.mxu0
    %v9659 = vadd.f32 0.0, %v9658
    %9660 = vdwg.mxu0
    %9661 = vmatpush.msra.mxu0 %v402
    %9662 = vmatpush.msra.mxu0 %v394
    %9663 = vmatpush.msra.mxu0 %v386
    %9664 = vmatpush.msra.mxu0 %v378
    %9665 = vmatpush.msra.mxu0 %v370
    %9666 = vmatpush.msra.mxu0 %v362
    %9667 = vmatpush.msra.mxu0 %v354
    %9668 = vmatpush.msra.mxu0 %v346
    %9669 = vmatpush.msra.mxu0 %v338
    %9670 = vmatpush.msra.mxu0 %v330
    %9671 = vmatpush.msra.mxu0 %v322
    %9672 = vmatpush.msra.mxu0 %v314
    %9673 = vmatpush.msra.mxu0 %v306
    %9674 = vmatpush.msra.mxu0 %v298
    %9675 = vmatpush.msra.mxu0 %v290
    %9676 = vmatpush.msra.mxu0 %v282
    %9677 = vmatmul.f32.gmra.mxu0 %v8851
    %v9678 = vpop.f32.mrf.mxu0
    %v9679 = vadd.f32 %v9659, %v9678
    %9680 = vdwg.mxu0
    %9681 = vmatpush.msra.mxu0 %v275
    %9682 = vmatpush.msra.mxu0 %v267
    %9683 = vmatpush.msra.mxu0 %v259
    %9684 = vmatpush.msra.mxu0 %v251
    %9685 = vmatpush.msra.mxu0 %v243
    %9686 = vmatpush.msra.mxu0 %v235
    %9687 = vmatpush.msra.mxu0 %v227
    %9688 = vmatpush.msra.mxu0 %v219
    %9689 = vmatpush.msra.mxu0 %v211
    %9690 = vmatpush.msra.mxu0 %v203
    %9691 = vmatpush.msra.mxu0 %v195
    %9692 = vmatpush.msra.mxu0 %v187
    %9693 = vmatpush.msra.mxu0 %v179
    %9694 = vmatpush.msra.mxu0 %v171
    %9695 = vmatpush.msra.mxu0 %v163
    %9696 = vmatpush.msra.mxu0 %v155
    %9697 = vmatmul.f32.gmra.mxu0 %v8850
    %v9698 = vpop.f32.mrf.mxu0
    %v9699 = vadd.f32 0.0, %v9698
    %9700 = vdwg.mxu0
    %9701 = vmatpush.msra.mxu0 %v403
    %9702 = vmatpush.msra.mxu0 %v395
    %9703 = vmatpush.msra.mxu0 %v387
    %9704 = vmatpush.msra.mxu0 %v379
    %9705 = vmatpush.msra.mxu0 %v371
    %9706 = vmatpush.msra.mxu0 %v363
    %9707 = vmatpush.msra.mxu0 %v355
    %9708 = vmatpush.msra.mxu0 %v347
    %9709 = vmatpush.msra.mxu0 %v339
    %9710 = vmatpush.msra.mxu0 %v331
    %9711 = vmatpush.msra.mxu0 %v323
    %9712 = vmatpush.msra.mxu0 %v315
    %9713 = vmatpush.msra.mxu0 %v307
    %9714 = vmatpush.msra.mxu0 %v299
    %9715 = vmatpush.msra.mxu0 %v291
    %9716 = vmatpush.msra.mxu0 %v283
    %9717 = vmatmul.f32.gmra.mxu0 %v8851
    %v9718 = vpop.f32.mrf.mxu0
    %v9719 = vadd.f32 %v9699, %v9718
    %9720 = vdwg.mxu0
    %9721 = vmatpush.msra.mxu0 %v276
    %9722 = vmatpush.msra.mxu0 %v268
    %9723 = vmatpush.msra.mxu0 %v260
    %9724 = vmatpush.msra.mxu0 %v252
    %9725 = vmatpush.msra.mxu0 %v244
    %9726 = vmatpush.msra.mxu0 %v236
    %9727 = vmatpush.msra.mxu0 %v228
    %9728 = vmatpush.msra.mxu0 %v220
    %9729 = vmatpush.msra.mxu0 %v212
    %9730 = vmatpush.msra.mxu0 %v204
    %9731 = vmatpush.msra.mxu0 %v196
    %9732 = vmatpush.msra.mxu0 %v188
    %9733 = vmatpush.msra.mxu0 %v180
    %9734 = vmatpush.msra.mxu0 %v172
    %9735 = vmatpush.msra.mxu0 %v164
    %9736 = vmatpush.msra.mxu0 %v156
    %9737 = vmatmul.f32.gmra.mxu0 %v8850
    %v9738 = vpop.f32.mrf.mxu0
    %v9739 = vadd.f32 0.0, %v9738
    %9740 = vdwg.mxu0
    %9741 = vmatpush.msra.mxu0 %v404
    %9742 = vmatpush.msra.mxu0 %v396
    %9743 = vmatpush.msra.mxu0 %v388
    %9744 = vmatpush.msra.mxu0 %v380
    %9745 = vmatpush.msra.mxu0 %v372
    %9746 = vmatpush.msra.mxu0 %v364
    %9747 = vmatpush.msra.mxu0 %v356
    %9748 = vmatpush.msra.mxu0 %v348
    %9749 = vmatpush.msra.mxu0 %v340
    %9750 = vmatpush.msra.mxu0 %v332
    %9751 = vmatpush.msra.mxu0 %v324
    %9752 = vmatpush.msra.mxu0 %v316
    %9753 = vmatpush.msra.mxu0 %v308
    %9754 = vmatpush.msra.mxu0 %v300
    %9755 = vmatpush.msra.mxu0 %v292
    %9756 = vmatpush.msra.mxu0 %v284
    %9757 = vmatmul.f32.gmra.mxu0 %v8851
    %v9758 = vpop.f32.mrf.mxu0
    %v9759 = vadd.f32 %v9739, %v9758
    %9760 = vdwg.mxu0
    %9761 = vmatpush.msra.mxu0 %v277
    %9762 = vmatpush.msra.mxu0 %v269
    %9763 = vmatpush.msra.mxu0 %v261
    %9764 = vmatpush.msra.mxu0 %v253
    %9765 = vmatpush.msra.mxu0 %v245
    %9766 = vmatpush.msra.mxu0 %v237
    %9767 = vmatpush.msra.mxu0 %v229
    %9768 = vmatpush.msra.mxu0 %v221
    %9769 = vmatpush.msra.mxu0 %v213
    %9770 = vmatpush.msra.mxu0 %v205
    %9771 = vmatpush.msra.mxu0 %v197
    %9772 = vmatpush.msra.mxu0 %v189
    %9773 = vmatpush.msra.mxu0 %v181
    %9774 = vmatpush.msra.mxu0 %v173
    %9775 = vmatpush.msra.mxu0 %v165
    %9776 = vmatpush.msra.mxu0 %v157
    %9777 = vmatmul.f32.gmra.mxu0 %v8850
    %v9778 = vpop.f32.mrf.mxu0
    %v9779 = vadd.f32 0.0, %v9778
    %9780 = vdwg.mxu0
    %9781 = vmatpush.msra.mxu0 %v405
    %9782 = vmatpush.msra.mxu0 %v397
    %9783 = vmatpush.msra.mxu0 %v389
    %9784 = vmatpush.msra.mxu0 %v381
    %9785 = vmatpush.msra.mxu0 %v373
    %9786 = vmatpush.msra.mxu0 %v365
    %9787 = vmatpush.msra.mxu0 %v357
    %9788 = vmatpush.msra.mxu0 %v349
    %9789 = vmatpush.msra.mxu0 %v341
    %9790 = vmatpush.msra.mxu0 %v333
    %9791 = vmatpush.msra.mxu0 %v325
    %9792 = vmatpush.msra.mxu0 %v317
    %9793 = vmatpush.msra.mxu0 %v309
    %9794 = vmatpush.msra.mxu0 %v301
    %9795 = vmatpush.msra.mxu0 %v293
    %9796 = vmatpush.msra.mxu0 %v285
    %9797 = vmatmul.f32.gmra.mxu0 %v8851
    %v9798 = vpop.f32.mrf.mxu0
    %v9799 = vadd.f32 %v9779, %v9798
    %9800 = vdwg.mxu0
    %9801 = vmatpush.msra.mxu0 %v278
    %9802 = vmatpush.msra.mxu0 %v270
    %9803 = vmatpush.msra.mxu0 %v262
    %9804 = vmatpush.msra.mxu0 %v254
    %9805 = vmatpush.msra.mxu0 %v246
    %9806 = vmatpush.msra.mxu0 %v238
    %9807 = vmatpush.msra.mxu0 %v230
    %9808 = vmatpush.msra.mxu0 %v222
    %9809 = vmatpush.msra.mxu0 %v214
    %9810 = vmatpush.msra.mxu0 %v206
    %9811 = vmatpush.msra.mxu0 %v198
    %9812 = vmatpush.msra.mxu0 %v190
    %9813 = vmatpush.msra.mxu0 %v182
    %9814 = vmatpush.msra.mxu0 %v174
    %9815 = vmatpush.msra.mxu0 %v166
    %9816 = vmatpush.msra.mxu0 %v158
    %9817 = vmatmul.f32.gmra.mxu0 %v8850
    %v9818 = vpop.f32.mrf.mxu0
    %v9819 = vadd.f32 0.0, %v9818
    %9820 = vdwg.mxu0
    %9821 = vmatpush.msra.mxu0 %v406
    %9822 = vmatpush.msra.mxu0 %v398
    %9823 = vmatpush.msra.mxu0 %v390
    %9824 = vmatpush.msra.mxu0 %v382
    %9825 = vmatpush.msra.mxu0 %v374
    %9826 = vmatpush.msra.mxu0 %v366
    %9827 = vmatpush.msra.mxu0 %v358
    %9828 = vmatpush.msra.mxu0 %v350
    %9829 = vmatpush.msra.mxu0 %v342
    %9830 = vmatpush.msra.mxu0 %v334
    %9831 = vmatpush.msra.mxu0 %v326
    %9832 = vmatpush.msra.mxu0 %v318
    %9833 = vmatpush.msra.mxu0 %v310
    %9834 = vmatpush.msra.mxu0 %v302
    %9835 = vmatpush.msra.mxu0 %v294
    %9836 = vmatpush.msra.mxu0 %v286
    %9837 = vmatmul.f32.gmra.mxu0 %v8851
    %v9838 = vpop.f32.mrf.mxu0
    %v9839 = vadd.f32 %v9819, %v9838
    %9840 = vdwg.mxu0
    %9841 = vmatpush.msra.mxu0 %v279
    %9842 = vmatpush.msra.mxu0 %v271
    %9843 = vmatpush.msra.mxu0 %v263
    %9844 = vmatpush.msra.mxu0 %v255
    %9845 = vmatpush.msra.mxu0 %v247
    %9846 = vmatpush.msra.mxu0 %v239
    %9847 = vmatpush.msra.mxu0 %v231
    %9848 = vmatpush.msra.mxu0 %v223
    %9849 = vmatpush.msra.mxu0 %v215
    %9850 = vmatpush.msra.mxu0 %v207
    %9851 = vmatpush.msra.mxu0 %v199
    %9852 = vmatpush.msra.mxu0 %v191
    %9853 = vmatpush.msra.mxu0 %v183
    %9854 = vmatpush.msra.mxu0 %v175
    %9855 = vmatpush.msra.mxu0 %v167
    %9856 = vmatpush.msra.mxu0 %v159
    %9857 = vmatmul.f32.gmra.mxu0 %v8850
    %v9858 = vpop.f32.mrf.mxu0
    %v9859 = vadd.f32 0.0, %v9858
    %9860 = vdwg.mxu0
    %9861 = vmatpush.msra.mxu0 %v407
    %9862 = vmatpush.msra.mxu0 %v399
    %9863 = vmatpush.msra.mxu0 %v391
    %9864 = vmatpush.msra.mxu0 %v383
    %9865 = vmatpush.msra.mxu0 %v375
    %9866 = vmatpush.msra.mxu0 %v367
    %9867 = vmatpush.msra.mxu0 %v359
    %9868 = vmatpush.msra.mxu0 %v351
    %9869 = vmatpush.msra.mxu0 %v343
    %9870 = vmatpush.msra.mxu0 %v335
    %9871 = vmatpush.msra.mxu0 %v327
    %9872 = vmatpush.msra.mxu0 %v319
    %9873 = vmatpush.msra.mxu0 %v311
    %9874 = vmatpush.msra.mxu0 %v303
    %9875 = vmatpush.msra.mxu0 %v295
    %9876 = vmatpush.msra.mxu0 %v287
    %9877 = vmatmul.f32.gmra.mxu0 %v8851
    %v9878 = vpop.f32.mrf.mxu0
    %v9879 = vadd.f32 %v9859, %v9878
    %9880 = vdwg.mxu0
    %9881 = vmatpush.msra.mxu0 %v280
    %9882 = vmatpush.msra.mxu0 %v272
    %9883 = vmatpush.msra.mxu0 %v264
    %9884 = vmatpush.msra.mxu0 %v256
    %9885 = vmatpush.msra.mxu0 %v248
    %9886 = vmatpush.msra.mxu0 %v240
    %9887 = vmatpush.msra.mxu0 %v232
    %9888 = vmatpush.msra.mxu0 %v224
    %9889 = vmatpush.msra.mxu0 %v216
    %9890 = vmatpush.msra.mxu0 %v208
    %9891 = vmatpush.msra.mxu0 %v200
    %9892 = vmatpush.msra.mxu0 %v192
    %9893 = vmatpush.msra.mxu0 %v184
    %9894 = vmatpush.msra.mxu0 %v176
    %9895 = vmatpush.msra.mxu0 %v168
    %9896 = vmatpush.msra.mxu0 %v160
    %9897 = vmatmul.f32.gmra.mxu0 %v8850
    %v9898 = vpop.f32.mrf.mxu0
    %v9899 = vadd.f32 0.0, %v9898
    %9900 = vdwg.mxu0
    %9901 = vmatpush.msra.mxu0 %v408
    %9902 = vmatpush.msra.mxu0 %v400
    %9903 = vmatpush.msra.mxu0 %v392
    %9904 = vmatpush.msra.mxu0 %v384
    %9905 = vmatpush.msra.mxu0 %v376
    %9906 = vmatpush.msra.mxu0 %v368
    %9907 = vmatpush.msra.mxu0 %v360
    %9908 = vmatpush.msra.mxu0 %v352
    %9909 = vmatpush.msra.mxu0 %v344
    %9910 = vmatpush.msra.mxu0 %v336
    %9911 = vmatpush.msra.mxu0 %v328
    %9912 = vmatpush.msra.mxu0 %v320
    %9913 = vmatpush.msra.mxu0 %v312
    %9914 = vmatpush.msra.mxu0 %v304
    %9915 = vmatpush.msra.mxu0 %v296
    %9916 = vmatpush.msra.mxu0 %v288
    %9917 = vmatmul.f32.gmra.mxu0 %v8851
    %v9918 = vpop.f32.mrf.mxu0
    %v9919 = vadd.f32 %v9899, %v9918
    %9920 = vdwg.mxu0
    %9921 = vmatpush.msra.mxu0 %v281
    %9922 = vmatpush.msra.mxu0 %v273
    %9923 = vmatpush.msra.mxu0 %v265
    %9924 = vmatpush.msra.mxu0 %v257
    %9925 = vmatpush.msra.mxu0 %v249
    %9926 = vmatpush.msra.mxu0 %v241
    %9927 = vmatpush.msra.mxu0 %v233
    %9928 = vmatpush.msra.mxu0 %v225
    %9929 = vmatpush.msra.mxu0 %v217
    %9930 = vmatpush.msra.mxu0 %v209
    %9931 = vmatpush.msra.mxu0 %v201
    %9932 = vmatpush.msra.mxu0 %v193
    %9933 = vmatpush.msra.mxu0 %v185
    %9934 = vmatpush.msra.mxu0 %v177
    %9935 = vmatpush.msra.mxu0 %v169
    %9936 = vmatpush.msra.mxu0 %v161
    %9937 = vmatmul.f32.gmra.mxu0 %v8850
    %v9938 = vpop.f32.mrf.mxu0
    %v9939 = vadd.f32 0.0, %v9938
    %9940 = vdwg.mxu0
    %9941 = vmatpush.msra.mxu0 %v409
    %9942 = vmatpush.msra.mxu0 %v401
    %9943 = vmatpush.msra.mxu0 %v393
    %9944 = vmatpush.msra.mxu0 %v385
    %9945 = vmatpush.msra.mxu0 %v377
    %9946 = vmatpush.msra.mxu0 %v369
    %9947 = vmatpush.msra.mxu0 %v361
    %9948 = vmatpush.msra.mxu0 %v353
    %9949 = vmatpush.msra.mxu0 %v345
    %9950 = vmatpush.msra.mxu0 %v337
    %9951 = vmatpush.msra.mxu0 %v329
    %9952 = vmatpush.msra.mxu0 %v321
    %9953 = vmatpush.msra.mxu0 %v313
    %9954 = vmatpush.msra.mxu0 %v305
    %9955 = vmatpush.msra.mxu0 %v297
    %9956 = vmatpush.msra.mxu0 %v289
    %9957 = vmatmul.f32.gmra.mxu0 %v8851
    %v9958 = vpop.f32.mrf.mxu0
    %v9959 = vadd.f32 %v9939, %v9958
    %9960 = vdwg.mxu0
    %v9961 = vadd.f32 %v9633, %v9679
    %v9962 = vadd.f32 %v9634, %v9719
    %v9963 = vadd.f32 %v9635, %v9759
    %v9964 = vadd.f32 %v9636, %v9799
    %v9965 = vadd.f32 %v9637, %v9839
    %v9966 = vadd.f32 %v9638, %v9879
    %v9967 = vadd.f32 %v9639, %v9919
    %v9968 = vadd.f32 %v9640, %v9959
    %v9969 = vxor.u32 %v9961, 2147483648
    %v9970 = vxor.u32 %v9962, 2147483648
    %v9971 = vmul.f32 %v9969, 1.442695
    %v9972 = vpow.pop %v9971
    %v9973 = vmul.f32 %v9970, 1.442695
    %v9974 = vpow.pop %v9973
    %v9975 = vadd.f32 %v9972, 1.0
    %v9976 = vadd.f32 %v9974, 1.0
    %v9977 = vrcp.pop %v9975
    %v9978 = vmul.f32 %v9975, %v9977
    %v9979 = vsub.f32 1.0, %v9978
    %v9980 = vmul.f32 %v9977, %v9979
    %v9981 = vadd.f32 %v9977, %v9980
    %vm9982 = vweird.f32 %v9975
    %vm9983 = vweird.f32 %v9977
    %vm9984 = vmor %vm9982, %vm9983
    %v9985 = vsel %vm9984, %v9977, %v9981
    %v9986 = vand.u32 2147483647, %v9975
    %vm9987 = vcmp.eq.f32.partialorder %v9986, 8.507059e+37
    %v9988 = vand.u32 %v9975, 2147483648
    %v9989 = vor.u32 1.1754944e-38, %v9988
    %v9990 = vsel %vm9987, %v9989, %v9985
    %v9991 = vmul.f32 1.0, %v9990
    %v9992 = vrcp.pop %v9976
    %v9993 = vmul.f32 %v9976, %v9992
    %v9994 = vsub.f32 1.0, %v9993
    %v9995 = vmul.f32 %v9992, %v9994
    %v9996 = vadd.f32 %v9992, %v9995
    %vm9997 = vweird.f32 %v9976
    %vm9998 = vweird.f32 %v9992
    %vm9999 = vmor %vm9997, %vm9998
    %v10000 = vsel %vm9999, %v9992, %v9996
    %v10001 = vand.u32 2147483647, %v9976
    %vm10002 = vcmp.eq.f32.partialorder %v10001, 8.507059e+37
    %v10003 = vand.u32 %v9976, 2147483648
    %v10004 = vor.u32 1.1754944e-38, %v10003
    %v10005 = vsel %vm10002, %v10004, %v10000
    %v10006 = vmul.f32 1.0, %v10005
    %v10007 = vxor.u32 %v9963, 2147483648
    %v10008 = vxor.u32 %v9964, 2147483648
    %v10009 = vmul.f32 %v10007, 1.442695
    %v10010 = vpow.pop %v10009
    %v10011 = vmul.f32 %v10008, 1.442695
    %v10012 = vpow.pop %v10011
    %v10013 = vadd.f32 %v10010, 1.0
    %v10014 = vadd.f32 %v10012, 1.0
    %v10015 = vrcp.pop %v10013
    %v10016 = vmul.f32 %v10013, %v10015
    %v10017 = vsub.f32 1.0, %v10016
    %v10018 = vmul.f32 %v10015, %v10017
    %v10019 = vadd.f32 %v10015, %v10018
    %vm10020 = vweird.f32 %v10013
    %vm10021 = vweird.f32 %v10015
    %vm10022 = vmor %vm10020, %vm10021
    %v10023 = vsel %vm10022, %v10015, %v10019
    %v10024 = vand.u32 2147483647, %v10013
    %vm10025 = vcmp.eq.f32.partialorder %v10024, 8.507059e+37
    %v10026 = vand.u32 %v10013, 2147483648
    %v10027 = vor.u32 1.1754944e-38, %v10026
    %v10028 = vsel %vm10025, %v10027, %v10023
    %v10029 = vmul.f32 1.0, %v10028
    %v10030 = vrcp.pop %v10014
    %v10031 = vmul.f32 %v10014, %v10030
    %v10032 = vsub.f32 1.0, %v10031
    %v10033 = vmul.f32 %v10030, %v10032
    %v10034 = vadd.f32 %v10030, %v10033
    %vm10035 = vweird.f32 %v10014
    %vm10036 = vweird.f32 %v10030
    %vm10037 = vmor %vm10035, %vm10036
    %v10038 = vsel %vm10037, %v10030, %v10034
    %v10039 = vand.u32 2147483647, %v10014
    %vm10040 = vcmp.eq.f32.partialorder %v10039, 8.507059e+37
    %v10041 = vand.u32 %v10014, 2147483648
    %v10042 = vor.u32 1.1754944e-38, %v10041
    %v10043 = vsel %vm10040, %v10042, %v10038
    %v10044 = vmul.f32 1.0, %v10043
    %v10045 = vtanh.pop %v9965
    %v10046 = vtanh.pop %v9966
    %v10047 = vxor.u32 %v9967, 2147483648
    %v10048 = vxor.u32 %v9968, 2147483648
    %v10049 = vmul.f32 %v10047, 1.442695
    %v10050 = vpow.pop %v10049
    %v10051 = vmul.f32 %v10048, 1.442695
    %v10052 = vpow.pop %v10051
    %v10053 = vadd.f32 %v10050, 1.0
    %v10054 = vadd.f32 %v10052, 1.0
    %v10055 = vrcp.pop %v10053
    %v10056 = vmul.f32 %v10053, %v10055
    %v10057 = vsub.f32 1.0, %v10056
    %v10058 = vmul.f32 %v10055, %v10057
    %v10059 = vadd.f32 %v10055, %v10058
    %vm10060 = vweird.f32 %v10053
    %vm10061 = vweird.f32 %v10055
    %vm10062 = vmor %vm10060, %vm10061
    %v10063 = vsel %vm10062, %v10055, %v10059
    %v10064 = vand.u32 2147483647, %v10053
    %vm10065 = vcmp.eq.f32.partialorder %v10064, 8.507059e+37
    %v10066 = vand.u32 %v10053, 2147483648
    %v10067 = vor.u32 1.1754944e-38, %v10066
    %v10068 = vsel %vm10065, %v10067, %v10063
    %v10069 = vmul.f32 1.0, %v10068
    %v10070 = vrcp.pop %v10054
    %v10071 = vmul.f32 %v10054, %v10070
    %v10072 = vsub.f32 1.0, %v10071
    %v10073 = vmul.f32 %v10070, %v10072
    %v10074 = vadd.f32 %v10070, %v10073
    %vm10075 = vweird.f32 %v10054
    %vm10076 = vweird.f32 %v10070
    %vm10077 = vmor %vm10075, %vm10076
    %v10078 = vsel %vm10077, %v10070, %v10074
    %v10079 = vand.u32 2147483647, %v10054
    %vm10080 = vcmp.eq.f32.partialorder %v10079, 8.507059e+37
    %v10081 = vand.u32 %v10054, 2147483648
    %v10082 = vor.u32 1.1754944e-38, %v10081
    %v10083 = vsel %vm10080, %v10082, %v10078
    %v10084 = vmul.f32 1.0, %v10083
    %v10085 = vmul.f32 %v10029, %v8846
    %v10086 = vmul.f32 %v10044, %v8847
    %v10087 = vmul.f32 %v9991, %v10045
    %v10088 = vmul.f32 %v10006, %v10046
    %v10089 = vadd.f32 %v10085, %v10087
    %v10090 = vadd.f32 %v10086, %v10088
    %v10091 = vtanh.pop %v10089
    %v10092 = vtanh.pop %v10090
    %v10093 = vmul.f32 %v10069, %v10091
    %v10094 = vmul.f32 %v10084, %v10092
    %10095 = vmatpush.msra.mxu0 %v984
    %10096 = vmatpush.msra.mxu0 %v976
    %10097 = vmatpush.msra.mxu0 %v968
    %10098 = vmatpush.msra.mxu0 %v960
    %10099 = vmatpush.msra.mxu0 %v952
    %10100 = vmatpush.msra.mxu0 %v944
    %10101 = vmatpush.msra.mxu0 %v936
    %10102 = vmatpush.msra.mxu0 %v928
    %10103 = vmatpush.msra.mxu0 %v920
    %10104 = vmatpush.msra.mxu0 %v912
    %10105 = vmatpush.msra.mxu0 %v904
    %10106 = vmatpush.msra.mxu0 %v896
    %10107 = vmatpush.msra.mxu0 %v888
    %10108 = vmatpush.msra.mxu0 %v880
    %10109 = vmatpush.msra.mxu0 %v872
    %10110 = vmatpush.msra.mxu0 %v864
    %10111 = vmatmul.f32.gmra.mxu0 %v10093
    %v10112 = vpop.f32.mrf.mxu0
    %v10113 = vadd.f32 %v1378, %v10112
    %10114 = vdwg.mxu0
    %10115 = vmatpush.msra.mxu0 %v1112
    %10116 = vmatpush.msra.mxu0 %v1104
    %10117 = vmatpush.msra.mxu0 %v1096
    %10118 = vmatpush.msra.mxu0 %v1088
    %10119 = vmatpush.msra.mxu0 %v1080
    %10120 = vmatpush.msra.mxu0 %v1072
    %10121 = vmatpush.msra.mxu0 %v1064
    %10122 = vmatpush.msra.mxu0 %v1056
    %10123 = vmatpush.msra.mxu0 %v1048
    %10124 = vmatpush.msra.mxu0 %v1040
    %10125 = vmatpush.msra.mxu0 %v1032
    %10126 = vmatpush.msra.mxu0 %v1024
    %10127 = vmatpush.msra.mxu0 %v1016
    %10128 = vmatpush.msra.mxu0 %v1008
    %10129 = vmatpush.msra.mxu0 %v1000
    %10130 = vmatpush.msra.mxu0 %v992
    %10131 = vmatmul.f32.gmra.mxu0 %v10094
    %v10132 = vpop.f32.mrf.mxu0
    %v10133 = vadd.f32 %v10113, %v10132
    %10134 = vdwg.mxu0
    %10135 = vmatpush.msra.mxu0 %v1240
    %10136 = vmatpush.msra.mxu0 %v1232
    %10137 = vmatpush.msra.mxu0 %v1224
    %10138 = vmatpush.msra.mxu0 %v1216
    %10139 = vmatpush.msra.mxu0 %v1208
    %10140 = vmatpush.msra.mxu0 %v1200
    %10141 = vmatpush.msra.mxu0 %v1192
    %10142 = vmatpush.msra.mxu0 %v1184
    %10143 = vmatpush.msra.mxu0 %v1176
    %10144 = vmatpush.msra.mxu0 %v1168
    %10145 = vmatpush.msra.mxu0 %v1160
    %10146 = vmatpush.msra.mxu0 %v1152
    %10147 = vmatpush.msra.mxu0 %v1144
    %10148 = vmatpush.msra.mxu0 %v1136
    %10149 = vmatpush.msra.mxu0 %v1128
    %10150 = vmatpush.msra.mxu0 %v1120
    %10151 = vmatmul.f32.gmra.mxu0 %v9616
    %v10152 = vpop.f32.mrf.mxu0
    %v10153 = vadd.f32 %v10133, %v10152
    %10154 = vdwg.mxu0
    %10155 = vmatpush.msra.mxu0 %v1368
    %10156 = vmatpush.msra.mxu0 %v1360
    %10157 = vmatpush.msra.mxu0 %v1352
    %10158 = vmatpush.msra.mxu0 %v1344
    %10159 = vmatpush.msra.mxu0 %v1336
    %10160 = vmatpush.msra.mxu0 %v1328
    %10161 = vmatpush.msra.mxu0 %v1320
    %10162 = vmatpush.msra.mxu0 %v1312
    %10163 = vmatpush.msra.mxu0 %v1304
    %10164 = vmatpush.msra.mxu0 %v1296
    %10165 = vmatpush.msra.mxu0 %v1288
    %10166 = vmatpush.msra.mxu0 %v1280
    %10167 = vmatpush.msra.mxu0 %v1272
    %10168 = vmatpush.msra.mxu0 %v1264
    %10169 = vmatpush.msra.mxu0 %v1256
    %10170 = vmatpush.msra.mxu0 %v1248
    %10171 = vmatmul.f32.gmra.mxu0 %v9617
    %v10172 = vpop.f32.mrf.mxu0
    %v10173 = vadd.f32 %v10153, %v10172
    %10174 = vdwg.mxu0
    %10175 = vmatpush.msra.mxu0 %v985
    %10176 = vmatpush.msra.mxu0 %v977
    %10177 = vmatpush.msra.mxu0 %v969
    %10178 = vmatpush.msra.mxu0 %v961
    %10179 = vmatpush.msra.mxu0 %v953
    %10180 = vmatpush.msra.mxu0 %v945
    %10181 = vmatpush.msra.mxu0 %v937
    %10182 = vmatpush.msra.mxu0 %v929
    %10183 = vmatpush.msra.mxu0 %v921
    %10184 = vmatpush.msra.mxu0 %v913
    %10185 = vmatpush.msra.mxu0 %v905
    %10186 = vmatpush.msra.mxu0 %v897
    %10187 = vmatpush.msra.mxu0 %v889
    %10188 = vmatpush.msra.mxu0 %v881
    %10189 = vmatpush.msra.mxu0 %v873
    %10190 = vmatpush.msra.mxu0 %v865
    %10191 = vmatmul.f32.gmra.mxu0 %v10093
    %v10192 = vpop.f32.mrf.mxu0
    %v10193 = vadd.f32 %v1379, %v10192
    %10194 = vdwg.mxu0
    %10195 = vmatpush.msra.mxu0 %v1113
    %10196 = vmatpush.msra.mxu0 %v1105
    %10197 = vmatpush.msra.mxu0 %v1097
    %10198 = vmatpush.msra.mxu0 %v1089
    %10199 = vmatpush.msra.mxu0 %v1081
    %10200 = vmatpush.msra.mxu0 %v1073
    %10201 = vmatpush.msra.mxu0 %v1065
    %10202 = vmatpush.msra.mxu0 %v1057
    %10203 = vmatpush.msra.mxu0 %v1049
    %10204 = vmatpush.msra.mxu0 %v1041
    %10205 = vmatpush.msra.mxu0 %v1033
    %10206 = vmatpush.msra.mxu0 %v1025
    %10207 = vmatpush.msra.mxu0 %v1017
    %10208 = vmatpush.msra.mxu0 %v1009
    %10209 = vmatpush.msra.mxu0 %v1001
    %10210 = vmatpush.msra.mxu0 %v993
    %10211 = vmatmul.f32.gmra.mxu0 %v10094
    %v10212 = vpop.f32.mrf.mxu0
    %v10213 = vadd.f32 %v10193, %v10212
    %10214 = vdwg.mxu0
    %10215 = vmatpush.msra.mxu0 %v1241
    %10216 = vmatpush.msra.mxu0 %v1233
    %10217 = vmatpush.msra.mxu0 %v1225
    %10218 = vmatpush.msra.mxu0 %v1217
    %10219 = vmatpush.msra.mxu0 %v1209
    %10220 = vmatpush.msra.mxu0 %v1201
    %10221 = vmatpush.msra.mxu0 %v1193
    %10222 = vmatpush.msra.mxu0 %v1185
    %10223 = vmatpush.msra.mxu0 %v1177
    %10224 = vmatpush.msra.mxu0 %v1169
    %10225 = vmatpush.msra.mxu0 %v1161
    %10226 = vmatpush.msra.mxu0 %v1153
    %10227 = vmatpush.msra.mxu0 %v1145
    %10228 = vmatpush.msra.mxu0 %v1137
    %10229 = vmatpush.msra.mxu0 %v1129
    %10230 = vmatpush.msra.mxu0 %v1121
    %10231 = vmatmul.f32.gmra.mxu0 %v9616
    %v10232 = vpop.f32.mrf.mxu0
    %v10233 = vadd.f32 %v10213, %v10232
    %10234 = vdwg.mxu0
    %10235 = vmatpush.msra.mxu0 %v1369
    %10236 = vmatpush.msra.mxu0 %v1361
    %10237 = vmatpush.msra.mxu0 %v1353
    %10238 = vmatpush.msra.mxu0 %v1345
    %10239 = vmatpush.msra.mxu0 %v1337
    %10240 = vmatpush.msra.mxu0 %v1329
    %10241 = vmatpush.msra.mxu0 %v1321
    %10242 = vmatpush.msra.mxu0 %v1313
    %10243 = vmatpush.msra.mxu0 %v1305
    %10244 = vmatpush.msra.mxu0 %v1297
    %10245 = vmatpush.msra.mxu0 %v1289
    %10246 = vmatpush.msra.mxu0 %v1281
    %10247 = vmatpush.msra.mxu0 %v1273
    %10248 = vmatpush.msra.mxu0 %v1265
    %10249 = vmatpush.msra.mxu0 %v1257
    %10250 = vmatpush.msra.mxu0 %v1249
    %10251 = vmatmul.f32.gmra.mxu0 %v9617
    %v10252 = vpop.f32.mrf.mxu0
    %v10253 = vadd.f32 %v10233, %v10252
    %10254 = vdwg.mxu0
    %10255 = vmatpush.msra.mxu0 %v986
    %10256 = vmatpush.msra.mxu0 %v978
    %10257 = vmatpush.msra.mxu0 %v970
    %10258 = vmatpush.msra.mxu0 %v962
    %10259 = vmatpush.msra.mxu0 %v954
    %10260 = vmatpush.msra.mxu0 %v946
    %10261 = vmatpush.msra.mxu0 %v938
    %10262 = vmatpush.msra.mxu0 %v930
    %10263 = vmatpush.msra.mxu0 %v922
    %10264 = vmatpush.msra.mxu0 %v914
    %10265 = vmatpush.msra.mxu0 %v906
    %10266 = vmatpush.msra.mxu0 %v898
    %10267 = vmatpush.msra.mxu0 %v890
    %10268 = vmatpush.msra.mxu0 %v882
    %10269 = vmatpush.msra.mxu0 %v874
    %10270 = vmatpush.msra.mxu0 %v866
    %10271 = vmatmul.f32.gmra.mxu0 %v10093
    %v10272 = vpop.f32.mrf.mxu0
    %v10273 = vadd.f32 %v1380, %v10272
    %10274 = vdwg.mxu0
    %10275 = vmatpush.msra.mxu0 %v1114
    %10276 = vmatpush.msra.mxu0 %v1106
    %10277 = vmatpush.msra.mxu0 %v1098
    %10278 = vmatpush.msra.mxu0 %v1090
    %10279 = vmatpush.msra.mxu0 %v1082
    %10280 = vmatpush.msra.mxu0 %v1074
    %10281 = vmatpush.msra.mxu0 %v1066
    %10282 = vmatpush.msra.mxu0 %v1058
    %10283 = vmatpush.msra.mxu0 %v1050
    %10284 = vmatpush.msra.mxu0 %v1042
    %10285 = vmatpush.msra.mxu0 %v1034
    %10286 = vmatpush.msra.mxu0 %v1026
    %10287 = vmatpush.msra.mxu0 %v1018
    %10288 = vmatpush.msra.mxu0 %v1010
    %10289 = vmatpush.msra.mxu0 %v1002
    %10290 = vmatpush.msra.mxu0 %v994
    %10291 = vmatmul.f32.gmra.mxu0 %v10094
    %v10292 = vpop.f32.mrf.mxu0
    %v10293 = vadd.f32 %v10273, %v10292
    %10294 = vdwg.mxu0
    %10295 = vmatpush.msra.mxu0 %v1242
    %10296 = vmatpush.msra.mxu0 %v1234
    %10297 = vmatpush.msra.mxu0 %v1226
    %10298 = vmatpush.msra.mxu0 %v1218
    %10299 = vmatpush.msra.mxu0 %v1210
    %10300 = vmatpush.msra.mxu0 %v1202
    %10301 = vmatpush.msra.mxu0 %v1194
    %10302 = vmatpush.msra.mxu0 %v1186
    %10303 = vmatpush.msra.mxu0 %v1178
    %10304 = vmatpush.msra.mxu0 %v1170
    %10305 = vmatpush.msra.mxu0 %v1162
    %10306 = vmatpush.msra.mxu0 %v1154
    %10307 = vmatpush.msra.mxu0 %v1146
    %10308 = vmatpush.msra.mxu0 %v1138
    %10309 = vmatpush.msra.mxu0 %v1130
    %10310 = vmatpush.msra.mxu0 %v1122
    %10311 = vmatmul.f32.gmra.mxu0 %v9616
    %v10312 = vpop.f32.mrf.mxu0
    %v10313 = vadd.f32 %v10293, %v10312
    %10314 = vdwg.mxu0
    %10315 = vmatpush.msra.mxu0 %v1370
    %10316 = vmatpush.msra.mxu0 %v1362
    %10317 = vmatpush.msra.mxu0 %v1354
    %10318 = vmatpush.msra.mxu0 %v1346
    %10319 = vmatpush.msra.mxu0 %v1338
    %10320 = vmatpush.msra.mxu0 %v1330
    %10321 = vmatpush.msra.mxu0 %v1322
    %10322 = vmatpush.msra.mxu0 %v1314
    %10323 = vmatpush.msra.mxu0 %v1306
    %10324 = vmatpush.msra.mxu0 %v1298
    %10325 = vmatpush.msra.mxu0 %v1290
    %10326 = vmatpush.msra.mxu0 %v1282
    %10327 = vmatpush.msra.mxu0 %v1274
    %10328 = vmatpush.msra.mxu0 %v1266
    %10329 = vmatpush.msra.mxu0 %v1258
    %10330 = vmatpush.msra.mxu0 %v1250
    %10331 = vmatmul.f32.gmra.mxu0 %v9617
    %v10332 = vpop.f32.mrf.mxu0
    %v10333 = vadd.f32 %v10313, %v10332
    %10334 = vdwg.mxu0
    %10335 = vmatpush.msra.mxu0 %v987
    %10336 = vmatpush.msra.mxu0 %v979
    %10337 = vmatpush.msra.mxu0 %v971
    %10338 = vmatpush.msra.mxu0 %v963
    %10339 = vmatpush.msra.mxu0 %v955
    %10340 = vmatpush.msra.mxu0 %v947
    %10341 = vmatpush.msra.mxu0 %v939
    %10342 = vmatpush.msra.mxu0 %v931
    %10343 = vmatpush.msra.mxu0 %v923
    %10344 = vmatpush.msra.mxu0 %v915
    %10345 = vmatpush.msra.mxu0 %v907
    %10346 = vmatpush.msra.mxu0 %v899
    %10347 = vmatpush.msra.mxu0 %v891
    %10348 = vmatpush.msra.mxu0 %v883
    %10349 = vmatpush.msra.mxu0 %v875
    %10350 = vmatpush.msra.mxu0 %v867
    %10351 = vmatmul.f32.gmra.mxu0 %v10093
    %v10352 = vpop.f32.mrf.mxu0
    %v10353 = vadd.f32 %v1381, %v10352
    %10354 = vdwg.mxu0
    %10355 = vmatpush.msra.mxu0 %v1115
    %10356 = vmatpush.msra.mxu0 %v1107
    %10357 = vmatpush.msra.mxu0 %v1099
    %10358 = vmatpush.msra.mxu0 %v1091
    %10359 = vmatpush.msra.mxu0 %v1083
    %10360 = vmatpush.msra.mxu0 %v1075
    %10361 = vmatpush.msra.mxu0 %v1067
    %10362 = vmatpush.msra.mxu0 %v1059
    %10363 = vmatpush.msra.mxu0 %v1051
    %10364 = vmatpush.msra.mxu0 %v1043
    %10365 = vmatpush.msra.mxu0 %v1035
    %10366 = vmatpush.msra.mxu0 %v1027
    %10367 = vmatpush.msra.mxu0 %v1019
    %10368 = vmatpush.msra.mxu0 %v1011
    %10369 = vmatpush.msra.mxu0 %v1003
    %10370 = vmatpush.msra.mxu0 %v995
    %10371 = vmatmul.f32.gmra.mxu0 %v10094
    %v10372 = vpop.f32.mrf.mxu0
    %v10373 = vadd.f32 %v10353, %v10372
    %10374 = vdwg.mxu0
    %10375 = vmatpush.msra.mxu0 %v1243
    %10376 = vmatpush.msra.mxu0 %v1235
    %10377 = vmatpush.msra.mxu0 %v1227
    %10378 = vmatpush.msra.mxu0 %v1219
    %10379 = vmatpush.msra.mxu0 %v1211
    %10380 = vmatpush.msra.mxu0 %v1203
    %10381 = vmatpush.msra.mxu0 %v1195
    %10382 = vmatpush.msra.mxu0 %v1187
    %10383 = vmatpush.msra.mxu0 %v1179
    %10384 = vmatpush.msra.mxu0 %v1171
    %10385 = vmatpush.msra.mxu0 %v1163
    %10386 = vmatpush.msra.mxu0 %v1155
    %10387 = vmatpush.msra.mxu0 %v1147
    %10388 = vmatpush.msra.mxu0 %v1139
    %10389 = vmatpush.msra.mxu0 %v1131
    %10390 = vmatpush.msra.mxu0 %v1123
    %10391 = vmatmul.f32.gmra.mxu0 %v9616
    %v10392 = vpop.f32.mrf.mxu0
    %v10393 = vadd.f32 %v10373, %v10392
    %10394 = vdwg.mxu0
    %10395 = vmatpush.msra.mxu0 %v1371
    %10396 = vmatpush.msra.mxu0 %v1363
    %10397 = vmatpush.msra.mxu0 %v1355
    %10398 = vmatpush.msra.mxu0 %v1347
    %10399 = vmatpush.msra.mxu0 %v1339
    %10400 = vmatpush.msra.mxu0 %v1331
    %10401 = vmatpush.msra.mxu0 %v1323
    %10402 = vmatpush.msra.mxu0 %v1315
    %10403 = vmatpush.msra.mxu0 %v1307
    %10404 = vmatpush.msra.mxu0 %v1299
    %10405 = vmatpush.msra.mxu0 %v1291
    %10406 = vmatpush.msra.mxu0 %v1283
    %10407 = vmatpush.msra.mxu0 %v1275
    %10408 = vmatpush.msra.mxu0 %v1267
    %10409 = vmatpush.msra.mxu0 %v1259
    %10410 = vmatpush.msra.mxu0 %v1251
    %10411 = vmatmul.f32.gmra.mxu0 %v9617
    %v10412 = vpop.f32.mrf.mxu0
    %v10413 = vadd.f32 %v10393, %v10412
    %10414 = vdwg.mxu0
    %10415 = vmatpush.msra.mxu0 %v988
    %10416 = vmatpush.msra.mxu0 %v980
    %10417 = vmatpush.msra.mxu0 %v972
    %10418 = vmatpush.msra.mxu0 %v964
    %10419 = vmatpush.msra.mxu0 %v956
    %10420 = vmatpush.msra.mxu0 %v948
    %10421 = vmatpush.msra.mxu0 %v940
    %10422 = vmatpush.msra.mxu0 %v932
    %10423 = vmatpush.msra.mxu0 %v924
    %10424 = vmatpush.msra.mxu0 %v916
    %10425 = vmatpush.msra.mxu0 %v908
    %10426 = vmatpush.msra.mxu0 %v900
    %10427 = vmatpush.msra.mxu0 %v892
    %10428 = vmatpush.msra.mxu0 %v884
    %10429 = vmatpush.msra.mxu0 %v876
    %10430 = vmatpush.msra.mxu0 %v868
    %10431 = vmatmul.f32.gmra.mxu0 %v10093
    %v10432 = vpop.f32.mrf.mxu0
    %v10433 = vadd.f32 %v1382, %v10432
    %10434 = vdwg.mxu0
    %10435 = vmatpush.msra.mxu0 %v1116
    %10436 = vmatpush.msra.mxu0 %v1108
    %10437 = vmatpush.msra.mxu0 %v1100
    %10438 = vmatpush.msra.mxu0 %v1092
    %10439 = vmatpush.msra.mxu0 %v1084
    %10440 = vmatpush.msra.mxu0 %v1076
    %10441 = vmatpush.msra.mxu0 %v1068
    %10442 = vmatpush.msra.mxu0 %v1060
    %10443 = vmatpush.msra.mxu0 %v1052
    %10444 = vmatpush.msra.mxu0 %v1044
    %10445 = vmatpush.msra.mxu0 %v1036
    %10446 = vmatpush.msra.mxu0 %v1028
    %10447 = vmatpush.msra.mxu0 %v1020
    %10448 = vmatpush.msra.mxu0 %v1012
    %10449 = vmatpush.msra.mxu0 %v1004
    %10450 = vmatpush.msra.mxu0 %v996
    %10451 = vmatmul.f32.gmra.mxu0 %v10094
    %v10452 = vpop.f32.mrf.mxu0
    %v10453 = vadd.f32 %v10433, %v10452
    %10454 = vdwg.mxu0
    %10455 = vmatpush.msra.mxu0 %v1244
    %10456 = vmatpush.msra.mxu0 %v1236
    %10457 = vmatpush.msra.mxu0 %v1228
    %10458 = vmatpush.msra.mxu0 %v1220
    %10459 = vmatpush.msra.mxu0 %v1212
    %10460 = vmatpush.msra.mxu0 %v1204
    %10461 = vmatpush.msra.mxu0 %v1196
    %10462 = vmatpush.msra.mxu0 %v1188
    %10463 = vmatpush.msra.mxu0 %v1180
    %10464 = vmatpush.msra.mxu0 %v1172
    %10465 = vmatpush.msra.mxu0 %v1164
    %10466 = vmatpush.msra.mxu0 %v1156
    %10467 = vmatpush.msra.mxu0 %v1148
    %10468 = vmatpush.msra.mxu0 %v1140
    %10469 = vmatpush.msra.mxu0 %v1132
    %10470 = vmatpush.msra.mxu0 %v1124
    %10471 = vmatmul.f32.gmra.mxu0 %v9616
    %v10472 = vpop.f32.mrf.mxu0
    %v10473 = vadd.f32 %v10453, %v10472
    %10474 = vdwg.mxu0
    %10475 = vmatpush.msra.mxu0 %v1372
    %10476 = vmatpush.msra.mxu0 %v1364
    %10477 = vmatpush.msra.mxu0 %v1356
    %10478 = vmatpush.msra.mxu0 %v1348
    %10479 = vmatpush.msra.mxu0 %v1340
    %10480 = vmatpush.msra.mxu0 %v1332
    %10481 = vmatpush.msra.mxu0 %v1324
    %10482 = vmatpush.msra.mxu0 %v1316
    %10483 = vmatpush.msra.mxu0 %v1308
    %10484 = vmatpush.msra.mxu0 %v1300
    %10485 = vmatpush.msra.mxu0 %v1292
    %10486 = vmatpush.msra.mxu0 %v1284
    %10487 = vmatpush.msra.mxu0 %v1276
    %10488 = vmatpush.msra.mxu0 %v1268
    %10489 = vmatpush.msra.mxu0 %v1260
    %10490 = vmatpush.msra.mxu0 %v1252
    %10491 = vmatmul.f32.gmra.mxu0 %v9617
    %v10492 = vpop.f32.mrf.mxu0
    %v10493 = vadd.f32 %v10473, %v10492
    %10494 = vdwg.mxu0
    %10495 = vmatpush.msra.mxu0 %v989
    %10496 = vmatpush.msra.mxu0 %v981
    %10497 = vmatpush.msra.mxu0 %v973
    %10498 = vmatpush.msra.mxu0 %v965
    %10499 = vmatpush.msra.mxu0 %v957
    %10500 = vmatpush.msra.mxu0 %v949
    %10501 = vmatpush.msra.mxu0 %v941
    %10502 = vmatpush.msra.mxu0 %v933
    %10503 = vmatpush.msra.mxu0 %v925
    %10504 = vmatpush.msra.mxu0 %v917
    %10505 = vmatpush.msra.mxu0 %v909
    %10506 = vmatpush.msra.mxu0 %v901
    %10507 = vmatpush.msra.mxu0 %v893
    %10508 = vmatpush.msra.mxu0 %v885
    %10509 = vmatpush.msra.mxu0 %v877
    %10510 = vmatpush.msra.mxu0 %v869
    %10511 = vmatmul.f32.gmra.mxu0 %v10093
    %v10512 = vpop.f32.mrf.mxu0
    %v10513 = vadd.f32 %v1383, %v10512
    %10514 = vdwg.mxu0
    %10515 = vmatpush.msra.mxu0 %v1117
    %10516 = vmatpush.msra.mxu0 %v1109
    %10517 = vmatpush.msra.mxu0 %v1101
    %10518 = vmatpush.msra.mxu0 %v1093
    %10519 = vmatpush.msra.mxu0 %v1085
    %10520 = vmatpush.msra.mxu0 %v1077
    %10521 = vmatpush.msra.mxu0 %v1069
    %10522 = vmatpush.msra.mxu0 %v1061
    %10523 = vmatpush.msra.mxu0 %v1053
    %10524 = vmatpush.msra.mxu0 %v1045
    %10525 = vmatpush.msra.mxu0 %v1037
    %10526 = vmatpush.msra.mxu0 %v1029
    %10527 = vmatpush.msra.mxu0 %v1021
    %10528 = vmatpush.msra.mxu0 %v1013
    %10529 = vmatpush.msra.mxu0 %v1005
    %10530 = vmatpush.msra.mxu0 %v997
    %10531 = vmatmul.f32.gmra.mxu0 %v10094
    %v10532 = vpop.f32.mrf.mxu0
    %v10533 = vadd.f32 %v10513, %v10532
    %10534 = vdwg.mxu0
    %10535 = vmatpush.msra.mxu0 %v1245
    %10536 = vmatpush.msra.mxu0 %v1237
    %10537 = vmatpush.msra.mxu0 %v1229
    %10538 = vmatpush.msra.mxu0 %v1221
    %10539 = vmatpush.msra.mxu0 %v1213
    %10540 = vmatpush.msra.mxu0 %v1205
    %10541 = vmatpush.msra.mxu0 %v1197
    %10542 = vmatpush.msra.mxu0 %v1189
    %10543 = vmatpush.msra.mxu0 %v1181
    %10544 = vmatpush.msra.mxu0 %v1173
    %10545 = vmatpush.msra.mxu0 %v1165
    %10546 = vmatpush.msra.mxu0 %v1157
    %10547 = vmatpush.msra.mxu0 %v1149
    %10548 = vmatpush.msra.mxu0 %v1141
    %10549 = vmatpush.msra.mxu0 %v1133
    %10550 = vmatpush.msra.mxu0 %v1125
    %10551 = vmatmul.f32.gmra.mxu0 %v9616
    %v10552 = vpop.f32.mrf.mxu0
    %v10553 = vadd.f32 %v10533, %v10552
    %10554 = vdwg.mxu0
    %10555 = vmatpush.msra.mxu0 %v1373
    %10556 = vmatpush.msra.mxu0 %v1365
    %10557 = vmatpush.msra.mxu0 %v1357
    %10558 = vmatpush.msra.mxu0 %v1349
    %10559 = vmatpush.msra.mxu0 %v1341
    %10560 = vmatpush.msra.mxu0 %v1333
    %10561 = vmatpush.msra.mxu0 %v1325
    %10562 = vmatpush.msra.mxu0 %v1317
    %10563 = vmatpush.msra.mxu0 %v1309
    %10564 = vmatpush.msra.mxu0 %v1301
    %10565 = vmatpush.msra.mxu0 %v1293
    %10566 = vmatpush.msra.mxu0 %v1285
    %10567 = vmatpush.msra.mxu0 %v1277
    %10568 = vmatpush.msra.mxu0 %v1269
    %10569 = vmatpush.msra.mxu0 %v1261
    %10570 = vmatpush.msra.mxu0 %v1253
    %10571 = vmatmul.f32.gmra.mxu0 %v9617
    %v10572 = vpop.f32.mrf.mxu0
    %v10573 = vadd.f32 %v10553, %v10572
    %10574 = vdwg.mxu0
    %10575 = vmatpush.msra.mxu0 %v990
    %10576 = vmatpush.msra.mxu0 %v982
    %10577 = vmatpush.msra.mxu0 %v974
    %10578 = vmatpush.msra.mxu0 %v966
    %10579 = vmatpush.msra.mxu0 %v958
    %10580 = vmatpush.msra.mxu0 %v950
    %10581 = vmatpush.msra.mxu0 %v942
    %10582 = vmatpush.msra.mxu0 %v934
    %10583 = vmatpush.msra.mxu0 %v926
    %10584 = vmatpush.msra.mxu0 %v918
    %10585 = vmatpush.msra.mxu0 %v910
    %10586 = vmatpush.msra.mxu0 %v902
    %10587 = vmatpush.msra.mxu0 %v894
    %10588 = vmatpush.msra.mxu0 %v886
    %10589 = vmatpush.msra.mxu0 %v878
    %10590 = vmatpush.msra.mxu0 %v870
    %10591 = vmatmul.f32.gmra.mxu0 %v10093
    %v10592 = vpop.f32.mrf.mxu0
    %v10593 = vadd.f32 %v1384, %v10592
    %10594 = vdwg.mxu0
    %10595 = vmatpush.msra.mxu0 %v1118
    %10596 = vmatpush.msra.mxu0 %v1110
    %10597 = vmatpush.msra.mxu0 %v1102
    %10598 = vmatpush.msra.mxu0 %v1094
    %10599 = vmatpush.msra.mxu0 %v1086
    %10600 = vmatpush.msra.mxu0 %v1078
    %10601 = vmatpush.msra.mxu0 %v1070
    %10602 = vmatpush.msra.mxu0 %v1062
    %10603 = vmatpush.msra.mxu0 %v1054
    %10604 = vmatpush.msra.mxu0 %v1046
    %10605 = vmatpush.msra.mxu0 %v1038
    %10606 = vmatpush.msra.mxu0 %v1030
    %10607 = vmatpush.msra.mxu0 %v1022
    %10608 = vmatpush.msra.mxu0 %v1014
    %10609 = vmatpush.msra.mxu0 %v1006
    %10610 = vmatpush.msra.mxu0 %v998
    %10611 = vmatmul.f32.gmra.mxu0 %v10094
    %v10612 = vpop.f32.mrf.mxu0
    %v10613 = vadd.f32 %v10593, %v10612
    %10614 = vdwg.mxu0
    %10615 = vmatpush.msra.mxu0 %v1246
    %10616 = vmatpush.msra.mxu0 %v1238
    %10617 = vmatpush.msra.mxu0 %v1230
    %10618 = vmatpush.msra.mxu0 %v1222
    %10619 = vmatpush.msra.mxu0 %v1214
    %10620 = vmatpush.msra.mxu0 %v1206
    %10621 = vmatpush.msra.mxu0 %v1198
    %10622 = vmatpush.msra.mxu0 %v1190
    %10623 = vmatpush.msra.mxu0 %v1182
    %10624 = vmatpush.msra.mxu0 %v1174
    %10625 = vmatpush.msra.mxu0 %v1166
    %10626 = vmatpush.msra.mxu0 %v1158
    %10627 = vmatpush.msra.mxu0 %v1150
    %10628 = vmatpush.msra.mxu0 %v1142
    %10629 = vmatpush.msra.mxu0 %v1134
    %10630 = vmatpush.msra.mxu0 %v1126
    %10631 = vmatmul.f32.gmra.mxu0 %v9616
    %v10632 = vpop.f32.mrf.mxu0
    %v10633 = vadd.f32 %v10613, %v10632
    %10634 = vdwg.mxu0
    %10635 = vmatpush.msra.mxu0 %v1374
    %10636 = vmatpush.msra.mxu0 %v1366
    %10637 = vmatpush.msra.mxu0 %v1358
    %10638 = vmatpush.msra.mxu0 %v1350
    %10639 = vmatpush.msra.mxu0 %v1342
    %10640 = vmatpush.msra.mxu0 %v1334
    %10641 = vmatpush.msra.mxu0 %v1326
    %10642 = vmatpush.msra.mxu0 %v1318
    %10643 = vmatpush.msra.mxu0 %v1310
    %10644 = vmatpush.msra.mxu0 %v1302
    %10645 = vmatpush.msra.mxu0 %v1294
    %10646 = vmatpush.msra.mxu0 %v1286
    %10647 = vmatpush.msra.mxu0 %v1278
    %10648 = vmatpush.msra.mxu0 %v1270
    %10649 = vmatpush.msra.mxu0 %v1262
    %10650 = vmatpush.msra.mxu0 %v1254
    %10651 = vmatmul.f32.gmra.mxu0 %v9617
    %v10652 = vpop.f32.mrf.mxu0
    %v10653 = vadd.f32 %v10633, %v10652
    %10654 = vdwg.mxu0
    %10655 = vmatpush.msra.mxu0 %v991
    %10656 = vmatpush.msra.mxu0 %v983
    %10657 = vmatpush.msra.mxu0 %v975
    %10658 = vmatpush.msra.mxu0 %v967
    %10659 = vmatpush.msra.mxu0 %v959
    %10660 = vmatpush.msra.mxu0 %v951
    %10661 = vmatpush.msra.mxu0 %v943
    %10662 = vmatpush.msra.mxu0 %v935
    %10663 = vmatpush.msra.mxu0 %v927
    %10664 = vmatpush.msra.mxu0 %v919
    %10665 = vmatpush.msra.mxu0 %v911
    %10666 = vmatpush.msra.mxu0 %v903
    %10667 = vmatpush.msra.mxu0 %v895
    %10668 = vmatpush.msra.mxu0 %v887
    %10669 = vmatpush.msra.mxu0 %v879
    %10670 = vmatpush.msra.mxu0 %v871
    %10671 = vmatmul.f32.gmra.mxu0 %v10093
    %v10672 = vpop.f32.mrf.mxu0
    %v10673 = vadd.f32 %v1385, %v10672
    %10674 = vdwg.mxu0
    %10675 = vmatpush.msra.mxu0 %v1119
    %10676 = vmatpush.msra.mxu0 %v1111
    %10677 = vmatpush.msra.mxu0 %v1103
    %10678 = vmatpush.msra.mxu0 %v1095
    %10679 = vmatpush.msra.mxu0 %v1087
    %10680 = vmatpush.msra.mxu0 %v1079
    %10681 = vmatpush.msra.mxu0 %v1071
    %10682 = vmatpush.msra.mxu0 %v1063
    %10683 = vmatpush.msra.mxu0 %v1055
    %10684 = vmatpush.msra.mxu0 %v1047
    %10685 = vmatpush.msra.mxu0 %v1039
    %10686 = vmatpush.msra.mxu0 %v1031
    %10687 = vmatpush.msra.mxu0 %v1023
    %10688 = vmatpush.msra.mxu0 %v1015
    %10689 = vmatpush.msra.mxu0 %v1007
    %10690 = vmatpush.msra.mxu0 %v999
    %10691 = vmatmul.f32.gmra.mxu0 %v10094
    %v10692 = vpop.f32.mrf.mxu0
    %v10693 = vadd.f32 %v10673, %v10692
    %10694 = vdwg.mxu0
    %10695 = vmatpush.msra.mxu0 %v1247
    %10696 = vmatpush.msra.mxu0 %v1239
    %10697 = vmatpush.msra.mxu0 %v1231
    %10698 = vmatpush.msra.mxu0 %v1223
    %10699 = vmatpush.msra.mxu0 %v1215
    %10700 = vmatpush.msra.mxu0 %v1207
    %10701 = vmatpush.msra.mxu0 %v1199
    %10702 = vmatpush.msra.mxu0 %v1191
    %10703 = vmatpush.msra.mxu0 %v1183
    %10704 = vmatpush.msra.mxu0 %v1175
    %10705 = vmatpush.msra.mxu0 %v1167
    %10706 = vmatpush.msra.mxu0 %v1159
    %10707 = vmatpush.msra.mxu0 %v1151
    %10708 = vmatpush.msra.mxu0 %v1143
    %10709 = vmatpush.msra.mxu0 %v1135
    %10710 = vmatpush.msra.mxu0 %v1127
    %10711 = vmatmul.f32.gmra.mxu0 %v9616
    %v10712 = vpop.f32.mrf.mxu0
    %v10713 = vadd.f32 %v10693, %v10712
    %10714 = vdwg.mxu0
    %10715 = vmatpush.msra.mxu0 %v1375
    %10716 = vmatpush.msra.mxu0 %v1367
    %10717 = vmatpush.msra.mxu0 %v1359
    %10718 = vmatpush.msra.mxu0 %v1351
    %10719 = vmatpush.msra.mxu0 %v1343
    %10720 = vmatpush.msra.mxu0 %v1335
    %10721 = vmatpush.msra.mxu0 %v1327
    %10722 = vmatpush.msra.mxu0 %v1319
    %10723 = vmatpush.msra.mxu0 %v1311
    %10724 = vmatpush.msra.mxu0 %v1303
    %10725 = vmatpush.msra.mxu0 %v1295
    %10726 = vmatpush.msra.mxu0 %v1287
    %10727 = vmatpush.msra.mxu0 %v1279
    %10728 = vmatpush.msra.mxu0 %v1271
    %10729 = vmatpush.msra.mxu0 %v1263
    %10730 = vmatpush.msra.mxu0 %v1255
    %10731 = vmatmul.f32.gmra.mxu0 %v9617
    %v10732 = vpop.f32.mrf.mxu0
    %v10733 = vadd.f32 %v10713, %v10732
    %10734 = vdwg.mxu0
    %v10735 = vxor.u32 %v10173, 2147483648
    %v10736 = vxor.u32 %v10253, 2147483648
    %v10737 = vmul.f32 %v10735, 1.442695
    %v10738 = vpow.pop %v10737
    %v10739 = vmul.f32 %v10736, 1.442695
    %v10740 = vpow.pop %v10739
    %v10741 = vadd.f32 %v10738, 1.0
    %v10742 = vadd.f32 %v10740, 1.0
    %v10743 = vrcp.pop %v10741
    %v10744 = vmul.f32 %v10741, %v10743
    %v10745 = vsub.f32 1.0, %v10744
    %v10746 = vmul.f32 %v10743, %v10745
    %v10747 = vadd.f32 %v10743, %v10746
    %vm10748 = vweird.f32 %v10741
    %vm10749 = vweird.f32 %v10743
    %vm10750 = vmor %vm10748, %vm10749
    %v10751 = vsel %vm10750, %v10743, %v10747
    %v10752 = vand.u32 2147483647, %v10741
    %vm10753 = vcmp.eq.f32.partialorder %v10752, 8.507059e+37
    %v10754 = vand.u32 %v10741, 2147483648
    %v10755 = vor.u32 1.1754944e-38, %v10754
    %v10756 = vsel %vm10753, %v10755, %v10751
    %v10757 = vmul.f32 1.0, %v10756
    %v10758 = vrcp.pop %v10742
    %v10759 = vmul.f32 %v10742, %v10758
    %v10760 = vsub.f32 1.0, %v10759
    %v10761 = vmul.f32 %v10758, %v10760
    %v10762 = vadd.f32 %v10758, %v10761
    %vm10763 = vweird.f32 %v10742
    %vm10764 = vweird.f32 %v10758
    %vm10765 = vmor %vm10763, %vm10764
    %v10766 = vsel %vm10765, %v10758, %v10762
    %v10767 = vand.u32 2147483647, %v10742
    %vm10768 = vcmp.eq.f32.partialorder %v10767, 8.507059e+37
    %v10769 = vand.u32 %v10742, 2147483648
    %v10770 = vor.u32 1.1754944e-38, %v10769
    %v10771 = vsel %vm10768, %v10770, %v10766
    %v10772 = vmul.f32 1.0, %v10771
    %v10773 = vxor.u32 %v10333, 2147483648
    %v10774 = vxor.u32 %v10413, 2147483648
    %v10775 = vmul.f32 %v10773, 1.442695
    %v10776 = vpow.pop %v10775
    %v10777 = vmul.f32 %v10774, 1.442695
    %v10778 = vpow.pop %v10777
    %v10779 = vadd.f32 %v10776, 1.0
    %v10780 = vadd.f32 %v10778, 1.0
    %v10781 = vrcp.pop %v10779
    %v10782 = vmul.f32 %v10779, %v10781
    %v10783 = vsub.f32 1.0, %v10782
    %v10784 = vmul.f32 %v10781, %v10783
    %v10785 = vadd.f32 %v10781, %v10784
    %vm10786 = vweird.f32 %v10779
    %vm10787 = vweird.f32 %v10781
    %vm10788 = vmor %vm10786, %vm10787
    %v10789 = vsel %vm10788, %v10781, %v10785
    %v10790 = vand.u32 2147483647, %v10779
    %vm10791 = vcmp.eq.f32.partialorder %v10790, 8.507059e+37
    %v10792 = vand.u32 %v10779, 2147483648
    %v10793 = vor.u32 1.1754944e-38, %v10792
    %v10794 = vsel %vm10791, %v10793, %v10789
    %v10795 = vmul.f32 1.0, %v10794
    %v10796 = vrcp.pop %v10780
    %v10797 = vmul.f32 %v10780, %v10796
    %v10798 = vsub.f32 1.0, %v10797
    %v10799 = vmul.f32 %v10796, %v10798
    %v10800 = vadd.f32 %v10796, %v10799
    %vm10801 = vweird.f32 %v10780
    %vm10802 = vweird.f32 %v10796
    %vm10803 = vmor %vm10801, %vm10802
    %v10804 = vsel %vm10803, %v10796, %v10800
    %v10805 = vand.u32 2147483647, %v10780
    %vm10806 = vcmp.eq.f32.partialorder %v10805, 8.507059e+37
    %v10807 = vand.u32 %v10780, 2147483648
    %v10808 = vor.u32 1.1754944e-38, %v10807
    %v10809 = vsel %vm10806, %v10808, %v10804
    %v10810 = vmul.f32 1.0, %v10809
    %v10811 = vtanh.pop %v10493
    %v10812 = vtanh.pop %v10573
    %v10813 = vxor.u32 %v10653, 2147483648
    %v10814 = vxor.u32 %v10733, 2147483648
    %v10815 = vmul.f32 %v10813, 1.442695
    %v10816 = vpow.pop %v10815
    %v10817 = vmul.f32 %v10814, 1.442695
    %v10818 = vpow.pop %v10817
    %v10819 = vadd.f32 %v10816, 1.0
    %v10820 = vadd.f32 %v10818, 1.0
    %v10821 = vrcp.pop %v10819
    %v10822 = vmul.f32 %v10819, %v10821
    %v10823 = vsub.f32 1.0, %v10822
    %v10824 = vmul.f32 %v10821, %v10823
    %v10825 = vadd.f32 %v10821, %v10824
    %vm10826 = vweird.f32 %v10819
    %vm10827 = vweird.f32 %v10821
    %vm10828 = vmor %vm10826, %vm10827
    %v10829 = vsel %vm10828, %v10821, %v10825
    %v10830 = vand.u32 2147483647, %v10819
    %vm10831 = vcmp.eq.f32.partialorder %v10830, 8.507059e+37
    %v10832 = vand.u32 %v10819, 2147483648
    %v10833 = vor.u32 1.1754944e-38, %v10832
    %v10834 = vsel %vm10831, %v10833, %v10829
    %v10835 = vmul.f32 1.0, %v10834
    %v10836 = vrcp.pop %v10820
    %v10837 = vmul.f32 %v10820, %v10836
    %v10838 = vsub.f32 1.0, %v10837
    %v10839 = vmul.f32 %v10836, %v10838
    %v10840 = vadd.f32 %v10836, %v10839
    %vm10841 = vweird.f32 %v10820
    %vm10842 = vweird.f32 %v10836
    %vm10843 = vmor %vm10841, %vm10842
    %v10844 = vsel %vm10843, %v10836, %v10840
    %v10845 = vand.u32 2147483647, %v10820
    %vm10846 = vcmp.eq.f32.partialorder %v10845, 8.507059e+37
    %v10847 = vand.u32 %v10820, 2147483648
    %v10848 = vor.u32 1.1754944e-38, %v10847
    %v10849 = vsel %vm10846, %v10848, %v10844
    %v10850 = vmul.f32 1.0, %v10849
    %v10851 = vmul.f32 %v10795, %v9612
    %v10852 = vmul.f32 %v10810, %v9613
    %v10853 = vmul.f32 %v10757, %v10811
    %v10854 = vmul.f32 %v10772, %v10812
    %v10855 = vadd.f32 %v10851, %v10853
    %v10856 = vadd.f32 %v10852, %v10854
    %v10857 = vtanh.pop %v10855
    %v10858 = vtanh.pop %v10856
    %v10859 = vmul.f32 %v10835, %v10857
    %v10860 = vmul.f32 %v10850, %v10858
    %10861 = vst [vmem:[#allocation11] sm:$0xff] %v10859
    %10862 = vst [vmem:[#allocation11 + $0x8] sm:$0xff] %v10860
    // Predicated region
    $region46: #{tpu_custom_call.1} parent=1 // pred_check
      _
    $region47: #{tpu_custom_call.1} parent=1 // pred_check_branch
      %10864 = sbr.rel (0) target = $region49
    $region48: #{tpu_custom_call.1} parent=1 // pred_region
      %10866 = vsyncadd [#allocation4], 0
      %s10868 = sshll.u32 [#allocation11], 4
      %s10869 = int_to_ptr.vmem [resolvable:$true] %s10868
      %s10870 = sshll.u32 %s6, 4
      %s10871 = int_to_ptr.hbm [resolvable:$true] %s10870
      %10873 = dma.vmem_to_hbm [thread:$0]  %s10869, 256, %s10871, [#allocation4]
    $region49: #{tpu_custom_call.1} parent=1 // pred_fallthru
      _
    // Predicated region
    $region50: #{tpu_custom_call.1} parent=1 // pred_check
      _
    $region51: #{tpu_custom_call.1} parent=1 // pred_check_branch
      %10875 = sbr.rel (0) target = $region53
    $region52: #{tpu_custom_call.1} parent=1 // pred_region
      %10877 = dma.done [#allocation4], 256
    $region53: #{tpu_custom_call.1} parent=1 // pred_fallthru
      _
    %10878 = vsyncpa [#allocation3], 1
    %10879 = vsyncpa [#allocation6], 1
    %10880 = vsyncpa [#allocation9], 1
    %10881 = vsyncpa [#allocation4], 1

</llo_original>
